<compile_context>
chip_gen: v5e
topology: v5e:2x2
jax: 0.10.0
libtpu: 0.0.40
codegen_flags: <defaults>
</compile_context>

<pallas_src>
import jax
import jax.numpy as jnp
import numpy as np
from jax.experimental import pallas as pl
from jax.experimental.pallas import tpu as pltpu


# Canonical per-branch parameter ordering (used on both sides of the pallas_call).
_BRANCH_KEYS = ('w1', 'b1', 's1', 'w2_taps', 'b2', 's2', 'w_sam', 'w_ct', 'b_ct',
                'w_adj', 'w_sw', 'b_sw', 'gamma', 'w_cc1', 'w_cc2', 'b_cc',
                'w_dw', 'b_dw')
_NB = len(_BRANCH_KEYS)


def _leaky(x, slope):
    return jnp.where(x >= 0, x, slope * x)


# ----------------------------------------------------------------------------
# Pallas kernels
# ----------------------------------------------------------------------------
def _branch_body(patches, shift_ref, valid_ref, p):
    """One full branch (conv1 -> conv2 -> SAM -> SGraph -> DGraph) for one sample.

    patches: (Cin*9, S1) bf16 value.  Returns (F, N) float32.
    """
    # ---- conv1 (3x3 valid) as a single matmul on pre-im2col'd patches.
    #      BN1 scale folded into w1/b1; leaky_relu(0.01); BN1 shift added after.
    z1 = jnp.dot(p['w1'][...], patches,
                 preferred_element_type=jnp.float32) + p['b1'][...]          # (32, S1)
    y1 = (_leaky(z1, 0.01) + p['s1'][...]).astype(jnp.bfloat16)

    # ---- conv2 (3x3 valid) with im2col fused in-kernel: each tap's spatial shift is
    #      applied with an exact 0/1 shift matrix on the MXU (columns past the valid
    #      window become junk and are masked out before SAM).
    c2 = p['w2_taps'].shape[1]
    S1 = y1.shape[1]
    acc2 = jnp.zeros((c2, S1), jnp.float32)
    for t in range(9):
        ys = jnp.dot(y1, shift_ref[t], preferred_element_type=jnp.float32)   # exact shift
        acc2 = acc2 + jnp.dot(p['w2_taps'][t], ys.astype(jnp.bfloat16),
                              preferred_element_type=jnp.float32)
    z2 = acc2 + p['b2'][...]
    x2 = _leaky(z2, 0.01) + p['s2'][...]                                     # (64, S1)

    # ---- SAM: junk conv2 columns are removed from the contraction by valid_ref (0/1).
    x2b = x2.astype(jnp.bfloat16)
    mask = jax.nn.sigmoid(jnp.dot(p['w_sam'][...], x2b,
                                  preferred_element_type=jnp.float32))       # (N, S1)
    xt = (jnp.dot(p['w_ct'][...], x2b, preferred_element_type=jnp.float32)
          + p['b_ct'][...]) * valid_ref[...]                                 # (F, S1)
    x3 = jax.lax.dot_general(xt, mask, (((1,), (1,)), ((), ())),
                             preferred_element_type=jnp.float32)             # (F, N)

    # ---- SGraph(x3) + x3
    t_ = jax.lax.dot_general(p['w_adj'][...], x3, (((1,), (1,)), ((), ())),
                             preferred_element_type=jnp.float32)             # (N, F)
    t_ = _leaky(t_, 0.2)
    z = jax.lax.dot_general(p['w_sw'][...], t_, (((1,), (1,)), ((), ())),
                            preferred_element_type=jnp.float32) + p['b_sw'][...]   # (F, N)
    x4 = _leaky(z, 0.2) + x3

    # ---- DGraph(x4) + x4
    energy = jax.lax.dot_general(x4, x4, (((1,), (1,)), ((), ())),
                                 preferred_element_type=jnp.float32)         # (F, F)
    energy_new = jnp.max(energy, axis=-1, keepdims=True) - energy
    e = energy_new - jnp.max(energy_new, axis=-1, keepdims=True)
    pexp = jnp.exp(e)
    attention = pexp * pl.reciprocal(jnp.sum(pexp, axis=-1, keepdims=True), approx=True)
    out = jnp.dot(attention, x4, preferred_element_type=jnp.float32)         # (F, N)
    x_glb = p['gamma'][0, 0] * out + x4
    adj = jax.nn.sigmoid(
        jnp.dot(p['w_cc1'][...], x_glb, preferred_element_type=jnp.float32)
        + jnp.dot(p['w_cc2'][...], x4, preferred_element_type=jnp.float32)
        + p['b_cc'][...])                                                    # (N, N)
    y = jnp.dot(x4, adj, preferred_element_type=jnp.float32)                 # (F, N)
    y = _leaky(y, 0.2)
    y = jnp.dot(p['w_dw'][...], y, preferred_element_type=jnp.float32) + p['b_dw'][...]
    y = _leaky(y, 0.2)
    return y + x4


def _branches_kernel(*refs):
    """Both branches for one batch element; output (1, 2, F, N)."""
    p1_ref, p2_ref, shift_ref, valid_ref = refs[0], refs[1], refs[2], refs[3]
    bp1 = dict(zip(_BRANCH_KEYS, refs[4:4 + _NB]))
    bp2 = dict(zip(_BRANCH_KEYS, refs[4 + _NB:4 + 2 * _NB]))
    o_ref = refs[4 + 2 * _NB]
    o_ref[0, 0] = _branch_body(p1_ref[0], shift_ref, valid_ref, bp1)
    o_ref[0, 1] = _branch_body(p2_ref[0], shift_ref, valid_ref, bp2)


def _head_kernel(x_ref, w1_ref, b1_ref, s1_ref, w2_ref, b2_ref, s2_ref,
                 w3_ref, b3_ref, o_ref):
    """Fused FC head: leaky(fc1)+bn -> leaky(fc2)+bn -> fc3 (BN scale pre-folded)."""
    h = jnp.dot(x_ref[...], w1_ref[...], preferred_element_type=jnp.float32) + b1_ref[...]
    h = (_leaky(h, 0.01) + s1_ref[...]).astype(jnp.bfloat16)
    h = jnp.dot(h, w2_ref[...], preferred_element_type=jnp.float32) + b2_ref[...]
    h = (_leaky(h, 0.01) + s2_ref[...]).astype(jnp.bfloat16)
    o_ref[...] = jnp.dot(h, w3_ref[...], preferred_element_type=jnp.float32) + b3_ref[...]


# ----------------------------------------------------------------------------
# pallas_call wrappers
# ----------------------------------------------------------------------------
def _full_spec(a):
    nd = a.ndim
    return pl.BlockSpec(a.shape, lambda *idx, _nd=nd: (0,) * _nd)


def _im2col_cf(x):
    """x: (B, C, H, W) -> channel-first patches (B, C*9, Ho*Wo), k index = ci*9+kh*3+kw."""
    B, C, H, W = x.shape
    Ho, Wo = H - 2, W - 2
    cols = []
    for kh in range(3):
        for kw in range(3):
            cols.append(x[:, :, kh:kh + Ho, kw:kw + Wo].reshape(B, C, Ho * Wo))
    p = jnp.stack(cols, axis=2)                       # (B, C, 9, Ho*Wo)
    return p.reshape(B, C * 9, Ho * Wo)


def _conv_aux(H, W):
    """Static helpers for the in-kernel conv2: 9 exact 0/1 shift matrices + valid mask."""
    Ho1, Wo1 = H - 2, W - 2
    Ho2, Wo2 = H - 4, W - 4
    S1 = Ho1 * Wo1
    idx = np.arange(S1)
    mats = np.zeros((9, S1, S1), np.float32)
    for t, (kh, kw) in enumerate([(a, b) for a in range(3) for b in range(3)]):
        s = kh * Wo1 + kw
        src = idx + s
        ok = src < S1
        mats[t, src[ok], idx[ok]] = 1.0               # (y1 @ S_t)[:, j] == y1[:, j+s]
    valid = ((idx % Wo1 < Wo2) & (idx // Wo1 < Ho2)).astype(np.float32).reshape(1, S1)
    return jnp.asarray(mats, dtype=jnp.bfloat16), jnp.asarray(valid, dtype=jnp.float32)


def branches_call(x1, x2, bp1, bp2):
    B, C1, H, W = x1.shape
    C2 = x2.shape[1]
    S1 = (H - 2) * (W - 2)
    feat = bp1['w_ct'].shape[0]
    num_node = bp1['w_sam'].shape[0]

    shift_mats, valid_mask = _conv_aux(H, W)
    patches1 = _im2col_cf(x1).astype(jnp.bfloat16)    # (B, C1*9, S1)
    patches2 = _im2col_cf(x2).astype(jnp.bfloat16)    # (B, C2*9, S1)

    ops = [shift_mats, valid_mask]
    ops += [bp1[k] for k in _BRANCH_KEYS]
    ops += [bp2[k] for k in _BRANCH_KEYS]

    in_specs = [pl.BlockSpec((1, C1 * 9, S1), lambda b: (b, 0, 0)),
                pl.BlockSpec((1, C2 * 9, S1), lambda b: (b, 0, 0))]
    in_specs += [_full_spec(a) for a in ops]

    return pl.pallas_call(
        _branches_kernel,
        out_shape=jax.ShapeDtypeStruct((B, 2, feat, num_node), jnp.float32),
        grid=(B,),
        in_specs=in_specs,
        out_specs=pl.BlockSpec((1, 2, feat, num_node), lambda b: (b, 0, 0, 0)),
        compiler_params=pltpu.CompilerParams(dimension_semantics=("parallel",)),
    )(patches1, patches2, *ops)


def head_call(joint, hp):
    B = joint.shape[0]
    n_out = hp['w3'].shape[1]
    args = [joint.astype(jnp.bfloat16), hp['w1'], hp['b1'], hp['s1'],
            hp['w2'], hp['b2'], hp['s2'], hp['w3'], hp['b3']]
    return pl.pallas_call(
        _head_kernel,
        out_shape=jax.ShapeDtypeStruct((B, n_out), jnp.float32),
        grid=(1,),
        in_specs=[_full_spec(a) for a in args],
        out_specs=pl.BlockSpec((B, n_out), lambda i: (0, 0)),
        compiler_params=pltpu.CompilerParams(dimension_semantics=("arbitrary",)),
    )(*args)


def shnet_forward(x1, x2, params):
    feats = branches_call(x1, x2, params['branch1'], params['branch2'])   # (B, 2, F, N)
    B = feats.shape[0]
    # Row-major reshape == torch.cat([x1.view(B,-1), x2.view(B,-1)], dim=1).
    joint = feats.reshape(B, -1)
    return head_call(joint, params['head'])


# ----------------------------------------------------------------------------
# Parameters: PyTorch-layout init + folding into kernel-ready layout
# ----------------------------------------------------------------------------
def _bn_init(n):
    return {'weight': jnp.ones((n,), jnp.float32), 'bias': jnp.zeros((n,), jnp.float32),
            'mean': jnp.zeros((n,), jnp.float32), 'var': jnp.ones((n,), jnp.float32)}


def _bn_fold(bn, eps=1e-5):
    # NOTE: folding the BN *scale* through leaky_relu requires scale > 0; this holds for
    # the default running stats (weight=1, var=1). Guard before loading trained stats.
    scale = bn['weight'] / jnp.sqrt(bn['var'] + eps)
    shift = bn['bias'] - bn['mean'] * scale
    return scale, shift


def init_branch(key, in_ch, feature, num_node):
    ks = jax.random.split(key, 12)
    w = lambda k, s: 0.05 * jax.random.normal(k, s, jnp.float32)
    return {
        'conv1_w': w(ks[0], (32, in_ch, 3, 3)), 'conv1_b': w(ks[1], (32,)), 'bn1': _bn_init(32),
        'conv2_w': w(ks[2], (64, 32, 3, 3)), 'conv2_b': w(ks[3], (64,)), 'bn2': _bn_init(64),
        'fc_sam_w': w(ks[4], (num_node, 64)),                  # Conv2d(64, num_node, 1, bias=False)
        'ct_w': w(ks[5], (feature, 64)), 'ct_b': w(ks[6], (feature,)),
        'sg_adj_w': w(ks[7], (num_node, num_node)),
        'sg_w_w': w(ks[8], (feature, feature)), 'sg_w_b': w(ks[9], (feature,)),
        'gamma': jnp.zeros((1,), jnp.float32),
        'cc_w': w(ks[10], (num_node, 2 * feature)), 'cc_b': jnp.zeros((num_node,), jnp.float32),
        'dw_w': w(ks[11], (feature, feature)), 'dw_b': jnp.zeros((feature,), jnp.float32),
    }


def init_shnet(key, l1, l2, num_classes, feature, factors):
    num_node = num_classes * factors
    flat = feature * num_node * 2
    k1, k2, k3, k4, k5, k6, k7, k8 = jax.random.split(key, 8)
    w = lambda k, s: 0.05 * jax.random.normal(k, s, jnp.float32)
    return {
        'branch1': init_branch(k1, l1, feature, num_node),
        'branch2': init_branch(k2, l2, feature, num_node),
        'fc1_w': w(k3, (1024, flat)), 'fc1_b': w(k4, (1024,)), 'bnf1': _bn_init(1024),
        'fc2_w': w(k5, (256, 1024)), 'fc2_b': w(k6, (256,)), 'bnf2': _bn_init(256),
        'fc3_w': w(k7, (num_classes, 256)), 'fc3_b': w(k8, (num_classes,)),
    }


def prepare_branch(rb):
    sc1, sh1 = _bn_fold(rb['bn1'])
    sc2, sh2 = _bn_fold(rb['bn2'])
    feat = rb['ct_w'].shape[0]
    w1 = (rb['conv1_w'] * sc1[:, None, None, None]).reshape(rb['conv1_w'].shape[0], -1)
    w2 = rb['conv2_w'] * sc2[:, None, None, None]                   # (64, 32, 3, 3)
    w2_taps = jnp.transpose(w2, (2, 3, 0, 1)).reshape(9, w2.shape[0], w2.shape[1])
    return {
        'w1': w1.astype(jnp.bfloat16),                              # (32, Cin*9), BN folded
        'b1': (rb['conv1_b'] * sc1).reshape(-1, 1), 's1': sh1.reshape(-1, 1),
        'w2_taps': w2_taps.astype(jnp.bfloat16),                    # (9, 64, 32), BN folded
        'b2': (rb['conv2_b'] * sc2).reshape(-1, 1), 's2': sh2.reshape(-1, 1),
        'w_sam': rb['fc_sam_w'].astype(jnp.bfloat16),
        'w_ct': rb['ct_w'].astype(jnp.bfloat16),
        'b_ct': rb['ct_b'].reshape(-1, 1),
        'w_adj': rb['sg_adj_w'],
        'w_sw': rb['sg_w_w'], 'b_sw': rb['sg_w_b'].reshape(-1, 1),
        'gamma': rb['gamma'].reshape(1, 1),
        'w_cc1': rb['cc_w'][:, :feat], 'w_cc2': rb['cc_w'][:, feat:],
        'b_cc': rb['cc_b'].reshape(-1, 1),
        'w_dw': rb['dw_w'], 'b_dw': rb['dw_b'].reshape(-1, 1),
    }


def prepare_head(rp):
    sc1, sh1 = _bn_fold(rp['bnf1'])
    sc2, sh2 = _bn_fold(rp['bnf2'])
    return {
        'w1': (rp['fc1_w'] * sc1[:, None]).T.astype(jnp.bfloat16),  # (in, 1024), BN folded
        'b1': (rp['fc1_b'] * sc1).reshape(1, -1), 's1': sh1.reshape(1, -1),
        'w2': (rp['fc2_w'] * sc2[:, None]).T.astype(jnp.bfloat16),  # (1024, 256), BN folded
        'b2': (rp['fc2_b'] * sc2).reshape(1, -1), 's2': sh2.reshape(1, -1),
        'w3': rp['fc3_w'].T.astype(jnp.bfloat16),                   # (256, num_classes)
        'b3': rp['fc3_b'].reshape(1, -1),
    }


def prepare_params(raw):
    return {'branch1': prepare_branch(raw['branch1']),
            'branch2': prepare_branch(raw['branch2']),
            'head': prepare_head(raw)}


# ----------------------------------------------------------------------------
if __name__ == "__main__":
    # Two 3x3 valid convs need H, W >= 5; num_node = num_classes * factors.
    B, L1, L2, H, W = 2, 4, 6, 11, 11
    NUM_CLASSES, FEATURE, FACTORS = 4, 32, 2

    key = jax.random.PRNGKey(0)
    kx1, kx2, kp = jax.random.split(key, 3)
    x1 = jax.random.normal(kx1, (B, L1, H, W), jnp.float32)
    x2 = jax.random.normal(kx2, (B, L2, H, W), jnp.float32)

    raw = init_shnet(kp, L1, L2, NUM_CLASSES, FEATURE, FACTORS)
    params = prepare_params(raw)

    # TODO(synk): DropBlock2D / LinearScheduler / Dropout are training-only stochastic
    # ops -> identity in this inference-mode forward pass.
    fwd = jax.jit(lambda a, b: shnet_forward(a, b, params))
    out = jax.block_until_ready(fwd(x1, x2))

    assert out.shape == (B, NUM_CLASSES), out.shape
    assert bool(jnp.all(jnp.isfinite(out)))
    print("KERNEL_OK")
</pallas_src>

<mosaic_0001>
module attributes {stable_mosaic.version = 11 : i64} {
  func.func @_head_kernel(%arg0: i32, %arg1: memref<2x512xbf16, #tpu.memory_space<vmem>>, %arg2: memref<512x1024xbf16, #tpu.memory_space<vmem>>, %arg3: memref<1x1024xf32, #tpu.memory_space<vmem>>, %arg4: memref<1x1024xf32, #tpu.memory_space<vmem>>, %arg5: memref<1024x256xbf16, #tpu.memory_space<vmem>>, %arg6: memref<1x256xf32, #tpu.memory_space<vmem>>, %arg7: memref<1x256xf32, #tpu.memory_space<vmem>>, %arg8: memref<256x4xbf16, #tpu.memory_space<vmem>>, %arg9: memref<1x4xf32, #tpu.memory_space<vmem>>, %arg10: memref<2x4xf32, #tpu.memory_space<vmem>>) attributes {dimension_semantics = [#tpu.dimension_semantics<arbitrary>], iteration_bounds = array<i64: 1>, scalar_prefetch = 0 : i64, scratch_operands = 0 : i64, tpu.core_type = #tpu.core_type<tc>, window_params = [{pipeline_mode = #tpu.pipeline_mode<synchronous>, transform_indices = @transform_0, window_bounds = array<i64: 2, 512>}, {pipeline_mode = #tpu.pipeline_mode<synchronous>, transform_indices = @transform_1, window_bounds = array<i64: 512, 1024>}, {pipeline_mode = #tpu.pipeline_mode<synchronous>, transform_indices = @transform_2, window_bounds = array<i64: 1, 1024>}, {pipeline_mode = #tpu.pipeline_mode<synchronous>, transform_indices = @transform_3, window_bounds = array<i64: 1, 1024>}, {pipeline_mode = #tpu.pipeline_mode<synchronous>, transform_indices = @transform_4, window_bounds = array<i64: 1024, 256>}, {pipeline_mode = #tpu.pipeline_mode<synchronous>, transform_indices = @transform_5, window_bounds = array<i64: 1, 256>}, {pipeline_mode = #tpu.pipeline_mode<synchronous>, transform_indices = @transform_6, window_bounds = array<i64: 1, 256>}, {pipeline_mode = #tpu.pipeline_mode<synchronous>, transform_indices = @transform_7, window_bounds = array<i64: 256, 4>}, {pipeline_mode = #tpu.pipeline_mode<synchronous>, transform_indices = @transform_8, window_bounds = array<i64: 1, 4>}, {pipeline_mode = #tpu.pipeline_mode<synchronous>, transform_indices = @transform_9, window_bounds = array<i64: 2, 4>}]} {
    %c0 = arith.constant 0 : index
    %c0_0 = arith.constant 0 : index
    %0 = vector.load %arg1[%c0, %c0_0] : memref<2x512xbf16, #tpu.memory_space<vmem>>, vector<2x512xbf16>
    %c0_1 = arith.constant 0 : index
    %c0_2 = arith.constant 0 : index
    %1 = vector.load %arg2[%c0_1, %c0_2] : memref<512x1024xbf16, #tpu.memory_space<vmem>>, vector<512x1024xbf16>
    %cst = arith.constant dense<0.000000e+00> : vector<2x1024xf32>
    %2 = tpu.matmul %0, %1, %cst {dimension_numbers = #tpu.dot_dimension_numbers<[1], [0], [0], [1], [0, 0, 1, 1], [], []>} : vector<2x512xbf16>, vector<512x1024xbf16>, vector<2x1024xf32> -> vector<2x1024xf32>
    %c0_3 = arith.constant 0 : index
    %c0_4 = arith.constant 0 : index
    %3 = vector.load %arg3[%c0_3, %c0_4] : memref<1x1024xf32, #tpu.memory_space<vmem>>, vector<1x1024xf32>
    %4 = vector.broadcast %3 : vector<1x1024xf32> to vector<2x1024xf32>
    %5 = arith.addf %2, %4 : vector<2x1024xf32>
    %cst_5 = arith.constant 0.000000e+00 : f32
    %6 = vector.broadcast %cst_5 : f32 to vector<2x1024xf32>
    %7 = arith.cmpf oge, %5, %6 : vector<2x1024xf32>
    %cst_6 = arith.constant 0.00999999977 : f32
    %8 = vector.broadcast %cst_6 : f32 to vector<2x1024xf32>
    %9 = arith.mulf %8, %5 : vector<2x1024xf32>
    %10 = arith.select %7, %5, %9 : vector<2x1024xi1>, vector<2x1024xf32>
    %c0_7 = arith.constant 0 : index
    %c0_8 = arith.constant 0 : index
    %11 = vector.load %arg4[%c0_7, %c0_8] : memref<1x1024xf32, #tpu.memory_space<vmem>>, vector<1x1024xf32>
    %12 = vector.broadcast %11 : vector<1x1024xf32> to vector<2x1024xf32>
    %13 = arith.addf %10, %12 : vector<2x1024xf32>
    %14 = arith.truncf %13 : vector<2x1024xf32> to vector<2x1024xbf16>
    %c0_9 = arith.constant 0 : index
    %c0_10 = arith.constant 0 : index
    %15 = vector.load %arg5[%c0_9, %c0_10] : memref<1024x256xbf16, #tpu.memory_space<vmem>>, vector<1024x256xbf16>
    %cst_11 = arith.constant dense<0.000000e+00> : vector<2x256xf32>
    %16 = tpu.matmul %14, %15, %cst_11 {dimension_numbers = #tpu.dot_dimension_numbers<[1], [0], [0], [1], [0, 0, 1, 1], [], []>} : vector<2x1024xbf16>, vector<1024x256xbf16>, vector<2x256xf32> -> vector<2x256xf32>
    %c0_12 = arith.constant 0 : index
    %c0_13 = arith.constant 0 : index
    %17 = vector.load %arg6[%c0_12, %c0_13] : memref<1x256xf32, #tpu.memory_space<vmem>>, vector<1x256xf32>
    %18 = vector.broadcast %17 : vector<1x256xf32> to vector<2x256xf32>
    %19 = arith.addf %16, %18 : vector<2x256xf32>
    %cst_14 = arith.constant 0.000000e+00 : f32
    %20 = vector.broadcast %cst_14 : f32 to vector<2x256xf32>
    %21 = arith.cmpf oge, %19, %20 : vector<2x256xf32>
    %cst_15 = arith.constant 0.00999999977 : f32
    %22 = vector.broadcast %cst_15 : f32 to vector<2x256xf32>
    %23 = arith.mulf %22, %19 : vector<2x256xf32>
    %24 = arith.select %21, %19, %23 : vector<2x256xi1>, vector<2x256xf32>
    %c0_16 = arith.constant 0 : index
    %c0_17 = arith.constant 0 : index
    %25 = vector.load %arg7[%c0_16, %c0_17] : memref<1x256xf32, #tpu.memory_space<vmem>>, vector<1x256xf32>
    %26 = vector.broadcast %25 : vector<1x256xf32> to vector<2x256xf32>
    %27 = arith.addf %24, %26 : vector<2x256xf32>
    %28 = arith.truncf %27 : vector<2x256xf32> to vector<2x256xbf16>
    %c0_18 = arith.constant 0 : index
    %c0_19 = arith.constant 0 : index
    %29 = vector.load %arg8[%c0_18, %c0_19] : memref<256x4xbf16, #tpu.memory_space<vmem>>, vector<256x4xbf16>
    %cst_20 = arith.constant dense<0.000000e+00> : vector<2x4xf32>
    %30 = tpu.matmul %28, %29, %cst_20 {dimension_numbers = #tpu.dot_dimension_numbers<[1], [0], [0], [1], [0, 0, 1, 1], [], []>} : vector<2x256xbf16>, vector<256x4xbf16>, vector<2x4xf32> -> vector<2x4xf32>
    %c0_21 = arith.constant 0 : index
    %c0_22 = arith.constant 0 : index
    %31 = vector.load %arg9[%c0_21, %c0_22] : memref<1x4xf32, #tpu.memory_space<vmem>>, vector<1x4xf32>
    %32 = vector.broadcast %31 : vector<1x4xf32> to vector<2x4xf32>
    %33 = arith.addf %30, %32 : vector<2x4xf32>
    %c0_23 = arith.constant 0 : index
    %c0_24 = arith.constant 0 : index
    %34 = vector.load %arg10[%c0_23, %c0_24] : memref<2x4xf32, #tpu.memory_space<vmem>>, vector<2x4xf32>
    tpu.vector_store %arg10[%c0_23, %c0_24], %33 {strides = array<i32>} : memref<2x4xf32, #tpu.memory_space<vmem>>, vector<2x4xf32>,
    return
  }
  func.func @transform_0(%arg0: i32) -> (i32, i32) {
    %c0_i32 = arith.constant 0 : i32
    %c0_i32_0 = arith.constant 0 : i32
    %c0_i32_1 = arith.constant 0 : i32
    return %c0_i32, %c0_i32_0 : i32, i32
  }
  func.func @transform_1(%arg0: i32) -> (i32, i32) {
    %c0_i32 = arith.constant 0 : i32
    %c0_i32_0 = arith.constant 0 : i32
    %c0_i32_1 = arith.constant 0 : i32
    return %c0_i32, %c0_i32_0 : i32, i32
  }
  func.func @transform_2(%arg0: i32) -> (i32, i32) {
    %c0_i32 = arith.constant 0 : i32
    %c0_i32_0 = arith.constant 0 : i32
    %c0_i32_1 = arith.constant 0 : i32
    return %c0_i32, %c0_i32_0 : i32, i32
  }
  func.func @transform_3(%arg0: i32) -> (i32, i32) {
    %c0_i32 = arith.constant 0 : i32
    %c0_i32_0 = arith.constant 0 : i32
    %c0_i32_1 = arith.constant 0 : i32
    return %c0_i32, %c0_i32_0 : i32, i32
  }
  func.func @transform_4(%arg0: i32) -> (i32, i32) {
    %c0_i32 = arith.constant 0 : i32
    %c0_i32_0 = arith.constant 0 : i32
    %c0_i32_1 = arith.constant 0 : i32
    return %c0_i32, %c0_i32_0 : i32, i32
  }
  func.func @transform_5(%arg0: i32) -> (i32, i32) {
    %c0_i32 = arith.constant 0 : i32
    %c0_i32_0 = arith.constant 0 : i32
    %c0_i32_1 = arith.constant 0 : i32
    return %c0_i32, %c0_i32_0 : i32, i32
  }
  func.func @transform_6(%arg0: i32) -> (i32, i32) {
    %c0_i32 = arith.constant 0 : i32
    %c0_i32_0 = arith.constant 0 : i32
    %c0_i32_1 = arith.constant 0 : i32
    return %c0_i32, %c0_i32_0 : i32, i32
  }
  func.func @transform_7(%arg0: i32) -> (i32, i32) {
    %c0_i32 = arith.constant 0 : i32
    %c0_i32_0 = arith.constant 0 : i32
    %c0_i32_1 = arith.constant 0 : i32
    return %c0_i32, %c0_i32_0 : i32, i32
  }
  func.func @transform_8(%arg0: i32) -> (i32, i32) {
    %c0_i32 = arith.constant 0 : i32
    %c0_i32_0 = arith.constant 0 : i32
    %c0_i32_1 = arith.constant 0 : i32
    return %c0_i32, %c0_i32_0 : i32, i32
  }
  func.func @transform_9(%arg0: i32) -> (i32, i32) {
    %c0_i32 = arith.constant 0 : i32
    %c0_i32_0 = arith.constant 0 : i32
    %c0_i32_1 = arith.constant 0 : i32
    return %c0_i32, %c0_i32_0 : i32, i32
  }
}

module attributes {stable_mosaic.version = 11 : i64} {
  func.func @_branches_kernel(%arg0: i32, %arg1: memref<1x36x81xbf16, #tpu.memory_space<vmem>>, %arg2: memref<1x54x81xbf16, #tpu.memory_space<vmem>>, %arg3: memref<9x81x81xbf16, #tpu.memory_space<vmem>>, %arg4: memref<1x81xf32, #tpu.memory_space<vmem>>, %arg5: memref<32x36xbf16, #tpu.memory_space<vmem>>, %arg6: memref<32x1xf32, #tpu.memory_space<vmem>>, %arg7: memref<32x1xf32, #tpu.memory_space<vmem>>, %arg8: memref<9x64x32xbf16, #tpu.memory_space<vmem>>, %arg9: memref<64x1xf32, #tpu.memory_space<vmem>>, %arg10: memref<64x1xf32, #tpu.memory_space<vmem>>, %arg11: memref<8x64xbf16, #tpu.memory_space<vmem>>, %arg12: memref<32x64xbf16, #tpu.memory_space<vmem>>, %arg13: memref<32x1xf32, #tpu.memory_space<vmem>>, %arg14: memref<8x8xf32, #tpu.memory_space<vmem>>, %arg15: memref<32x32xf32, #tpu.memory_space<vmem>>, %arg16: memref<32x1xf32, #tpu.memory_space<vmem>>, %arg17: memref<1x1xf32, #tpu.memory_space<vmem>>, %arg18: memref<8x32xf32, #tpu.memory_space<vmem>>, %arg19: memref<8x32xf32, #tpu.memory_space<vmem>>, %arg20: memref<8x1xf32, #tpu.memory_space<vmem>>, %arg21: memref<32x32xf32, #tpu.memory_space<vmem>>, %arg22: memref<32x1xf32, #tpu.memory_space<vmem>>, %arg23: memref<32x54xbf16, #tpu.memory_space<vmem>>, %arg24: memref<32x1xf32, #tpu.memory_space<vmem>>, %arg25: memref<32x1xf32, #tpu.memory_space<vmem>>, %arg26: memref<9x64x32xbf16, #tpu.memory_space<vmem>>, %arg27: memref<64x1xf32, #tpu.memory_space<vmem>>, %arg28: memref<64x1xf32, #tpu.memory_space<vmem>>, %arg29: memref<8x64xbf16, #tpu.memory_space<vmem>>, %arg30: memref<32x64xbf16, #tpu.memory_space<vmem>>, %arg31: memref<32x1xf32, #tpu.memory_space<vmem>>, %arg32: memref<8x8xf32, #tpu.memory_space<vmem>>, %arg33: memref<32x32xf32, #tpu.memory_space<vmem>>, %arg34: memref<32x1xf32, #tpu.memory_space<vmem>>, %arg35: memref<1x1xf32, #tpu.memory_space<vmem>>, %arg36: memref<8x32xf32, #tpu.memory_space<vmem>>, %arg37: memref<8x32xf32, #tpu.memory_space<vmem>>, %arg38: memref<8x1xf32, #tpu.memory_space<vmem>>, %arg39: memref<32x32xf32, #tpu.memory_space<vmem>>, %arg40: memref<32x1xf32, #tpu.memory_space<vmem>>, %arg41: memref<1x2x32x8xf32, #tpu.memory_space<vmem>>) attributes {dimension_semantics = [#tpu.dimension_semantics<parallel>], iteration_bounds = array<i64: 2>, scalar_prefetch = 0 : i64, scratch_operands = 0 : i64, tpu.core_type = #tpu.core_type<tc>, window_params = [{transform_indices = @transform_0, window_bounds = array<i64: 1, 36, 81>}, {transform_indices = @transform_1, window_bounds = array<i64: 1, 54, 81>}, {pipeline_mode = #tpu.pipeline_mode<synchronous>, transform_indices = @transform_2, window_bounds = array<i64: 9, 81, 81>}, {pipeline_mode = #tpu.pipeline_mode<synchronous>, transform_indices = @transform_3, window_bounds = array<i64: 1, 81>}, {pipeline_mode = #tpu.pipeline_mode<synchronous>, transform_indices = @transform_4, window_bounds = array<i64: 32, 36>}, {pipeline_mode = #tpu.pipeline_mode<synchronous>, transform_indices = @transform_5, window_bounds = array<i64: 32, 1>}, {pipeline_mode = #tpu.pipeline_mode<synchronous>, transform_indices = @transform_6, window_bounds = array<i64: 32, 1>}, {pipeline_mode = #tpu.pipeline_mode<synchronous>, transform_indices = @transform_7, window_bounds = array<i64: 9, 64, 32>}, {pipeline_mode = #tpu.pipeline_mode<synchronous>, transform_indices = @transform_8, window_bounds = array<i64: 64, 1>}, {pipeline_mode = #tpu.pipeline_mode<synchronous>, transform_indices = @transform_9, window_bounds = array<i64: 64, 1>}, {pipeline_mode = #tpu.pipeline_mode<synchronous>, transform_indices = @transform_10, window_bounds = array<i64: 8, 64>}, {pipeline_mode = #tpu.pipeline_mode<synchronous>, transform_indices = @transform_11, window_bounds = array<i64: 32, 64>}, {pipeline_mode = #tpu.pipeline_mode<synchronous>, transform_indices = @transform_12, window_bounds = array<i64: 32, 1>}, {pipeline_mode = #tpu.pipeline_mode<synchronous>, transform_indices = @transform_13, window_bounds = array<i64: 8, 8>}, {pipeline_mode = #tpu.pipeline_mode<synchronous>, transform_indices = @transform_14, window_bounds = array<i64: 32, 32>}, {pipeline_mode = #tpu.pipeline_mode<synchronous>, transform_indices = @transform_15, window_bounds = array<i64: 32, 1>}, {pipeline_mode = #tpu.pipeline_mode<synchronous>, transform_indices = @transform_16, window_bounds = array<i64: 1, 1>}, {pipeline_mode = #tpu.pipeline_mode<synchronous>, transform_indices = @transform_17, window_bounds = array<i64: 8, 32>}, {pipeline_mode = #tpu.pipeline_mode<synchronous>, transform_indices = @transform_18, window_bounds = array<i64: 8, 32>}, {pipeline_mode = #tpu.pipeline_mode<synchronous>, transform_indices = @transform_19, window_bounds = array<i64: 8, 1>}, {pipeline_mode = #tpu.pipeline_mode<synchronous>, transform_indices = @transform_20, window_bounds = array<i64: 32, 32>}, {pipeline_mode = #tpu.pipeline_mode<synchronous>, transform_indices = @transform_21, window_bounds = array<i64: 32, 1>}, {pipeline_mode = #tpu.pipeline_mode<synchronous>, transform_indices = @transform_22, window_bounds = array<i64: 32, 54>}, {pipeline_mode = #tpu.pipeline_mode<synchronous>, transform_indices = @transform_23, window_bounds = array<i64: 32, 1>}, {pipeline_mode = #tpu.pipeline_mode<synchronous>, transform_indices = @transform_24, window_bounds = array<i64: 32, 1>}, {pipeline_mode = #tpu.pipeline_mode<synchronous>, transform_indices = @transform_25, window_bounds = array<i64: 9, 64, 32>}, {pipeline_mode = #tpu.pipeline_mode<synchronous>, transform_indices = @transform_26, window_bounds = array<i64: 64, 1>}, {pipeline_mode = #tpu.pipeline_mode<synchronous>, transform_indices = @transform_27, window_bounds = array<i64: 64, 1>}, {pipeline_mode = #tpu.pipeline_mode<synchronous>, transform_indices = @transform_28, window_bounds = array<i64: 8, 64>}, {pipeline_mode = #tpu.pipeline_mode<synchronous>, transform_indices = @transform_29, window_bounds = array<i64: 32, 64>}, {pipeline_mode = #tpu.pipeline_mode<synchronous>, transform_indices = @transform_30, window_bounds = array<i64: 32, 1>}, {pipeline_mode = #tpu.pipeline_mode<synchronous>, transform_indices = @transform_31, window_bounds = array<i64: 8, 8>}, {pipeline_mode = #tpu.pipeline_mode<synchronous>, transform_indices = @transform_32, window_bounds = array<i64: 32, 32>}, {pipeline_mode = #tpu.pipeline_mode<synchronous>, transform_indices = @transform_33, window_bounds = array<i64: 32, 1>}, {pipeline_mode = #tpu.pipeline_mode<synchronous>, transform_indices = @transform_34, window_bounds = array<i64: 1, 1>}, {pipeline_mode = #tpu.pipeline_mode<synchronous>, transform_indices = @transform_35, window_bounds = array<i64: 8, 32>}, {pipeline_mode = #tpu.pipeline_mode<synchronous>, transform_indices = @transform_36, window_bounds = array<i64: 8, 32>}, {pipeline_mode = #tpu.pipeline_mode<synchronous>, transform_indices = @transform_37, window_bounds = array<i64: 8, 1>}, {pipeline_mode = #tpu.pipeline_mode<synchronous>, transform_indices = @transform_38, window_bounds = array<i64: 32, 32>}, {pipeline_mode = #tpu.pipeline_mode<synchronous>, transform_indices = @transform_39, window_bounds = array<i64: 32, 1>}, {transform_indices = @transform_40, window_bounds = array<i64: 1, 2, 32, 8>}]} {
    %c0 = arith.constant 0 : index
    %c0_0 = arith.constant 0 : index
    %c0_1 = arith.constant 0 : index
    %0 = vector.load %arg1[%c0, %c0_0, %c0_1] : memref<1x36x81xbf16, #tpu.memory_space<vmem>>, vector<1x36x81xbf16>
    %1 = vector.shape_cast %0 : vector<1x36x81xbf16> to vector<36x81xbf16>
    %c0_2 = arith.constant 0 : index
    %c0_3 = arith.constant 0 : index
    %2 = vector.load %arg5[%c0_2, %c0_3] : memref<32x36xbf16, #tpu.memory_space<vmem>>, vector<32x36xbf16>
    %cst = arith.constant dense<0.000000e+00> : vector<32x81xf32>
    %3 = tpu.matmul %2, %1, %cst {dimension_numbers = #tpu.dot_dimension_numbers<[1], [0], [0], [1], [0, 0, 1, 1], [], []>} : vector<32x36xbf16>, vector<36x81xbf16>, vector<32x81xf32> -> vector<32x81xf32>
    %c0_4 = arith.constant 0 : index
    %c0_5 = arith.constant 0 : index
    %4 = vector.load %arg6[%c0_4, %c0_5] : memref<32x1xf32, #tpu.memory_space<vmem>>, vector<32x1xf32>
    %5 = vector.broadcast %4 : vector<32x1xf32> to vector<32x81xf32>
    %6 = arith.addf %3, %5 : vector<32x81xf32>
    %cst_6 = arith.constant 0.000000e+00 : f32
    %7 = vector.broadcast %cst_6 : f32 to vector<32x81xf32>
    %8 = arith.cmpf oge, %6, %7 : vector<32x81xf32>
    %cst_7 = arith.constant 0.00999999977 : f32
    %9 = vector.broadcast %cst_7 : f32 to vector<32x81xf32>
    %10 = arith.mulf %9, %6 : vector<32x81xf32>
    %11 = arith.select %8, %6, %10 : vector<32x81xi1>, vector<32x81xf32>
    %c0_8 = arith.constant 0 : index
    %c0_9 = arith.constant 0 : index
    %12 = vector.load %arg7[%c0_8, %c0_9] : memref<32x1xf32, #tpu.memory_space<vmem>>, vector<32x1xf32>
    %13 = vector.broadcast %12 : vector<32x1xf32> to vector<32x81xf32>
    %14 = arith.addf %11, %13 : vector<32x81xf32>
    %15 = arith.truncf %14 : vector<32x81xf32> to vector<32x81xbf16>
    %cst_10 = arith.constant 0.000000e+00 : f32
    %16 = vector.broadcast %cst_10 : f32 to vector<64x81xf32>
    %c0_11 = arith.constant 0 : index
    %c0_12 = arith.constant 0 : index
    %c0_13 = arith.constant 0 : index
    %17 = vector.load %arg3[%c0_11, %c0_12, %c0_13] : memref<9x81x81xbf16, #tpu.memory_space<vmem>>, vector<1x81x81xbf16>
    %18 = vector.shape_cast %17 : vector<1x81x81xbf16> to vector<81x81xbf16>
    %cst_14 = arith.constant dense<0.000000e+00> : vector<32x81xf32>
    %19 = tpu.matmul %15, %18, %cst_14 {dimension_numbers = #tpu.dot_dimension_numbers<[1], [0], [0], [1], [0, 0, 1, 1], [], []>} : vector<32x81xbf16>, vector<81x81xbf16>, vector<32x81xf32> -> vector<32x81xf32>
    %c0_15 = arith.constant 0 : index
    %c0_16 = arith.constant 0 : index
    %c0_17 = arith.constant 0 : index
    %20 = vector.load %arg8[%c0_15, %c0_16, %c0_17] : memref<9x64x32xbf16, #tpu.memory_space<vmem>>, vector<1x64x32xbf16>
    %21 = vector.shape_cast %20 : vector<1x64x32xbf16> to vector<64x32xbf16>
    %22 = arith.truncf %19 : vector<32x81xf32> to vector<32x81xbf16>
    %cst_18 = arith.constant dense<0.000000e+00> : vector<64x81xf32>
    %23 = tpu.matmul %21, %22, %cst_18 {dimension_numbers = #tpu.dot_dimension_numbers<[1], [0], [0], [1], [0, 0, 1, 1], [], []>} : vector<64x32xbf16>, vector<32x81xbf16>, vector<64x81xf32> -> vector<64x81xf32>
    %24 = arith.addf %16, %23 : vector<64x81xf32>
    %c1 = arith.constant 1 : index
    %c0_19 = arith.constant 0 : index
    %c0_20 = arith.constant 0 : index
    %25 = vector.load %arg3[%c1, %c0_19, %c0_20] : memref<9x81x81xbf16, #tpu.memory_space<vmem>>, vector<1x81x81xbf16>
    %26 = vector.shape_cast %25 : vector<1x81x81xbf16> to vector<81x81xbf16>
    %cst_21 = arith.constant dense<0.000000e+00> : vector<32x81xf32>
    %27 = tpu.matmul %15, %26, %cst_21 {dimension_numbers = #tpu.dot_dimension_numbers<[1], [0], [0], [1], [0, 0, 1, 1], [], []>} : vector<32x81xbf16>, vector<81x81xbf16>, vector<32x81xf32> -> vector<32x81xf32>
    %c1_22 = arith.constant 1 : index
    %c0_23 = arith.constant 0 : index
    %c0_24 = arith.constant 0 : index
    %28 = vector.load %arg8[%c1_22, %c0_23, %c0_24] : memref<9x64x32xbf16, #tpu.memory_space<vmem>>, vector<1x64x32xbf16>
    %29 = vector.shape_cast %28 : vector<1x64x32xbf16> to vector<64x32xbf16>
    %30 = arith.truncf %27 : vector<32x81xf32> to vector<32x81xbf16>
    %cst_25 = arith.constant dense<0.000000e+00> : vector<64x81xf32>
    %31 = tpu.matmul %29, %30, %cst_25 {dimension_numbers = #tpu.dot_dimension_numbers<[1], [0], [0], [1], [0, 0, 1, 1], [], []>} : vector<64x32xbf16>, vector<32x81xbf16>, vector<64x81xf32> -> vector<64x81xf32>
    %32 = arith.addf %24, %31 : vector<64x81xf32>
    %c2 = arith.constant 2 : index
    %c0_26 = arith.constant 0 : index
    %c0_27 = arith.constant 0 : index
    %33 = vector.load %arg3[%c2, %c0_26, %c0_27] : memref<9x81x81xbf16, #tpu.memory_space<vmem>>, vector<1x81x81xbf16>
    %34 = vector.shape_cast %33 : vector<1x81x81xbf16> to vector<81x81xbf16>
    %cst_28 = arith.constant dense<0.000000e+00> : vector<32x81xf32>
    %35 = tpu.matmul %15, %34, %cst_28 {dimension_numbers = #tpu.dot_dimension_numbers<[1], [0], [0], [1], [0, 0, 1, 1], [], []>} : vector<32x81xbf16>, vector<81x81xbf16>, vector<32x81xf32> -> vector<32x81xf32>
    %c2_29 = arith.constant 2 : index
    %c0_30 = arith.constant 0 : index
    %c0_31 = arith.constant 0 : index
    %36 = vector.load %arg8[%c2_29, %c0_30, %c0_31] : memref<9x64x32xbf16, #tpu.memory_space<vmem>>, vector<1x64x32xbf16>
    %37 = vector.shape_cast %36 : vector<1x64x32xbf16> to vector<64x32xbf16>
    %38 = arith.truncf %35 : vector<32x81xf32> to vector<32x81xbf16>
    %cst_32 = arith.constant dense<0.000000e+00> : vector<64x81xf32>
    %39 = tpu.matmul %37, %38, %cst_32 {dimension_numbers = #tpu.dot_dimension_numbers<[1], [0], [0], [1], [0, 0, 1, 1], [], []>} : vector<64x32xbf16>, vector<32x81xbf16>, vector<64x81xf32> -> vector<64x81xf32>
    %40 = arith.addf %32, %39 : vector<64x81xf32>
    %c3 = arith.constant 3 : index
    %c0_33 = arith.constant 0 : index
    %c0_34 = arith.constant 0 : index
    %41 = vector.load %arg3[%c3, %c0_33, %c0_34] : memref<9x81x81xbf16, #tpu.memory_space<vmem>>, vector<1x81x81xbf16>
    %42 = vector.shape_cast %41 : vector<1x81x81xbf16> to vector<81x81xbf16>
    %cst_35 = arith.constant dense<0.000000e+00> : vector<32x81xf32>
    %43 = tpu.matmul %15, %42, %cst_35 {dimension_numbers = #tpu.dot_dimension_numbers<[1], [0], [0], [1], [0, 0, 1, 1], [], []>} : vector<32x81xbf16>, vector<81x81xbf16>, vector<32x81xf32> -> vector<32x81xf32>
    %c3_36 = arith.constant 3 : index
    %c0_37 = arith.constant 0 : index
    %c0_38 = arith.constant 0 : index
    %44 = vector.load %arg8[%c3_36, %c0_37, %c0_38] : memref<9x64x32xbf16, #tpu.memory_space<vmem>>, vector<1x64x32xbf16>
    %45 = vector.shape_cast %44 : vector<1x64x32xbf16> to vector<64x32xbf16>
    %46 = arith.truncf %43 : vector<32x81xf32> to vector<32x81xbf16>
    %cst_39 = arith.constant dense<0.000000e+00> : vector<64x81xf32>
    %47 = tpu.matmul %45, %46, %cst_39 {dimension_numbers = #tpu.dot_dimension_numbers<[1], [0], [0], [1], [0, 0, 1, 1], [], []>} : vector<64x32xbf16>, vector<32x81xbf16>, vector<64x81xf32> -> vector<64x81xf32>
    %48 = arith.addf %40, %47 : vector<64x81xf32>
    %c4 = arith.constant 4 : index
    %c0_40 = arith.constant 0 : index
    %c0_41 = arith.constant 0 : index
    %49 = vector.load %arg3[%c4, %c0_40, %c0_41] : memref<9x81x81xbf16, #tpu.memory_space<vmem>>, vector<1x81x81xbf16>
    %50 = vector.shape_cast %49 : vector<1x81x81xbf16> to vector<81x81xbf16>
    %cst_42 = arith.constant dense<0.000000e+00> : vector<32x81xf32>
    %51 = tpu.matmul %15, %50, %cst_42 {dimension_numbers = #tpu.dot_dimension_numbers<[1], [0], [0], [1], [0, 0, 1, 1], [], []>} : vector<32x81xbf16>, vector<81x81xbf16>, vector<32x81xf32> -> vector<32x81xf32>
    %c4_43 = arith.constant 4 : index
    %c0_44 = arith.constant 0 : index
    %c0_45 = arith.constant 0 : index
    %52 = vector.load %arg8[%c4_43, %c0_44, %c0_45] : memref<9x64x32xbf16, #tpu.memory_space<vmem>>, vector<1x64x32xbf16>
    %53 = vector.shape_cast %52 : vector<1x64x32xbf16> to vector<64x32xbf16>
    %54 = arith.truncf %51 : vector<32x81xf32> to vector<32x81xbf16>
    %cst_46 = arith.constant dense<0.000000e+00> : vector<64x81xf32>
    %55 = tpu.matmul %53, %54, %cst_46 {dimension_numbers = #tpu.dot_dimension_numbers<[1], [0], [0], [1], [0, 0, 1, 1], [], []>} : vector<64x32xbf16>, vector<32x81xbf16>, vector<64x81xf32> -> vector<64x81xf32>
    %56 = arith.addf %48, %55 : vector<64x81xf32>
    %c5 = arith.constant 5 : index
    %c0_47 = arith.constant 0 : index
    %c0_48 = arith.constant 0 : index
    %57 = vector.load %arg3[%c5, %c0_47, %c0_48] : memref<9x81x81xbf16, #tpu.memory_space<vmem>>, vector<1x81x81xbf16>
    %58 = vector.shape_cast %57 : vector<1x81x81xbf16> to vector<81x81xbf16>
    %cst_49 = arith.constant dense<0.000000e+00> : vector<32x81xf32>
    %59 = tpu.matmul %15, %58, %cst_49 {dimension_numbers = #tpu.dot_dimension_numbers<[1], [0], [0], [1], [0, 0, 1, 1], [], []>} : vector<32x81xbf16>, vector<81x81xbf16>, vector<32x81xf32> -> vector<32x81xf32>
    %c5_50 = arith.constant 5 : index
    %c0_51 = arith.constant 0 : index
    %c0_52 = arith.constant 0 : index
    %60 = vector.load %arg8[%c5_50, %c0_51, %c0_52] : memref<9x64x32xbf16, #tpu.memory_space<vmem>>, vector<1x64x32xbf16>
    %61 = vector.shape_cast %60 : vector<1x64x32xbf16> to vector<64x32xbf16>
    %62 = arith.truncf %59 : vector<32x81xf32> to vector<32x81xbf16>
    %cst_53 = arith.constant dense<0.000000e+00> : vector<64x81xf32>
    %63 = tpu.matmul %61, %62, %cst_53 {dimension_numbers = #tpu.dot_dimension_numbers<[1], [0], [0], [1], [0, 0, 1, 1], [], []>} : vector<64x32xbf16>, vector<32x81xbf16>, vector<64x81xf32> -> vector<64x81xf32>
    %64 = arith.addf %56, %63 : vector<64x81xf32>
    %c6 = arith.constant 6 : index
    %c0_54 = arith.constant 0 : index
    %c0_55 = arith.constant 0 : index
    %65 = vector.load %arg3[%c6, %c0_54, %c0_55] : memref<9x81x81xbf16, #tpu.memory_space<vmem>>, vector<1x81x81xbf16>
    %66 = vector.shape_cast %65 : vector<1x81x81xbf16> to vector<81x81xbf16>
    %cst_56 = arith.constant dense<0.000000e+00> : vector<32x81xf32>
    %67 = tpu.matmul %15, %66, %cst_56 {dimension_numbers = #tpu.dot_dimension_numbers<[1], [0], [0], [1], [0, 0, 1, 1], [], []>} : vector<32x81xbf16>, vector<81x81xbf16>, vector<32x81xf32> -> vector<32x81xf32>
    %c6_57 = arith.constant 6 : index
    %c0_58 = arith.constant 0 : index
    %c0_59 = arith.constant 0 : index
    %68 = vector.load %arg8[%c6_57, %c0_58, %c0_59] : memref<9x64x32xbf16, #tpu.memory_space<vmem>>, vector<1x64x32xbf16>
    %69 = vector.shape_cast %68 : vector<1x64x32xbf16> to vector<64x32xbf16>
    %70 = arith.truncf %67 : vector<32x81xf32> to vector<32x81xbf16>
    %cst_60 = arith.constant dense<0.000000e+00> : vector<64x81xf32>
    %71 = tpu.matmul %69, %70, %cst_60 {dimension_numbers = #tpu.dot_dimension_numbers<[1], [0], [0], [1], [0, 0, 1, 1], [], []>} : vector<64x32xbf16>, vector<32x81xbf16>, vector<64x81xf32> -> vector<64x81xf32>
    %72 = arith.addf %64, %71 : vector<64x81xf32>
    %c7 = arith.constant 7 : index
    %c0_61 = arith.constant 0 : index
    %c0_62 = arith.constant 0 : index
    %73 = vector.load %arg3[%c7, %c0_61, %c0_62] : memref<9x81x81xbf16, #tpu.memory_space<vmem>>, vector<1x81x81xbf16>
    %74 = vector.shape_cast %73 : vector<1x81x81xbf16> to vector<81x81xbf16>
    %cst_63 = arith.constant dense<0.000000e+00> : vector<32x81xf32>
    %75 = tpu.matmul %15, %74, %cst_63 {dimension_numbers = #tpu.dot_dimension_numbers<[1], [0], [0], [1], [0, 0, 1, 1], [], []>} : vector<32x81xbf16>, vector<81x81xbf16>, vector<32x81xf32> -> vector<32x81xf32>
    %c7_64 = arith.constant 7 : index
    %c0_65 = arith.constant 0 : index
    %c0_66 = arith.constant 0 : index
    %76 = vector.load %arg8[%c7_64, %c0_65, %c0_66] : memref<9x64x32xbf16, #tpu.memory_space<vmem>>, vector<1x64x32xbf16>
    %77 = vector.shape_cast %76 : vector<1x64x32xbf16> to vector<64x32xbf16>
    %78 = arith.truncf %75 : vector<32x81xf32> to vector<32x81xbf16>
    %cst_67 = arith.constant dense<0.000000e+00> : vector<64x81xf32>
    %79 = tpu.matmul %77, %78, %cst_67 {dimension_numbers = #tpu.dot_dimension_numbers<[1], [0], [0], [1], [0, 0, 1, 1], [], []>} : vector<64x32xbf16>, vector<32x81xbf16>, vector<64x81xf32> -> vector<64x81xf32>
    %80 = arith.addf %72, %79 : vector<64x81xf32>
    %c8 = arith.constant 8 : index
    %c0_68 = arith.constant 0 : index
    %c0_69 = arith.constant 0 : index
    %81 = vector.load %arg3[%c8, %c0_68, %c0_69] : memref<9x81x81xbf16, #tpu.memory_space<vmem>>, vector<1x81x81xbf16>
    %82 = vector.shape_cast %81 : vector<1x81x81xbf16> to vector<81x81xbf16>
    %cst_70 = arith.constant dense<0.000000e+00> : vector<32x81xf32>
    %83 = tpu.matmul %15, %82, %cst_70 {dimension_numbers = #tpu.dot_dimension_numbers<[1], [0], [0], [1], [0, 0, 1, 1], [], []>} : vector<32x81xbf16>, vector<81x81xbf16>, vector<32x81xf32> -> vector<32x81xf32>
    %c8_71 = arith.constant 8 : index
    %c0_72 = arith.constant 0 : index
    %c0_73 = arith.constant 0 : index
    %84 = vector.load %arg8[%c8_71, %c0_72, %c0_73] : memref<9x64x32xbf16, #tpu.memory_space<vmem>>, vector<1x64x32xbf16>
    %85 = vector.shape_cast %84 : vector<1x64x32xbf16> to vector<64x32xbf16>
    %86 = arith.truncf %83 : vector<32x81xf32> to vector<32x81xbf16>
    %cst_74 = arith.constant dense<0.000000e+00> : vector<64x81xf32>
    %87 = tpu.matmul %85, %86, %cst_74 {dimension_numbers = #tpu.dot_dimension_numbers<[1], [0], [0], [1], [0, 0, 1, 1], [], []>} : vector<64x32xbf16>, vector<32x81xbf16>, vector<64x81xf32> -> vector<64x81xf32>
    %88 = arith.addf %80, %87 : vector<64x81xf32>
    %c0_75 = arith.constant 0 : index
    %c0_76 = arith.constant 0 : index
    %89 = vector.load %arg9[%c0_75, %c0_76] : memref<64x1xf32, #tpu.memory_space<vmem>>, vector<64x1xf32>
    %90 = vector.broadcast %89 : vector<64x1xf32> to vector<64x81xf32>
    %91 = arith.addf %88, %90 : vector<64x81xf32>
    %cst_77 = arith.constant 0.000000e+00 : f32
    %92 = vector.broadcast %cst_77 : f32 to vector<64x81xf32>
    %93 = arith.cmpf oge, %91, %92 : vector<64x81xf32>
    %cst_78 = arith.constant 0.00999999977 : f32
    %94 = vector.broadcast %cst_78 : f32 to vector<64x81xf32>
    %95 = arith.mulf %94, %91 : vector<64x81xf32>
    %96 = arith.select %93, %91, %95 : vector<64x81xi1>, vector<64x81xf32>
    %c0_79 = arith.constant 0 : index
    %c0_80 = arith.constant 0 : index
    %97 = vector.load %arg10[%c0_79, %c0_80] : memref<64x1xf32, #tpu.memory_space<vmem>>, vector<64x1xf32>
    %98 = vector.broadcast %97 : vector<64x1xf32> to vector<64x81xf32>
    %99 = arith.addf %96, %98 : vector<64x81xf32>
    %100 = arith.truncf %99 : vector<64x81xf32> to vector<64x81xbf16>
    %c0_81 = arith.constant 0 : index
    %c0_82 = arith.constant 0 : index
    %101 = vector.load %arg11[%c0_81, %c0_82] : memref<8x64xbf16, #tpu.memory_space<vmem>>, vector<8x64xbf16>
    %cst_83 = arith.constant dense<0.000000e+00> : vector<8x81xf32>
    %102 = tpu.matmul %101, %100, %cst_83 {dimension_numbers = #tpu.dot_dimension_numbers<[1], [0], [0], [1], [0, 0, 1, 1], [], []>} : vector<8x64xbf16>, vector<64x81xbf16>, vector<8x81xf32> -> vector<8x81xf32>
    %103 = arith.negf %102 : vector<8x81xf32>
    %104 = math.exp %103 : vector<8x81xf32>
    %cst_84 = arith.constant 1.000000e+00 : f32
    %105 = vector.broadcast %cst_84 : f32 to vector<8x81xf32>
    %106 = arith.addf %105, %104 : vector<8x81xf32>
    %107 = arith.divf %105, %106 : vector<8x81xf32>
    %c0_85 = arith.constant 0 : index
    %c0_86 = arith.constant 0 : index
    %108 = vector.load %arg12[%c0_85, %c0_86] : memref<32x64xbf16, #tpu.memory_space<vmem>>, vector<32x64xbf16>
    %cst_87 = arith.constant dense<0.000000e+00> : vector<32x81xf32>
    %109 = tpu.matmul %108, %100, %cst_87 {dimension_numbers = #tpu.dot_dimension_numbers<[1], [0], [0], [1], [0, 0, 1, 1], [], []>} : vector<32x64xbf16>, vector<64x81xbf16>, vector<32x81xf32> -> vector<32x81xf32>
    %c0_88 = arith.constant 0 : index
    %c0_89 = arith.constant 0 : index
    %110 = vector.load %arg13[%c0_88, %c0_89] : memref<32x1xf32, #tpu.memory_space<vmem>>, vector<32x1xf32>
    %111 = vector.broadcast %110 : vector<32x1xf32> to vector<32x81xf32>
    %112 = arith.addf %109, %111 : vector<32x81xf32>
    %c0_90 = arith.constant 0 : index
    %c0_91 = arith.constant 0 : index
    %113 = vector.load %arg4[%c0_90, %c0_91] : memref<1x81xf32, #tpu.memory_space<vmem>>, vector<1x81xf32>
    %114 = vector.broadcast %113 : vector<1x81xf32> to vector<32x81xf32>
    %115 = arith.mulf %112, %114 : vector<32x81xf32>
    %cst_92 = arith.constant dense<0.000000e+00> : vector<32x8xf32>
    %116 = tpu.matmul %115, %107, %cst_92 {dimension_numbers = #tpu.dot_dimension_numbers<[1], [1], [0], [0], [0, 0, 1, 0], [], []>} : vector<32x81xf32>, vector<8x81xf32>, vector<32x8xf32> -> vector<32x8xf32>
    %c0_93 = arith.constant 0 : index
    %c0_94 = arith.constant 0 : index
    %117 = vector.load %arg14[%c0_93, %c0_94] : memref<8x8xf32, #tpu.memory_space<vmem>>, vector<8x8xf32>
    %cst_95 = arith.constant dense<0.000000e+00> : vector<8x32xf32>
    %118 = tpu.matmul %117, %116, %cst_95 {dimension_numbers = #tpu.dot_dimension_numbers<[1], [1], [0], [0], [0, 0, 1, 0], [], []>} : vector<8x8xf32>, vector<32x8xf32>, vector<8x32xf32> -> vector<8x32xf32>
    %cst_96 = arith.constant 0.000000e+00 : f32
    %119 = vector.broadcast %cst_96 : f32 to vector<8x32xf32>
    %120 = arith.cmpf oge, %118, %119 : vector<8x32xf32>
    %cst_97 = arith.constant 2.000000e-01 : f32
    %121 = vector.broadcast %cst_97 : f32 to vector<8x32xf32>
    %122 = arith.mulf %121, %118 : vector<8x32xf32>
    %123 = arith.select %120, %118, %122 : vector<8x32xi1>, vector<8x32xf32>
    %c0_98 = arith.constant 0 : index
    %c0_99 = arith.constant 0 : index
    %124 = vector.load %arg15[%c0_98, %c0_99] : memref<32x32xf32, #tpu.memory_space<vmem>>, vector<32x32xf32>
    %cst_100 = arith.constant dense<0.000000e+00> : vector<32x8xf32>
    %125 = tpu.matmul %124, %123, %cst_100 {dimension_numbers = #tpu.dot_dimension_numbers<[1], [1], [0], [0], [0, 0, 1, 0], [], []>} : vector<32x32xf32>, vector<8x32xf32>, vector<32x8xf32> -> vector<32x8xf32>
    %c0_101 = arith.constant 0 : index
    %c0_102 = arith.constant 0 : index
    %126 = vector.load %arg16[%c0_101, %c0_102] : memref<32x1xf32, #tpu.memory_space<vmem>>, vector<32x1xf32>
    %127 = vector.broadcast %126 : vector<32x1xf32> to vector<32x8xf32>
    %128 = arith.addf %125, %127 : vector<32x8xf32>
    %cst_103 = arith.constant 0.000000e+00 : f32
    %129 = vector.broadcast %cst_103 : f32 to vector<32x8xf32>
    %130 = arith.cmpf oge, %128, %129 : vector<32x8xf32>
    %cst_104 = arith.constant 2.000000e-01 : f32
    %131 = vector.broadcast %cst_104 : f32 to vector<32x8xf32>
    %132 = arith.mulf %131, %128 : vector<32x8xf32>
    %133 = arith.select %130, %128, %132 : vector<32x8xi1>, vector<32x8xf32>
    %134 = arith.addf %133, %116 : vector<32x8xf32>
    %cst_105 = arith.constant dense<0.000000e+00> : vector<32x32xf32>
    %135 = tpu.matmul %134, %134, %cst_105 {dimension_numbers = #tpu.dot_dimension_numbers<[1], [1], [0], [0], [0, 0, 1, 0], [], []>} : vector<32x8xf32>, vector<32x8xf32>, vector<32x32xf32> -> vector<32x32xf32>
    %cst_106 = arith.constant dense<0xFF800000> : vector<32xf32>
    %136 = vector.multi_reduction <maximumf>, %135, %cst_106 [1] : vector<32x32xf32> to vector<32xf32>
    %137 = vector.shape_cast %136 : vector<32xf32> to vector<32x1xf32>
    %138 = vector.broadcast %137 : vector<32x1xf32> to vector<32x32xf32>
    %139 = arith.subf %138, %135 : vector<32x32xf32>
    %cst_107 = arith.constant dense<0xFF800000> : vector<32xf32>
    %140 = vector.multi_reduction <maximumf>, %139, %cst_107 [1] : vector<32x32xf32> to vector<32xf32>
    %141 = vector.shape_cast %140 : vector<32xf32> to vector<32x1xf32>
    %142 = vector.broadcast %141 : vector<32x1xf32> to vector<32x32xf32>
    %143 = arith.subf %139, %142 : vector<32x32xf32>
    %144 = math.exp %143 : vector<32x32xf32>
    %cst_108 = arith.constant dense<0.000000e+00> : vector<32xf32>
    %145 = vector.multi_reduction <add>, %144, %cst_108 [1] : vector<32x32xf32> to vector<32xf32>
    %146 = vector.shape_cast %145 : vector<32xf32> to vector<32x1xf32>
    %147 = tpu.reciprocal %146 {approx = true} : vector<32x1xf32> -> vector<32x1xf32>
    %148 = vector.broadcast %147 : vector<32x1xf32> to vector<32x32xf32>
    %149 = arith.mulf %144, %148 : vector<32x32xf32>
    %cst_109 = arith.constant dense<0.000000e+00> : vector<32x8xf32>
    %150 = tpu.matmul %149, %134, %cst_109 {dimension_numbers = #tpu.dot_dimension_numbers<[1], [0], [0], [1], [0, 0, 1, 1], [], []>} : vector<32x32xf32>, vector<32x8xf32>, vector<32x8xf32> -> vector<32x8xf32>
    %c0_110 = arith.constant 0 : index
    %c0_111 = arith.constant 0 : index
    %151 = vector.load %arg17[%c0_110, %c0_111] : memref<1x1xf32, #tpu.memory_space<vmem>>, vector<1x1xf32>
    %152 = vector.extract %151[0, 0] : f32 from vector<1x1xf32>
    %153 = vector.broadcast %152 : f32 to vector<32x8xf32>
    %154 = arith.mulf %153, %150 : vector<32x8xf32>
    %155 = arith.addf %154, %134 : vector<32x8xf32>
    %c0_112 = arith.constant 0 : index
    %c0_113 = arith.constant 0 : index
    %156 = vector.load %arg18[%c0_112, %c0_113] : memref<8x32xf32, #tpu.memory_space<vmem>>, vector<8x32xf32>
    %cst_114 = arith.constant dense<0.000000e+00> : vector<8x8xf32>
    %157 = tpu.matmul %156, %155, %cst_114 {dimension_numbers = #tpu.dot_dimension_numbers<[1], [0], [0], [1], [0, 0, 1, 1], [], []>} : vector<8x32xf32>, vector<32x8xf32>, vector<8x8xf32> -> vector<8x8xf32>
    %c0_115 = arith.constant 0 : index
    %c0_116 = arith.constant 0 : index
    %158 = vector.load %arg19[%c0_115, %c0_116] : memref<8x32xf32, #tpu.memory_space<vmem>>, vector<8x32xf32>
    %cst_117 = arith.constant dense<0.000000e+00> : vector<8x8xf32>
    %159 = tpu.matmul %158, %134, %cst_117 {dimension_numbers = #tpu.dot_dimension_numbers<[1], [0], [0], [1], [0, 0, 1, 1], [], []>} : vector<8x32xf32>, vector<32x8xf32>, vector<8x8xf32> -> vector<8x8xf32>
    %160 = arith.addf %157, %159 : vector<8x8xf32>
    %c0_118 = arith.constant 0 : index
    %c0_119 = arith.constant 0 : index
    %161 = vector.load %arg20[%c0_118, %c0_119] : memref<8x1xf32, #tpu.memory_space<vmem>>, vector<8x1xf32>
    %162 = vector.broadcast %161 : vector<8x1xf32> to vector<8x8xf32>
    %163 = arith.addf %160, %162 : vector<8x8xf32>
    %164 = arith.negf %163 : vector<8x8xf32>
    %165 = math.exp %164 : vector<8x8xf32>
    %cst_120 = arith.constant 1.000000e+00 : f32
    %166 = vector.broadcast %cst_120 : f32 to vector<8x8xf32>
    %167 = arith.addf %166, %165 : vector<8x8xf32>
    %168 = arith.divf %166, %167 : vector<8x8xf32>
    %cst_121 = arith.constant dense<0.000000e+00> : vector<32x8xf32>
    %169 = tpu.matmul %134, %168, %cst_121 {dimension_numbers = #tpu.dot_dimension_numbers<[1], [0], [0], [1], [0, 0, 1, 1], [], []>} : vector<32x8xf32>, vector<8x8xf32>, vector<32x8xf32> -> vector<32x8xf32>
    %cst_122 = arith.constant 0.000000e+00 : f32
    %170 = vector.broadcast %cst_122 : f32 to vector<32x8xf32>
    %171 = arith.cmpf oge, %169, %170 : vector<32x8xf32>
    %cst_123 = arith.constant 2.000000e-01 : f32
    %172 = vector.broadcast %cst_123 : f32 to vector<32x8xf32>
    %173 = arith.mulf %172, %169 : vector<32x8xf32>
    %174 = arith.select %171, %169, %173 : vector<32x8xi1>, vector<32x8xf32>
    %c0_124 = arith.constant 0 : index
    %c0_125 = arith.constant 0 : index
    %175 = vector.load %arg21[%c0_124, %c0_125] : memref<32x32xf32, #tpu.memory_space<vmem>>, vector<32x32xf32>
    %cst_126 = arith.constant dense<0.000000e+00> : vector<32x8xf32>
    %176 = tpu.matmul %175, %174, %cst_126 {dimension_numbers = #tpu.dot_dimension_numbers<[1], [0], [0], [1], [0, 0, 1, 1], [], []>} : vector<32x32xf32>, vector<32x8xf32>, vector<32x8xf32> -> vector<32x8xf32>
    %c0_127 = arith.constant 0 : index
    %c0_128 = arith.constant 0 : index
    %177 = vector.load %arg22[%c0_127, %c0_128] : memref<32x1xf32, #tpu.memory_space<vmem>>, vector<32x1xf32>
    %178 = vector.broadcast %177 : vector<32x1xf32> to vector<32x8xf32>
    %179 = arith.addf %176, %178 : vector<32x8xf32>
    %cst_129 = arith.constant 0.000000e+00 : f32
    %180 = vector.broadcast %cst_129 : f32 to vector<32x8xf32>
    %181 = arith.cmpf oge, %179, %180 : vector<32x8xf32>
    %cst_130 = arith.constant 2.000000e-01 : f32
    %182 = vector.broadcast %cst_130 : f32 to vector<32x8xf32>
    %183 = arith.mulf %182, %179 : vector<32x8xf32>
    %184 = arith.select %181, %179, %183 : vector<32x8xi1>, vector<32x8xf32>
    %185 = arith.addf %184, %134 : vector<32x8xf32>
    %c0_131 = arith.constant 0 : index
    %c0_132 = arith.constant 0 : index
    %c0_133 = arith.constant 0 : index
    %c0_134 = arith.constant 0 : index
    %186 = vector.load %arg41[%c0_131, %c0_132, %c0_133, %c0_134] : memref<1x2x32x8xf32, #tpu.memory_space<vmem>>, vector<1x1x32x8xf32>
    %187 = vector.shape_cast %186 : vector<1x1x32x8xf32> to vector<32x8xf32>
    %188 = vector.shape_cast %185 : vector<32x8xf32> to vector<1x1x32x8xf32>
    tpu.vector_store %arg41[%c0_131, %c0_132, %c0_133, %c0_134], %188 {strides = array<i32>} : memref<1x2x32x8xf32, #tpu.memory_space<vmem>>, vector<1x1x32x8xf32>,
    %c0_135 = arith.constant 0 : index
    %c0_136 = arith.constant 0 : index
    %c0_137 = arith.constant 0 : index
    %189 = vector.load %arg2[%c0_135, %c0_136, %c0_137] : memref<1x54x81xbf16, #tpu.memory_space<vmem>>, vector<1x54x81xbf16>
    %190 = vector.shape_cast %189 : vector<1x54x81xbf16> to vector<54x81xbf16>
    %c0_138 = arith.constant 0 : index
    %c0_139 = arith.constant 0 : index
    %191 = vector.load %arg23[%c0_138, %c0_139] : memref<32x54xbf16, #tpu.memory_space<vmem>>, vector<32x54xbf16>
    %cst_140 = arith.constant dense<0.000000e+00> : vector<32x81xf32>
    %192 = tpu.matmul %191, %190, %cst_140 {dimension_numbers = #tpu.dot_dimension_numbers<[1], [0], [0], [1], [0, 0, 1, 1], [], []>} : vector<32x54xbf16>, vector<54x81xbf16>, vector<32x81xf32> -> vector<32x81xf32>
    %c0_141 = arith.constant 0 : index
    %c0_142 = arith.constant 0 : index
    %193 = vector.load %arg24[%c0_141, %c0_142] : memref<32x1xf32, #tpu.memory_space<vmem>>, vector<32x1xf32>
    %194 = vector.broadcast %193 : vector<32x1xf32> to vector<32x81xf32>
    %195 = arith.addf %192, %194 : vector<32x81xf32>
    %cst_143 = arith.constant 0.000000e+00 : f32
    %196 = vector.broadcast %cst_143 : f32 to vector<32x81xf32>
    %197 = arith.cmpf oge, %195, %196 : vector<32x81xf32>
    %cst_144 = arith.constant 0.00999999977 : f32
    %198 = vector.broadcast %cst_144 : f32 to vector<32x81xf32>
    %199 = arith.mulf %198, %195 : vector<32x81xf32>
    %200 = arith.select %197, %195, %199 : vector<32x81xi1>, vector<32x81xf32>
    %c0_145 = arith.constant 0 : index
    %c0_146 = arith.constant 0 : index
    %201 = vector.load %arg25[%c0_145, %c0_146] : memref<32x1xf32, #tpu.memory_space<vmem>>, vector<32x1xf32>
    %202 = vector.broadcast %201 : vector<32x1xf32> to vector<32x81xf32>
    %203 = arith.addf %200, %202 : vector<32x81xf32>
    %204 = arith.truncf %203 : vector<32x81xf32> to vector<32x81xbf16>
    %cst_147 = arith.constant 0.000000e+00 : f32
    %205 = vector.broadcast %cst_147 : f32 to vector<64x81xf32>
    %c0_148 = arith.constant 0 : index
    %c0_149 = arith.constant 0 : index
    %c0_150 = arith.constant 0 : index
    %206 = vector.load %arg3[%c0_148, %c0_149, %c0_150] : memref<9x81x81xbf16, #tpu.memory_space<vmem>>, vector<1x81x81xbf16>
    %207 = vector.shape_cast %206 : vector<1x81x81xbf16> to vector<81x81xbf16>
    %cst_151 = arith.constant dense<0.000000e+00> : vector<32x81xf32>
    %208 = tpu.matmul %204, %207, %cst_151 {dimension_numbers = #tpu.dot_dimension_numbers<[1], [0], [0], [1], [0, 0, 1, 1], [], []>} : vector<32x81xbf16>, vector<81x81xbf16>, vector<32x81xf32> -> vector<32x81xf32>
    %c0_152 = arith.constant 0 : index
    %c0_153 = arith.constant 0 : index
    %c0_154 = arith.constant 0 : index
    %209 = vector.load %arg26[%c0_152, %c0_153, %c0_154] : memref<9x64x32xbf16, #tpu.memory_space<vmem>>, vector<1x64x32xbf16>
    %210 = vector.shape_cast %209 : vector<1x64x32xbf16> to vector<64x32xbf16>
    %211 = arith.truncf %208 : vector<32x81xf32> to vector<32x81xbf16>
    %cst_155 = arith.constant dense<0.000000e+00> : vector<64x81xf32>
    %212 = tpu.matmul %210, %211, %cst_155 {dimension_numbers = #tpu.dot_dimension_numbers<[1], [0], [0], [1], [0, 0, 1, 1], [], []>} : vector<64x32xbf16>, vector<32x81xbf16>, vector<64x81xf32> -> vector<64x81xf32>
    %213 = arith.addf %205, %212 : vector<64x81xf32>
    %c1_156 = arith.constant 1 : index
    %c0_157 = arith.constant 0 : index
    %c0_158 = arith.constant 0 : index
    %214 = vector.load %arg3[%c1_156, %c0_157, %c0_158] : memref<9x81x81xbf16, #tpu.memory_space<vmem>>, vector<1x81x81xbf16>
    %215 = vector.shape_cast %214 : vector<1x81x81xbf16> to vector<81x81xbf16>
    %cst_159 = arith.constant dense<0.000000e+00> : vector<32x81xf32>
    %216 = tpu.matmul %204, %215, %cst_159 {dimension_numbers = #tpu.dot_dimension_numbers<[1], [0], [0], [1], [0, 0, 1, 1], [], []>} : vector<32x81xbf16>, vector<81x81xbf16>, vector<32x81xf32> -> vector<32x81xf32>
    %c1_160 = arith.constant 1 : index
    %c0_161 = arith.constant 0 : index
    %c0_162 = arith.constant 0 : index
    %217 = vector.load %arg26[%c1_160, %c0_161, %c0_162] : memref<9x64x32xbf16, #tpu.memory_space<vmem>>, vector<1x64x32xbf16>
    %218 = vector.shape_cast %217 : vector<1x64x32xbf16> to vector<64x32xbf16>
    %219 = arith.truncf %216 : vector<32x81xf32> to vector<32x81xbf16>
    %cst_163 = arith.constant dense<0.000000e+00> : vector<64x81xf32>
    %220 = tpu.matmul %218, %219, %cst_163 {dimension_numbers = #tpu.dot_dimension_numbers<[1], [0], [0], [1], [0, 0, 1, 1], [], []>} : vector<64x32xbf16>, vector<32x81xbf16>, vector<64x81xf32> -> vector<64x81xf32>
    %221 = arith.addf %213, %220 : vector<64x81xf32>
    %c2_164 = arith.constant 2 : index
    %c0_165 = arith.constant 0 : index
    %c0_166 = arith.constant 0 : index
    %222 = vector.load %arg3[%c2_164, %c0_165, %c0_166] : memref<9x81x81xbf16, #tpu.memory_space<vmem>>, vector<1x81x81xbf16>
    %223 = vector.shape_cast %222 : vector<1x81x81xbf16> to vector<81x81xbf16>
    %cst_167 = arith.constant dense<0.000000e+00> : vector<32x81xf32>
    %224 = tpu.matmul %204, %223, %cst_167 {dimension_numbers = #tpu.dot_dimension_numbers<[1], [0], [0], [1], [0, 0, 1, 1], [], []>} : vector<32x81xbf16>, vector<81x81xbf16>, vector<32x81xf32> -> vector<32x81xf32>
    %c2_168 = arith.constant 2 : index
    %c0_169 = arith.constant 0 : index
    %c0_170 = arith.constant 0 : index
    %225 = vector.load %arg26[%c2_168, %c0_169, %c0_170] : memref<9x64x32xbf16, #tpu.memory_space<vmem>>, vector<1x64x32xbf16>
    %226 = vector.shape_cast %225 : vector<1x64x32xbf16> to vector<64x32xbf16>
    %227 = arith.truncf %224 : vector<32x81xf32> to vector<32x81xbf16>
    %cst_171 = arith.constant dense<0.000000e+00> : vector<64x81xf32>
    %228 = tpu.matmul %226, %227, %cst_171 {dimension_numbers = #tpu.dot_dimension_numbers<[1], [0], [0], [1], [0, 0, 1, 1], [], []>} : vector<64x32xbf16>, vector<32x81xbf16>, vector<64x81xf32> -> vector<64x81xf32>
    %229 = arith.addf %221, %228 : vector<64x81xf32>
    %c3_172 = arith.constant 3 : index
    %c0_173 = arith.constant 0 : index
    %c0_174 = arith.constant 0 : index
    %230 = vector.load %arg3[%c3_172, %c0_173, %c0_174] : memref<9x81x81xbf16, #tpu.memory_space<vmem>>, vector<1x81x81xbf16>
    %231 = vector.shape_cast %230 : vector<1x81x81xbf16> to vector<81x81xbf16>
    %cst_175 = arith.constant dense<0.000000e+00> : vector<32x81xf32>
    %232 = tpu.matmul %204, %231, %cst_175 {dimension_numbers = #tpu.dot_dimension_numbers<[1], [0], [0], [1], [0, 0, 1, 1], [], []>} : vector<32x81xbf16>, vector<81x81xbf16>, vector<32x81xf32> -> vector<32x81xf32>
    %c3_176 = arith.constant 3 : index
    %c0_177 = arith.constant 0 : index
    %c0_178 = arith.constant 0 : index
    %233 = vector.load %arg26[%c3_176, %c0_177, %c0_178] : memref<9x64x32xbf16, #tpu.memory_space<vmem>>, vector<1x64x32xbf16>
    %234 = vector.shape_cast %233 : vector<1x64x32xbf16> to vector<64x32xbf16>
    %235 = arith.truncf %232 : vector<32x81xf32> to vector<32x81xbf16>
    %cst_179 = arith.constant dense<0.000000e+00> : vector<64x81xf32>
    %236 = tpu.matmul %234, %235, %cst_179 {dimension_numbers = #tpu.dot_dimension_numbers<[1], [0], [0], [1], [0, 0, 1, 1], [], []>} : vector<64x32xbf16>, vector<32x81xbf16>, vector<64x81xf32> -> vector<64x81xf32>
    %237 = arith.addf %229, %236 : vector<64x81xf32>
    %c4_180 = arith.constant 4 : index
    %c0_181 = arith.constant 0 : index
    %c0_182 = arith.constant 0 : index
    %238 = vector.load %arg3[%c4_180, %c0_181, %c0_182] : memref<9x81x81xbf16, #tpu.memory_space<vmem>>, vector<1x81x81xbf16>
    %239 = vector.shape_cast %238 : vector<1x81x81xbf16> to vector<81x81xbf16>
    %cst_183 = arith.constant dense<0.000000e+00> : vector<32x81xf32>
    %240 = tpu.matmul %204, %239, %cst_183 {dimension_numbers = #tpu.dot_dimension_numbers<[1], [0], [0], [1], [0, 0, 1, 1], [], []>} : vector<32x81xbf16>, vector<81x81xbf16>, vector<32x81xf32> -> vector<32x81xf32>
    %c4_184 = arith.constant 4 : index
    %c0_185 = arith.constant 0 : index
    %c0_186 = arith.constant 0 : index
    %241 = vector.load %arg26[%c4_184, %c0_185, %c0_186] : memref<9x64x32xbf16, #tpu.memory_space<vmem>>, vector<1x64x32xbf16>
    %242 = vector.shape_cast %241 : vector<1x64x32xbf16> to vector<64x32xbf16>
    %243 = arith.truncf %240 : vector<32x81xf32> to vector<32x81xbf16>
    %cst_187 = arith.constant dense<0.000000e+00> : vector<64x81xf32>
    %244 = tpu.matmul %242, %243, %cst_187 {dimension_numbers = #tpu.dot_dimension_numbers<[1], [0], [0], [1], [0, 0, 1, 1], [], []>} : vector<64x32xbf16>, vector<32x81xbf16>, vector<64x81xf32> -> vector<64x81xf32>
    %245 = arith.addf %237, %244 : vector<64x81xf32>
    %c5_188 = arith.constant 5 : index
    %c0_189 = arith.constant 0 : index
    %c0_190 = arith.constant 0 : index
    %246 = vector.load %arg3[%c5_188, %c0_189, %c0_190] : memref<9x81x81xbf16, #tpu.memory_space<vmem>>, vector<1x81x81xbf16>
    %247 = vector.shape_cast %246 : vector<1x81x81xbf16> to vector<81x81xbf16>
    %cst_191 = arith.constant dense<0.000000e+00> : vector<32x81xf32>
    %248 = tpu.matmul %204, %247, %cst_191 {dimension_numbers = #tpu.dot_dimension_numbers<[1], [0], [0], [1], [0, 0, 1, 1], [], []>} : vector<32x81xbf16>, vector<81x81xbf16>, vector<32x81xf32> -> vector<32x81xf32>
    %c5_192 = arith.constant 5 : index
    %c0_193 = arith.constant 0 : index
    %c0_194 = arith.constant 0 : index
    %249 = vector.load %arg26[%c5_192, %c0_193, %c0_194] : memref<9x64x32xbf16, #tpu.memory_space<vmem>>, vector<1x64x32xbf16>
    %250 = vector.shape_cast %249 : vector<1x64x32xbf16> to vector<64x32xbf16>
    %251 = arith.truncf %248 : vector<32x81xf32> to vector<32x81xbf16>
    %cst_195 = arith.constant dense<0.000000e+00> : vector<64x81xf32>
    %252 = tpu.matmul %250, %251, %cst_195 {dimension_numbers = #tpu.dot_dimension_numbers<[1], [0], [0], [1], [0, 0, 1, 1], [], []>} : vector<64x32xbf16>, vector<32x81xbf16>, vector<64x81xf32> -> vector<64x81xf32>
    %253 = arith.addf %245, %252 : vector<64x81xf32>
    %c6_196 = arith.constant 6 : index
    %c0_197 = arith.constant 0 : index
    %c0_198 = arith.constant 0 : index
    %254 = vector.load %arg3[%c6_196, %c0_197, %c0_198] : memref<9x81x81xbf16, #tpu.memory_space<vmem>>, vector<1x81x81xbf16>
    %255 = vector.shape_cast %254 : vector<1x81x81xbf16> to vector<81x81xbf16>
    %cst_199 = arith.constant dense<0.000000e+00> : vector<32x81xf32>
    %256 = tpu.matmul %204, %255, %cst_199 {dimension_numbers = #tpu.dot_dimension_numbers<[1], [0], [0], [1], [0, 0, 1, 1], [], []>} : vector<32x81xbf16>, vector<81x81xbf16>, vector<32x81xf32> -> vector<32x81xf32>
    %c6_200 = arith.constant 6 : index
    %c0_201 = arith.constant 0 : index
    %c0_202 = arith.constant 0 : index
    %257 = vector.load %arg26[%c6_200, %c0_201, %c0_202] : memref<9x64x32xbf16, #tpu.memory_space<vmem>>, vector<1x64x32xbf16>
    %258 = vector.shape_cast %257 : vector<1x64x32xbf16> to vector<64x32xbf16>
    %259 = arith.truncf %256 : vector<32x81xf32> to vector<32x81xbf16>
    %cst_203 = arith.constant dense<0.000000e+00> : vector<64x81xf32>
    %260 = tpu.matmul %258, %259, %cst_203 {dimension_numbers = #tpu.dot_dimension_numbers<[1], [0], [0], [1], [0, 0, 1, 1], [], []>} : vector<64x32xbf16>, vector<32x81xbf16>, vector<64x81xf32> -> vector<64x81xf32>
    %261 = arith.addf %253, %260 : vector<64x81xf32>
    %c7_204 = arith.constant 7 : index
    %c0_205 = arith.constant 0 : index
    %c0_206 = arith.constant 0 : index
    %262 = vector.load %arg3[%c7_204, %c0_205, %c0_206] : memref<9x81x81xbf16, #tpu.memory_space<vmem>>, vector<1x81x81xbf16>
    %263 = vector.shape_cast %262 : vector<1x81x81xbf16> to vector<81x81xbf16>
    %cst_207 = arith.constant dense<0.000000e+00> : vector<32x81xf32>
    %264 = tpu.matmul %204, %263, %cst_207 {dimension_numbers = #tpu.dot_dimension_numbers<[1], [0], [0], [1], [0, 0, 1, 1], [], []>} : vector<32x81xbf16>, vector<81x81xbf16>, vector<32x81xf32> -> vector<32x81xf32>
    %c7_208 = arith.constant 7 : index
    %c0_209 = arith.constant 0 : index
    %c0_210 = arith.constant 0 : index
    %265 = vector.load %arg26[%c7_208, %c0_209, %c0_210] : memref<9x64x32xbf16, #tpu.memory_space<vmem>>, vector<1x64x32xbf16>
    %266 = vector.shape_cast %265 : vector<1x64x32xbf16> to vector<64x32xbf16>
    %267 = arith.truncf %264 : vector<32x81xf32> to vector<32x81xbf16>
    %cst_211 = arith.constant dense<0.000000e+00> : vector<64x81xf32>
    %268 = tpu.matmul %266, %267, %cst_211 {dimension_numbers = #tpu.dot_dimension_numbers<[1], [0], [0], [1], [0, 0, 1, 1], [], []>} : vector<64x32xbf16>, vector<32x81xbf16>, vector<64x81xf32> -> vector<64x81xf32>
    %269 = arith.addf %261, %268 : vector<64x81xf32>
    %c8_212 = arith.constant 8 : index
    %c0_213 = arith.constant 0 : index
    %c0_214 = arith.constant 0 : index
    %270 = vector.load %arg3[%c8_212, %c0_213, %c0_214] : memref<9x81x81xbf16, #tpu.memory_space<vmem>>, vector<1x81x81xbf16>
    %271 = vector.shape_cast %270 : vector<1x81x81xbf16> to vector<81x81xbf16>
    %cst_215 = arith.constant dense<0.000000e+00> : vector<32x81xf32>
    %272 = tpu.matmul %204, %271, %cst_215 {dimension_numbers = #tpu.dot_dimension_numbers<[1], [0], [0], [1], [0, 0, 1, 1], [], []>} : vector<32x81xbf16>, vector<81x81xbf16>, vector<32x81xf32> -> vector<32x81xf32>
    %c8_216 = arith.constant 8 : index
    %c0_217 = arith.constant 0 : index
    %c0_218 = arith.constant 0 : index
    %273 = vector.load %arg26[%c8_216, %c0_217, %c0_218] : memref<9x64x32xbf16, #tpu.memory_space<vmem>>, vector<1x64x32xbf16>
    %274 = vector.shape_cast %273 : vector<1x64x32xbf16> to vector<64x32xbf16>
    %275 = arith.truncf %272 : vector<32x81xf32> to vector<32x81xbf16>
    %cst_219 = arith.constant dense<0.000000e+00> : vector<64x81xf32>
    %276 = tpu.matmul %274, %275, %cst_219 {dimension_numbers = #tpu.dot_dimension_numbers<[1], [0], [0], [1], [0, 0, 1, 1], [], []>} : vector<64x32xbf16>, vector<32x81xbf16>, vector<64x81xf32> -> vector<64x81xf32>
    %277 = arith.addf %269, %276 : vector<64x81xf32>
    %c0_220 = arith.constant 0 : index
    %c0_221 = arith.constant 0 : index
    %278 = vector.load %arg27[%c0_220, %c0_221] : memref<64x1xf32, #tpu.memory_space<vmem>>, vector<64x1xf32>
    %279 = vector.broadcast %278 : vector<64x1xf32> to vector<64x81xf32>
    %280 = arith.addf %277, %279 : vector<64x81xf32>
    %cst_222 = arith.constant 0.000000e+00 : f32
    %281 = vector.broadcast %cst_222 : f32 to vector<64x81xf32>
    %282 = arith.cmpf oge, %280, %281 : vector<64x81xf32>
    %cst_223 = arith.constant 0.00999999977 : f32
    %283 = vector.broadcast %cst_223 : f32 to vector<64x81xf32>
    %284 = arith.mulf %283, %280 : vector<64x81xf32>
    %285 = arith.select %282, %280, %284 : vector<64x81xi1>, vector<64x81xf32>
    %c0_224 = arith.constant 0 : index
    %c0_225 = arith.constant 0 : index
    %286 = vector.load %arg28[%c0_224, %c0_225] : memref<64x1xf32, #tpu.memory_space<vmem>>, vector<64x1xf32>
    %287 = vector.broadcast %286 : vector<64x1xf32> to vector<64x81xf32>
    %288 = arith.addf %285, %287 : vector<64x81xf32>
    %289 = arith.truncf %288 : vector<64x81xf32> to vector<64x81xbf16>
    %c0_226 = arith.constant 0 : index
    %c0_227 = arith.constant 0 : index
    %290 = vector.load %arg29[%c0_226, %c0_227] : memref<8x64xbf16, #tpu.memory_space<vmem>>, vector<8x64xbf16>
    %cst_228 = arith.constant dense<0.000000e+00> : vector<8x81xf32>
    %291 = tpu.matmul %290, %289, %cst_228 {dimension_numbers = #tpu.dot_dimension_numbers<[1], [0], [0], [1], [0, 0, 1, 1], [], []>} : vector<8x64xbf16>, vector<64x81xbf16>, vector<8x81xf32> -> vector<8x81xf32>
    %292 = arith.negf %291 : vector<8x81xf32>
    %293 = math.exp %292 : vector<8x81xf32>
    %cst_229 = arith.constant 1.000000e+00 : f32
    %294 = vector.broadcast %cst_229 : f32 to vector<8x81xf32>
    %295 = arith.addf %294, %293 : vector<8x81xf32>
    %296 = arith.divf %294, %295 : vector<8x81xf32>
    %c0_230 = arith.constant 0 : index
    %c0_231 = arith.constant 0 : index
    %297 = vector.load %arg30[%c0_230, %c0_231] : memref<32x64xbf16, #tpu.memory_space<vmem>>, vector<32x64xbf16>
    %cst_232 = arith.constant dense<0.000000e+00> : vector<32x81xf32>
    %298 = tpu.matmul %297, %289, %cst_232 {dimension_numbers = #tpu.dot_dimension_numbers<[1], [0], [0], [1], [0, 0, 1, 1], [], []>} : vector<32x64xbf16>, vector<64x81xbf16>, vector<32x81xf32> -> vector<32x81xf32>
    %c0_233 = arith.constant 0 : index
    %c0_234 = arith.constant 0 : index
    %299 = vector.load %arg31[%c0_233, %c0_234] : memref<32x1xf32, #tpu.memory_space<vmem>>, vector<32x1xf32>
    %300 = vector.broadcast %299 : vector<32x1xf32> to vector<32x81xf32>
    %301 = arith.addf %298, %300 : vector<32x81xf32>
    %c0_235 = arith.constant 0 : index
    %c0_236 = arith.constant 0 : index
    %302 = vector.load %arg4[%c0_235, %c0_236] : memref<1x81xf32, #tpu.memory_space<vmem>>, vector<1x81xf32>
    %303 = vector.broadcast %302 : vector<1x81xf32> to vector<32x81xf32>
    %304 = arith.mulf %301, %303 : vector<32x81xf32>
    %cst_237 = arith.constant dense<0.000000e+00> : vector<32x8xf32>
    %305 = tpu.matmul %304, %296, %cst_237 {dimension_numbers = #tpu.dot_dimension_numbers<[1], [1], [0], [0], [0, 0, 1, 0], [], []>} : vector<32x81xf32>, vector<8x81xf32>, vector<32x8xf32> -> vector<32x8xf32>
    %c0_238 = arith.constant 0 : index
    %c0_239 = arith.constant 0 : index
    %306 = vector.load %arg32[%c0_238, %c0_239] : memref<8x8xf32, #tpu.memory_space<vmem>>, vector<8x8xf32>
    %cst_240 = arith.constant dense<0.000000e+00> : vector<8x32xf32>
    %307 = tpu.matmul %306, %305, %cst_240 {dimension_numbers = #tpu.dot_dimension_numbers<[1], [1], [0], [0], [0, 0, 1, 0], [], []>} : vector<8x8xf32>, vector<32x8xf32>, vector<8x32xf32> -> vector<8x32xf32>
    %cst_241 = arith.constant 0.000000e+00 : f32
    %308 = vector.broadcast %cst_241 : f32 to vector<8x32xf32>
    %309 = arith.cmpf oge, %307, %308 : vector<8x32xf32>
    %cst_242 = arith.constant 2.000000e-01 : f32
    %310 = vector.broadcast %cst_242 : f32 to vector<8x32xf32>
    %311 = arith.mulf %310, %307 : vector<8x32xf32>
    %312 = arith.select %309, %307, %311 : vector<8x32xi1>, vector<8x32xf32>
    %c0_243 = arith.constant 0 : index
    %c0_244 = arith.constant 0 : index
    %313 = vector.load %arg33[%c0_243, %c0_244] : memref<32x32xf32, #tpu.memory_space<vmem>>, vector<32x32xf32>
    %cst_245 = arith.constant dense<0.000000e+00> : vector<32x8xf32>
    %314 = tpu.matmul %313, %312, %cst_245 {dimension_numbers = #tpu.dot_dimension_numbers<[1], [1], [0], [0], [0, 0, 1, 0], [], []>} : vector<32x32xf32>, vector<8x32xf32>, vector<32x8xf32> -> vector<32x8xf32>
    %c0_246 = arith.constant 0 : index
    %c0_247 = arith.constant 0 : index
    %315 = vector.load %arg34[%c0_246, %c0_247] : memref<32x1xf32, #tpu.memory_space<vmem>>, vector<32x1xf32>
    %316 = vector.broadcast %315 : vector<32x1xf32> to vector<32x8xf32>
    %317 = arith.addf %314, %316 : vector<32x8xf32>
    %cst_248 = arith.constant 0.000000e+00 : f32
    %318 = vector.broadcast %cst_248 : f32 to vector<32x8xf32>
    %319 = arith.cmpf oge, %317, %318 : vector<32x8xf32>
    %cst_249 = arith.constant 2.000000e-01 : f32
    %320 = vector.broadcast %cst_249 : f32 to vector<32x8xf32>
    %321 = arith.mulf %320, %317 : vector<32x8xf32>
    %322 = arith.select %319, %317, %321 : vector<32x8xi1>, vector<32x8xf32>
    %323 = arith.addf %322, %305 : vector<32x8xf32>
    %cst_250 = arith.constant dense<0.000000e+00> : vector<32x32xf32>
    %324 = tpu.matmul %323, %323, %cst_250 {dimension_numbers = #tpu.dot_dimension_numbers<[1], [1], [0], [0], [0, 0, 1, 0], [], []>} : vector<32x8xf32>, vector<32x8xf32>, vector<32x32xf32> -> vector<32x32xf32>
    %cst_251 = arith.constant dense<0xFF800000> : vector<32xf32>
    %325 = vector.multi_reduction <maximumf>, %324, %cst_251 [1] : vector<32x32xf32> to vector<32xf32>
    %326 = vector.shape_cast %325 : vector<32xf32> to vector<32x1xf32>
    %327 = vector.broadcast %326 : vector<32x1xf32> to vector<32x32xf32>
    %328 = arith.subf %327, %324 : vector<32x32xf32>
    %cst_252 = arith.constant dense<0xFF800000> : vector<32xf32>
    %329 = vector.multi_reduction <maximumf>, %328, %cst_252 [1] : vector<32x32xf32> to vector<32xf32>
    %330 = vector.shape_cast %329 : vector<32xf32> to vector<32x1xf32>
    %331 = vector.broadcast %330 : vector<32x1xf32> to vector<32x32xf32>
    %332 = arith.subf %328, %331 : vector<32x32xf32>
    %333 = math.exp %332 : vector<32x32xf32>
    %cst_253 = arith.constant dense<0.000000e+00> : vector<32xf32>
    %334 = vector.multi_reduction <add>, %333, %cst_253 [1] : vector<32x32xf32> to vector<32xf32>
    %335 = vector.shape_cast %334 : vector<32xf32> to vector<32x1xf32>
    %336 = tpu.reciprocal %335 {approx = true} : vector<32x1xf32> -> vector<32x1xf32>
    %337 = vector.broadcast %336 : vector<32x1xf32> to vector<32x32xf32>
    %338 = arith.mulf %333, %337 : vector<32x32xf32>
    %cst_254 = arith.constant dense<0.000000e+00> : vector<32x8xf32>
    %339 = tpu.matmul %338, %323, %cst_254 {dimension_numbers = #tpu.dot_dimension_numbers<[1], [0], [0], [1], [0, 0, 1, 1], [], []>} : vector<32x32xf32>, vector<32x8xf32>, vector<32x8xf32> -> vector<32x8xf32>
    %c0_255 = arith.constant 0 : index
    %c0_256 = arith.constant 0 : index
    %340 = vector.load %arg35[%c0_255, %c0_256] : memref<1x1xf32, #tpu.memory_space<vmem>>, vector<1x1xf32>
    %341 = vector.extract %340[0, 0] : f32 from vector<1x1xf32>
    %342 = vector.broadcast %341 : f32 to vector<32x8xf32>
    %343 = arith.mulf %342, %339 : vector<32x8xf32>
    %344 = arith.addf %343, %323 : vector<32x8xf32>
    %c0_257 = arith.constant 0 : index
    %c0_258 = arith.constant 0 : index
    %345 = vector.load %arg36[%c0_257, %c0_258] : memref<8x32xf32, #tpu.memory_space<vmem>>, vector<8x32xf32>
    %cst_259 = arith.constant dense<0.000000e+00> : vector<8x8xf32>
    %346 = tpu.matmul %345, %344, %cst_259 {dimension_numbers = #tpu.dot_dimension_numbers<[1], [0], [0], [1], [0, 0, 1, 1], [], []>} : vector<8x32xf32>, vector<32x8xf32>, vector<8x8xf32> -> vector<8x8xf32>
    %c0_260 = arith.constant 0 : index
    %c0_261 = arith.constant 0 : index
    %347 = vector.load %arg37[%c0_260, %c0_261] : memref<8x32xf32, #tpu.memory_space<vmem>>, vector<8x32xf32>
    %cst_262 = arith.constant dense<0.000000e+00> : vector<8x8xf32>
    %348 = tpu.matmul %347, %323, %cst_262 {dimension_numbers = #tpu.dot_dimension_numbers<[1], [0], [0], [1], [0, 0, 1, 1], [], []>} : vector<8x32xf32>, vector<32x8xf32>, vector<8x8xf32> -> vector<8x8xf32>
    %349 = arith.addf %346, %348 : vector<8x8xf32>
    %c0_263 = arith.constant 0 : index
    %c0_264 = arith.constant 0 : index
    %350 = vector.load %arg38[%c0_263, %c0_264] : memref<8x1xf32, #tpu.memory_space<vmem>>, vector<8x1xf32>
    %351 = vector.broadcast %350 : vector<8x1xf32> to vector<8x8xf32>
    %352 = arith.addf %349, %351 : vector<8x8xf32>
    %353 = arith.negf %352 : vector<8x8xf32>
    %354 = math.exp %353 : vector<8x8xf32>
    %cst_265 = arith.constant 1.000000e+00 : f32
    %355 = vector.broadcast %cst_265 : f32 to vector<8x8xf32>
    %356 = arith.addf %355, %354 : vector<8x8xf32>
    %357 = arith.divf %355, %356 : vector<8x8xf32>
    %cst_266 = arith.constant dense<0.000000e+00> : vector<32x8xf32>
    %358 = tpu.matmul %323, %357, %cst_266 {dimension_numbers = #tpu.dot_dimension_numbers<[1], [0], [0], [1], [0, 0, 1, 1], [], []>} : vector<32x8xf32>, vector<8x8xf32>, vector<32x8xf32> -> vector<32x8xf32>
    %cst_267 = arith.constant 0.000000e+00 : f32
    %359 = vector.broadcast %cst_267 : f32 to vector<32x8xf32>
    %360 = arith.cmpf oge, %358, %359 : vector<32x8xf32>
    %cst_268 = arith.constant 2.000000e-01 : f32
    %361 = vector.broadcast %cst_268 : f32 to vector<32x8xf32>
    %362 = arith.mulf %361, %358 : vector<32x8xf32>
    %363 = arith.select %360, %358, %362 : vector<32x8xi1>, vector<32x8xf32>
    %c0_269 = arith.constant 0 : index
    %c0_270 = arith.constant 0 : index
    %364 = vector.load %arg39[%c0_269, %c0_270] : memref<32x32xf32, #tpu.memory_space<vmem>>, vector<32x32xf32>
    %cst_271 = arith.constant dense<0.000000e+00> : vector<32x8xf32>
    %365 = tpu.matmul %364, %363, %cst_271 {dimension_numbers = #tpu.dot_dimension_numbers<[1], [0], [0], [1], [0, 0, 1, 1], [], []>} : vector<32x32xf32>, vector<32x8xf32>, vector<32x8xf32> -> vector<32x8xf32>
    %c0_272 = arith.constant 0 : index
    %c0_273 = arith.constant 0 : index
    %366 = vector.load %arg40[%c0_272, %c0_273] : memref<32x1xf32, #tpu.memory_space<vmem>>, vector<32x1xf32>
    %367 = vector.broadcast %366 : vector<32x1xf32> to vector<32x8xf32>
    %368 = arith.addf %365, %367 : vector<32x8xf32>
    %cst_274 = arith.constant 0.000000e+00 : f32
    %369 = vector.broadcast %cst_274 : f32 to vector<32x8xf32>
    %370 = arith.cmpf oge, %368, %369 : vector<32x8xf32>
    %cst_275 = arith.constant 2.000000e-01 : f32
    %371 = vector.broadcast %cst_275 : f32 to vector<32x8xf32>
    %372 = arith.mulf %371, %368 : vector<32x8xf32>
    %373 = arith.select %370, %368, %372 : vector<32x8xi1>, vector<32x8xf32>
    %374 = arith.addf %373, %323 : vector<32x8xf32>
    %c0_276 = arith.constant 0 : index
    %c1_277 = arith.constant 1 : index
    %c0_278 = arith.constant 0 : index
    %c0_279 = arith.constant 0 : index
    %375 = vector.load %arg41[%c0_276, %c1_277, %c0_278, %c0_279] : memref<1x2x32x8xf32, #tpu.memory_space<vmem>>, vector<1x1x32x8xf32>
    %376 = vector.shape_cast %375 : vector<1x1x32x8xf32> to vector<32x8xf32>
    %377 = vector.shape_cast %374 : vector<32x8xf32> to vector<1x1x32x8xf32>
    tpu.vector_store %arg41[%c0_276, %c1_277, %c0_278, %c0_279], %377 {strides = array<i32>} : memref<1x2x32x8xf32, #tpu.memory_space<vmem>>, vector<1x1x32x8xf32>,
    return
  }
  func.func @transform_0(%arg0: i32) -> (i32, i32, i32) {
    %c0_i32 = arith.constant 0 : i32
    %c0_i32_0 = arith.constant 0 : i32
    %c0_i32_1 = arith.constant 0 : i32
    return %arg0, %c0_i32, %c0_i32_0 : i32, i32, i32
  }
  func.func @transform_1(%arg0: i32) -> (i32, i32, i32) {
    %c0_i32 = arith.constant 0 : i32
    %c0_i32_0 = arith.constant 0 : i32
    %c0_i32_1 = arith.constant 0 : i32
    return %arg0, %c0_i32, %c0_i32_0 : i32, i32, i32
  }
  func.func @transform_2(%arg0: i32) -> (i32, i32, i32) {
    %c0_i32 = arith.constant 0 : i32
    %c0_i32_0 = arith.constant 0 : i32
    %c0_i32_1 = arith.constant 0 : i32
    %c0_i32_2 = arith.constant 0 : i32
    return %c0_i32, %c0_i32_0, %c0_i32_1 : i32, i32, i32
  }
  func.func @transform_3(%arg0: i32) -> (i32, i32) {
    %c0_i32 = arith.constant 0 : i32
    %c0_i32_0 = arith.constant 0 : i32
    %c0_i32_1 = arith.constant 0 : i32
    return %c0_i32, %c0_i32_0 : i32, i32
  }
  func.func @transform_4(%arg0: i32) -> (i32, i32) {
    %c0_i32 = arith.constant 0 : i32
    %c0_i32_0 = arith.constant 0 : i32
    %c0_i32_1 = arith.constant 0 : i32
    return %c0_i32, %c0_i32_0 : i32, i32
  }
  func.func @transform_5(%arg0: i32) -> (i32, i32) {
    %c0_i32 = arith.constant 0 : i32
    %c0_i32_0 = arith.constant 0 : i32
    %c0_i32_1 = arith.constant 0 : i32
    return %c0_i32, %c0_i32_0 : i32, i32
  }
  func.func @transform_6(%arg0: i32) -> (i32, i32) {
    %c0_i32 = arith.constant 0 : i32
    %c0_i32_0 = arith.constant 0 : i32
    %c0_i32_1 = arith.constant 0 : i32
    return %c0_i32, %c0_i32_0 : i32, i32
  }
  func.func @transform_7(%arg0: i32) -> (i32, i32, i32) {
    %c0_i32 = arith.constant 0 : i32
    %c0_i32_0 = arith.constant 0 : i32
    %c0_i32_1 = arith.constant 0 : i32
    %c0_i32_2 = arith.constant 0 : i32
    return %c0_i32, %c0_i32_0, %c0_i32_1 : i32, i32, i32
  }
  func.func @transform_8(%arg0: i32) -> (i32, i32) {
    %c0_i32 = arith.constant 0 : i32
    %c0_i32_0 = arith.constant 0 : i32
    %c0_i32_1 = arith.constant 0 : i32
    return %c0_i32, %c0_i32_0 : i32, i32
  }
  func.func @transform_9(%arg0: i32) -> (i32, i32) {
    %c0_i32 = arith.constant 0 : i32
    %c0_i32_0 = arith.constant 0 : i32
    %c0_i32_1 = arith.constant 0 : i32
    return %c0_i32, %c0_i32_0 : i32, i32
  }
  func.func @transform_10(%arg0: i32) -> (i32, i32) {
    %c0_i32 = arith.constant 0 : i32
    %c0_i32_0 = arith.constant 0 : i32
    %c0_i32_1 = arith.constant 0 : i32
    return %c0_i32, %c0_i32_0 : i32, i32
  }
  func.func @transform_11(%arg0: i32) -> (i32, i32) {
    %c0_i32 = arith.constant 0 : i32
    %c0_i32_0 = arith.constant 0 : i32
    %c0_i32_1 = arith.constant 0 : i32
    return %c0_i32, %c0_i32_0 : i32, i32
  }
  func.func @transform_12(%arg0: i32) -> (i32, i32) {
    %c0_i32 = arith.constant 0 : i32
    %c0_i32_0 = arith.constant 0 : i32
    %c0_i32_1 = arith.constant 0 : i32
    return %c0_i32, %c0_i32_0 : i32, i32
  }
  func.func @transform_13(%arg0: i32) -> (i32, i32) {
    %c0_i32 = arith.constant 0 : i32
    %c0_i32_0 = arith.constant 0 : i32
    %c0_i32_1 = arith.constant 0 : i32
    return %c0_i32, %c0_i32_0 : i32, i32
  }
  func.func @transform_14(%arg0: i32) -> (i32, i32) {
    %c0_i32 = arith.constant 0 : i32
    %c0_i32_0 = arith.constant 0 : i32
    %c0_i32_1 = arith.constant 0 : i32
    return %c0_i32, %c0_i32_0 : i32, i32
  }
  func.func @transform_15(%arg0: i32) -> (i32, i32) {
    %c0_i32 = arith.constant 0 : i32
    %c0_i32_0 = arith.constant 0 : i32
    %c0_i32_1 = arith.constant 0 : i32
    return %c0_i32, %c0_i32_0 : i32, i32
  }
  func.func @transform_16(%arg0: i32) -> (i32, i32) {
    %c0_i32 = arith.constant 0 : i32
    %c0_i32_0 = arith.constant 0 : i32
    %c0_i32_1 = arith.constant 0 : i32
    return %c0_i32, %c0_i32_0 : i32, i32
  }
  func.func @transform_17(%arg0: i32) -> (i32, i32) {
    %c0_i32 = arith.constant 0 : i32
    %c0_i32_0 = arith.constant 0 : i32
    %c0_i32_1 = arith.constant 0 : i32
    return %c0_i32, %c0_i32_0 : i32, i32
  }
  func.func @transform_18(%arg0: i32) -> (i32, i32) {
    %c0_i32 = arith.constant 0 : i32
    %c0_i32_0 = arith.constant 0 : i32
    %c0_i32_1 = arith.constant 0 : i32
    return %c0_i32, %c0_i32_0 : i32, i32
  }
  func.func @transform_19(%arg0: i32) -> (i32, i32) {
    %c0_i32 = arith.constant 0 : i32
    %c0_i32_0 = arith.constant 0 : i32
    %c0_i32_1 = arith.constant 0 : i32
    return %c0_i32, %c0_i32_0 : i32, i32
  }
  func.func @transform_20(%arg0: i32) -> (i32, i32) {
    %c0_i32 = arith.constant 0 : i32
    %c0_i32_0 = arith.constant 0 : i32
    %c0_i32_1 = arith.constant 0 : i32
    return %c0_i32, %c0_i32_0 : i32, i32
  }
  func.func @transform_21(%arg0: i32) -> (i32, i32) {
    %c0_i32 = arith.constant 0 : i32
    %c0_i32_0 = arith.constant 0 : i32
    %c0_i32_1 = arith.constant 0 : i32
    return %c0_i32, %c0_i32_0 : i32, i32
  }
  func.func @transform_22(%arg0: i32) -> (i32, i32) {
    %c0_i32 = arith.constant 0 : i32
    %c0_i32_0 = arith.constant 0 : i32
    %c0_i32_1 = arith.constant 0 : i32
    return %c0_i32, %c0_i32_0 : i32, i32
  }
  func.func @transform_23(%arg0: i32) -> (i32, i32) {
    %c0_i32 = arith.constant 0 : i32
    %c0_i32_0 = arith.constant 0 : i32
    %c0_i32_1 = arith.constant 0 : i32
    return %c0_i32, %c0_i32_0 : i32, i32
  }
  func.func @transform_24(%arg0: i32) -> (i32, i32) {
    %c0_i32 = arith.constant 0 : i32
    %c0_i32_0 = arith.constant 0 : i32
    %c0_i32_1 = arith.constant 0 : i32
    return %c0_i32, %c0_i32_0 : i32, i32
  }
  func.func @transform_25(%arg0: i32) -> (i32, i32, i32) {
    %c0_i32 = arith.constant 0 : i32
    %c0_i32_0 = arith.constant 0 : i32
    %c0_i32_1 = arith.constant 0 : i32
    %c0_i32_2 = arith.constant 0 : i32
    return %c0_i32, %c0_i32_0, %c0_i32_1 : i32, i32, i32
  }
  func.func @transform_26(%arg0: i32) -> (i32, i32) {
    %c0_i32 = arith.constant 0 : i32
    %c0_i32_0 = arith.constant 0 : i32
    %c0_i32_1 = arith.constant 0 : i32
    return %c0_i32, %c0_i32_0 : i32, i32
  }
  func.func @transform_27(%arg0: i32) -> (i32, i32) {
    %c0_i32 = arith.constant 0 : i32
    %c0_i32_0 = arith.constant 0 : i32
    %c0_i32_1 = arith.constant 0 : i32
    return %c0_i32, %c0_i32_0 : i32, i32
  }
  func.func @transform_28(%arg0: i32) -> (i32, i32) {
    %c0_i32 = arith.constant 0 : i32
    %c0_i32_0 = arith.constant 0 : i32
    %c0_i32_1 = arith.constant 0 : i32
    return %c0_i32, %c0_i32_0 : i32, i32
  }
  func.func @transform_29(%arg0: i32) -> (i32, i32) {
    %c0_i32 = arith.constant 0 : i32
    %c0_i32_0 = arith.constant 0 : i32
    %c0_i32_1 = arith.constant 0 : i32
    return %c0_i32, %c0_i32_0 : i32, i32
  }
  func.func @transform_30(%arg0: i32) -> (i32, i32) {
    %c0_i32 = arith.constant 0 : i32
    %c0_i32_0 = arith.constant 0 : i32
    %c0_i32_1 = arith.constant 0 : i32
    return %c0_i32, %c0_i32_0 : i32, i32
  }
  func.func @transform_31(%arg0: i32) -> (i32, i32) {
    %c0_i32 = arith.constant 0 : i32
    %c0_i32_0 = arith.constant 0 : i32
    %c0_i32_1 = arith.constant 0 : i32
    return %c0_i32, %c0_i32_0 : i32, i32
  }
  func.func @transform_32(%arg0: i32) -> (i32, i32) {
    %c0_i32 = arith.constant 0 : i32
    %c0_i32_0 = arith.constant 0 : i32
    %c0_i32_1 = arith.constant 0 : i32
    return %c0_i32, %c0_i32_0 : i32, i32
  }
  func.func @transform_33(%arg0: i32) -> (i32, i32) {
    %c0_i32 = arith.constant 0 : i32
    %c0_i32_0 = arith.constant 0 : i32
    %c0_i32_1 = arith.constant 0 : i32
    return %c0_i32, %c0_i32_0 : i32, i32
  }
  func.func @transform_34(%arg0: i32) -> (i32, i32) {
    %c0_i32 = arith.constant 0 : i32
    %c0_i32_0 = arith.constant 0 : i32
    %c0_i32_1 = arith.constant 0 : i32
    return %c0_i32, %c0_i32_0 : i32, i32
  }
  func.func @transform_35(%arg0: i32) -> (i32, i32) {
    %c0_i32 = arith.constant 0 : i32
    %c0_i32_0 = arith.constant 0 : i32
    %c0_i32_1 = arith.constant 0 : i32
    return %c0_i32, %c0_i32_0 : i32, i32
  }
  func.func @transform_36(%arg0: i32) -> (i32, i32) {
    %c0_i32 = arith.constant 0 : i32
    %c0_i32_0 = arith.constant 0 : i32
    %c0_i32_1 = arith.constant 0 : i32
    return %c0_i32, %c0_i32_0 : i32, i32
  }
  func.func @transform_37(%arg0: i32) -> (i32, i32) {
    %c0_i32 = arith.constant 0 : i32
    %c0_i32_0 = arith.constant 0 : i32
    %c0_i32_1 = arith.constant 0 : i32
    return %c0_i32, %c0_i32_0 : i32, i32
  }
  func.func @transform_38(%arg0: i32) -> (i32, i32) {
    %c0_i32 = arith.constant 0 : i32
    %c0_i32_0 = arith.constant 0 : i32
    %c0_i32_1 = arith.constant 0 : i32
    return %c0_i32, %c0_i32_0 : i32, i32
  }
  func.func @transform_39(%arg0: i32) -> (i32, i32) {
    %c0_i32 = arith.constant 0 : i32
    %c0_i32_0 = arith.constant 0 : i32
    %c0_i32_1 = arith.constant 0 : i32
    return %c0_i32, %c0_i32_0 : i32, i32
  }
  func.func @transform_40(%arg0: i32) -> (i32, i32, i32, i32) {
    %c0_i32 = arith.constant 0 : i32
    %c0_i32_0 = arith.constant 0 : i32
    %c0_i32_1 = arith.constant 0 : i32
    %c0_i32_2 = arith.constant 0 : i32
    return %arg0, %c0_i32, %c0_i32_0, %c0_i32_1 : i32, i32, i32, i32
  }
}

</mosaic_0001>

<llo_original>
// kernel: _lambda_.3
$region0: #{_lambda_.3}
  #allocation0 [shape = 'u32[]', space=smem, size = 0x4, offset = 0x4, fixed_abs, tag = 'smem constant byte address 0x4 - core index']
  #allocation1 [shape = 'u32[72,128]{1,0:T(1,128)}', space=vmem, size = 0x9000, scoped, tag = 'internal scratch']
  %s0 = inlined_call_operand.vmem [shape: bf16[2,512], index: 0, kind: input, shape index: {}]
  %s1 = inlined_call_operand.vmem [shape: bf16[512,1024], index: 1, kind: input, shape index: {}]
  %s2 = inlined_call_operand.vmem [shape: f32[1,1024], index: 2, kind: input, shape index: {}]
  %s3 = inlined_call_operand.vmem [shape: f32[1,1024], index: 3, kind: input, shape index: {}]
  %s4 = inlined_call_operand.vmem [shape: bf16[1024,256], index: 4, kind: input, shape index: {}]
  %s5 = inlined_call_operand.vmem [shape: f32[1,256], index: 5, kind: input, shape index: {}]
  %s6 = inlined_call_operand.vmem [shape: f32[1,256], index: 6, kind: input, shape index: {}]
  %s7 = inlined_call_operand.vmem [shape: bf16[256,4], index: 7, kind: input, shape index: {}]
  %s8 = inlined_call_operand.vmem [shape: f32[1,4], index: 8, kind: input, shape index: {}]
  %s9 = inlined_call_operand.hbm [shape: f32[2,4], index: 9, kind: output, shape index: {}]
  %s10 = sld [smem:[#allocation0]]
  $region46: #{_lambda_.3} parent=0
    _
  %s12 = ssub.s32 1, %s10
  %s13 = scalar_select 0, %s12, %s10
  $region1: #{_lambda_.3} parent=0
    #allocation2 [shape = 'u8[1024]{0}', space=vmem, size = 0x400, scoped, tag = 'output window, operand 0, single buffered']
    #allocation3 [shape = 's32[1]{0}', space=sflag, size = 0x4, scoped, tag = 'scoped memory for _lambda_.3']
    %14 = vsyncpa [#allocation3], 0
    // Predicated region
    $region2: #{_lambda_.3} parent=1 // pred_check
      _
    $region3: #{_lambda_.3} parent=1 // pred_check_branch
      %16 = sbr.rel (0) target = $region5
    $region4: #{_lambda_.3} parent=1 // pred_region
      _
    $region5: #{_lambda_.3} parent=1 // pred_fallthru
      _
    // Predicated region
    $region6: #{_lambda_.3} parent=1 // pred_check
      _
    $region7: #{_lambda_.3} parent=1 // pred_check_branch
      %18 = sbr.rel (0) target = $region9
    $region8: #{_lambda_.3} parent=1 // pred_region
      _
    $region9: #{_lambda_.3} parent=1 // pred_fallthru
      _
    // Predicated region
    $region10: #{_lambda_.3} parent=1 // pred_check
      _
    $region11: #{_lambda_.3} parent=1 // pred_check_branch
      %20 = sbr.rel (0) target = $region13
    $region12: #{_lambda_.3} parent=1 // pred_region
      _
    $region13: #{_lambda_.3} parent=1 // pred_fallthru
      _
    // Predicated region
    $region14: #{_lambda_.3} parent=1 // pred_check
      _
    $region15: #{_lambda_.3} parent=1 // pred_check_branch
      %22 = sbr.rel (0) target = $region17
    $region16: #{_lambda_.3} parent=1 // pred_region
      _
    $region17: #{_lambda_.3} parent=1 // pred_fallthru
      _
    // Predicated region
    $region18: #{_lambda_.3} parent=1 // pred_check
      _
    $region19: #{_lambda_.3} parent=1 // pred_check_branch
      %24 = sbr.rel (0) target = $region21
    $region20: #{_lambda_.3} parent=1 // pred_region
      _
    $region21: #{_lambda_.3} parent=1 // pred_fallthru
      _
    // Predicated region
    $region22: #{_lambda_.3} parent=1 // pred_check
      _
    $region23: #{_lambda_.3} parent=1 // pred_check_branch
      %26 = sbr.rel (0) target = $region25
    $region24: #{_lambda_.3} parent=1 // pred_region
      _
    $region25: #{_lambda_.3} parent=1 // pred_fallthru
      _
    // Predicated region
    $region26: #{_lambda_.3} parent=1 // pred_check
      _
    $region27: #{_lambda_.3} parent=1 // pred_check_branch
      %28 = sbr.rel (0) target = $region29
    $region28: #{_lambda_.3} parent=1 // pred_region
      _
    $region29: #{_lambda_.3} parent=1 // pred_fallthru
      _
    // Predicated region
    $region30: #{_lambda_.3} parent=1 // pred_check
      _
    $region31: #{_lambda_.3} parent=1 // pred_check_branch
      %30 = sbr.rel (0) target = $region33
    $region32: #{_lambda_.3} parent=1 // pred_region
      _
    $region33: #{_lambda_.3} parent=1 // pred_fallthru
      _
    // Predicated region
    $region34: #{_lambda_.3} parent=1 // pred_check
      _
    $region35: #{_lambda_.3} parent=1 // pred_check_branch
      %32 = sbr.rel (0) target = $region37
    $region36: #{_lambda_.3} parent=1 // pred_region
      _
    $region37: #{_lambda_.3} parent=1 // pred_fallthru
      _
    %v33 = vld [vmem:[%s0] sm:$0xf]
    %v34 = vld [vmem:[%s1] sm:$0xff]
    %v35 = vld [vmem:[%s1 + $0x8] sm:$0xff]
    %v36 = vld [vmem:[%s1 + $0x10] sm:$0xff]
    %v37 = vld [vmem:[%s1 + $0x18] sm:$0xff]
    %v38 = vld [vmem:[%s1 + $0x20] sm:$0xff]
    %v39 = vld [vmem:[%s1 + $0x28] sm:$0xff]
    %v40 = vld [vmem:[%s1 + $0x30] sm:$0xff]
    %v41 = vld [vmem:[%s1 + $0x38] sm:$0xff]
    %v42 = vld [vmem:[%s1 + $0x40] sm:$0xff]
    %v43 = vld [vmem:[%s1 + $0x48] sm:$0xff]
    %v44 = vld [vmem:[%s1 + $0x50] sm:$0xff]
    %v45 = vld [vmem:[%s1 + $0x58] sm:$0xff]
    %v46 = vld [vmem:[%s1 + $0x60] sm:$0xff]
    %v47 = vld [vmem:[%s1 + $0x68] sm:$0xff]
    %v48 = vld [vmem:[%s1 + $0x70] sm:$0xff]
    %v49 = vld [vmem:[%s1 + $0x78] sm:$0xff]
    %v50 = vld [vmem:[%s1 + $0x80] sm:$0xff]
    %v51 = vld [vmem:[%s1 + $0x88] sm:$0xff]
    %v52 = vld [vmem:[%s1 + $0x90] sm:$0xff]
    %v53 = vld [vmem:[%s1 + $0x98] sm:$0xff]
    %v54 = vld [vmem:[%s1 + $0xa0] sm:$0xff]
    %v55 = vld [vmem:[%s1 + $0xa8] sm:$0xff]
    %v56 = vld [vmem:[%s1 + $0xb0] sm:$0xff]
    %v57 = vld [vmem:[%s1 + $0xb8] sm:$0xff]
    %v58 = vld [vmem:[%s1 + $0xc0] sm:$0xff]
    %v59 = vld [vmem:[%s1 + $0xc8] sm:$0xff]
    %v60 = vld [vmem:[%s1 + $0xd0] sm:$0xff]
    %v61 = vld [vmem:[%s1 + $0xd8] sm:$0xff]
    %v62 = vld [vmem:[%s1 + $0xe0] sm:$0xff]
    %v63 = vld [vmem:[%s1 + $0xe8] sm:$0xff]
    %v64 = vld [vmem:[%s1 + $0xf0] sm:$0xff]
    %v65 = vld [vmem:[%s1 + $0xf8] sm:$0xff]
    %v66 = vld [vmem:[%s1 + $0x100] sm:$0xff]
    %v67 = vld [vmem:[%s1 + $0x108] sm:$0xff]
    %v68 = vld [vmem:[%s1 + $0x110] sm:$0xff]
    %v69 = vld [vmem:[%s1 + $0x118] sm:$0xff]
    %v70 = vld [vmem:[%s1 + $0x120] sm:$0xff]
    %v71 = vld [vmem:[%s1 + $0x128] sm:$0xff]
    %v72 = vld [vmem:[%s1 + $0x130] sm:$0xff]
    %v73 = vld [vmem:[%s1 + $0x138] sm:$0xff]
    %v74 = vld [vmem:[%s1 + $0x140] sm:$0xff]
    %v75 = vld [vmem:[%s1 + $0x148] sm:$0xff]
    %v76 = vld [vmem:[%s1 + $0x150] sm:$0xff]
    %v77 = vld [vmem:[%s1 + $0x158] sm:$0xff]
    %v78 = vld [vmem:[%s1 + $0x160] sm:$0xff]
    %v79 = vld [vmem:[%s1 + $0x168] sm:$0xff]
    %v80 = vld [vmem:[%s1 + $0x170] sm:$0xff]
    %v81 = vld [vmem:[%s1 + $0x178] sm:$0xff]
    %v82 = vld [vmem:[%s1 + $0x180] sm:$0xff]
    %v83 = vld [vmem:[%s1 + $0x188] sm:$0xff]
    %v84 = vld [vmem:[%s1 + $0x190] sm:$0xff]
    %v85 = vld [vmem:[%s1 + $0x198] sm:$0xff]
    %v86 = vld [vmem:[%s1 + $0x1a0] sm:$0xff]
    %v87 = vld [vmem:[%s1 + $0x1a8] sm:$0xff]
    %v88 = vld [vmem:[%s1 + $0x1b0] sm:$0xff]
    %v89 = vld [vmem:[%s1 + $0x1b8] sm:$0xff]
    %v90 = vld [vmem:[%s1 + $0x1c0] sm:$0xff]
    %v91 = vld [vmem:[%s1 + $0x1c8] sm:$0xff]
    %v92 = vld [vmem:[%s1 + $0x1d0] sm:$0xff]
    %v93 = vld [vmem:[%s1 + $0x1d8] sm:$0xff]
    %v94 = vld [vmem:[%s1 + $0x1e0] sm:$0xff]
    %v95 = vld [vmem:[%s1 + $0x1e8] sm:$0xff]
    %v96 = vld [vmem:[%s1 + $0x1f0] sm:$0xff]
    %v97 = vld [vmem:[%s1 + $0x1f8] sm:$0xff]
    %v98 = vld [vmem:[%s1 + $0x200] sm:$0xff]
    %v99 = vld [vmem:[%s1 + $0x208] sm:$0xff]
    %v100 = vld [vmem:[%s1 + $0x210] sm:$0xff]
    %v101 = vld [vmem:[%s1 + $0x218] sm:$0xff]
    %v102 = vld [vmem:[%s1 + $0x220] sm:$0xff]
    %v103 = vld [vmem:[%s1 + $0x228] sm:$0xff]
    %v104 = vld [vmem:[%s1 + $0x230] sm:$0xff]
    %v105 = vld [vmem:[%s1 + $0x238] sm:$0xff]
    %v106 = vld [vmem:[%s1 + $0x240] sm:$0xff]
    %v107 = vld [vmem:[%s1 + $0x248] sm:$0xff]
    %v108 = vld [vmem:[%s1 + $0x250] sm:$0xff]
    %v109 = vld [vmem:[%s1 + $0x258] sm:$0xff]
    %v110 = vld [vmem:[%s1 + $0x260] sm:$0xff]
    %v111 = vld [vmem:[%s1 + $0x268] sm:$0xff]
    %v112 = vld [vmem:[%s1 + $0x270] sm:$0xff]
    %v113 = vld [vmem:[%s1 + $0x278] sm:$0xff]
    %v114 = vld [vmem:[%s1 + $0x280] sm:$0xff]
    %v115 = vld [vmem:[%s1 + $0x288] sm:$0xff]
    %v116 = vld [vmem:[%s1 + $0x290] sm:$0xff]
    %v117 = vld [vmem:[%s1 + $0x298] sm:$0xff]
    %v118 = vld [vmem:[%s1 + $0x2a0] sm:$0xff]
    %v119 = vld [vmem:[%s1 + $0x2a8] sm:$0xff]
    %v120 = vld [vmem:[%s1 + $0x2b0] sm:$0xff]
    %v121 = vld [vmem:[%s1 + $0x2b8] sm:$0xff]
    %v122 = vld [vmem:[%s1 + $0x2c0] sm:$0xff]
    %v123 = vld [vmem:[%s1 + $0x2c8] sm:$0xff]
    %v124 = vld [vmem:[%s1 + $0x2d0] sm:$0xff]
    %v125 = vld [vmem:[%s1 + $0x2d8] sm:$0xff]
    %v126 = vld [vmem:[%s1 + $0x2e0] sm:$0xff]
    %v127 = vld [vmem:[%s1 + $0x2e8] sm:$0xff]
    %v128 = vld [vmem:[%s1 + $0x2f0] sm:$0xff]
    %v129 = vld [vmem:[%s1 + $0x2f8] sm:$0xff]
    %v130 = vld [vmem:[%s1 + $0x300] sm:$0xff]
    %v131 = vld [vmem:[%s1 + $0x308] sm:$0xff]
    %v132 = vld [vmem:[%s1 + $0x310] sm:$0xff]
    %v133 = vld [vmem:[%s1 + $0x318] sm:$0xff]
    %v134 = vld [vmem:[%s1 + $0x320] sm:$0xff]
    %v135 = vld [vmem:[%s1 + $0x328] sm:$0xff]
    %v136 = vld [vmem:[%s1 + $0x330] sm:$0xff]
    %v137 = vld [vmem:[%s1 + $0x338] sm:$0xff]
    %v138 = vld [vmem:[%s1 + $0x340] sm:$0xff]
    %v139 = vld [vmem:[%s1 + $0x348] sm:$0xff]
    %v140 = vld [vmem:[%s1 + $0x350] sm:$0xff]
    %v141 = vld [vmem:[%s1 + $0x358] sm:$0xff]
    %v142 = vld [vmem:[%s1 + $0x360] sm:$0xff]
    %v143 = vld [vmem:[%s1 + $0x368] sm:$0xff]
    %v144 = vld [vmem:[%s1 + $0x370] sm:$0xff]
    %v145 = vld [vmem:[%s1 + $0x378] sm:$0xff]
    %v146 = vld [vmem:[%s1 + $0x380] sm:$0xff]
    %v147 = vld [vmem:[%s1 + $0x388] sm:$0xff]
    %v148 = vld [vmem:[%s1 + $0x390] sm:$0xff]
    %v149 = vld [vmem:[%s1 + $0x398] sm:$0xff]
    %v150 = vld [vmem:[%s1 + $0x3a0] sm:$0xff]
    %v151 = vld [vmem:[%s1 + $0x3a8] sm:$0xff]
    %v152 = vld [vmem:[%s1 + $0x3b0] sm:$0xff]
    %v153 = vld [vmem:[%s1 + $0x3b8] sm:$0xff]
    %v154 = vld [vmem:[%s1 + $0x3c0] sm:$0xff]
    %v155 = vld [vmem:[%s1 + $0x3c8] sm:$0xff]
    %v156 = vld [vmem:[%s1 + $0x3d0] sm:$0xff]
    %v157 = vld [vmem:[%s1 + $0x3d8] sm:$0xff]
    %v158 = vld [vmem:[%s1 + $0x3e0] sm:$0xff]
    %v159 = vld [vmem:[%s1 + $0x3e8] sm:$0xff]
    %v160 = vld [vmem:[%s1 + $0x3f0] sm:$0xff]
    %v161 = vld [vmem:[%s1 + $0x3f8] sm:$0xff]
    %v162 = vld [vmem:[%s1 + $0x400] sm:$0xff]
    %v163 = vld [vmem:[%s1 + $0x408] sm:$0xff]
    %v164 = vld [vmem:[%s1 + $0x410] sm:$0xff]
    %v165 = vld [vmem:[%s1 + $0x418] sm:$0xff]
    %v166 = vld [vmem:[%s1 + $0x420] sm:$0xff]
    %v167 = vld [vmem:[%s1 + $0x428] sm:$0xff]
    %v168 = vld [vmem:[%s1 + $0x430] sm:$0xff]
    %v169 = vld [vmem:[%s1 + $0x438] sm:$0xff]
    %v170 = vld [vmem:[%s1 + $0x440] sm:$0xff]
    %v171 = vld [vmem:[%s1 + $0x448] sm:$0xff]
    %v172 = vld [vmem:[%s1 + $0x450] sm:$0xff]
    %v173 = vld [vmem:[%s1 + $0x458] sm:$0xff]
    %v174 = vld [vmem:[%s1 + $0x460] sm:$0xff]
    %v175 = vld [vmem:[%s1 + $0x468] sm:$0xff]
    %v176 = vld [vmem:[%s1 + $0x470] sm:$0xff]
    %v177 = vld [vmem:[%s1 + $0x478] sm:$0xff]
    %v178 = vld [vmem:[%s1 + $0x480] sm:$0xff]
    %v179 = vld [vmem:[%s1 + $0x488] sm:$0xff]
    %v180 = vld [vmem:[%s1 + $0x490] sm:$0xff]
    %v181 = vld [vmem:[%s1 + $0x498] sm:$0xff]
    %v182 = vld [vmem:[%s1 + $0x4a0] sm:$0xff]
    %v183 = vld [vmem:[%s1 + $0x4a8] sm:$0xff]
    %v184 = vld [vmem:[%s1 + $0x4b0] sm:$0xff]
    %v185 = vld [vmem:[%s1 + $0x4b8] sm:$0xff]
    %v186 = vld [vmem:[%s1 + $0x4c0] sm:$0xff]
    %v187 = vld [vmem:[%s1 + $0x4c8] sm:$0xff]
    %v188 = vld [vmem:[%s1 + $0x4d0] sm:$0xff]
    %v189 = vld [vmem:[%s1 + $0x4d8] sm:$0xff]
    %v190 = vld [vmem:[%s1 + $0x4e0] sm:$0xff]
    %v191 = vld [vmem:[%s1 + $0x4e8] sm:$0xff]
    %v192 = vld [vmem:[%s1 + $0x4f0] sm:$0xff]
    %v193 = vld [vmem:[%s1 + $0x4f8] sm:$0xff]
    %v194 = vld [vmem:[%s1 + $0x500] sm:$0xff]
    %v195 = vld [vmem:[%s1 + $0x508] sm:$0xff]
    %v196 = vld [vmem:[%s1 + $0x510] sm:$0xff]
    %v197 = vld [vmem:[%s1 + $0x518] sm:$0xff]
    %v198 = vld [vmem:[%s1 + $0x520] sm:$0xff]
    %v199 = vld [vmem:[%s1 + $0x528] sm:$0xff]
    %v200 = vld [vmem:[%s1 + $0x530] sm:$0xff]
    %v201 = vld [vmem:[%s1 + $0x538] sm:$0xff]
    %v202 = vld [vmem:[%s1 + $0x540] sm:$0xff]
    %v203 = vld [vmem:[%s1 + $0x548] sm:$0xff]
    %v204 = vld [vmem:[%s1 + $0x550] sm:$0xff]
    %v205 = vld [vmem:[%s1 + $0x558] sm:$0xff]
    %v206 = vld [vmem:[%s1 + $0x560] sm:$0xff]
    %v207 = vld [vmem:[%s1 + $0x568] sm:$0xff]
    %v208 = vld [vmem:[%s1 + $0x570] sm:$0xff]
    %v209 = vld [vmem:[%s1 + $0x578] sm:$0xff]
    %v210 = vld [vmem:[%s1 + $0x580] sm:$0xff]
    %v211 = vld [vmem:[%s1 + $0x588] sm:$0xff]
    %v212 = vld [vmem:[%s1 + $0x590] sm:$0xff]
    %v213 = vld [vmem:[%s1 + $0x598] sm:$0xff]
    %v214 = vld [vmem:[%s1 + $0x5a0] sm:$0xff]
    %v215 = vld [vmem:[%s1 + $0x5a8] sm:$0xff]
    %v216 = vld [vmem:[%s1 + $0x5b0] sm:$0xff]
    %v217 = vld [vmem:[%s1 + $0x5b8] sm:$0xff]
    %v218 = vld [vmem:[%s1 + $0x5c0] sm:$0xff]
    %v219 = vld [vmem:[%s1 + $0x5c8] sm:$0xff]
    %v220 = vld [vmem:[%s1 + $0x5d0] sm:$0xff]
    %v221 = vld [vmem:[%s1 + $0x5d8] sm:$0xff]
    %v222 = vld [vmem:[%s1 + $0x5e0] sm:$0xff]
    %v223 = vld [vmem:[%s1 + $0x5e8] sm:$0xff]
    %v224 = vld [vmem:[%s1 + $0x5f0] sm:$0xff]
    %v225 = vld [vmem:[%s1 + $0x5f8] sm:$0xff]
    %v226 = vld [vmem:[%s1 + $0x600] sm:$0xff]
    %v227 = vld [vmem:[%s1 + $0x608] sm:$0xff]
    %v228 = vld [vmem:[%s1 + $0x610] sm:$0xff]
    %v229 = vld [vmem:[%s1 + $0x618] sm:$0xff]
    %v230 = vld [vmem:[%s1 + $0x620] sm:$0xff]
    %v231 = vld [vmem:[%s1 + $0x628] sm:$0xff]
    %v232 = vld [vmem:[%s1 + $0x630] sm:$0xff]
    %v233 = vld [vmem:[%s1 + $0x638] sm:$0xff]
    %v234 = vld [vmem:[%s1 + $0x640] sm:$0xff]
    %v235 = vld [vmem:[%s1 + $0x648] sm:$0xff]
    %v236 = vld [vmem:[%s1 + $0x650] sm:$0xff]
    %v237 = vld [vmem:[%s1 + $0x658] sm:$0xff]
    %v238 = vld [vmem:[%s1 + $0x660] sm:$0xff]
    %v239 = vld [vmem:[%s1 + $0x668] sm:$0xff]
    %v240 = vld [vmem:[%s1 + $0x670] sm:$0xff]
    %v241 = vld [vmem:[%s1 + $0x678] sm:$0xff]
    %v242 = vld [vmem:[%s1 + $0x680] sm:$0xff]
    %v243 = vld [vmem:[%s1 + $0x688] sm:$0xff]
    %v244 = vld [vmem:[%s1 + $0x690] sm:$0xff]
    %v245 = vld [vmem:[%s1 + $0x698] sm:$0xff]
    %v246 = vld [vmem:[%s1 + $0x6a0] sm:$0xff]
    %v247 = vld [vmem:[%s1 + $0x6a8] sm:$0xff]
    %v248 = vld [vmem:[%s1 + $0x6b0] sm:$0xff]
    %v249 = vld [vmem:[%s1 + $0x6b8] sm:$0xff]
    %v250 = vld [vmem:[%s1 + $0x6c0] sm:$0xff]
    %v251 = vld [vmem:[%s1 + $0x6c8] sm:$0xff]
    %v252 = vld [vmem:[%s1 + $0x6d0] sm:$0xff]
    %v253 = vld [vmem:[%s1 + $0x6d8] sm:$0xff]
    %v254 = vld [vmem:[%s1 + $0x6e0] sm:$0xff]
    %v255 = vld [vmem:[%s1 + $0x6e8] sm:$0xff]
    %v256 = vld [vmem:[%s1 + $0x6f0] sm:$0xff]
    %v257 = vld [vmem:[%s1 + $0x6f8] sm:$0xff]
    %v258 = vld [vmem:[%s1 + $0x700] sm:$0xff]
    %v259 = vld [vmem:[%s1 + $0x708] sm:$0xff]
    %v260 = vld [vmem:[%s1 + $0x710] sm:$0xff]
    %v261 = vld [vmem:[%s1 + $0x718] sm:$0xff]
    %v262 = vld [vmem:[%s1 + $0x720] sm:$0xff]
    %v263 = vld [vmem:[%s1 + $0x728] sm:$0xff]
    %v264 = vld [vmem:[%s1 + $0x730] sm:$0xff]
    %v265 = vld [vmem:[%s1 + $0x738] sm:$0xff]
    %v266 = vld [vmem:[%s1 + $0x740] sm:$0xff]
    %v267 = vld [vmem:[%s1 + $0x748] sm:$0xff]
    %v268 = vld [vmem:[%s1 + $0x750] sm:$0xff]
    %v269 = vld [vmem:[%s1 + $0x758] sm:$0xff]
    %v270 = vld [vmem:[%s1 + $0x760] sm:$0xff]
    %v271 = vld [vmem:[%s1 + $0x768] sm:$0xff]
    %v272 = vld [vmem:[%s1 + $0x770] sm:$0xff]
    %v273 = vld [vmem:[%s1 + $0x778] sm:$0xff]
    %v274 = vld [vmem:[%s1 + $0x780] sm:$0xff]
    %v275 = vld [vmem:[%s1 + $0x788] sm:$0xff]
    %v276 = vld [vmem:[%s1 + $0x790] sm:$0xff]
    %v277 = vld [vmem:[%s1 + $0x798] sm:$0xff]
    %v278 = vld [vmem:[%s1 + $0x7a0] sm:$0xff]
    %v279 = vld [vmem:[%s1 + $0x7a8] sm:$0xff]
    %v280 = vld [vmem:[%s1 + $0x7b0] sm:$0xff]
    %v281 = vld [vmem:[%s1 + $0x7b8] sm:$0xff]
    %v282 = vld [vmem:[%s1 + $0x7c0] sm:$0xff]
    %v283 = vld [vmem:[%s1 + $0x7c8] sm:$0xff]
    %v284 = vld [vmem:[%s1 + $0x7d0] sm:$0xff]
    %v285 = vld [vmem:[%s1 + $0x7d8] sm:$0xff]
    %v286 = vld [vmem:[%s1 + $0x7e0] sm:$0xff]
    %v287 = vld [vmem:[%s1 + $0x7e8] sm:$0xff]
    %v288 = vld [vmem:[%s1 + $0x7f0] sm:$0xff]
    %v289 = vld [vmem:[%s1 + $0x7f8] sm:$0xff]
    %v290 = vld [vmem:[%s2] sm:$0xff]
    %v292 = vperm.slane %v290, 0
    %v293 = vperm.slane %v290, 1
    %v294 = vperm.slane %v290, 2
    %v295 = vperm.slane %v290, 3
    %v296 = vperm.slane %v290, 4
    %v297 = vperm.slane %v290, 5
    %v298 = vperm.slane %v290, 6
    %v299 = vperm.slane %v290, 7
    %309 = vst [vmem:[#allocation1] ss:$9 sm:$0xff] %v33
    %v310 = vld [vmem:[#allocation1] sm:$0xff]
    %v311 = vld [vmem:[#allocation1 + $0x9] sm:$0xff]
    %v312 = vld [vmem:[#allocation1 + $0x12] sm:$0xff]
    %v313 = vld [vmem:[#allocation1 + $0x1b] sm:$0xff]
    %v574 = vunpack.c.l.b16 %v34
    %v575 = vunpack.c.h.b16 %v34
    %v576 = vunpack.c.l.b16 %v35
    %v577 = vunpack.c.h.b16 %v35
    %v578 = vunpack.c.l.b16 %v36
    %v579 = vunpack.c.h.b16 %v36
    %v580 = vunpack.c.l.b16 %v37
    %v581 = vunpack.c.h.b16 %v37
    %v582 = vunpack.c.l.b16 %v38
    %v583 = vunpack.c.h.b16 %v38
    %v584 = vunpack.c.l.b16 %v39
    %v585 = vunpack.c.h.b16 %v39
    %v586 = vunpack.c.l.b16 %v40
    %v587 = vunpack.c.h.b16 %v40
    %v588 = vunpack.c.l.b16 %v41
    %v589 = vunpack.c.h.b16 %v41
    %v590 = vunpack.c.l.b16 %v42
    %v591 = vunpack.c.h.b16 %v42
    %v592 = vunpack.c.l.b16 %v43
    %v593 = vunpack.c.h.b16 %v43
    %v594 = vunpack.c.l.b16 %v44
    %v595 = vunpack.c.h.b16 %v44
    %v596 = vunpack.c.l.b16 %v45
    %v597 = vunpack.c.h.b16 %v45
    %v598 = vunpack.c.l.b16 %v46
    %v599 = vunpack.c.h.b16 %v46
    %v600 = vunpack.c.l.b16 %v47
    %v601 = vunpack.c.h.b16 %v47
    %v602 = vunpack.c.l.b16 %v48
    %v603 = vunpack.c.h.b16 %v48
    %v604 = vunpack.c.l.b16 %v49
    %v605 = vunpack.c.h.b16 %v49
    %v606 = vunpack.c.l.b16 %v50
    %v607 = vunpack.c.h.b16 %v50
    %v608 = vunpack.c.l.b16 %v51
    %v609 = vunpack.c.h.b16 %v51
    %v610 = vunpack.c.l.b16 %v52
    %v611 = vunpack.c.h.b16 %v52
    %v612 = vunpack.c.l.b16 %v53
    %v613 = vunpack.c.h.b16 %v53
    %v614 = vunpack.c.l.b16 %v54
    %v615 = vunpack.c.h.b16 %v54
    %v616 = vunpack.c.l.b16 %v55
    %v617 = vunpack.c.h.b16 %v55
    %v618 = vunpack.c.l.b16 %v56
    %v619 = vunpack.c.h.b16 %v56
    %v620 = vunpack.c.l.b16 %v57
    %v621 = vunpack.c.h.b16 %v57
    %v622 = vunpack.c.l.b16 %v58
    %v623 = vunpack.c.h.b16 %v58
    %v624 = vunpack.c.l.b16 %v59
    %v625 = vunpack.c.h.b16 %v59
    %v626 = vunpack.c.l.b16 %v60
    %v627 = vunpack.c.h.b16 %v60
    %v628 = vunpack.c.l.b16 %v61
    %v629 = vunpack.c.h.b16 %v61
    %v630 = vunpack.c.l.b16 %v62
    %v631 = vunpack.c.h.b16 %v62
    %v632 = vunpack.c.l.b16 %v63
    %v633 = vunpack.c.h.b16 %v63
    %v634 = vunpack.c.l.b16 %v64
    %v635 = vunpack.c.h.b16 %v64
    %v636 = vunpack.c.l.b16 %v65
    %v637 = vunpack.c.h.b16 %v65
    %v638 = vunpack.c.l.b16 %v66
    %v639 = vunpack.c.h.b16 %v66
    %v640 = vunpack.c.l.b16 %v67
    %v641 = vunpack.c.h.b16 %v67
    %v642 = vunpack.c.l.b16 %v68
    %v643 = vunpack.c.h.b16 %v68
    %v644 = vunpack.c.l.b16 %v69
    %v645 = vunpack.c.h.b16 %v69
    %v646 = vunpack.c.l.b16 %v70
    %v647 = vunpack.c.h.b16 %v70
    %v648 = vunpack.c.l.b16 %v71
    %v649 = vunpack.c.h.b16 %v71
    %v650 = vunpack.c.l.b16 %v72
    %v651 = vunpack.c.h.b16 %v72
    %v652 = vunpack.c.l.b16 %v73
    %v653 = vunpack.c.h.b16 %v73
    %v654 = vunpack.c.l.b16 %v74
    %v655 = vunpack.c.h.b16 %v74
    %v656 = vunpack.c.l.b16 %v75
    %v657 = vunpack.c.h.b16 %v75
    %v658 = vunpack.c.l.b16 %v76
    %v659 = vunpack.c.h.b16 %v76
    %v660 = vunpack.c.l.b16 %v77
    %v661 = vunpack.c.h.b16 %v77
    %v662 = vunpack.c.l.b16 %v78
    %v663 = vunpack.c.h.b16 %v78
    %v664 = vunpack.c.l.b16 %v79
    %v665 = vunpack.c.h.b16 %v79
    %v666 = vunpack.c.l.b16 %v80
    %v667 = vunpack.c.h.b16 %v80
    %v668 = vunpack.c.l.b16 %v81
    %v669 = vunpack.c.h.b16 %v81
    %v670 = vunpack.c.l.b16 %v82
    %v671 = vunpack.c.h.b16 %v82
    %v672 = vunpack.c.l.b16 %v83
    %v673 = vunpack.c.h.b16 %v83
    %v674 = vunpack.c.l.b16 %v84
    %v675 = vunpack.c.h.b16 %v84
    %v676 = vunpack.c.l.b16 %v85
    %v677 = vunpack.c.h.b16 %v85
    %v678 = vunpack.c.l.b16 %v86
    %v679 = vunpack.c.h.b16 %v86
    %v680 = vunpack.c.l.b16 %v87
    %v681 = vunpack.c.h.b16 %v87
    %v682 = vunpack.c.l.b16 %v88
    %v683 = vunpack.c.h.b16 %v88
    %v684 = vunpack.c.l.b16 %v89
    %v685 = vunpack.c.h.b16 %v89
    %v686 = vunpack.c.l.b16 %v90
    %v687 = vunpack.c.h.b16 %v90
    %v688 = vunpack.c.l.b16 %v91
    %v689 = vunpack.c.h.b16 %v91
    %v690 = vunpack.c.l.b16 %v92
    %v691 = vunpack.c.h.b16 %v92
    %v692 = vunpack.c.l.b16 %v93
    %v693 = vunpack.c.h.b16 %v93
    %v694 = vunpack.c.l.b16 %v94
    %v695 = vunpack.c.h.b16 %v94
    %v696 = vunpack.c.l.b16 %v95
    %v697 = vunpack.c.h.b16 %v95
    %v698 = vunpack.c.l.b16 %v96
    %v699 = vunpack.c.h.b16 %v96
    %v700 = vunpack.c.l.b16 %v97
    %v701 = vunpack.c.h.b16 %v97
    %v702 = vunpack.c.l.b16 %v98
    %v703 = vunpack.c.h.b16 %v98
    %v704 = vunpack.c.l.b16 %v99
    %v705 = vunpack.c.h.b16 %v99
    %v706 = vunpack.c.l.b16 %v100
    %v707 = vunpack.c.h.b16 %v100
    %v708 = vunpack.c.l.b16 %v101
    %v709 = vunpack.c.h.b16 %v101
    %v710 = vunpack.c.l.b16 %v102
    %v711 = vunpack.c.h.b16 %v102
    %v712 = vunpack.c.l.b16 %v103
    %v713 = vunpack.c.h.b16 %v103
    %v714 = vunpack.c.l.b16 %v104
    %v715 = vunpack.c.h.b16 %v104
    %v716 = vunpack.c.l.b16 %v105
    %v717 = vunpack.c.h.b16 %v105
    %v718 = vunpack.c.l.b16 %v106
    %v719 = vunpack.c.h.b16 %v106
    %v720 = vunpack.c.l.b16 %v107
    %v721 = vunpack.c.h.b16 %v107
    %v722 = vunpack.c.l.b16 %v108
    %v723 = vunpack.c.h.b16 %v108
    %v724 = vunpack.c.l.b16 %v109
    %v725 = vunpack.c.h.b16 %v109
    %v726 = vunpack.c.l.b16 %v110
    %v727 = vunpack.c.h.b16 %v110
    %v728 = vunpack.c.l.b16 %v111
    %v729 = vunpack.c.h.b16 %v111
    %v730 = vunpack.c.l.b16 %v112
    %v731 = vunpack.c.h.b16 %v112
    %v732 = vunpack.c.l.b16 %v113
    %v733 = vunpack.c.h.b16 %v113
    %v734 = vunpack.c.l.b16 %v114
    %v735 = vunpack.c.h.b16 %v114
    %v736 = vunpack.c.l.b16 %v115
    %v737 = vunpack.c.h.b16 %v115
    %v738 = vunpack.c.l.b16 %v116
    %v739 = vunpack.c.h.b16 %v116
    %v740 = vunpack.c.l.b16 %v117
    %v741 = vunpack.c.h.b16 %v117
    %v742 = vunpack.c.l.b16 %v118
    %v743 = vunpack.c.h.b16 %v118
    %v744 = vunpack.c.l.b16 %v119
    %v745 = vunpack.c.h.b16 %v119
    %v746 = vunpack.c.l.b16 %v120
    %v747 = vunpack.c.h.b16 %v120
    %v748 = vunpack.c.l.b16 %v121
    %v749 = vunpack.c.h.b16 %v121
    %v750 = vunpack.c.l.b16 %v122
    %v751 = vunpack.c.h.b16 %v122
    %v752 = vunpack.c.l.b16 %v123
    %v753 = vunpack.c.h.b16 %v123
    %v754 = vunpack.c.l.b16 %v124
    %v755 = vunpack.c.h.b16 %v124
    %v756 = vunpack.c.l.b16 %v125
    %v757 = vunpack.c.h.b16 %v125
    %v758 = vunpack.c.l.b16 %v126
    %v759 = vunpack.c.h.b16 %v126
    %v760 = vunpack.c.l.b16 %v127
    %v761 = vunpack.c.h.b16 %v127
    %v762 = vunpack.c.l.b16 %v128
    %v763 = vunpack.c.h.b16 %v128
    %v764 = vunpack.c.l.b16 %v129
    %v765 = vunpack.c.h.b16 %v129
    %v766 = vunpack.c.l.b16 %v130
    %v767 = vunpack.c.h.b16 %v130
    %v768 = vunpack.c.l.b16 %v131
    %v769 = vunpack.c.h.b16 %v131
    %v770 = vunpack.c.l.b16 %v132
    %v771 = vunpack.c.h.b16 %v132
    %v772 = vunpack.c.l.b16 %v133
    %v773 = vunpack.c.h.b16 %v133
    %v774 = vunpack.c.l.b16 %v134
    %v775 = vunpack.c.h.b16 %v134
    %v776 = vunpack.c.l.b16 %v135
    %v777 = vunpack.c.h.b16 %v135
    %v778 = vunpack.c.l.b16 %v136
    %v779 = vunpack.c.h.b16 %v136
    %v780 = vunpack.c.l.b16 %v137
    %v781 = vunpack.c.h.b16 %v137
    %v782 = vunpack.c.l.b16 %v138
    %v783 = vunpack.c.h.b16 %v138
    %v784 = vunpack.c.l.b16 %v139
    %v785 = vunpack.c.h.b16 %v139
    %v786 = vunpack.c.l.b16 %v140
    %v787 = vunpack.c.h.b16 %v140
    %v788 = vunpack.c.l.b16 %v141
    %v789 = vunpack.c.h.b16 %v141
    %v790 = vunpack.c.l.b16 %v142
    %v791 = vunpack.c.h.b16 %v142
    %v792 = vunpack.c.l.b16 %v143
    %v793 = vunpack.c.h.b16 %v143
    %v794 = vunpack.c.l.b16 %v144
    %v795 = vunpack.c.h.b16 %v144
    %v796 = vunpack.c.l.b16 %v145
    %v797 = vunpack.c.h.b16 %v145
    %v798 = vunpack.c.l.b16 %v146
    %v799 = vunpack.c.h.b16 %v146
    %v800 = vunpack.c.l.b16 %v147
    %v801 = vunpack.c.h.b16 %v147
    %v802 = vunpack.c.l.b16 %v148
    %v803 = vunpack.c.h.b16 %v148
    %v804 = vunpack.c.l.b16 %v149
    %v805 = vunpack.c.h.b16 %v149
    %v806 = vunpack.c.l.b16 %v150
    %v807 = vunpack.c.h.b16 %v150
    %v808 = vunpack.c.l.b16 %v151
    %v809 = vunpack.c.h.b16 %v151
    %v810 = vunpack.c.l.b16 %v152
    %v811 = vunpack.c.h.b16 %v152
    %v812 = vunpack.c.l.b16 %v153
    %v813 = vunpack.c.h.b16 %v153
    %v814 = vunpack.c.l.b16 %v154
    %v815 = vunpack.c.h.b16 %v154
    %v816 = vunpack.c.l.b16 %v155
    %v817 = vunpack.c.h.b16 %v155
    %v818 = vunpack.c.l.b16 %v156
    %v819 = vunpack.c.h.b16 %v156
    %v820 = vunpack.c.l.b16 %v157
    %v821 = vunpack.c.h.b16 %v157
    %v822 = vunpack.c.l.b16 %v158
    %v823 = vunpack.c.h.b16 %v158
    %v824 = vunpack.c.l.b16 %v159
    %v825 = vunpack.c.h.b16 %v159
    %v826 = vunpack.c.l.b16 %v160
    %v827 = vunpack.c.h.b16 %v160
    %v828 = vunpack.c.l.b16 %v161
    %v829 = vunpack.c.h.b16 %v161
    %v830 = vunpack.c.l.b16 %v162
    %v831 = vunpack.c.h.b16 %v162
    %v832 = vunpack.c.l.b16 %v163
    %v833 = vunpack.c.h.b16 %v163
    %v834 = vunpack.c.l.b16 %v164
    %v835 = vunpack.c.h.b16 %v164
    %v836 = vunpack.c.l.b16 %v165
    %v837 = vunpack.c.h.b16 %v165
    %v838 = vunpack.c.l.b16 %v166
    %v839 = vunpack.c.h.b16 %v166
    %v840 = vunpack.c.l.b16 %v167
    %v841 = vunpack.c.h.b16 %v167
    %v842 = vunpack.c.l.b16 %v168
    %v843 = vunpack.c.h.b16 %v168
    %v844 = vunpack.c.l.b16 %v169
    %v845 = vunpack.c.h.b16 %v169
    %v846 = vunpack.c.l.b16 %v170
    %v847 = vunpack.c.h.b16 %v170
    %v848 = vunpack.c.l.b16 %v171
    %v849 = vunpack.c.h.b16 %v171
    %v850 = vunpack.c.l.b16 %v172
    %v851 = vunpack.c.h.b16 %v172
    %v852 = vunpack.c.l.b16 %v173
    %v853 = vunpack.c.h.b16 %v173
    %v854 = vunpack.c.l.b16 %v174
    %v855 = vunpack.c.h.b16 %v174
    %v856 = vunpack.c.l.b16 %v175
    %v857 = vunpack.c.h.b16 %v175
    %v858 = vunpack.c.l.b16 %v176
    %v859 = vunpack.c.h.b16 %v176
    %v860 = vunpack.c.l.b16 %v177
    %v861 = vunpack.c.h.b16 %v177
    %v862 = vunpack.c.l.b16 %v178
    %v863 = vunpack.c.h.b16 %v178
    %v864 = vunpack.c.l.b16 %v179
    %v865 = vunpack.c.h.b16 %v179
    %v866 = vunpack.c.l.b16 %v180
    %v867 = vunpack.c.h.b16 %v180
    %v868 = vunpack.c.l.b16 %v181
    %v869 = vunpack.c.h.b16 %v181
    %v870 = vunpack.c.l.b16 %v182
    %v871 = vunpack.c.h.b16 %v182
    %v872 = vunpack.c.l.b16 %v183
    %v873 = vunpack.c.h.b16 %v183
    %v874 = vunpack.c.l.b16 %v184
    %v875 = vunpack.c.h.b16 %v184
    %v876 = vunpack.c.l.b16 %v185
    %v877 = vunpack.c.h.b16 %v185
    %v878 = vunpack.c.l.b16 %v186
    %v879 = vunpack.c.h.b16 %v186
    %v880 = vunpack.c.l.b16 %v187
    %v881 = vunpack.c.h.b16 %v187
    %v882 = vunpack.c.l.b16 %v188
    %v883 = vunpack.c.h.b16 %v188
    %v884 = vunpack.c.l.b16 %v189
    %v885 = vunpack.c.h.b16 %v189
    %v886 = vunpack.c.l.b16 %v190
    %v887 = vunpack.c.h.b16 %v190
    %v888 = vunpack.c.l.b16 %v191
    %v889 = vunpack.c.h.b16 %v191
    %v890 = vunpack.c.l.b16 %v192
    %v891 = vunpack.c.h.b16 %v192
    %v892 = vunpack.c.l.b16 %v193
    %v893 = vunpack.c.h.b16 %v193
    %v894 = vunpack.c.l.b16 %v194
    %v895 = vunpack.c.h.b16 %v194
    %v896 = vunpack.c.l.b16 %v195
    %v897 = vunpack.c.h.b16 %v195
    %v898 = vunpack.c.l.b16 %v196
    %v899 = vunpack.c.h.b16 %v196
    %v900 = vunpack.c.l.b16 %v197
    %v901 = vunpack.c.h.b16 %v197
    %v902 = vunpack.c.l.b16 %v198
    %v903 = vunpack.c.h.b16 %v198
    %v904 = vunpack.c.l.b16 %v199
    %v905 = vunpack.c.h.b16 %v199
    %v906 = vunpack.c.l.b16 %v200
    %v907 = vunpack.c.h.b16 %v200
    %v908 = vunpack.c.l.b16 %v201
    %v909 = vunpack.c.h.b16 %v201
    %v910 = vunpack.c.l.b16 %v202
    %v911 = vunpack.c.h.b16 %v202
    %v912 = vunpack.c.l.b16 %v203
    %v913 = vunpack.c.h.b16 %v203
    %v914 = vunpack.c.l.b16 %v204
    %v915 = vunpack.c.h.b16 %v204
    %v916 = vunpack.c.l.b16 %v205
    %v917 = vunpack.c.h.b16 %v205
    %v918 = vunpack.c.l.b16 %v206
    %v919 = vunpack.c.h.b16 %v206
    %v920 = vunpack.c.l.b16 %v207
    %v921 = vunpack.c.h.b16 %v207
    %v922 = vunpack.c.l.b16 %v208
    %v923 = vunpack.c.h.b16 %v208
    %v924 = vunpack.c.l.b16 %v209
    %v925 = vunpack.c.h.b16 %v209
    %v926 = vunpack.c.l.b16 %v210
    %v927 = vunpack.c.h.b16 %v210
    %v928 = vunpack.c.l.b16 %v211
    %v929 = vunpack.c.h.b16 %v211
    %v930 = vunpack.c.l.b16 %v212
    %v931 = vunpack.c.h.b16 %v212
    %v932 = vunpack.c.l.b16 %v213
    %v933 = vunpack.c.h.b16 %v213
    %v934 = vunpack.c.l.b16 %v214
    %v935 = vunpack.c.h.b16 %v214
    %v936 = vunpack.c.l.b16 %v215
    %v937 = vunpack.c.h.b16 %v215
    %v938 = vunpack.c.l.b16 %v216
    %v939 = vunpack.c.h.b16 %v216
    %v940 = vunpack.c.l.b16 %v217
    %v941 = vunpack.c.h.b16 %v217
    %v942 = vunpack.c.l.b16 %v218
    %v943 = vunpack.c.h.b16 %v218
    %v944 = vunpack.c.l.b16 %v219
    %v945 = vunpack.c.h.b16 %v219
    %v946 = vunpack.c.l.b16 %v220
    %v947 = vunpack.c.h.b16 %v220
    %v948 = vunpack.c.l.b16 %v221
    %v949 = vunpack.c.h.b16 %v221
    %v950 = vunpack.c.l.b16 %v222
    %v951 = vunpack.c.h.b16 %v222
    %v952 = vunpack.c.l.b16 %v223
    %v953 = vunpack.c.h.b16 %v223
    %v954 = vunpack.c.l.b16 %v224
    %v955 = vunpack.c.h.b16 %v224
    %v956 = vunpack.c.l.b16 %v225
    %v957 = vunpack.c.h.b16 %v225
    %v958 = vunpack.c.l.b16 %v226
    %v959 = vunpack.c.h.b16 %v226
    %v960 = vunpack.c.l.b16 %v227
    %v961 = vunpack.c.h.b16 %v227
    %v962 = vunpack.c.l.b16 %v228
    %v963 = vunpack.c.h.b16 %v228
    %v964 = vunpack.c.l.b16 %v229
    %v965 = vunpack.c.h.b16 %v229
    %v966 = vunpack.c.l.b16 %v230
    %v967 = vunpack.c.h.b16 %v230
    %v968 = vunpack.c.l.b16 %v231
    %v969 = vunpack.c.h.b16 %v231
    %v970 = vunpack.c.l.b16 %v232
    %v971 = vunpack.c.h.b16 %v232
    %v972 = vunpack.c.l.b16 %v233
    %v973 = vunpack.c.h.b16 %v233
    %v974 = vunpack.c.l.b16 %v234
    %v975 = vunpack.c.h.b16 %v234
    %v976 = vunpack.c.l.b16 %v235
    %v977 = vunpack.c.h.b16 %v235
    %v978 = vunpack.c.l.b16 %v236
    %v979 = vunpack.c.h.b16 %v236
    %v980 = vunpack.c.l.b16 %v237
    %v981 = vunpack.c.h.b16 %v237
    %v982 = vunpack.c.l.b16 %v238
    %v983 = vunpack.c.h.b16 %v238
    %v984 = vunpack.c.l.b16 %v239
    %v985 = vunpack.c.h.b16 %v239
    %v986 = vunpack.c.l.b16 %v240
    %v987 = vunpack.c.h.b16 %v240
    %v988 = vunpack.c.l.b16 %v241
    %v989 = vunpack.c.h.b16 %v241
    %v990 = vunpack.c.l.b16 %v242
    %v991 = vunpack.c.h.b16 %v242
    %v992 = vunpack.c.l.b16 %v243
    %v993 = vunpack.c.h.b16 %v243
    %v994 = vunpack.c.l.b16 %v244
    %v995 = vunpack.c.h.b16 %v244
    %v996 = vunpack.c.l.b16 %v245
    %v997 = vunpack.c.h.b16 %v245
    %v998 = vunpack.c.l.b16 %v246
    %v999 = vunpack.c.h.b16 %v246
    %v1000 = vunpack.c.l.b16 %v247
    %v1001 = vunpack.c.h.b16 %v247
    %v1002 = vunpack.c.l.b16 %v248
    %v1003 = vunpack.c.h.b16 %v248
    %v1004 = vunpack.c.l.b16 %v249
    %v1005 = vunpack.c.h.b16 %v249
    %v1006 = vunpack.c.l.b16 %v250
    %v1007 = vunpack.c.h.b16 %v250
    %v1008 = vunpack.c.l.b16 %v251
    %v1009 = vunpack.c.h.b16 %v251
    %v1010 = vunpack.c.l.b16 %v252
    %v1011 = vunpack.c.h.b16 %v252
    %v1012 = vunpack.c.l.b16 %v253
    %v1013 = vunpack.c.h.b16 %v253
    %v1014 = vunpack.c.l.b16 %v254
    %v1015 = vunpack.c.h.b16 %v254
    %v1016 = vunpack.c.l.b16 %v255
    %v1017 = vunpack.c.h.b16 %v255
    %v1018 = vunpack.c.l.b16 %v256
    %v1019 = vunpack.c.h.b16 %v256
    %v1020 = vunpack.c.l.b16 %v257
    %v1021 = vunpack.c.h.b16 %v257
    %v1022 = vunpack.c.l.b16 %v258
    %v1023 = vunpack.c.h.b16 %v258
    %v1024 = vunpack.c.l.b16 %v259
    %v1025 = vunpack.c.h.b16 %v259
    %v1026 = vunpack.c.l.b16 %v260
    %v1027 = vunpack.c.h.b16 %v260
    %v1028 = vunpack.c.l.b16 %v261
    %v1029 = vunpack.c.h.b16 %v261
    %v1030 = vunpack.c.l.b16 %v262
    %v1031 = vunpack.c.h.b16 %v262
    %v1032 = vunpack.c.l.b16 %v263
    %v1033 = vunpack.c.h.b16 %v263
    %v1034 = vunpack.c.l.b16 %v264
    %v1035 = vunpack.c.h.b16 %v264
    %v1036 = vunpack.c.l.b16 %v265
    %v1037 = vunpack.c.h.b16 %v265
    %v1038 = vunpack.c.l.b16 %v266
    %v1039 = vunpack.c.h.b16 %v266
    %v1040 = vunpack.c.l.b16 %v267
    %v1041 = vunpack.c.h.b16 %v267
    %v1042 = vunpack.c.l.b16 %v268
    %v1043 = vunpack.c.h.b16 %v268
    %v1044 = vunpack.c.l.b16 %v269
    %v1045 = vunpack.c.h.b16 %v269
    %v1046 = vunpack.c.l.b16 %v270
    %v1047 = vunpack.c.h.b16 %v270
    %v1048 = vunpack.c.l.b16 %v271
    %v1049 = vunpack.c.h.b16 %v271
    %v1050 = vunpack.c.l.b16 %v272
    %v1051 = vunpack.c.h.b16 %v272
    %v1052 = vunpack.c.l.b16 %v273
    %v1053 = vunpack.c.h.b16 %v273
    %v1054 = vunpack.c.l.b16 %v274
    %v1055 = vunpack.c.h.b16 %v274
    %v1056 = vunpack.c.l.b16 %v275
    %v1057 = vunpack.c.h.b16 %v275
    %v1058 = vunpack.c.l.b16 %v276
    %v1059 = vunpack.c.h.b16 %v276
    %v1060 = vunpack.c.l.b16 %v277
    %v1061 = vunpack.c.h.b16 %v277
    %v1062 = vunpack.c.l.b16 %v278
    %v1063 = vunpack.c.h.b16 %v278
    %v1064 = vunpack.c.l.b16 %v279
    %v1065 = vunpack.c.h.b16 %v279
    %v1066 = vunpack.c.l.b16 %v280
    %v1067 = vunpack.c.h.b16 %v280
    %v1068 = vunpack.c.l.b16 %v281
    %v1069 = vunpack.c.h.b16 %v281
    %v1070 = vunpack.c.l.b16 %v282
    %v1071 = vunpack.c.h.b16 %v282
    %v1072 = vunpack.c.l.b16 %v283
    %v1073 = vunpack.c.h.b16 %v283
    %v1074 = vunpack.c.l.b16 %v284
    %v1075 = vunpack.c.h.b16 %v284
    %v1076 = vunpack.c.l.b16 %v285
    %v1077 = vunpack.c.h.b16 %v285
    %v1078 = vunpack.c.l.b16 %v286
    %v1079 = vunpack.c.h.b16 %v286
    %v1080 = vunpack.c.l.b16 %v287
    %v1081 = vunpack.c.h.b16 %v287
    %v1082 = vunpack.c.l.b16 %v288
    %v1083 = vunpack.c.h.b16 %v288
    %v1084 = vunpack.c.l.b16 %v289
    %v1085 = vunpack.c.h.b16 %v289
    %v1086 = vpack.c.b16 %v582, %v574
    %v1087 = vpack.c.b16 %v583, %v575
    %v1088 = vpack.c.b16 %v584, %v576
    %v1089 = vpack.c.b16 %v585, %v577
    %v1090 = vpack.c.b16 %v586, %v578
    %v1091 = vpack.c.b16 %v587, %v579
    %v1092 = vpack.c.b16 %v588, %v580
    %v1093 = vpack.c.b16 %v589, %v581
    %v1094 = vpack.c.b16 %v598, %v590
    %v1095 = vpack.c.b16 %v599, %v591
    %v1096 = vpack.c.b16 %v600, %v592
    %v1097 = vpack.c.b16 %v601, %v593
    %v1098 = vpack.c.b16 %v602, %v594
    %v1099 = vpack.c.b16 %v603, %v595
    %v1100 = vpack.c.b16 %v604, %v596
    %v1101 = vpack.c.b16 %v605, %v597
    %v1102 = vpack.c.b16 %v614, %v606
    %v1103 = vpack.c.b16 %v615, %v607
    %v1104 = vpack.c.b16 %v616, %v608
    %v1105 = vpack.c.b16 %v617, %v609
    %v1106 = vpack.c.b16 %v618, %v610
    %v1107 = vpack.c.b16 %v619, %v611
    %v1108 = vpack.c.b16 %v620, %v612
    %v1109 = vpack.c.b16 %v621, %v613
    %v1110 = vpack.c.b16 %v630, %v622
    %v1111 = vpack.c.b16 %v631, %v623
    %v1112 = vpack.c.b16 %v632, %v624
    %v1113 = vpack.c.b16 %v633, %v625
    %v1114 = vpack.c.b16 %v634, %v626
    %v1115 = vpack.c.b16 %v635, %v627
    %v1116 = vpack.c.b16 %v636, %v628
    %v1117 = vpack.c.b16 %v637, %v629
    %v1118 = vpack.c.b16 %v646, %v638
    %v1119 = vpack.c.b16 %v647, %v639
    %v1120 = vpack.c.b16 %v648, %v640
    %v1121 = vpack.c.b16 %v649, %v641
    %v1122 = vpack.c.b16 %v650, %v642
    %v1123 = vpack.c.b16 %v651, %v643
    %v1124 = vpack.c.b16 %v652, %v644
    %v1125 = vpack.c.b16 %v653, %v645
    %v1126 = vpack.c.b16 %v662, %v654
    %v1127 = vpack.c.b16 %v663, %v655
    %v1128 = vpack.c.b16 %v664, %v656
    %v1129 = vpack.c.b16 %v665, %v657
    %v1130 = vpack.c.b16 %v666, %v658
    %v1131 = vpack.c.b16 %v667, %v659
    %v1132 = vpack.c.b16 %v668, %v660
    %v1133 = vpack.c.b16 %v669, %v661
    %v1134 = vpack.c.b16 %v678, %v670
    %v1135 = vpack.c.b16 %v679, %v671
    %v1136 = vpack.c.b16 %v680, %v672
    %v1137 = vpack.c.b16 %v681, %v673
    %v1138 = vpack.c.b16 %v682, %v674
    %v1139 = vpack.c.b16 %v683, %v675
    %v1140 = vpack.c.b16 %v684, %v676
    %v1141 = vpack.c.b16 %v685, %v677
    %v1142 = vpack.c.b16 %v694, %v686
    %v1143 = vpack.c.b16 %v695, %v687
    %v1144 = vpack.c.b16 %v696, %v688
    %v1145 = vpack.c.b16 %v697, %v689
    %v1146 = vpack.c.b16 %v698, %v690
    %v1147 = vpack.c.b16 %v699, %v691
    %v1148 = vpack.c.b16 %v700, %v692
    %v1149 = vpack.c.b16 %v701, %v693
    %v1150 = vpack.c.b16 %v710, %v702
    %v1151 = vpack.c.b16 %v711, %v703
    %v1152 = vpack.c.b16 %v712, %v704
    %v1153 = vpack.c.b16 %v713, %v705
    %v1154 = vpack.c.b16 %v714, %v706
    %v1155 = vpack.c.b16 %v715, %v707
    %v1156 = vpack.c.b16 %v716, %v708
    %v1157 = vpack.c.b16 %v717, %v709
    %v1158 = vpack.c.b16 %v726, %v718
    %v1159 = vpack.c.b16 %v727, %v719
    %v1160 = vpack.c.b16 %v728, %v720
    %v1161 = vpack.c.b16 %v729, %v721
    %v1162 = vpack.c.b16 %v730, %v722
    %v1163 = vpack.c.b16 %v731, %v723
    %v1164 = vpack.c.b16 %v732, %v724
    %v1165 = vpack.c.b16 %v733, %v725
    %v1166 = vpack.c.b16 %v742, %v734
    %v1167 = vpack.c.b16 %v743, %v735
    %v1168 = vpack.c.b16 %v744, %v736
    %v1169 = vpack.c.b16 %v745, %v737
    %v1170 = vpack.c.b16 %v746, %v738
    %v1171 = vpack.c.b16 %v747, %v739
    %v1172 = vpack.c.b16 %v748, %v740
    %v1173 = vpack.c.b16 %v749, %v741
    %v1174 = vpack.c.b16 %v758, %v750
    %v1175 = vpack.c.b16 %v759, %v751
    %v1176 = vpack.c.b16 %v760, %v752
    %v1177 = vpack.c.b16 %v761, %v753
    %v1178 = vpack.c.b16 %v762, %v754
    %v1179 = vpack.c.b16 %v763, %v755
    %v1180 = vpack.c.b16 %v764, %v756
    %v1181 = vpack.c.b16 %v765, %v757
    %v1182 = vpack.c.b16 %v774, %v766
    %v1183 = vpack.c.b16 %v775, %v767
    %v1184 = vpack.c.b16 %v776, %v768
    %v1185 = vpack.c.b16 %v777, %v769
    %v1186 = vpack.c.b16 %v778, %v770
    %v1187 = vpack.c.b16 %v779, %v771
    %v1188 = vpack.c.b16 %v780, %v772
    %v1189 = vpack.c.b16 %v781, %v773
    %v1190 = vpack.c.b16 %v790, %v782
    %v1191 = vpack.c.b16 %v791, %v783
    %v1192 = vpack.c.b16 %v792, %v784
    %v1193 = vpack.c.b16 %v793, %v785
    %v1194 = vpack.c.b16 %v794, %v786
    %v1195 = vpack.c.b16 %v795, %v787
    %v1196 = vpack.c.b16 %v796, %v788
    %v1197 = vpack.c.b16 %v797, %v789
    %v1198 = vpack.c.b16 %v806, %v798
    %v1199 = vpack.c.b16 %v807, %v799
    %v1200 = vpack.c.b16 %v808, %v800
    %v1201 = vpack.c.b16 %v809, %v801
    %v1202 = vpack.c.b16 %v810, %v802
    %v1203 = vpack.c.b16 %v811, %v803
    %v1204 = vpack.c.b16 %v812, %v804
    %v1205 = vpack.c.b16 %v813, %v805
    %v1206 = vpack.c.b16 %v822, %v814
    %v1207 = vpack.c.b16 %v823, %v815
    %v1208 = vpack.c.b16 %v824, %v816
    %v1209 = vpack.c.b16 %v825, %v817
    %v1210 = vpack.c.b16 %v826, %v818
    %v1211 = vpack.c.b16 %v827, %v819
    %v1212 = vpack.c.b16 %v828, %v820
    %v1213 = vpack.c.b16 %v829, %v821
    %v1214 = vpack.c.b16 %v838, %v830
    %v1215 = vpack.c.b16 %v839, %v831
    %v1216 = vpack.c.b16 %v840, %v832
    %v1217 = vpack.c.b16 %v841, %v833
    %v1218 = vpack.c.b16 %v842, %v834
    %v1219 = vpack.c.b16 %v843, %v835
    %v1220 = vpack.c.b16 %v844, %v836
    %v1221 = vpack.c.b16 %v845, %v837
    %v1222 = vpack.c.b16 %v854, %v846
    %v1223 = vpack.c.b16 %v855, %v847
    %v1224 = vpack.c.b16 %v856, %v848
    %v1225 = vpack.c.b16 %v857, %v849
    %v1226 = vpack.c.b16 %v858, %v850
    %v1227 = vpack.c.b16 %v859, %v851
    %v1228 = vpack.c.b16 %v860, %v852
    %v1229 = vpack.c.b16 %v861, %v853
    %v1230 = vpack.c.b16 %v870, %v862
    %v1231 = vpack.c.b16 %v871, %v863
    %v1232 = vpack.c.b16 %v872, %v864
    %v1233 = vpack.c.b16 %v873, %v865
    %v1234 = vpack.c.b16 %v874, %v866
    %v1235 = vpack.c.b16 %v875, %v867
    %v1236 = vpack.c.b16 %v876, %v868
    %v1237 = vpack.c.b16 %v877, %v869
    %v1238 = vpack.c.b16 %v886, %v878
    %v1239 = vpack.c.b16 %v887, %v879
    %v1240 = vpack.c.b16 %v888, %v880
    %v1241 = vpack.c.b16 %v889, %v881
    %v1242 = vpack.c.b16 %v890, %v882
    %v1243 = vpack.c.b16 %v891, %v883
    %v1244 = vpack.c.b16 %v892, %v884
    %v1245 = vpack.c.b16 %v893, %v885
    %v1246 = vpack.c.b16 %v902, %v894
    %v1247 = vpack.c.b16 %v903, %v895
    %v1248 = vpack.c.b16 %v904, %v896
    %v1249 = vpack.c.b16 %v905, %v897
    %v1250 = vpack.c.b16 %v906, %v898
    %v1251 = vpack.c.b16 %v907, %v899
    %v1252 = vpack.c.b16 %v908, %v900
    %v1253 = vpack.c.b16 %v909, %v901
    %v1254 = vpack.c.b16 %v918, %v910
    %v1255 = vpack.c.b16 %v919, %v911
    %v1256 = vpack.c.b16 %v920, %v912
    %v1257 = vpack.c.b16 %v921, %v913
    %v1258 = vpack.c.b16 %v922, %v914
    %v1259 = vpack.c.b16 %v923, %v915
    %v1260 = vpack.c.b16 %v924, %v916
    %v1261 = vpack.c.b16 %v925, %v917
    %v1262 = vpack.c.b16 %v934, %v926
    %v1263 = vpack.c.b16 %v935, %v927
    %v1264 = vpack.c.b16 %v936, %v928
    %v1265 = vpack.c.b16 %v937, %v929
    %v1266 = vpack.c.b16 %v938, %v930
    %v1267 = vpack.c.b16 %v939, %v931
    %v1268 = vpack.c.b16 %v940, %v932
    %v1269 = vpack.c.b16 %v941, %v933
    %v1270 = vpack.c.b16 %v950, %v942
    %v1271 = vpack.c.b16 %v951, %v943
    %v1272 = vpack.c.b16 %v952, %v944
    %v1273 = vpack.c.b16 %v953, %v945
    %v1274 = vpack.c.b16 %v954, %v946
    %v1275 = vpack.c.b16 %v955, %v947
    %v1276 = vpack.c.b16 %v956, %v948
    %v1277 = vpack.c.b16 %v957, %v949
    %v1278 = vpack.c.b16 %v966, %v958
    %v1279 = vpack.c.b16 %v967, %v959
    %v1280 = vpack.c.b16 %v968, %v960
    %v1281 = vpack.c.b16 %v969, %v961
    %v1282 = vpack.c.b16 %v970, %v962
    %v1283 = vpack.c.b16 %v971, %v963
    %v1284 = vpack.c.b16 %v972, %v964
    %v1285 = vpack.c.b16 %v973, %v965
    %v1286 = vpack.c.b16 %v982, %v974
    %v1287 = vpack.c.b16 %v983, %v975
    %v1288 = vpack.c.b16 %v984, %v976
    %v1289 = vpack.c.b16 %v985, %v977
    %v1290 = vpack.c.b16 %v986, %v978
    %v1291 = vpack.c.b16 %v987, %v979
    %v1292 = vpack.c.b16 %v988, %v980
    %v1293 = vpack.c.b16 %v989, %v981
    %v1294 = vpack.c.b16 %v998, %v990
    %v1295 = vpack.c.b16 %v999, %v991
    %v1296 = vpack.c.b16 %v1000, %v992
    %v1297 = vpack.c.b16 %v1001, %v993
    %v1298 = vpack.c.b16 %v1002, %v994
    %v1299 = vpack.c.b16 %v1003, %v995
    %v1300 = vpack.c.b16 %v1004, %v996
    %v1301 = vpack.c.b16 %v1005, %v997
    %v1302 = vpack.c.b16 %v1014, %v1006
    %v1303 = vpack.c.b16 %v1015, %v1007
    %v1304 = vpack.c.b16 %v1016, %v1008
    %v1305 = vpack.c.b16 %v1017, %v1009
    %v1306 = vpack.c.b16 %v1018, %v1010
    %v1307 = vpack.c.b16 %v1019, %v1011
    %v1308 = vpack.c.b16 %v1020, %v1012
    %v1309 = vpack.c.b16 %v1021, %v1013
    %v1310 = vpack.c.b16 %v1030, %v1022
    %v1311 = vpack.c.b16 %v1031, %v1023
    %v1312 = vpack.c.b16 %v1032, %v1024
    %v1313 = vpack.c.b16 %v1033, %v1025
    %v1314 = vpack.c.b16 %v1034, %v1026
    %v1315 = vpack.c.b16 %v1035, %v1027
    %v1316 = vpack.c.b16 %v1036, %v1028
    %v1317 = vpack.c.b16 %v1037, %v1029
    %v1318 = vpack.c.b16 %v1046, %v1038
    %v1319 = vpack.c.b16 %v1047, %v1039
    %v1320 = vpack.c.b16 %v1048, %v1040
    %v1321 = vpack.c.b16 %v1049, %v1041
    %v1322 = vpack.c.b16 %v1050, %v1042
    %v1323 = vpack.c.b16 %v1051, %v1043
    %v1324 = vpack.c.b16 %v1052, %v1044
    %v1325 = vpack.c.b16 %v1053, %v1045
    %v1326 = vpack.c.b16 %v1062, %v1054
    %v1327 = vpack.c.b16 %v1063, %v1055
    %v1328 = vpack.c.b16 %v1064, %v1056
    %v1329 = vpack.c.b16 %v1065, %v1057
    %v1330 = vpack.c.b16 %v1066, %v1058
    %v1331 = vpack.c.b16 %v1067, %v1059
    %v1332 = vpack.c.b16 %v1068, %v1060
    %v1333 = vpack.c.b16 %v1069, %v1061
    %v1334 = vpack.c.b16 %v1078, %v1070
    %v1335 = vpack.c.b16 %v1079, %v1071
    %v1336 = vpack.c.b16 %v1080, %v1072
    %v1337 = vpack.c.b16 %v1081, %v1073
    %v1338 = vpack.c.b16 %v1082, %v1074
    %v1339 = vpack.c.b16 %v1083, %v1075
    %v1340 = vpack.c.b16 %v1084, %v1076
    %v1341 = vpack.c.b16 %v1085, %v1077
    %1598 = vmatpush.bf16.msra.mxu0 %v1142
    %1599 = vmatpush.bf16.msra.mxu0 %v1134
    %1600 = vmatpush.bf16.msra.mxu0 %v1126
    %1601 = vmatpush.bf16.msra.mxu0 %v1118
    %1602 = vmatpush.bf16.msra.mxu0 %v1110
    %1603 = vmatpush.bf16.msra.mxu0 %v1102
    %1604 = vmatpush.bf16.msra.mxu0 %v1094
    %1605 = vmatpush.bf16.msra.mxu0 %v1086
    %1606 = vmatmul.bf16.gmra.mxu0 %v310
    %v1607 = vpop.f32.mrf.mxu0
    %v1608 = vadd.f32 %v292, %v1607
    %v1609 = vpop.f32.mrf.mxu0
    %1610 = vdwg.mxu0
    %1611 = vmatpush.bf16.msra.mxu0 %v1206
    %1612 = vmatpush.bf16.msra.mxu0 %v1198
    %1613 = vmatpush.bf16.msra.mxu0 %v1190
    %1614 = vmatpush.bf16.msra.mxu0 %v1182
    %1615 = vmatpush.bf16.msra.mxu0 %v1174
    %1616 = vmatpush.bf16.msra.mxu0 %v1166
    %1617 = vmatpush.bf16.msra.mxu0 %v1158
    %1618 = vmatpush.bf16.msra.mxu0 %v1150
    %1619 = vmatmul.bf16.gmra.mxu0 %v311
    %v1620 = vpop.f32.mrf.mxu0
    %v1621 = vadd.f32 %v1608, %v1620
    %v1622 = vpop.f32.mrf.mxu0
    %1623 = vdwg.mxu0
    %1624 = vmatpush.bf16.msra.mxu0 %v1270
    %1625 = vmatpush.bf16.msra.mxu0 %v1262
    %1626 = vmatpush.bf16.msra.mxu0 %v1254
    %1627 = vmatpush.bf16.msra.mxu0 %v1246
    %1628 = vmatpush.bf16.msra.mxu0 %v1238
    %1629 = vmatpush.bf16.msra.mxu0 %v1230
    %1630 = vmatpush.bf16.msra.mxu0 %v1222
    %1631 = vmatpush.bf16.msra.mxu0 %v1214
    %1632 = vmatmul.bf16.gmra.mxu0 %v312
    %v1633 = vpop.f32.mrf.mxu0
    %v1634 = vadd.f32 %v1621, %v1633
    %v1635 = vpop.f32.mrf.mxu0
    %1636 = vdwg.mxu0
    %1637 = vmatpush.bf16.msra.mxu0 %v1334
    %1638 = vmatpush.bf16.msra.mxu0 %v1326
    %1639 = vmatpush.bf16.msra.mxu0 %v1318
    %1640 = vmatpush.bf16.msra.mxu0 %v1310
    %1641 = vmatpush.bf16.msra.mxu0 %v1302
    %1642 = vmatpush.bf16.msra.mxu0 %v1294
    %1643 = vmatpush.bf16.msra.mxu0 %v1286
    %1644 = vmatpush.bf16.msra.mxu0 %v1278
    %1645 = vmatmul.bf16.gmra.mxu0 %v313
    %v1646 = vpop.f32.mrf.mxu0
    %v1647 = vadd.f32 %v1634, %v1646
    %v1648 = vpop.f32.mrf.mxu0
    %1649 = vdwg.mxu0
    %1650 = vmatpush.bf16.msra.mxu0 %v1143
    %1651 = vmatpush.bf16.msra.mxu0 %v1135
    %1652 = vmatpush.bf16.msra.mxu0 %v1127
    %1653 = vmatpush.bf16.msra.mxu0 %v1119
    %1654 = vmatpush.bf16.msra.mxu0 %v1111
    %1655 = vmatpush.bf16.msra.mxu0 %v1103
    %1656 = vmatpush.bf16.msra.mxu0 %v1095
    %1657 = vmatpush.bf16.msra.mxu0 %v1087
    %1658 = vmatmul.bf16.gmra.mxu0 %v310
    %v1659 = vpop.f32.mrf.mxu0
    %v1660 = vadd.f32 %v293, %v1659
    %v1661 = vpop.f32.mrf.mxu0
    %1662 = vdwg.mxu0
    %1663 = vmatpush.bf16.msra.mxu0 %v1207
    %1664 = vmatpush.bf16.msra.mxu0 %v1199
    %1665 = vmatpush.bf16.msra.mxu0 %v1191
    %1666 = vmatpush.bf16.msra.mxu0 %v1183
    %1667 = vmatpush.bf16.msra.mxu0 %v1175
    %1668 = vmatpush.bf16.msra.mxu0 %v1167
    %1669 = vmatpush.bf16.msra.mxu0 %v1159
    %1670 = vmatpush.bf16.msra.mxu0 %v1151
    %1671 = vmatmul.bf16.gmra.mxu0 %v311
    %v1672 = vpop.f32.mrf.mxu0
    %v1673 = vadd.f32 %v1660, %v1672
    %v1674 = vpop.f32.mrf.mxu0
    %1675 = vdwg.mxu0
    %1676 = vmatpush.bf16.msra.mxu0 %v1271
    %1677 = vmatpush.bf16.msra.mxu0 %v1263
    %1678 = vmatpush.bf16.msra.mxu0 %v1255
    %1679 = vmatpush.bf16.msra.mxu0 %v1247
    %1680 = vmatpush.bf16.msra.mxu0 %v1239
    %1681 = vmatpush.bf16.msra.mxu0 %v1231
    %1682 = vmatpush.bf16.msra.mxu0 %v1223
    %1683 = vmatpush.bf16.msra.mxu0 %v1215
    %1684 = vmatmul.bf16.gmra.mxu0 %v312
    %v1685 = vpop.f32.mrf.mxu0
    %v1686 = vadd.f32 %v1673, %v1685
    %v1687 = vpop.f32.mrf.mxu0
    %1688 = vdwg.mxu0
    %1689 = vmatpush.bf16.msra.mxu0 %v1335
    %1690 = vmatpush.bf16.msra.mxu0 %v1327
    %1691 = vmatpush.bf16.msra.mxu0 %v1319
    %1692 = vmatpush.bf16.msra.mxu0 %v1311
    %1693 = vmatpush.bf16.msra.mxu0 %v1303
    %1694 = vmatpush.bf16.msra.mxu0 %v1295
    %1695 = vmatpush.bf16.msra.mxu0 %v1287
    %1696 = vmatpush.bf16.msra.mxu0 %v1279
    %1697 = vmatmul.bf16.gmra.mxu0 %v313
    %v1698 = vpop.f32.mrf.mxu0
    %v1699 = vadd.f32 %v1686, %v1698
    %v1700 = vpop.f32.mrf.mxu0
    %1701 = vdwg.mxu0
    %1702 = vmatpush.bf16.msra.mxu0 %v1144
    %1703 = vmatpush.bf16.msra.mxu0 %v1136
    %1704 = vmatpush.bf16.msra.mxu0 %v1128
    %1705 = vmatpush.bf16.msra.mxu0 %v1120
    %1706 = vmatpush.bf16.msra.mxu0 %v1112
    %1707 = vmatpush.bf16.msra.mxu0 %v1104
    %1708 = vmatpush.bf16.msra.mxu0 %v1096
    %1709 = vmatpush.bf16.msra.mxu0 %v1088
    %1710 = vmatmul.bf16.gmra.mxu0 %v310
    %v1711 = vpop.f32.mrf.mxu0
    %v1712 = vadd.f32 %v294, %v1711
    %v1713 = vpop.f32.mrf.mxu0
    %1714 = vdwg.mxu0
    %1715 = vmatpush.bf16.msra.mxu0 %v1208
    %1716 = vmatpush.bf16.msra.mxu0 %v1200
    %1717 = vmatpush.bf16.msra.mxu0 %v1192
    %1718 = vmatpush.bf16.msra.mxu0 %v1184
    %1719 = vmatpush.bf16.msra.mxu0 %v1176
    %1720 = vmatpush.bf16.msra.mxu0 %v1168
    %1721 = vmatpush.bf16.msra.mxu0 %v1160
    %1722 = vmatpush.bf16.msra.mxu0 %v1152
    %1723 = vmatmul.bf16.gmra.mxu0 %v311
    %v1724 = vpop.f32.mrf.mxu0
    %v1725 = vadd.f32 %v1712, %v1724
    %v1726 = vpop.f32.mrf.mxu0
    %1727 = vdwg.mxu0
    %1728 = vmatpush.bf16.msra.mxu0 %v1272
    %1729 = vmatpush.bf16.msra.mxu0 %v1264
    %1730 = vmatpush.bf16.msra.mxu0 %v1256
    %1731 = vmatpush.bf16.msra.mxu0 %v1248
    %1732 = vmatpush.bf16.msra.mxu0 %v1240
    %1733 = vmatpush.bf16.msra.mxu0 %v1232
    %1734 = vmatpush.bf16.msra.mxu0 %v1224
    %1735 = vmatpush.bf16.msra.mxu0 %v1216
    %1736 = vmatmul.bf16.gmra.mxu0 %v312
    %v1737 = vpop.f32.mrf.mxu0
    %v1738 = vadd.f32 %v1725, %v1737
    %v1739 = vpop.f32.mrf.mxu0
    %1740 = vdwg.mxu0
    %1741 = vmatpush.bf16.msra.mxu0 %v1336
    %1742 = vmatpush.bf16.msra.mxu0 %v1328
    %1743 = vmatpush.bf16.msra.mxu0 %v1320
    %1744 = vmatpush.bf16.msra.mxu0 %v1312
    %1745 = vmatpush.bf16.msra.mxu0 %v1304
    %1746 = vmatpush.bf16.msra.mxu0 %v1296
    %1747 = vmatpush.bf16.msra.mxu0 %v1288
    %1748 = vmatpush.bf16.msra.mxu0 %v1280
    %1749 = vmatmul.bf16.gmra.mxu0 %v313
    %v1750 = vpop.f32.mrf.mxu0
    %v1751 = vadd.f32 %v1738, %v1750
    %v1752 = vpop.f32.mrf.mxu0
    %1753 = vdwg.mxu0
    %1754 = vmatpush.bf16.msra.mxu0 %v1145
    %1755 = vmatpush.bf16.msra.mxu0 %v1137
    %1756 = vmatpush.bf16.msra.mxu0 %v1129
    %1757 = vmatpush.bf16.msra.mxu0 %v1121
    %1758 = vmatpush.bf16.msra.mxu0 %v1113
    %1759 = vmatpush.bf16.msra.mxu0 %v1105
    %1760 = vmatpush.bf16.msra.mxu0 %v1097
    %1761 = vmatpush.bf16.msra.mxu0 %v1089
    %1762 = vmatmul.bf16.gmra.mxu0 %v310
    %v1763 = vpop.f32.mrf.mxu0
    %v1764 = vadd.f32 %v295, %v1763
    %v1765 = vpop.f32.mrf.mxu0
    %1766 = vdwg.mxu0
    %1767 = vmatpush.bf16.msra.mxu0 %v1209
    %1768 = vmatpush.bf16.msra.mxu0 %v1201
    %1769 = vmatpush.bf16.msra.mxu0 %v1193
    %1770 = vmatpush.bf16.msra.mxu0 %v1185
    %1771 = vmatpush.bf16.msra.mxu0 %v1177
    %1772 = vmatpush.bf16.msra.mxu0 %v1169
    %1773 = vmatpush.bf16.msra.mxu0 %v1161
    %1774 = vmatpush.bf16.msra.mxu0 %v1153
    %1775 = vmatmul.bf16.gmra.mxu0 %v311
    %v1776 = vpop.f32.mrf.mxu0
    %v1777 = vadd.f32 %v1764, %v1776
    %v1778 = vpop.f32.mrf.mxu0
    %1779 = vdwg.mxu0
    %1780 = vmatpush.bf16.msra.mxu0 %v1273
    %1781 = vmatpush.bf16.msra.mxu0 %v1265
    %1782 = vmatpush.bf16.msra.mxu0 %v1257
    %1783 = vmatpush.bf16.msra.mxu0 %v1249
    %1784 = vmatpush.bf16.msra.mxu0 %v1241
    %1785 = vmatpush.bf16.msra.mxu0 %v1233
    %1786 = vmatpush.bf16.msra.mxu0 %v1225
    %1787 = vmatpush.bf16.msra.mxu0 %v1217
    %1788 = vmatmul.bf16.gmra.mxu0 %v312
    %v1789 = vpop.f32.mrf.mxu0
    %v1790 = vadd.f32 %v1777, %v1789
    %v1791 = vpop.f32.mrf.mxu0
    %1792 = vdwg.mxu0
    %1793 = vmatpush.bf16.msra.mxu0 %v1337
    %1794 = vmatpush.bf16.msra.mxu0 %v1329
    %1795 = vmatpush.bf16.msra.mxu0 %v1321
    %1796 = vmatpush.bf16.msra.mxu0 %v1313
    %1797 = vmatpush.bf16.msra.mxu0 %v1305
    %1798 = vmatpush.bf16.msra.mxu0 %v1297
    %1799 = vmatpush.bf16.msra.mxu0 %v1289
    %1800 = vmatpush.bf16.msra.mxu0 %v1281
    %1801 = vmatmul.bf16.gmra.mxu0 %v313
    %v1802 = vpop.f32.mrf.mxu0
    %v1803 = vadd.f32 %v1790, %v1802
    %v1804 = vpop.f32.mrf.mxu0
    %1805 = vdwg.mxu0
    %1806 = vmatpush.bf16.msra.mxu0 %v1146
    %1807 = vmatpush.bf16.msra.mxu0 %v1138
    %1808 = vmatpush.bf16.msra.mxu0 %v1130
    %1809 = vmatpush.bf16.msra.mxu0 %v1122
    %1810 = vmatpush.bf16.msra.mxu0 %v1114
    %1811 = vmatpush.bf16.msra.mxu0 %v1106
    %1812 = vmatpush.bf16.msra.mxu0 %v1098
    %1813 = vmatpush.bf16.msra.mxu0 %v1090
    %1814 = vmatmul.bf16.gmra.mxu0 %v310
    %v1815 = vpop.f32.mrf.mxu0
    %v1816 = vadd.f32 %v296, %v1815
    %v1817 = vpop.f32.mrf.mxu0
    %1818 = vdwg.mxu0
    %1819 = vmatpush.bf16.msra.mxu0 %v1210
    %1820 = vmatpush.bf16.msra.mxu0 %v1202
    %1821 = vmatpush.bf16.msra.mxu0 %v1194
    %1822 = vmatpush.bf16.msra.mxu0 %v1186
    %1823 = vmatpush.bf16.msra.mxu0 %v1178
    %1824 = vmatpush.bf16.msra.mxu0 %v1170
    %1825 = vmatpush.bf16.msra.mxu0 %v1162
    %1826 = vmatpush.bf16.msra.mxu0 %v1154
    %1827 = vmatmul.bf16.gmra.mxu0 %v311
    %v1828 = vpop.f32.mrf.mxu0
    %v1829 = vadd.f32 %v1816, %v1828
    %v1830 = vpop.f32.mrf.mxu0
    %1831 = vdwg.mxu0
    %1832 = vmatpush.bf16.msra.mxu0 %v1274
    %1833 = vmatpush.bf16.msra.mxu0 %v1266
    %1834 = vmatpush.bf16.msra.mxu0 %v1258
    %1835 = vmatpush.bf16.msra.mxu0 %v1250
    %1836 = vmatpush.bf16.msra.mxu0 %v1242
    %1837 = vmatpush.bf16.msra.mxu0 %v1234
    %1838 = vmatpush.bf16.msra.mxu0 %v1226
    %1839 = vmatpush.bf16.msra.mxu0 %v1218
    %1840 = vmatmul.bf16.gmra.mxu0 %v312
    %v1841 = vpop.f32.mrf.mxu0
    %v1842 = vadd.f32 %v1829, %v1841
    %v1843 = vpop.f32.mrf.mxu0
    %1844 = vdwg.mxu0
    %1845 = vmatpush.bf16.msra.mxu0 %v1338
    %1846 = vmatpush.bf16.msra.mxu0 %v1330
    %1847 = vmatpush.bf16.msra.mxu0 %v1322
    %1848 = vmatpush.bf16.msra.mxu0 %v1314
    %1849 = vmatpush.bf16.msra.mxu0 %v1306
    %1850 = vmatpush.bf16.msra.mxu0 %v1298
    %1851 = vmatpush.bf16.msra.mxu0 %v1290
    %1852 = vmatpush.bf16.msra.mxu0 %v1282
    %1853 = vmatmul.bf16.gmra.mxu0 %v313
    %v1854 = vpop.f32.mrf.mxu0
    %v1855 = vadd.f32 %v1842, %v1854
    %v1856 = vpop.f32.mrf.mxu0
    %1857 = vdwg.mxu0
    %1858 = vmatpush.bf16.msra.mxu0 %v1147
    %1859 = vmatpush.bf16.msra.mxu0 %v1139
    %1860 = vmatpush.bf16.msra.mxu0 %v1131
    %1861 = vmatpush.bf16.msra.mxu0 %v1123
    %1862 = vmatpush.bf16.msra.mxu0 %v1115
    %1863 = vmatpush.bf16.msra.mxu0 %v1107
    %1864 = vmatpush.bf16.msra.mxu0 %v1099
    %1865 = vmatpush.bf16.msra.mxu0 %v1091
    %1866 = vmatmul.bf16.gmra.mxu0 %v310
    %v1867 = vpop.f32.mrf.mxu0
    %v1868 = vadd.f32 %v297, %v1867
    %v1869 = vpop.f32.mrf.mxu0
    %1870 = vdwg.mxu0
    %1871 = vmatpush.bf16.msra.mxu0 %v1211
    %1872 = vmatpush.bf16.msra.mxu0 %v1203
    %1873 = vmatpush.bf16.msra.mxu0 %v1195
    %1874 = vmatpush.bf16.msra.mxu0 %v1187
    %1875 = vmatpush.bf16.msra.mxu0 %v1179
    %1876 = vmatpush.bf16.msra.mxu0 %v1171
    %1877 = vmatpush.bf16.msra.mxu0 %v1163
    %1878 = vmatpush.bf16.msra.mxu0 %v1155
    %1879 = vmatmul.bf16.gmra.mxu0 %v311
    %v1880 = vpop.f32.mrf.mxu0
    %v1881 = vadd.f32 %v1868, %v1880
    %v1882 = vpop.f32.mrf.mxu0
    %1883 = vdwg.mxu0
    %1884 = vmatpush.bf16.msra.mxu0 %v1275
    %1885 = vmatpush.bf16.msra.mxu0 %v1267
    %1886 = vmatpush.bf16.msra.mxu0 %v1259
    %1887 = vmatpush.bf16.msra.mxu0 %v1251
    %1888 = vmatpush.bf16.msra.mxu0 %v1243
    %1889 = vmatpush.bf16.msra.mxu0 %v1235
    %1890 = vmatpush.bf16.msra.mxu0 %v1227
    %1891 = vmatpush.bf16.msra.mxu0 %v1219
    %1892 = vmatmul.bf16.gmra.mxu0 %v312
    %v1893 = vpop.f32.mrf.mxu0
    %v1894 = vadd.f32 %v1881, %v1893
    %v1895 = vpop.f32.mrf.mxu0
    %1896 = vdwg.mxu0
    %1897 = vmatpush.bf16.msra.mxu0 %v1339
    %1898 = vmatpush.bf16.msra.mxu0 %v1331
    %1899 = vmatpush.bf16.msra.mxu0 %v1323
    %1900 = vmatpush.bf16.msra.mxu0 %v1315
    %1901 = vmatpush.bf16.msra.mxu0 %v1307
    %1902 = vmatpush.bf16.msra.mxu0 %v1299
    %1903 = vmatpush.bf16.msra.mxu0 %v1291
    %1904 = vmatpush.bf16.msra.mxu0 %v1283
    %1905 = vmatmul.bf16.gmra.mxu0 %v313
    %v1906 = vpop.f32.mrf.mxu0
    %v1907 = vadd.f32 %v1894, %v1906
    %v1908 = vpop.f32.mrf.mxu0
    %1909 = vdwg.mxu0
    %1910 = vmatpush.bf16.msra.mxu0 %v1148
    %1911 = vmatpush.bf16.msra.mxu0 %v1140
    %1912 = vmatpush.bf16.msra.mxu0 %v1132
    %1913 = vmatpush.bf16.msra.mxu0 %v1124
    %1914 = vmatpush.bf16.msra.mxu0 %v1116
    %1915 = vmatpush.bf16.msra.mxu0 %v1108
    %1916 = vmatpush.bf16.msra.mxu0 %v1100
    %1917 = vmatpush.bf16.msra.mxu0 %v1092
    %1918 = vmatmul.bf16.gmra.mxu0 %v310
    %v1919 = vpop.f32.mrf.mxu0
    %v1920 = vadd.f32 %v298, %v1919
    %v1921 = vpop.f32.mrf.mxu0
    %1922 = vdwg.mxu0
    %1923 = vmatpush.bf16.msra.mxu0 %v1212
    %1924 = vmatpush.bf16.msra.mxu0 %v1204
    %1925 = vmatpush.bf16.msra.mxu0 %v1196
    %1926 = vmatpush.bf16.msra.mxu0 %v1188
    %1927 = vmatpush.bf16.msra.mxu0 %v1180
    %1928 = vmatpush.bf16.msra.mxu0 %v1172
    %1929 = vmatpush.bf16.msra.mxu0 %v1164
    %1930 = vmatpush.bf16.msra.mxu0 %v1156
    %1931 = vmatmul.bf16.gmra.mxu0 %v311
    %v1932 = vpop.f32.mrf.mxu0
    %v1933 = vadd.f32 %v1920, %v1932
    %v1934 = vpop.f32.mrf.mxu0
    %1935 = vdwg.mxu0
    %1936 = vmatpush.bf16.msra.mxu0 %v1276
    %1937 = vmatpush.bf16.msra.mxu0 %v1268
    %1938 = vmatpush.bf16.msra.mxu0 %v1260
    %1939 = vmatpush.bf16.msra.mxu0 %v1252
    %1940 = vmatpush.bf16.msra.mxu0 %v1244
    %1941 = vmatpush.bf16.msra.mxu0 %v1236
    %1942 = vmatpush.bf16.msra.mxu0 %v1228
    %1943 = vmatpush.bf16.msra.mxu0 %v1220
    %1944 = vmatmul.bf16.gmra.mxu0 %v312
    %v1945 = vpop.f32.mrf.mxu0
    %v1946 = vadd.f32 %v1933, %v1945
    %v1947 = vpop.f32.mrf.mxu0
    %1948 = vdwg.mxu0
    %1949 = vmatpush.bf16.msra.mxu0 %v1340
    %1950 = vmatpush.bf16.msra.mxu0 %v1332
    %1951 = vmatpush.bf16.msra.mxu0 %v1324
    %1952 = vmatpush.bf16.msra.mxu0 %v1316
    %1953 = vmatpush.bf16.msra.mxu0 %v1308
    %1954 = vmatpush.bf16.msra.mxu0 %v1300
    %1955 = vmatpush.bf16.msra.mxu0 %v1292
    %1956 = vmatpush.bf16.msra.mxu0 %v1284
    %1957 = vmatmul.bf16.gmra.mxu0 %v313
    %v1958 = vpop.f32.mrf.mxu0
    %v1959 = vadd.f32 %v1946, %v1958
    %v1960 = vpop.f32.mrf.mxu0
    %1961 = vdwg.mxu0
    %1962 = vmatpush.bf16.msra.mxu0 %v1149
    %1963 = vmatpush.bf16.msra.mxu0 %v1141
    %1964 = vmatpush.bf16.msra.mxu0 %v1133
    %1965 = vmatpush.bf16.msra.mxu0 %v1125
    %1966 = vmatpush.bf16.msra.mxu0 %v1117
    %1967 = vmatpush.bf16.msra.mxu0 %v1109
    %1968 = vmatpush.bf16.msra.mxu0 %v1101
    %1969 = vmatpush.bf16.msra.mxu0 %v1093
    %1970 = vmatmul.bf16.gmra.mxu0 %v310
    %v1971 = vpop.f32.mrf.mxu0
    %v1972 = vadd.f32 %v299, %v1971
    %v1973 = vpop.f32.mrf.mxu0
    %1974 = vdwg.mxu0
    %1975 = vmatpush.bf16.msra.mxu0 %v1213
    %1976 = vmatpush.bf16.msra.mxu0 %v1205
    %1977 = vmatpush.bf16.msra.mxu0 %v1197
    %1978 = vmatpush.bf16.msra.mxu0 %v1189
    %1979 = vmatpush.bf16.msra.mxu0 %v1181
    %1980 = vmatpush.bf16.msra.mxu0 %v1173
    %1981 = vmatpush.bf16.msra.mxu0 %v1165
    %1982 = vmatpush.bf16.msra.mxu0 %v1157
    %1983 = vmatmul.bf16.gmra.mxu0 %v311
    %v1984 = vpop.f32.mrf.mxu0
    %v1985 = vadd.f32 %v1972, %v1984
    %v1986 = vpop.f32.mrf.mxu0
    %1987 = vdwg.mxu0
    %1988 = vmatpush.bf16.msra.mxu0 %v1277
    %1989 = vmatpush.bf16.msra.mxu0 %v1269
    %1990 = vmatpush.bf16.msra.mxu0 %v1261
    %1991 = vmatpush.bf16.msra.mxu0 %v1253
    %1992 = vmatpush.bf16.msra.mxu0 %v1245
    %1993 = vmatpush.bf16.msra.mxu0 %v1237
    %1994 = vmatpush.bf16.msra.mxu0 %v1229
    %1995 = vmatpush.bf16.msra.mxu0 %v1221
    %1996 = vmatmul.bf16.gmra.mxu0 %v312
    %v1997 = vpop.f32.mrf.mxu0
    %v1998 = vadd.f32 %v1985, %v1997
    %v1999 = vpop.f32.mrf.mxu0
    %2000 = vdwg.mxu0
    %2001 = vmatpush.bf16.msra.mxu0 %v1341
    %2002 = vmatpush.bf16.msra.mxu0 %v1333
    %2003 = vmatpush.bf16.msra.mxu0 %v1325
    %2004 = vmatpush.bf16.msra.mxu0 %v1317
    %2005 = vmatpush.bf16.msra.mxu0 %v1309
    %2006 = vmatpush.bf16.msra.mxu0 %v1301
    %2007 = vmatpush.bf16.msra.mxu0 %v1293
    %2008 = vmatpush.bf16.msra.mxu0 %v1285
    %2009 = vmatmul.bf16.gmra.mxu0 %v313
    %v2010 = vpop.f32.mrf.mxu0
    %v2011 = vadd.f32 %v1998, %v2010
    %v2012 = vpop.f32.mrf.mxu0
    %2013 = vdwg.mxu0
    %vm2014 = vcmp.ge.f32.partialorder %v1647, 0.0
    %vm2015 = vcmp.ge.f32.partialorder %v1699, 0.0
    %vm2016 = vcmp.ge.f32.partialorder %v1751, 0.0
    %vm2017 = vcmp.ge.f32.partialorder %v1803, 0.0
    %vm2018 = vcmp.ge.f32.partialorder %v1855, 0.0
    %vm2019 = vcmp.ge.f32.partialorder %v1907, 0.0
    %vm2020 = vcmp.ge.f32.partialorder %v1959, 0.0
    %vm2021 = vcmp.ge.f32.partialorder %v2011, 0.0
    %v2022 = vmul.f32 %v1647, 0.01
    %v2023 = vmul.f32 %v1699, 0.01
    %v2024 = vmul.f32 %v1751, 0.01
    %v2025 = vmul.f32 %v1803, 0.01
    %v2026 = vmul.f32 %v1855, 0.01
    %v2027 = vmul.f32 %v1907, 0.01
    %v2028 = vmul.f32 %v1959, 0.01
    %v2029 = vmul.f32 %v2011, 0.01
    %v2030 = vsel %vm2014, %v1647, %v2022
    %v2031 = vsel %vm2015, %v1699, %v2023
    %v2032 = vsel %vm2016, %v1751, %v2024
    %v2033 = vsel %vm2017, %v1803, %v2025
    %v2034 = vsel %vm2018, %v1855, %v2026
    %v2035 = vsel %vm2019, %v1907, %v2027
    %v2036 = vsel %vm2020, %v1959, %v2028
    %v2037 = vsel %vm2021, %v2011, %v2029
    %v2038 = vld [vmem:[%s3] sm:$0xff]
    %v2040 = vperm.slane %v2038, 0
    %v2041 = vperm.slane %v2038, 1
    %v2042 = vperm.slane %v2038, 2
    %v2043 = vperm.slane %v2038, 3
    %v2044 = vperm.slane %v2038, 4
    %v2045 = vperm.slane %v2038, 5
    %v2046 = vperm.slane %v2038, 6
    %v2047 = vperm.slane %v2038, 7
    %v2056 = vadd.f32 %v2030, %v2040
    %v2057 = vadd.f32 %v2031, %v2041
    %v2058 = vadd.f32 %v2032, %v2042
    %v2059 = vadd.f32 %v2033, %v2043
    %v2060 = vadd.f32 %v2034, %v2044
    %v2061 = vadd.f32 %v2035, %v2045
    %v2062 = vadd.f32 %v2036, %v2046
    %v2063 = vadd.f32 %v2037, %v2047
    %v2064 = vpack.c.bf16 %v2056, %v2056
    %v2065 = vpack.c.bf16 %v2057, %v2057
    %v2066 = vpack.c.bf16 %v2058, %v2058
    %v2067 = vpack.c.bf16 %v2059, %v2059
    %v2068 = vpack.c.bf16 %v2060, %v2060
    %v2069 = vpack.c.bf16 %v2061, %v2061
    %v2070 = vpack.c.bf16 %v2062, %v2062
    %v2071 = vpack.c.bf16 %v2063, %v2063
    %v2072 = vld [vmem:[%s4] sm:$0xff]
    %v2073 = vld [vmem:[%s4 + $0x8] sm:$0xff]
    %v2074 = vld [vmem:[%s4 + $0x10] sm:$0xff]
    %v2075 = vld [vmem:[%s4 + $0x18] sm:$0xff]
    %v2076 = vld [vmem:[%s4 + $0x20] sm:$0xff]
    %v2077 = vld [vmem:[%s4 + $0x28] sm:$0xff]
    %v2078 = vld [vmem:[%s4 + $0x30] sm:$0xff]
    %v2079 = vld [vmem:[%s4 + $0x38] sm:$0xff]
    %v2080 = vld [vmem:[%s4 + $0x40] sm:$0xff]
    %v2081 = vld [vmem:[%s4 + $0x48] sm:$0xff]
    %v2082 = vld [vmem:[%s4 + $0x50] sm:$0xff]
    %v2083 = vld [vmem:[%s4 + $0x58] sm:$0xff]
    %v2084 = vld [vmem:[%s4 + $0x60] sm:$0xff]
    %v2085 = vld [vmem:[%s4 + $0x68] sm:$0xff]
    %v2086 = vld [vmem:[%s4 + $0x70] sm:$0xff]
    %v2087 = vld [vmem:[%s4 + $0x78] sm:$0xff]
    %v2088 = vld [vmem:[%s4 + $0x80] sm:$0xff]
    %v2089 = vld [vmem:[%s4 + $0x88] sm:$0xff]
    %v2090 = vld [vmem:[%s4 + $0x90] sm:$0xff]
    %v2091 = vld [vmem:[%s4 + $0x98] sm:$0xff]
    %v2092 = vld [vmem:[%s4 + $0xa0] sm:$0xff]
    %v2093 = vld [vmem:[%s4 + $0xa8] sm:$0xff]
    %v2094 = vld [vmem:[%s4 + $0xb0] sm:$0xff]
    %v2095 = vld [vmem:[%s4 + $0xb8] sm:$0xff]
    %v2096 = vld [vmem:[%s4 + $0xc0] sm:$0xff]
    %v2097 = vld [vmem:[%s4 + $0xc8] sm:$0xff]
    %v2098 = vld [vmem:[%s4 + $0xd0] sm:$0xff]
    %v2099 = vld [vmem:[%s4 + $0xd8] sm:$0xff]
    %v2100 = vld [vmem:[%s4 + $0xe0] sm:$0xff]
    %v2101 = vld [vmem:[%s4 + $0xe8] sm:$0xff]
    %v2102 = vld [vmem:[%s4 + $0xf0] sm:$0xff]
    %v2103 = vld [vmem:[%s4 + $0xf8] sm:$0xff]
    %v2104 = vld [vmem:[%s4 + $0x100] sm:$0xff]
    %v2105 = vld [vmem:[%s4 + $0x108] sm:$0xff]
    %v2106 = vld [vmem:[%s4 + $0x110] sm:$0xff]
    %v2107 = vld [vmem:[%s4 + $0x118] sm:$0xff]
    %v2108 = vld [vmem:[%s4 + $0x120] sm:$0xff]
    %v2109 = vld [vmem:[%s4 + $0x128] sm:$0xff]
    %v2110 = vld [vmem:[%s4 + $0x130] sm:$0xff]
    %v2111 = vld [vmem:[%s4 + $0x138] sm:$0xff]
    %v2112 = vld [vmem:[%s4 + $0x140] sm:$0xff]
    %v2113 = vld [vmem:[%s4 + $0x148] sm:$0xff]
    %v2114 = vld [vmem:[%s4 + $0x150] sm:$0xff]
    %v2115 = vld [vmem:[%s4 + $0x158] sm:$0xff]
    %v2116 = vld [vmem:[%s4 + $0x160] sm:$0xff]
    %v2117 = vld [vmem:[%s4 + $0x168] sm:$0xff]
    %v2118 = vld [vmem:[%s4 + $0x170] sm:$0xff]
    %v2119 = vld [vmem:[%s4 + $0x178] sm:$0xff]
    %v2120 = vld [vmem:[%s4 + $0x180] sm:$0xff]
    %v2121 = vld [vmem:[%s4 + $0x188] sm:$0xff]
    %v2122 = vld [vmem:[%s4 + $0x190] sm:$0xff]
    %v2123 = vld [vmem:[%s4 + $0x198] sm:$0xff]
    %v2124 = vld [vmem:[%s4 + $0x1a0] sm:$0xff]
    %v2125 = vld [vmem:[%s4 + $0x1a8] sm:$0xff]
    %v2126 = vld [vmem:[%s4 + $0x1b0] sm:$0xff]
    %v2127 = vld [vmem:[%s4 + $0x1b8] sm:$0xff]
    %v2128 = vld [vmem:[%s4 + $0x1c0] sm:$0xff]
    %v2129 = vld [vmem:[%s4 + $0x1c8] sm:$0xff]
    %v2130 = vld [vmem:[%s4 + $0x1d0] sm:$0xff]
    %v2131 = vld [vmem:[%s4 + $0x1d8] sm:$0xff]
    %v2132 = vld [vmem:[%s4 + $0x1e0] sm:$0xff]
    %v2133 = vld [vmem:[%s4 + $0x1e8] sm:$0xff]
    %v2134 = vld [vmem:[%s4 + $0x1f0] sm:$0xff]
    %v2135 = vld [vmem:[%s4 + $0x1f8] sm:$0xff]
    %v2136 = vld [vmem:[%s4 + $0x200] sm:$0xff]
    %v2137 = vld [vmem:[%s4 + $0x208] sm:$0xff]
    %v2138 = vld [vmem:[%s4 + $0x210] sm:$0xff]
    %v2139 = vld [vmem:[%s4 + $0x218] sm:$0xff]
    %v2140 = vld [vmem:[%s4 + $0x220] sm:$0xff]
    %v2141 = vld [vmem:[%s4 + $0x228] sm:$0xff]
    %v2142 = vld [vmem:[%s4 + $0x230] sm:$0xff]
    %v2143 = vld [vmem:[%s4 + $0x238] sm:$0xff]
    %v2144 = vld [vmem:[%s4 + $0x240] sm:$0xff]
    %v2145 = vld [vmem:[%s4 + $0x248] sm:$0xff]
    %v2146 = vld [vmem:[%s4 + $0x250] sm:$0xff]
    %v2147 = vld [vmem:[%s4 + $0x258] sm:$0xff]
    %v2148 = vld [vmem:[%s4 + $0x260] sm:$0xff]
    %v2149 = vld [vmem:[%s4 + $0x268] sm:$0xff]
    %v2150 = vld [vmem:[%s4 + $0x270] sm:$0xff]
    %v2151 = vld [vmem:[%s4 + $0x278] sm:$0xff]
    %v2152 = vld [vmem:[%s4 + $0x280] sm:$0xff]
    %v2153 = vld [vmem:[%s4 + $0x288] sm:$0xff]
    %v2154 = vld [vmem:[%s4 + $0x290] sm:$0xff]
    %v2155 = vld [vmem:[%s4 + $0x298] sm:$0xff]
    %v2156 = vld [vmem:[%s4 + $0x2a0] sm:$0xff]
    %v2157 = vld [vmem:[%s4 + $0x2a8] sm:$0xff]
    %v2158 = vld [vmem:[%s4 + $0x2b0] sm:$0xff]
    %v2159 = vld [vmem:[%s4 + $0x2b8] sm:$0xff]
    %v2160 = vld [vmem:[%s4 + $0x2c0] sm:$0xff]
    %v2161 = vld [vmem:[%s4 + $0x2c8] sm:$0xff]
    %v2162 = vld [vmem:[%s4 + $0x2d0] sm:$0xff]
    %v2163 = vld [vmem:[%s4 + $0x2d8] sm:$0xff]
    %v2164 = vld [vmem:[%s4 + $0x2e0] sm:$0xff]
    %v2165 = vld [vmem:[%s4 + $0x2e8] sm:$0xff]
    %v2166 = vld [vmem:[%s4 + $0x2f0] sm:$0xff]
    %v2167 = vld [vmem:[%s4 + $0x2f8] sm:$0xff]
    %v2168 = vld [vmem:[%s4 + $0x300] sm:$0xff]
    %v2169 = vld [vmem:[%s4 + $0x308] sm:$0xff]
    %v2170 = vld [vmem:[%s4 + $0x310] sm:$0xff]
    %v2171 = vld [vmem:[%s4 + $0x318] sm:$0xff]
    %v2172 = vld [vmem:[%s4 + $0x320] sm:$0xff]
    %v2173 = vld [vmem:[%s4 + $0x328] sm:$0xff]
    %v2174 = vld [vmem:[%s4 + $0x330] sm:$0xff]
    %v2175 = vld [vmem:[%s4 + $0x338] sm:$0xff]
    %v2176 = vld [vmem:[%s4 + $0x340] sm:$0xff]
    %v2177 = vld [vmem:[%s4 + $0x348] sm:$0xff]
    %v2178 = vld [vmem:[%s4 + $0x350] sm:$0xff]
    %v2179 = vld [vmem:[%s4 + $0x358] sm:$0xff]
    %v2180 = vld [vmem:[%s4 + $0x360] sm:$0xff]
    %v2181 = vld [vmem:[%s4 + $0x368] sm:$0xff]
    %v2182 = vld [vmem:[%s4 + $0x370] sm:$0xff]
    %v2183 = vld [vmem:[%s4 + $0x378] sm:$0xff]
    %v2184 = vld [vmem:[%s4 + $0x380] sm:$0xff]
    %v2185 = vld [vmem:[%s4 + $0x388] sm:$0xff]
    %v2186 = vld [vmem:[%s4 + $0x390] sm:$0xff]
    %v2187 = vld [vmem:[%s4 + $0x398] sm:$0xff]
    %v2188 = vld [vmem:[%s4 + $0x3a0] sm:$0xff]
    %v2189 = vld [vmem:[%s4 + $0x3a8] sm:$0xff]
    %v2190 = vld [vmem:[%s4 + $0x3b0] sm:$0xff]
    %v2191 = vld [vmem:[%s4 + $0x3b8] sm:$0xff]
    %v2192 = vld [vmem:[%s4 + $0x3c0] sm:$0xff]
    %v2193 = vld [vmem:[%s4 + $0x3c8] sm:$0xff]
    %v2194 = vld [vmem:[%s4 + $0x3d0] sm:$0xff]
    %v2195 = vld [vmem:[%s4 + $0x3d8] sm:$0xff]
    %v2196 = vld [vmem:[%s4 + $0x3e0] sm:$0xff]
    %v2197 = vld [vmem:[%s4 + $0x3e8] sm:$0xff]
    %v2198 = vld [vmem:[%s4 + $0x3f0] sm:$0xff]
    %v2199 = vld [vmem:[%s4 + $0x3f8] sm:$0xff]
    %v2200 = vld [vmem:[%s5] sm:$0x3]
    %v2202 = vperm.slane %v2200, 0
    %v2203 = vperm.slane %v2200, 1
    %v2334 = vunpack.c.l.b16 %v2072
    %v2335 = vunpack.c.h.b16 %v2072
    %v2336 = vunpack.c.l.b16 %v2073
    %v2337 = vunpack.c.h.b16 %v2073
    %v2338 = vunpack.c.l.b16 %v2074
    %v2339 = vunpack.c.h.b16 %v2074
    %v2340 = vunpack.c.l.b16 %v2075
    %v2341 = vunpack.c.h.b16 %v2075
    %v2342 = vunpack.c.l.b16 %v2076
    %v2343 = vunpack.c.h.b16 %v2076
    %v2344 = vunpack.c.l.b16 %v2077
    %v2345 = vunpack.c.h.b16 %v2077
    %v2346 = vunpack.c.l.b16 %v2078
    %v2347 = vunpack.c.h.b16 %v2078
    %v2348 = vunpack.c.l.b16 %v2079
    %v2349 = vunpack.c.h.b16 %v2079
    %v2350 = vunpack.c.l.b16 %v2080
    %v2351 = vunpack.c.h.b16 %v2080
    %v2352 = vunpack.c.l.b16 %v2081
    %v2353 = vunpack.c.h.b16 %v2081
    %v2354 = vunpack.c.l.b16 %v2082
    %v2355 = vunpack.c.h.b16 %v2082
    %v2356 = vunpack.c.l.b16 %v2083
    %v2357 = vunpack.c.h.b16 %v2083
    %v2358 = vunpack.c.l.b16 %v2084
    %v2359 = vunpack.c.h.b16 %v2084
    %v2360 = vunpack.c.l.b16 %v2085
    %v2361 = vunpack.c.h.b16 %v2085
    %v2362 = vunpack.c.l.b16 %v2086
    %v2363 = vunpack.c.h.b16 %v2086
    %v2364 = vunpack.c.l.b16 %v2087
    %v2365 = vunpack.c.h.b16 %v2087
    %v2366 = vunpack.c.l.b16 %v2088
    %v2367 = vunpack.c.h.b16 %v2088
    %v2368 = vunpack.c.l.b16 %v2089
    %v2369 = vunpack.c.h.b16 %v2089
    %v2370 = vunpack.c.l.b16 %v2090
    %v2371 = vunpack.c.h.b16 %v2090
    %v2372 = vunpack.c.l.b16 %v2091
    %v2373 = vunpack.c.h.b16 %v2091
    %v2374 = vunpack.c.l.b16 %v2092
    %v2375 = vunpack.c.h.b16 %v2092
    %v2376 = vunpack.c.l.b16 %v2093
    %v2377 = vunpack.c.h.b16 %v2093
    %v2378 = vunpack.c.l.b16 %v2094
    %v2379 = vunpack.c.h.b16 %v2094
    %v2380 = vunpack.c.l.b16 %v2095
    %v2381 = vunpack.c.h.b16 %v2095
    %v2382 = vunpack.c.l.b16 %v2096
    %v2383 = vunpack.c.h.b16 %v2096
    %v2384 = vunpack.c.l.b16 %v2097
    %v2385 = vunpack.c.h.b16 %v2097
    %v2386 = vunpack.c.l.b16 %v2098
    %v2387 = vunpack.c.h.b16 %v2098
    %v2388 = vunpack.c.l.b16 %v2099
    %v2389 = vunpack.c.h.b16 %v2099
    %v2390 = vunpack.c.l.b16 %v2100
    %v2391 = vunpack.c.h.b16 %v2100
    %v2392 = vunpack.c.l.b16 %v2101
    %v2393 = vunpack.c.h.b16 %v2101
    %v2394 = vunpack.c.l.b16 %v2102
    %v2395 = vunpack.c.h.b16 %v2102
    %v2396 = vunpack.c.l.b16 %v2103
    %v2397 = vunpack.c.h.b16 %v2103
    %v2398 = vunpack.c.l.b16 %v2104
    %v2399 = vunpack.c.h.b16 %v2104
    %v2400 = vunpack.c.l.b16 %v2105
    %v2401 = vunpack.c.h.b16 %v2105
    %v2402 = vunpack.c.l.b16 %v2106
    %v2403 = vunpack.c.h.b16 %v2106
    %v2404 = vunpack.c.l.b16 %v2107
    %v2405 = vunpack.c.h.b16 %v2107
    %v2406 = vunpack.c.l.b16 %v2108
    %v2407 = vunpack.c.h.b16 %v2108
    %v2408 = vunpack.c.l.b16 %v2109
    %v2409 = vunpack.c.h.b16 %v2109
    %v2410 = vunpack.c.l.b16 %v2110
    %v2411 = vunpack.c.h.b16 %v2110
    %v2412 = vunpack.c.l.b16 %v2111
    %v2413 = vunpack.c.h.b16 %v2111
    %v2414 = vunpack.c.l.b16 %v2112
    %v2415 = vunpack.c.h.b16 %v2112
    %v2416 = vunpack.c.l.b16 %v2113
    %v2417 = vunpack.c.h.b16 %v2113
    %v2418 = vunpack.c.l.b16 %v2114
    %v2419 = vunpack.c.h.b16 %v2114
    %v2420 = vunpack.c.l.b16 %v2115
    %v2421 = vunpack.c.h.b16 %v2115
    %v2422 = vunpack.c.l.b16 %v2116
    %v2423 = vunpack.c.h.b16 %v2116
    %v2424 = vunpack.c.l.b16 %v2117
    %v2425 = vunpack.c.h.b16 %v2117
    %v2426 = vunpack.c.l.b16 %v2118
    %v2427 = vunpack.c.h.b16 %v2118
    %v2428 = vunpack.c.l.b16 %v2119
    %v2429 = vunpack.c.h.b16 %v2119
    %v2430 = vunpack.c.l.b16 %v2120
    %v2431 = vunpack.c.h.b16 %v2120
    %v2432 = vunpack.c.l.b16 %v2121
    %v2433 = vunpack.c.h.b16 %v2121
    %v2434 = vunpack.c.l.b16 %v2122
    %v2435 = vunpack.c.h.b16 %v2122
    %v2436 = vunpack.c.l.b16 %v2123
    %v2437 = vunpack.c.h.b16 %v2123
    %v2438 = vunpack.c.l.b16 %v2124
    %v2439 = vunpack.c.h.b16 %v2124
    %v2440 = vunpack.c.l.b16 %v2125
    %v2441 = vunpack.c.h.b16 %v2125
    %v2442 = vunpack.c.l.b16 %v2126
    %v2443 = vunpack.c.h.b16 %v2126
    %v2444 = vunpack.c.l.b16 %v2127
    %v2445 = vunpack.c.h.b16 %v2127
    %v2446 = vunpack.c.l.b16 %v2128
    %v2447 = vunpack.c.h.b16 %v2128
    %v2448 = vunpack.c.l.b16 %v2129
    %v2449 = vunpack.c.h.b16 %v2129
    %v2450 = vunpack.c.l.b16 %v2130
    %v2451 = vunpack.c.h.b16 %v2130
    %v2452 = vunpack.c.l.b16 %v2131
    %v2453 = vunpack.c.h.b16 %v2131
    %v2454 = vunpack.c.l.b16 %v2132
    %v2455 = vunpack.c.h.b16 %v2132
    %v2456 = vunpack.c.l.b16 %v2133
    %v2457 = vunpack.c.h.b16 %v2133
    %v2458 = vunpack.c.l.b16 %v2134
    %v2459 = vunpack.c.h.b16 %v2134
    %v2460 = vunpack.c.l.b16 %v2135
    %v2461 = vunpack.c.h.b16 %v2135
    %v2462 = vunpack.c.l.b16 %v2136
    %v2463 = vunpack.c.h.b16 %v2136
    %v2464 = vunpack.c.l.b16 %v2137
    %v2465 = vunpack.c.h.b16 %v2137
    %v2466 = vunpack.c.l.b16 %v2138
    %v2467 = vunpack.c.h.b16 %v2138
    %v2468 = vunpack.c.l.b16 %v2139
    %v2469 = vunpack.c.h.b16 %v2139
    %v2470 = vunpack.c.l.b16 %v2140
    %v2471 = vunpack.c.h.b16 %v2140
    %v2472 = vunpack.c.l.b16 %v2141
    %v2473 = vunpack.c.h.b16 %v2141
    %v2474 = vunpack.c.l.b16 %v2142
    %v2475 = vunpack.c.h.b16 %v2142
    %v2476 = vunpack.c.l.b16 %v2143
    %v2477 = vunpack.c.h.b16 %v2143
    %v2478 = vunpack.c.l.b16 %v2144
    %v2479 = vunpack.c.h.b16 %v2144
    %v2480 = vunpack.c.l.b16 %v2145
    %v2481 = vunpack.c.h.b16 %v2145
    %v2482 = vunpack.c.l.b16 %v2146
    %v2483 = vunpack.c.h.b16 %v2146
    %v2484 = vunpack.c.l.b16 %v2147
    %v2485 = vunpack.c.h.b16 %v2147
    %v2486 = vunpack.c.l.b16 %v2148
    %v2487 = vunpack.c.h.b16 %v2148
    %v2488 = vunpack.c.l.b16 %v2149
    %v2489 = vunpack.c.h.b16 %v2149
    %v2490 = vunpack.c.l.b16 %v2150
    %v2491 = vunpack.c.h.b16 %v2150
    %v2492 = vunpack.c.l.b16 %v2151
    %v2493 = vunpack.c.h.b16 %v2151
    %v2494 = vunpack.c.l.b16 %v2152
    %v2495 = vunpack.c.h.b16 %v2152
    %v2496 = vunpack.c.l.b16 %v2153
    %v2497 = vunpack.c.h.b16 %v2153
    %v2498 = vunpack.c.l.b16 %v2154
    %v2499 = vunpack.c.h.b16 %v2154
    %v2500 = vunpack.c.l.b16 %v2155
    %v2501 = vunpack.c.h.b16 %v2155
    %v2502 = vunpack.c.l.b16 %v2156
    %v2503 = vunpack.c.h.b16 %v2156
    %v2504 = vunpack.c.l.b16 %v2157
    %v2505 = vunpack.c.h.b16 %v2157
    %v2506 = vunpack.c.l.b16 %v2158
    %v2507 = vunpack.c.h.b16 %v2158
    %v2508 = vunpack.c.l.b16 %v2159
    %v2509 = vunpack.c.h.b16 %v2159
    %v2510 = vunpack.c.l.b16 %v2160
    %v2511 = vunpack.c.h.b16 %v2160
    %v2512 = vunpack.c.l.b16 %v2161
    %v2513 = vunpack.c.h.b16 %v2161
    %v2514 = vunpack.c.l.b16 %v2162
    %v2515 = vunpack.c.h.b16 %v2162
    %v2516 = vunpack.c.l.b16 %v2163
    %v2517 = vunpack.c.h.b16 %v2163
    %v2518 = vunpack.c.l.b16 %v2164
    %v2519 = vunpack.c.h.b16 %v2164
    %v2520 = vunpack.c.l.b16 %v2165
    %v2521 = vunpack.c.h.b16 %v2165
    %v2522 = vunpack.c.l.b16 %v2166
    %v2523 = vunpack.c.h.b16 %v2166
    %v2524 = vunpack.c.l.b16 %v2167
    %v2525 = vunpack.c.h.b16 %v2167
    %v2526 = vunpack.c.l.b16 %v2168
    %v2527 = vunpack.c.h.b16 %v2168
    %v2528 = vunpack.c.l.b16 %v2169
    %v2529 = vunpack.c.h.b16 %v2169
    %v2530 = vunpack.c.l.b16 %v2170
    %v2531 = vunpack.c.h.b16 %v2170
    %v2532 = vunpack.c.l.b16 %v2171
    %v2533 = vunpack.c.h.b16 %v2171
    %v2534 = vunpack.c.l.b16 %v2172
    %v2535 = vunpack.c.h.b16 %v2172
    %v2536 = vunpack.c.l.b16 %v2173
    %v2537 = vunpack.c.h.b16 %v2173
    %v2538 = vunpack.c.l.b16 %v2174
    %v2539 = vunpack.c.h.b16 %v2174
    %v2540 = vunpack.c.l.b16 %v2175
    %v2541 = vunpack.c.h.b16 %v2175
    %v2542 = vunpack.c.l.b16 %v2176
    %v2543 = vunpack.c.h.b16 %v2176
    %v2544 = vunpack.c.l.b16 %v2177
    %v2545 = vunpack.c.h.b16 %v2177
    %v2546 = vunpack.c.l.b16 %v2178
    %v2547 = vunpack.c.h.b16 %v2178
    %v2548 = vunpack.c.l.b16 %v2179
    %v2549 = vunpack.c.h.b16 %v2179
    %v2550 = vunpack.c.l.b16 %v2180
    %v2551 = vunpack.c.h.b16 %v2180
    %v2552 = vunpack.c.l.b16 %v2181
    %v2553 = vunpack.c.h.b16 %v2181
    %v2554 = vunpack.c.l.b16 %v2182
    %v2555 = vunpack.c.h.b16 %v2182
    %v2556 = vunpack.c.l.b16 %v2183
    %v2557 = vunpack.c.h.b16 %v2183
    %v2558 = vunpack.c.l.b16 %v2184
    %v2559 = vunpack.c.h.b16 %v2184
    %v2560 = vunpack.c.l.b16 %v2185
    %v2561 = vunpack.c.h.b16 %v2185
    %v2562 = vunpack.c.l.b16 %v2186
    %v2563 = vunpack.c.h.b16 %v2186
    %v2564 = vunpack.c.l.b16 %v2187
    %v2565 = vunpack.c.h.b16 %v2187
    %v2566 = vunpack.c.l.b16 %v2188
    %v2567 = vunpack.c.h.b16 %v2188
    %v2568 = vunpack.c.l.b16 %v2189
    %v2569 = vunpack.c.h.b16 %v2189
    %v2570 = vunpack.c.l.b16 %v2190
    %v2571 = vunpack.c.h.b16 %v2190
    %v2572 = vunpack.c.l.b16 %v2191
    %v2573 = vunpack.c.h.b16 %v2191
    %v2574 = vunpack.c.l.b16 %v2192
    %v2575 = vunpack.c.h.b16 %v2192
    %v2576 = vunpack.c.l.b16 %v2193
    %v2577 = vunpack.c.h.b16 %v2193
    %v2578 = vunpack.c.l.b16 %v2194
    %v2579 = vunpack.c.h.b16 %v2194
    %v2580 = vunpack.c.l.b16 %v2195
    %v2581 = vunpack.c.h.b16 %v2195
    %v2582 = vunpack.c.l.b16 %v2196
    %v2583 = vunpack.c.h.b16 %v2196
    %v2584 = vunpack.c.l.b16 %v2197
    %v2585 = vunpack.c.h.b16 %v2197
    %v2586 = vunpack.c.l.b16 %v2198
    %v2587 = vunpack.c.h.b16 %v2198
    %v2588 = vunpack.c.l.b16 %v2199
    %v2589 = vunpack.c.h.b16 %v2199
    %v2590 = vpack.c.b16 %v2336, %v2334
    %v2591 = vpack.c.b16 %v2337, %v2335
    %v2592 = vpack.c.b16 %v2340, %v2338
    %v2593 = vpack.c.b16 %v2341, %v2339
    %v2594 = vpack.c.b16 %v2344, %v2342
    %v2595 = vpack.c.b16 %v2345, %v2343
    %v2596 = vpack.c.b16 %v2348, %v2346
    %v2597 = vpack.c.b16 %v2349, %v2347
    %v2598 = vpack.c.b16 %v2352, %v2350
    %v2599 = vpack.c.b16 %v2353, %v2351
    %v2600 = vpack.c.b16 %v2356, %v2354
    %v2601 = vpack.c.b16 %v2357, %v2355
    %v2602 = vpack.c.b16 %v2360, %v2358
    %v2603 = vpack.c.b16 %v2361, %v2359
    %v2604 = vpack.c.b16 %v2364, %v2362
    %v2605 = vpack.c.b16 %v2365, %v2363
    %v2606 = vpack.c.b16 %v2368, %v2366
    %v2607 = vpack.c.b16 %v2369, %v2367
    %v2608 = vpack.c.b16 %v2372, %v2370
    %v2609 = vpack.c.b16 %v2373, %v2371
    %v2610 = vpack.c.b16 %v2376, %v2374
    %v2611 = vpack.c.b16 %v2377, %v2375
    %v2612 = vpack.c.b16 %v2380, %v2378
    %v2613 = vpack.c.b16 %v2381, %v2379
    %v2614 = vpack.c.b16 %v2384, %v2382
    %v2615 = vpack.c.b16 %v2385, %v2383
    %v2616 = vpack.c.b16 %v2388, %v2386
    %v2617 = vpack.c.b16 %v2389, %v2387
    %v2618 = vpack.c.b16 %v2392, %v2390
    %v2619 = vpack.c.b16 %v2393, %v2391
    %v2620 = vpack.c.b16 %v2396, %v2394
    %v2621 = vpack.c.b16 %v2397, %v2395
    %v2622 = vpack.c.b16 %v2400, %v2398
    %v2623 = vpack.c.b16 %v2401, %v2399
    %v2624 = vpack.c.b16 %v2404, %v2402
    %v2625 = vpack.c.b16 %v2405, %v2403
    %v2626 = vpack.c.b16 %v2408, %v2406
    %v2627 = vpack.c.b16 %v2409, %v2407
    %v2628 = vpack.c.b16 %v2412, %v2410
    %v2629 = vpack.c.b16 %v2413, %v2411
    %v2630 = vpack.c.b16 %v2416, %v2414
    %v2631 = vpack.c.b16 %v2417, %v2415
    %v2632 = vpack.c.b16 %v2420, %v2418
    %v2633 = vpack.c.b16 %v2421, %v2419
    %v2634 = vpack.c.b16 %v2424, %v2422
    %v2635 = vpack.c.b16 %v2425, %v2423
    %v2636 = vpack.c.b16 %v2428, %v2426
    %v2637 = vpack.c.b16 %v2429, %v2427
    %v2638 = vpack.c.b16 %v2432, %v2430
    %v2639 = vpack.c.b16 %v2433, %v2431
    %v2640 = vpack.c.b16 %v2436, %v2434
    %v2641 = vpack.c.b16 %v2437, %v2435
    %v2642 = vpack.c.b16 %v2440, %v2438
    %v2643 = vpack.c.b16 %v2441, %v2439
    %v2644 = vpack.c.b16 %v2444, %v2442
    %v2645 = vpack.c.b16 %v2445, %v2443
    %v2646 = vpack.c.b16 %v2448, %v2446
    %v2647 = vpack.c.b16 %v2449, %v2447
    %v2648 = vpack.c.b16 %v2452, %v2450
    %v2649 = vpack.c.b16 %v2453, %v2451
    %v2650 = vpack.c.b16 %v2456, %v2454
    %v2651 = vpack.c.b16 %v2457, %v2455
    %v2652 = vpack.c.b16 %v2460, %v2458
    %v2653 = vpack.c.b16 %v2461, %v2459
    %v2654 = vpack.c.b16 %v2464, %v2462
    %v2655 = vpack.c.b16 %v2465, %v2463
    %v2656 = vpack.c.b16 %v2468, %v2466
    %v2657 = vpack.c.b16 %v2469, %v2467
    %v2658 = vpack.c.b16 %v2472, %v2470
    %v2659 = vpack.c.b16 %v2473, %v2471
    %v2660 = vpack.c.b16 %v2476, %v2474
    %v2661 = vpack.c.b16 %v2477, %v2475
    %v2662 = vpack.c.b16 %v2480, %v2478
    %v2663 = vpack.c.b16 %v2481, %v2479
    %v2664 = vpack.c.b16 %v2484, %v2482
    %v2665 = vpack.c.b16 %v2485, %v2483
    %v2666 = vpack.c.b16 %v2488, %v2486
    %v2667 = vpack.c.b16 %v2489, %v2487
    %v2668 = vpack.c.b16 %v2492, %v2490
    %v2669 = vpack.c.b16 %v2493, %v2491
    %v2670 = vpack.c.b16 %v2496, %v2494
    %v2671 = vpack.c.b16 %v2497, %v2495
    %v2672 = vpack.c.b16 %v2500, %v2498
    %v2673 = vpack.c.b16 %v2501, %v2499
    %v2674 = vpack.c.b16 %v2504, %v2502
    %v2675 = vpack.c.b16 %v2505, %v2503
    %v2676 = vpack.c.b16 %v2508, %v2506
    %v2677 = vpack.c.b16 %v2509, %v2507
    %v2678 = vpack.c.b16 %v2512, %v2510
    %v2679 = vpack.c.b16 %v2513, %v2511
    %v2680 = vpack.c.b16 %v2516, %v2514
    %v2681 = vpack.c.b16 %v2517, %v2515
    %v2682 = vpack.c.b16 %v2520, %v2518
    %v2683 = vpack.c.b16 %v2521, %v2519
    %v2684 = vpack.c.b16 %v2524, %v2522
    %v2685 = vpack.c.b16 %v2525, %v2523
    %v2686 = vpack.c.b16 %v2528, %v2526
    %v2687 = vpack.c.b16 %v2529, %v2527
    %v2688 = vpack.c.b16 %v2532, %v2530
    %v2689 = vpack.c.b16 %v2533, %v2531
    %v2690 = vpack.c.b16 %v2536, %v2534
    %v2691 = vpack.c.b16 %v2537, %v2535
    %v2692 = vpack.c.b16 %v2540, %v2538
    %v2693 = vpack.c.b16 %v2541, %v2539
    %v2694 = vpack.c.b16 %v2544, %v2542
    %v2695 = vpack.c.b16 %v2545, %v2543
    %v2696 = vpack.c.b16 %v2548, %v2546
    %v2697 = vpack.c.b16 %v2549, %v2547
    %v2698 = vpack.c.b16 %v2552, %v2550
    %v2699 = vpack.c.b16 %v2553, %v2551
    %v2700 = vpack.c.b16 %v2556, %v2554
    %v2701 = vpack.c.b16 %v2557, %v2555
    %v2702 = vpack.c.b16 %v2560, %v2558
    %v2703 = vpack.c.b16 %v2561, %v2559
    %v2704 = vpack.c.b16 %v2564, %v2562
    %v2705 = vpack.c.b16 %v2565, %v2563
    %v2706 = vpack.c.b16 %v2568, %v2566
    %v2707 = vpack.c.b16 %v2569, %v2567
    %v2708 = vpack.c.b16 %v2572, %v2570
    %v2709 = vpack.c.b16 %v2573, %v2571
    %v2710 = vpack.c.b16 %v2576, %v2574
    %v2711 = vpack.c.b16 %v2577, %v2575
    %v2712 = vpack.c.b16 %v2580, %v2578
    %v2713 = vpack.c.b16 %v2581, %v2579
    %v2714 = vpack.c.b16 %v2584, %v2582
    %v2715 = vpack.c.b16 %v2585, %v2583
    %v2716 = vpack.c.b16 %v2588, %v2586
    %v2717 = vpack.c.b16 %v2589, %v2587
    %2846 = vmatpush.bf16.msra.mxu0 %v2604
    %2847 = vmatpush.bf16.msra.mxu0 %v2602
    %2848 = vmatpush.bf16.msra.mxu0 %v2600
    %2849 = vmatpush.bf16.msra.mxu0 %v2598
    %2850 = vmatpush.bf16.msra.mxu0 %v2596
    %2851 = vmatpush.bf16.msra.mxu0 %v2594
    %2852 = vmatpush.bf16.msra.mxu0 %v2592
    %2853 = vmatpush.bf16.msra.mxu0 %v2590
    %2854 = vmatmul.bf16.gmra.mxu0 %v2064
    %v2855 = vpop.f32.mrf.mxu0
    %v2856 = vadd.f32 %v2202, %v2855
    %v2857 = vpop.f32.mrf.mxu0
    %2858 = vdwg.mxu0
    %2859 = vmatpush.bf16.msra.mxu0 %v2620
    %2860 = vmatpush.bf16.msra.mxu0 %v2618
    %2861 = vmatpush.bf16.msra.mxu0 %v2616
    %2862 = vmatpush.bf16.msra.mxu0 %v2614
    %2863 = vmatpush.bf16.msra.mxu0 %v2612
    %2864 = vmatpush.bf16.msra.mxu0 %v2610
    %2865 = vmatpush.bf16.msra.mxu0 %v2608
    %2866 = vmatpush.bf16.msra.mxu0 %v2606
    %2867 = vmatmul.bf16.gmra.mxu0 %v2065
    %v2868 = vpop.f32.mrf.mxu0
    %v2869 = vadd.f32 %v2856, %v2868
    %v2870 = vpop.f32.mrf.mxu0
    %2871 = vdwg.mxu0
    %2872 = vmatpush.bf16.msra.mxu0 %v2636
    %2873 = vmatpush.bf16.msra.mxu0 %v2634
    %2874 = vmatpush.bf16.msra.mxu0 %v2632
    %2875 = vmatpush.bf16.msra.mxu0 %v2630
    %2876 = vmatpush.bf16.msra.mxu0 %v2628
    %2877 = vmatpush.bf16.msra.mxu0 %v2626
    %2878 = vmatpush.bf16.msra.mxu0 %v2624
    %2879 = vmatpush.bf16.msra.mxu0 %v2622
    %2880 = vmatmul.bf16.gmra.mxu0 %v2066
    %v2881 = vpop.f32.mrf.mxu0
    %v2882 = vadd.f32 %v2869, %v2881
    %v2883 = vpop.f32.mrf.mxu0
    %2884 = vdwg.mxu0
    %2885 = vmatpush.bf16.msra.mxu0 %v2652
    %2886 = vmatpush.bf16.msra.mxu0 %v2650
    %2887 = vmatpush.bf16.msra.mxu0 %v2648
    %2888 = vmatpush.bf16.msra.mxu0 %v2646
    %2889 = vmatpush.bf16.msra.mxu0 %v2644
    %2890 = vmatpush.bf16.msra.mxu0 %v2642
    %2891 = vmatpush.bf16.msra.mxu0 %v2640
    %2892 = vmatpush.bf16.msra.mxu0 %v2638
    %2893 = vmatmul.bf16.gmra.mxu0 %v2067
    %v2894 = vpop.f32.mrf.mxu0
    %v2895 = vadd.f32 %v2882, %v2894
    %v2896 = vpop.f32.mrf.mxu0
    %2897 = vdwg.mxu0
    %2898 = vmatpush.bf16.msra.mxu0 %v2668
    %2899 = vmatpush.bf16.msra.mxu0 %v2666
    %2900 = vmatpush.bf16.msra.mxu0 %v2664
    %2901 = vmatpush.bf16.msra.mxu0 %v2662
    %2902 = vmatpush.bf16.msra.mxu0 %v2660
    %2903 = vmatpush.bf16.msra.mxu0 %v2658
    %2904 = vmatpush.bf16.msra.mxu0 %v2656
    %2905 = vmatpush.bf16.msra.mxu0 %v2654
    %2906 = vmatmul.bf16.gmra.mxu0 %v2068
    %v2907 = vpop.f32.mrf.mxu0
    %v2908 = vadd.f32 %v2895, %v2907
    %v2909 = vpop.f32.mrf.mxu0
    %2910 = vdwg.mxu0
    %2911 = vmatpush.bf16.msra.mxu0 %v2684
    %2912 = vmatpush.bf16.msra.mxu0 %v2682
    %2913 = vmatpush.bf16.msra.mxu0 %v2680
    %2914 = vmatpush.bf16.msra.mxu0 %v2678
    %2915 = vmatpush.bf16.msra.mxu0 %v2676
    %2916 = vmatpush.bf16.msra.mxu0 %v2674
    %2917 = vmatpush.bf16.msra.mxu0 %v2672
    %2918 = vmatpush.bf16.msra.mxu0 %v2670
    %2919 = vmatmul.bf16.gmra.mxu0 %v2069
    %v2920 = vpop.f32.mrf.mxu0
    %v2921 = vadd.f32 %v2908, %v2920
    %v2922 = vpop.f32.mrf.mxu0
    %2923 = vdwg.mxu0
    %2924 = vmatpush.bf16.msra.mxu0 %v2700
    %2925 = vmatpush.bf16.msra.mxu0 %v2698
    %2926 = vmatpush.bf16.msra.mxu0 %v2696
    %2927 = vmatpush.bf16.msra.mxu0 %v2694
    %2928 = vmatpush.bf16.msra.mxu0 %v2692
    %2929 = vmatpush.bf16.msra.mxu0 %v2690
    %2930 = vmatpush.bf16.msra.mxu0 %v2688
    %2931 = vmatpush.bf16.msra.mxu0 %v2686
    %2932 = vmatmul.bf16.gmra.mxu0 %v2070
    %v2933 = vpop.f32.mrf.mxu0
    %v2934 = vadd.f32 %v2921, %v2933
    %v2935 = vpop.f32.mrf.mxu0
    %2936 = vdwg.mxu0
    %2937 = vmatpush.bf16.msra.mxu0 %v2716
    %2938 = vmatpush.bf16.msra.mxu0 %v2714
    %2939 = vmatpush.bf16.msra.mxu0 %v2712
    %2940 = vmatpush.bf16.msra.mxu0 %v2710
    %2941 = vmatpush.bf16.msra.mxu0 %v2708
    %2942 = vmatpush.bf16.msra.mxu0 %v2706
    %2943 = vmatpush.bf16.msra.mxu0 %v2704
    %2944 = vmatpush.bf16.msra.mxu0 %v2702
    %2945 = vmatmul.bf16.gmra.mxu0 %v2071
    %v2946 = vpop.f32.mrf.mxu0
    %v2947 = vadd.f32 %v2934, %v2946
    %v2948 = vpop.f32.mrf.mxu0
    %2949 = vdwg.mxu0
    %2950 = vmatpush.bf16.msra.mxu0 %v2605
    %2951 = vmatpush.bf16.msra.mxu0 %v2603
    %2952 = vmatpush.bf16.msra.mxu0 %v2601
    %2953 = vmatpush.bf16.msra.mxu0 %v2599
    %2954 = vmatpush.bf16.msra.mxu0 %v2597
    %2955 = vmatpush.bf16.msra.mxu0 %v2595
    %2956 = vmatpush.bf16.msra.mxu0 %v2593
    %2957 = vmatpush.bf16.msra.mxu0 %v2591
    %2958 = vmatmul.bf16.gmra.mxu0 %v2064
    %v2959 = vpop.f32.mrf.mxu0
    %v2960 = vadd.f32 %v2203, %v2959
    %v2961 = vpop.f32.mrf.mxu0
    %2962 = vdwg.mxu0
    %2963 = vmatpush.bf16.msra.mxu0 %v2621
    %2964 = vmatpush.bf16.msra.mxu0 %v2619
    %2965 = vmatpush.bf16.msra.mxu0 %v2617
    %2966 = vmatpush.bf16.msra.mxu0 %v2615
    %2967 = vmatpush.bf16.msra.mxu0 %v2613
    %2968 = vmatpush.bf16.msra.mxu0 %v2611
    %2969 = vmatpush.bf16.msra.mxu0 %v2609
    %2970 = vmatpush.bf16.msra.mxu0 %v2607
    %2971 = vmatmul.bf16.gmra.mxu0 %v2065
    %v2972 = vpop.f32.mrf.mxu0
    %v2973 = vadd.f32 %v2960, %v2972
    %v2974 = vpop.f32.mrf.mxu0
    %2975 = vdwg.mxu0
    %2976 = vmatpush.bf16.msra.mxu0 %v2637
    %2977 = vmatpush.bf16.msra.mxu0 %v2635
    %2978 = vmatpush.bf16.msra.mxu0 %v2633
    %2979 = vmatpush.bf16.msra.mxu0 %v2631
    %2980 = vmatpush.bf16.msra.mxu0 %v2629
    %2981 = vmatpush.bf16.msra.mxu0 %v2627
    %2982 = vmatpush.bf16.msra.mxu0 %v2625
    %2983 = vmatpush.bf16.msra.mxu0 %v2623
    %2984 = vmatmul.bf16.gmra.mxu0 %v2066
    %v2985 = vpop.f32.mrf.mxu0
    %v2986 = vadd.f32 %v2973, %v2985
    %v2987 = vpop.f32.mrf.mxu0
    %2988 = vdwg.mxu0
    %2989 = vmatpush.bf16.msra.mxu0 %v2653
    %2990 = vmatpush.bf16.msra.mxu0 %v2651
    %2991 = vmatpush.bf16.msra.mxu0 %v2649
    %2992 = vmatpush.bf16.msra.mxu0 %v2647
    %2993 = vmatpush.bf16.msra.mxu0 %v2645
    %2994 = vmatpush.bf16.msra.mxu0 %v2643
    %2995 = vmatpush.bf16.msra.mxu0 %v2641
    %2996 = vmatpush.bf16.msra.mxu0 %v2639
    %2997 = vmatmul.bf16.gmra.mxu0 %v2067
    %v2998 = vpop.f32.mrf.mxu0
    %v2999 = vadd.f32 %v2986, %v2998
    %v3000 = vpop.f32.mrf.mxu0
    %3001 = vdwg.mxu0
    %3002 = vmatpush.bf16.msra.mxu0 %v2669
    %3003 = vmatpush.bf16.msra.mxu0 %v2667
    %3004 = vmatpush.bf16.msra.mxu0 %v2665
    %3005 = vmatpush.bf16.msra.mxu0 %v2663
    %3006 = vmatpush.bf16.msra.mxu0 %v2661
    %3007 = vmatpush.bf16.msra.mxu0 %v2659
    %3008 = vmatpush.bf16.msra.mxu0 %v2657
    %3009 = vmatpush.bf16.msra.mxu0 %v2655
    %3010 = vmatmul.bf16.gmra.mxu0 %v2068
    %v3011 = vpop.f32.mrf.mxu0
    %v3012 = vadd.f32 %v2999, %v3011
    %v3013 = vpop.f32.mrf.mxu0
    %3014 = vdwg.mxu0
    %3015 = vmatpush.bf16.msra.mxu0 %v2685
    %3016 = vmatpush.bf16.msra.mxu0 %v2683
    %3017 = vmatpush.bf16.msra.mxu0 %v2681
    %3018 = vmatpush.bf16.msra.mxu0 %v2679
    %3019 = vmatpush.bf16.msra.mxu0 %v2677
    %3020 = vmatpush.bf16.msra.mxu0 %v2675
    %3021 = vmatpush.bf16.msra.mxu0 %v2673
    %3022 = vmatpush.bf16.msra.mxu0 %v2671
    %3023 = vmatmul.bf16.gmra.mxu0 %v2069
    %v3024 = vpop.f32.mrf.mxu0
    %v3025 = vadd.f32 %v3012, %v3024
    %v3026 = vpop.f32.mrf.mxu0
    %3027 = vdwg.mxu0
    %3028 = vmatpush.bf16.msra.mxu0 %v2701
    %3029 = vmatpush.bf16.msra.mxu0 %v2699
    %3030 = vmatpush.bf16.msra.mxu0 %v2697
    %3031 = vmatpush.bf16.msra.mxu0 %v2695
    %3032 = vmatpush.bf16.msra.mxu0 %v2693
    %3033 = vmatpush.bf16.msra.mxu0 %v2691
    %3034 = vmatpush.bf16.msra.mxu0 %v2689
    %3035 = vmatpush.bf16.msra.mxu0 %v2687
    %3036 = vmatmul.bf16.gmra.mxu0 %v2070
    %v3037 = vpop.f32.mrf.mxu0
    %v3038 = vadd.f32 %v3025, %v3037
    %v3039 = vpop.f32.mrf.mxu0
    %3040 = vdwg.mxu0
    %3041 = vmatpush.bf16.msra.mxu0 %v2717
    %3042 = vmatpush.bf16.msra.mxu0 %v2715
    %3043 = vmatpush.bf16.msra.mxu0 %v2713
    %3044 = vmatpush.bf16.msra.mxu0 %v2711
    %3045 = vmatpush.bf16.msra.mxu0 %v2709
    %3046 = vmatpush.bf16.msra.mxu0 %v2707
    %3047 = vmatpush.bf16.msra.mxu0 %v2705
    %3048 = vmatpush.bf16.msra.mxu0 %v2703
    %3049 = vmatmul.bf16.gmra.mxu0 %v2071
    %v3050 = vpop.f32.mrf.mxu0
    %v3051 = vadd.f32 %v3038, %v3050
    %v3052 = vpop.f32.mrf.mxu0
    %3053 = vdwg.mxu0
    %vm3054 = vcmp.ge.f32.partialorder %v2947, 0.0
    %vm3055 = vcmp.ge.f32.partialorder %v3051, 0.0
    %v3056 = vmul.f32 %v2947, 0.01
    %v3057 = vmul.f32 %v3051, 0.01
    %v3058 = vsel %vm3054, %v2947, %v3056
    %v3059 = vsel %vm3055, %v3051, %v3057
    %v3060 = vld [vmem:[%s6] sm:$0x3]
    %v3062 = vperm.slane %v3060, 0
    %v3063 = vperm.slane %v3060, 1
    %v3066 = vadd.f32 %v3058, %v3062
    %v3067 = vadd.f32 %v3059, %v3063
    %v3068 = vpack.c.bf16 %v3066, %v3066
    %v3069 = vpack.c.bf16 %v3067, %v3067
    %v3070 = vld [vmem:[%s7] sm:$0xf]
    %v3071 = vld [vmem:[%s7 + $0x4] sm:$0xf]
    %v3072 = vld [vmem:[%s7 + $0x8] sm:$0xf]
    %v3073 = vld [vmem:[%s7 + $0xc] sm:$0xf]
    %v3074 = vld [vmem:[%s7 + $0x10] sm:$0xf]
    %v3075 = vld [vmem:[%s7 + $0x14] sm:$0xf]
    %v3076 = vld [vmem:[%s7 + $0x18] sm:$0xf]
    %v3077 = vld [vmem:[%s7 + $0x1c] sm:$0xf]
    %v3078 = vld [vmem:[%s7 + $0x20] sm:$0xf]
    %v3079 = vld [vmem:[%s7 + $0x24] sm:$0xf]
    %v3080 = vld [vmem:[%s7 + $0x28] sm:$0xf]
    %v3081 = vld [vmem:[%s7 + $0x2c] sm:$0xf]
    %v3082 = vld [vmem:[%s7 + $0x30] sm:$0xf]
    %v3083 = vld [vmem:[%s7 + $0x34] sm:$0xf]
    %v3084 = vld [vmem:[%s7 + $0x38] sm:$0xf]
    %v3085 = vld [vmem:[%s7 + $0x3c] sm:$0xf]
    %v3086 = vld [vmem:[%s7 + $0x40] sm:$0xf]
    %v3087 = vld [vmem:[%s7 + $0x44] sm:$0xf]
    %v3088 = vld [vmem:[%s7 + $0x48] sm:$0xf]
    %v3089 = vld [vmem:[%s7 + $0x4c] sm:$0xf]
    %v3090 = vld [vmem:[%s7 + $0x50] sm:$0xf]
    %v3091 = vld [vmem:[%s7 + $0x54] sm:$0xf]
    %v3092 = vld [vmem:[%s7 + $0x58] sm:$0xf]
    %v3093 = vld [vmem:[%s7 + $0x5c] sm:$0xf]
    %v3094 = vld [vmem:[%s7 + $0x60] sm:$0xf]
    %v3095 = vld [vmem:[%s7 + $0x64] sm:$0xf]
    %v3096 = vld [vmem:[%s7 + $0x68] sm:$0xf]
    %v3097 = vld [vmem:[%s7 + $0x6c] sm:$0xf]
    %v3098 = vld [vmem:[%s7 + $0x70] sm:$0xf]
    %v3099 = vld [vmem:[%s7 + $0x74] sm:$0xf]
    %v3100 = vld [vmem:[%s7 + $0x78] sm:$0xf]
    %v3101 = vld [vmem:[%s7 + $0x7c] sm:$0xf]
    %v3102 = vld [vmem:[%s8] sm:$0x1]
    %v3104 = vperm.slane %v3102, 0
    %v3138 = vunpack.c.l.b16 %v3070
    %v3139 = vunpack.c.l.b16 %v3071
    %v3140 = vunpack.c.l.b16 %v3072
    %v3141 = vunpack.c.l.b16 %v3073
    %v3142 = vunpack.c.l.b16 %v3074
    %v3143 = vunpack.c.l.b16 %v3075
    %v3144 = vunpack.c.l.b16 %v3076
    %v3145 = vunpack.c.l.b16 %v3077
    %v3146 = vunpack.c.l.b16 %v3078
    %v3147 = vunpack.c.l.b16 %v3079
    %v3148 = vunpack.c.l.b16 %v3080
    %v3149 = vunpack.c.l.b16 %v3081
    %v3150 = vunpack.c.l.b16 %v3082
    %v3151 = vunpack.c.l.b16 %v3083
    %v3152 = vunpack.c.l.b16 %v3084
    %v3153 = vunpack.c.l.b16 %v3085
    %v3154 = vunpack.c.l.b16 %v3086
    %v3155 = vunpack.c.l.b16 %v3087
    %v3156 = vunpack.c.l.b16 %v3088
    %v3157 = vunpack.c.l.b16 %v3089
    %v3158 = vunpack.c.l.b16 %v3090
    %v3159 = vunpack.c.l.b16 %v3091
    %v3160 = vunpack.c.l.b16 %v3092
    %v3161 = vunpack.c.l.b16 %v3093
    %v3162 = vunpack.c.l.b16 %v3094
    %v3163 = vunpack.c.l.b16 %v3095
    %v3164 = vunpack.c.l.b16 %v3096
    %v3165 = vunpack.c.l.b16 %v3097
    %v3166 = vunpack.c.l.b16 %v3098
    %v3167 = vunpack.c.l.b16 %v3099
    %v3168 = vunpack.c.l.b16 %v3100
    %v3169 = vunpack.c.l.b16 %v3101
    %v3170 = vpack.c.b16 %v3139, %v3138
    %v3171 = vpack.c.b16 %v3141, %v3140
    %v3172 = vpack.c.b16 %v3143, %v3142
    %v3173 = vpack.c.b16 %v3145, %v3144
    %v3174 = vpack.c.b16 %v3147, %v3146
    %v3175 = vpack.c.b16 %v3149, %v3148
    %v3176 = vpack.c.b16 %v3151, %v3150
    %v3177 = vpack.c.b16 %v3153, %v3152
    %v3178 = vpack.c.b16 %v3155, %v3154
    %v3179 = vpack.c.b16 %v3157, %v3156
    %v3180 = vpack.c.b16 %v3159, %v3158
    %v3181 = vpack.c.b16 %v3161, %v3160
    %v3182 = vpack.c.b16 %v3163, %v3162
    %v3183 = vpack.c.b16 %v3165, %v3164
    %v3184 = vpack.c.b16 %v3167, %v3166
    %v3185 = vpack.c.b16 %v3169, %v3168
    %3202 = vmatpush.bf16.msra.mxu0 %v3177
    %3203 = vmatpush.bf16.msra.mxu0 %v3176
    %3204 = vmatpush.bf16.msra.mxu0 %v3175
    %3205 = vmatpush.bf16.msra.mxu0 %v3174
    %3206 = vmatpush.bf16.msra.mxu0 %v3173
    %3207 = vmatpush.bf16.msra.mxu0 %v3172
    %3208 = vmatpush.bf16.msra.mxu0 %v3171
    %3209 = vmatpush.bf16.msra.mxu0 %v3170
    %3210 = vmatmul.bf16.gmra.mxu0 %v3068
    %v3211 = vpop.f32.mrf.mxu0
    %v3212 = vadd.f32 %v3104, %v3211
    %v3213 = vpop.f32.mrf.mxu0
    %3214 = vdwg.mxu0
    %3215 = vmatpush.bf16.msra.mxu0 %v3185
    %3216 = vmatpush.bf16.msra.mxu0 %v3184
    %3217 = vmatpush.bf16.msra.mxu0 %v3183
    %3218 = vmatpush.bf16.msra.mxu0 %v3182
    %3219 = vmatpush.bf16.msra.mxu0 %v3181
    %3220 = vmatpush.bf16.msra.mxu0 %v3180
    %3221 = vmatpush.bf16.msra.mxu0 %v3179
    %3222 = vmatpush.bf16.msra.mxu0 %v3178
    %3223 = vmatmul.bf16.gmra.mxu0 %v3069
    %v3224 = vpop.f32.mrf.mxu0
    %v3225 = vadd.f32 %v3212, %v3224
    %v3226 = vpop.f32.mrf.mxu0
    %3227 = vdwg.mxu0
    %vm3228 = vcmask 25600
    %3229 = vst.msk [vmem:[#allocation2] sm:$0x3] %vm3228, %v3225
    // Predicated region
    $region38: #{_lambda_.3} parent=1 // pred_check
      _
    $region39: #{_lambda_.3} parent=1 // pred_check_branch
      %3231 = sbr.rel (0) target = $region41
    $region40: #{_lambda_.3} parent=1 // pred_region
      %3233 = vsyncadd [#allocation3], 0
      %s3235 = sshll.u32 [#allocation2], 4
      %s3236 = int_to_ptr.vmem [resolvable:$true] %s3235
      %s3237 = sshll.u32 %s9, 4
      %s3238 = int_to_ptr.hbm [resolvable:$true] %s3237
      %3240 = dma.vmem_to_hbm [thread:$0]  %s3236, 32, %s3238, [#allocation3]
    $region41: #{_lambda_.3} parent=1 // pred_fallthru
      _
    // Predicated region
    $region42: #{_lambda_.3} parent=1 // pred_check
      _
    $region43: #{_lambda_.3} parent=1 // pred_check_branch
      %3242 = sbr.rel (0) target = $region45
    $region44: #{_lambda_.3} parent=1 // pred_region
      %3244 = dma.done [#allocation3], 32
    $region45: #{_lambda_.3} parent=1 // pred_fallthru
      _
    %3245 = vsyncpa [#allocation3], 1

// kernel: _lambda_.2
$region0: #{_lambda_.2}
  #allocation0 [shape = 'u32[]', space=smem, size = 0x4, offset = 0x4, fixed_abs, tag = 'smem constant byte address 0x4 - core index']
  #allocation1 [shape = 'u32[72,128]{1,0:T(1,128)}', space=vmem, size = 0x9000, scoped, tag = 'internal scratch']
  #allocation2 [shape = 'f32[1,1]{1,0:T(1,128)S(1)}', space=vmem, size = 0x200, scoped, tag = 'scoped memory for _lambda_.2']
  #allocation3 [shape = 'f32[1,1]{1,0:T(1,128)S(1)}', space=vmem, size = 0x200, scoped, tag = 'scoped memory for _lambda_.2']
  %s0 = inlined_call_operand.smem [shape: u32[41], index: -1, kind: input, shape index: {}]
  %s1 = sld [smem:[%s0]]
  %s2 = scalar_lea.smem %s0, 1
  %s3 = sld [smem:[%s2]]
  %s4 = scalar_lea.smem %s0, 2
  %s5 = sld [smem:[%s4]]
  %s6 = scalar_lea.smem %s0, 3
  %s7 = sld [smem:[%s6]]
  %s8 = scalar_lea.smem %s0, 4
  %s9 = sld [smem:[%s8]]
  %s10 = scalar_lea.smem %s0, 5
  %s11 = sld [smem:[%s10]]
  %s12 = scalar_lea.smem %s0, 6
  %s13 = sld [smem:[%s12]]
  %s14 = scalar_lea.smem %s0, 7
  %s15 = sld [smem:[%s14]]
  %s16 = scalar_lea.smem %s0, 8
  %s17 = sld [smem:[%s16]]
  %s18 = scalar_lea.smem %s0, 9
  %s19 = sld [smem:[%s18]]
  %s20 = scalar_lea.smem %s0, 10
  %s21 = sld [smem:[%s20]]
  %s22 = scalar_lea.smem %s0, 11
  %s23 = sld [smem:[%s22]]
  %s24 = scalar_lea.smem %s0, 12
  %s25 = sld [smem:[%s24]]
  %s26 = scalar_lea.smem %s0, 13
  %s27 = sld [smem:[%s26]]
  %s28 = scalar_lea.smem %s0, 14
  %s29 = sld [smem:[%s28]]
  %s30 = scalar_lea.smem %s0, 15
  %s31 = sld [smem:[%s30]]
  %s32 = scalar_lea.smem %s0, 16
  %s33 = sld [smem:[%s32]]
  %s34 = scalar_lea.smem %s0, 17
  %s35 = sld [smem:[%s34]]
  %s36 = scalar_lea.smem %s0, 18
  %s37 = sld [smem:[%s36]]
  %s38 = scalar_lea.smem %s0, 19
  %s39 = sld [smem:[%s38]]
  %s40 = scalar_lea.smem %s0, 20
  %s41 = sld [smem:[%s40]]
  %s42 = scalar_lea.smem %s0, 21
  %s43 = sld [smem:[%s42]]
  %s44 = scalar_lea.smem %s0, 22
  %s45 = sld [smem:[%s44]]
  %s46 = scalar_lea.smem %s0, 23
  %s47 = sld [smem:[%s46]]
  %s48 = scalar_lea.smem %s0, 24
  %s49 = sld [smem:[%s48]]
  %s50 = scalar_lea.smem %s0, 25
  %s51 = sld [smem:[%s50]]
  %s52 = scalar_lea.smem %s0, 26
  %s53 = sld [smem:[%s52]]
  %s54 = scalar_lea.smem %s0, 27
  %s55 = sld [smem:[%s54]]
  %s56 = scalar_lea.smem %s0, 28
  %s57 = sld [smem:[%s56]]
  %s58 = scalar_lea.smem %s0, 29
  %s59 = sld [smem:[%s58]]
  %s60 = scalar_lea.smem %s0, 30
  %s61 = sld [smem:[%s60]]
  %s62 = scalar_lea.smem %s0, 31
  %s63 = sld [smem:[%s62]]
  %s64 = scalar_lea.smem %s0, 32
  %s65 = sld [smem:[%s64]]
  %s66 = scalar_lea.smem %s0, 33
  %s67 = sld [smem:[%s66]]
  %s68 = scalar_lea.smem %s0, 34
  %s69 = sld [smem:[%s68]]
  %s70 = scalar_lea.smem %s0, 35
  %s71 = sld [smem:[%s70]]
  %s72 = scalar_lea.smem %s0, 36
  %s73 = sld [smem:[%s72]]
  %s74 = scalar_lea.smem %s0, 37
  %s75 = sld [smem:[%s74]]
  %s76 = scalar_lea.smem %s0, 38
  %s77 = sld [smem:[%s76]]
  %s78 = scalar_lea.smem %s0, 39
  %s79 = sld [smem:[%s78]]
  %s80 = scalar_lea.smem %s0, 40
  %s81 = sld [smem:[%s80]]
  %s82 = sld [smem:[#allocation0]]
  $region193: #{_lambda_.2} parent=0
    _
  %s84 = ssub.s32 1, %s82
  %s85 = scalar_select 0, %s84, %s82
  %v86 = vstv %s33
  %87 = vst [vmem:[#allocation2] sm:$0x1] %v86
  %v88 = vstv %s69
  %89 = vst [vmem:[#allocation3] sm:$0x1] %v88
  loop: start=0, step=1, limit=4
  $region2: #{_lambda_.2} parent=0 // loop_pre_header
    _
  $region3: #{_lambda_.2} parent=0 // loop_header
    %s91 = sphi 0, %s95
    %p92 = scmp.ge.s32.totalorder %s91, 4
    %s101 = sphi 0, %s103
    %s104 = sphi 0, %s101
    %s105 = sphi 0, %s104
    %s121 = sphi 0, %s105
    %s127 = sphi 0, %s129
    %s130 = sphi 0, %s127
    %s131 = sphi 0, %s130
    %s147 = sphi 0, %s131
    %s151 = sphi 0, %s151
    %s153 = sphi 0, %s151
    %s154 = sphi 0, %s153
    %s168 = sphi 0, %s154
    %s172 = sphi 0, %s172
    %s174 = sphi 0, %s172
    %s175 = sphi 0, %s174
    %s189 = sphi 0, %s175
    %s193 = sphi 0, %s193
    %s195 = sphi 0, %s193
    %s196 = sphi 0, %s195
    %s210 = sphi 0, %s196
    %s214 = sphi 0, %s214
    %s216 = sphi 0, %s214
    %s217 = sphi 0, %s216
    %s231 = sphi 0, %s217
    %s235 = sphi 0, %s235
    %s237 = sphi 0, %s235
    %s238 = sphi 0, %s237
    %s252 = sphi 0, %s238
    %s256 = sphi 0, %s256
    %s258 = sphi 0, %s256
    %s259 = sphi 0, %s258
    %s273 = sphi 0, %s259
    %s277 = sphi 0, %s277
    %s279 = sphi 0, %s277
    %s280 = sphi 0, %s279
    %s294 = sphi 0, %s280
    %s298 = sphi 0, %s298
    %s300 = sphi 0, %s298
    %s301 = sphi 0, %s300
    %s315 = sphi 0, %s301
    %s319 = sphi 0, %s319
    %s321 = sphi 0, %s319
    %s322 = sphi 0, %s321
    %s336 = sphi 0, %s322
    %s340 = sphi 0, %s340
    %s342 = sphi 0, %s340
    %s343 = sphi 0, %s342
    %s357 = sphi 0, %s343
    %s361 = sphi 0, %s361
    %s363 = sphi 0, %s361
    %s364 = sphi 0, %s363
    %s378 = sphi 0, %s364
    %s382 = sphi 0, %s382
    %s384 = sphi 0, %s382
    %s385 = sphi 0, %s384
    %s399 = sphi 0, %s385
    %s403 = sphi 0, %s403
    %s405 = sphi 0, %s403
    %s406 = sphi 0, %s405
    %s420 = sphi 0, %s406
    %s424 = sphi 0, %s424
    %s426 = sphi 0, %s424
    %s427 = sphi 0, %s426
    %s441 = sphi 0, %s427
    %s445 = sphi 0, %s445
    %s447 = sphi 0, %s445
    %s448 = sphi 0, %s447
    %s462 = sphi 0, %s448
    %s466 = sphi 0, %s466
    %s468 = sphi 0, %s466
    %s469 = sphi 0, %s468
    %s483 = sphi 0, %s469
    %s487 = sphi 0, %s487
    %s489 = sphi 0, %s487
    %s490 = sphi 0, %s489
    %s504 = sphi 0, %s490
    %s508 = sphi 0, %s508
    %s510 = sphi 0, %s508
    %s511 = sphi 0, %s510
    %s525 = sphi 0, %s511
    %s529 = sphi 0, %s529
    %s531 = sphi 0, %s529
    %s532 = sphi 0, %s531
    %s546 = sphi 0, %s532
    %s550 = sphi 0, %s550
    %s552 = sphi 0, %s550
    %s553 = sphi 0, %s552
    %s567 = sphi 0, %s553
    %s571 = sphi 0, %s571
    %s573 = sphi 0, %s571
    %s574 = sphi 0, %s573
    %s588 = sphi 0, %s574
    %s592 = sphi 0, %s592
    %s594 = sphi 0, %s592
    %s595 = sphi 0, %s594
    %s609 = sphi 0, %s595
    %s613 = sphi 0, %s613
    %s615 = sphi 0, %s613
    %s616 = sphi 0, %s615
    %s630 = sphi 0, %s616
    %s634 = sphi 0, %s634
    %s636 = sphi 0, %s634
    %s637 = sphi 0, %s636
    %s651 = sphi 0, %s637
    %s655 = sphi 0, %s655
    %s657 = sphi 0, %s655
    %s658 = sphi 0, %s657
    %s672 = sphi 0, %s658
    %s676 = sphi 0, %s676
    %s678 = sphi 0, %s676
    %s679 = sphi 0, %s678
    %s693 = sphi 0, %s679
    %s697 = sphi 0, %s697
    %s699 = sphi 0, %s697
    %s700 = sphi 0, %s699
    %s714 = sphi 0, %s700
    %s718 = sphi 0, %s718
    %s720 = sphi 0, %s718
    %s721 = sphi 0, %s720
    %s735 = sphi 0, %s721
    %s739 = sphi 0, %s739
    %s741 = sphi 0, %s739
    %s742 = sphi 0, %s741
    %s756 = sphi 0, %s742
    %s760 = sphi 0, %s760
    %s762 = sphi 0, %s760
    %s763 = sphi 0, %s762
    %s777 = sphi 0, %s763
    %s781 = sphi 0, %s781
    %s783 = sphi 0, %s781
    %s784 = sphi 0, %s783
    %s798 = sphi 0, %s784
    %s802 = sphi 0, %s802
    %s804 = sphi 0, %s802
    %s805 = sphi 0, %s804
    %s819 = sphi 0, %s805
    %s823 = sphi 0, %s823
    %s825 = sphi 0, %s823
    %s826 = sphi 0, %s825
    %s840 = sphi 0, %s826
    %s844 = sphi 0, %s844
    %s846 = sphi 0, %s844
    %s847 = sphi 0, %s846
    %s861 = sphi 0, %s847
    %s865 = sphi 0, %s865
    %s867 = sphi 0, %s865
    %s868 = sphi 0, %s867
    %s882 = sphi 0, %s868
    %s886 = sphi 0, %s886
    %s888 = sphi 0, %s886
    %s889 = sphi 0, %s888
    %s903 = sphi 0, %s889
    %s907 = sphi 0, %s907
    %s909 = sphi 0, %s907
    %s910 = sphi 0, %s909
    %s924 = sphi 0, %s910
    %s928 = sphi 0, %s928
    %s930 = sphi 0, %s928
    %s931 = sphi 0, %s930
    %s945 = sphi 0, %s931
    %s951 = sphi 0, %s953
    %s954 = sphi 0, %s951
    %s955 = sphi 0, %s954
    %s971 = sphi 0, %s955
  $region4: #{_lambda_.2} parent=0 // loop_header_branch
    %94 = sbr.rel (%p92) target = $region8
  $region5: #{_lambda_.2} parent=0 // loop_body
    %s96 = ssub.s32 %s91, 1
    %s97 = ssub.s32 %s91, 2
    %s98 = sadd.s32 %s91, 1
    %s99 = ssub.s32 %s91, %s98
    %p100 = scmp.eq.s32.totalorder %s99, 0
    %s102 = sadd.s32 %s101, 1
    %s103 = scalar_select %p100, %s101, %s102
    %p106 = pneg %p100
    %p107 = scmp.eq.s32.totalorder %s91, 1
    %p108 = por %p106, %p107
    %p109 = scmp.ne.s32.totalorder %s101, %s104
    %p110 = scmp.eq.s32.totalorder %s91, 0
    %p111 = por %p109, %p110
    %p112 = scmp.ne.s32.totalorder %s101, %s104
    %p113 = scmp.eq.s32.totalorder %s96, 1
    %p114 = por %p112, %p113
    %p115 = scmp.ne.s32.totalorder %s104, %s105
    %p116 = scmp.eq.s32.totalorder %s96, 0
    %p117 = por %p115, %p116
    %p118 = scmp.ne.s32.totalorder %s104, %s105
    %p119 = scmp.eq.s32.totalorder %s97, 1
    %p120 = por %p118, %p119
    %p122 = scmp.ne.s32.totalorder %s105, %s121
    %p123 = scmp.eq.s32.totalorder %s97, 0
    %p124 = por %p122, %p123
    %s125 = ssub.s32 %s91, %s98
    %p126 = scmp.eq.s32.totalorder %s125, 0
    %s128 = sadd.s32 %s127, 1
    %s129 = scalar_select %p126, %s127, %s128
    %p132 = pneg %p126
    %p133 = scmp.eq.s32.totalorder %s91, 1
    %p134 = por %p132, %p133
    %p135 = scmp.ne.s32.totalorder %s127, %s130
    %p136 = scmp.eq.s32.totalorder %s91, 0
    %p137 = por %p135, %p136
    %p138 = scmp.ne.s32.totalorder %s127, %s130
    %p139 = scmp.eq.s32.totalorder %s96, 1
    %p140 = por %p138, %p139
    %p141 = scmp.ne.s32.totalorder %s130, %s131
    %p142 = scmp.eq.s32.totalorder %s96, 0
    %p143 = por %p141, %p142
    %p144 = scmp.ne.s32.totalorder %s130, %s131
    %p145 = scmp.eq.s32.totalorder %s97, 1
    %p146 = por %p144, %p145
    %p148 = scmp.ne.s32.totalorder %s131, %s147
    %p149 = scmp.eq.s32.totalorder %s97, 0
    %p150 = por %p148, %p149
    %s152 = sadd.s32 %s151, 1
    %p155 = scmp.eq.s32.totalorder %s91, 1
    %p156 = scmp.ne.s32.totalorder %s151, %s153
    %p157 = scmp.eq.s32.totalorder %s91, 0
    %p158 = por %p156, %p157
    %p159 = scmp.ne.s32.totalorder %s151, %s153
    %p160 = scmp.eq.s32.totalorder %s96, 1
    %p161 = por %p159, %p160
    %p162 = scmp.ne.s32.totalorder %s153, %s154
    %p163 = scmp.eq.s32.totalorder %s96, 0
    %p164 = por %p162, %p163
    %p165 = scmp.ne.s32.totalorder %s153, %s154
    %p166 = scmp.eq.s32.totalorder %s97, 1
    %p167 = por %p165, %p166
    %p169 = scmp.ne.s32.totalorder %s154, %s168
    %p170 = scmp.eq.s32.totalorder %s97, 0
    %p171 = por %p169, %p170
    %s173 = sadd.s32 %s172, 1
    %p176 = scmp.eq.s32.totalorder %s91, 1
    %p177 = scmp.ne.s32.totalorder %s172, %s174
    %p178 = scmp.eq.s32.totalorder %s91, 0
    %p179 = por %p177, %p178
    %p180 = scmp.ne.s32.totalorder %s172, %s174
    %p181 = scmp.eq.s32.totalorder %s96, 1
    %p182 = por %p180, %p181
    %p183 = scmp.ne.s32.totalorder %s174, %s175
    %p184 = scmp.eq.s32.totalorder %s96, 0
    %p185 = por %p183, %p184
    %p186 = scmp.ne.s32.totalorder %s174, %s175
    %p187 = scmp.eq.s32.totalorder %s97, 1
    %p188 = por %p186, %p187
    %p190 = scmp.ne.s32.totalorder %s175, %s189
    %p191 = scmp.eq.s32.totalorder %s97, 0
    %p192 = por %p190, %p191
    %s194 = sadd.s32 %s193, 1
    %p197 = scmp.eq.s32.totalorder %s91, 1
    %p198 = scmp.ne.s32.totalorder %s193, %s195
    %p199 = scmp.eq.s32.totalorder %s91, 0
    %p200 = por %p198, %p199
    %p201 = scmp.ne.s32.totalorder %s193, %s195
    %p202 = scmp.eq.s32.totalorder %s96, 1
    %p203 = por %p201, %p202
    %p204 = scmp.ne.s32.totalorder %s195, %s196
    %p205 = scmp.eq.s32.totalorder %s96, 0
    %p206 = por %p204, %p205
    %p207 = scmp.ne.s32.totalorder %s195, %s196
    %p208 = scmp.eq.s32.totalorder %s97, 1
    %p209 = por %p207, %p208
    %p211 = scmp.ne.s32.totalorder %s196, %s210
    %p212 = scmp.eq.s32.totalorder %s97, 0
    %p213 = por %p211, %p212
    %s215 = sadd.s32 %s214, 1
    %p218 = scmp.eq.s32.totalorder %s91, 1
    %p219 = scmp.ne.s32.totalorder %s214, %s216
    %p220 = scmp.eq.s32.totalorder %s91, 0
    %p221 = por %p219, %p220
    %p222 = scmp.ne.s32.totalorder %s214, %s216
    %p223 = scmp.eq.s32.totalorder %s96, 1
    %p224 = por %p222, %p223
    %p225 = scmp.ne.s32.totalorder %s216, %s217
    %p226 = scmp.eq.s32.totalorder %s96, 0
    %p227 = por %p225, %p226
    %p228 = scmp.ne.s32.totalorder %s216, %s217
    %p229 = scmp.eq.s32.totalorder %s97, 1
    %p230 = por %p228, %p229
    %p232 = scmp.ne.s32.totalorder %s217, %s231
    %p233 = scmp.eq.s32.totalorder %s97, 0
    %p234 = por %p232, %p233
    %s236 = sadd.s32 %s235, 1
    %p239 = scmp.eq.s32.totalorder %s91, 1
    %p240 = scmp.ne.s32.totalorder %s235, %s237
    %p241 = scmp.eq.s32.totalorder %s91, 0
    %p242 = por %p240, %p241
    %p243 = scmp.ne.s32.totalorder %s235, %s237
    %p244 = scmp.eq.s32.totalorder %s96, 1
    %p245 = por %p243, %p244
    %p246 = scmp.ne.s32.totalorder %s237, %s238
    %p247 = scmp.eq.s32.totalorder %s96, 0
    %p248 = por %p246, %p247
    %p249 = scmp.ne.s32.totalorder %s237, %s238
    %p250 = scmp.eq.s32.totalorder %s97, 1
    %p251 = por %p249, %p250
    %p253 = scmp.ne.s32.totalorder %s238, %s252
    %p254 = scmp.eq.s32.totalorder %s97, 0
    %p255 = por %p253, %p254
    %s257 = sadd.s32 %s256, 1
    %p260 = scmp.eq.s32.totalorder %s91, 1
    %p261 = scmp.ne.s32.totalorder %s256, %s258
    %p262 = scmp.eq.s32.totalorder %s91, 0
    %p263 = por %p261, %p262
    %p264 = scmp.ne.s32.totalorder %s256, %s258
    %p265 = scmp.eq.s32.totalorder %s96, 1
    %p266 = por %p264, %p265
    %p267 = scmp.ne.s32.totalorder %s258, %s259
    %p268 = scmp.eq.s32.totalorder %s96, 0
    %p269 = por %p267, %p268
    %p270 = scmp.ne.s32.totalorder %s258, %s259
    %p271 = scmp.eq.s32.totalorder %s97, 1
    %p272 = por %p270, %p271
    %p274 = scmp.ne.s32.totalorder %s259, %s273
    %p275 = scmp.eq.s32.totalorder %s97, 0
    %p276 = por %p274, %p275
    %s278 = sadd.s32 %s277, 1
    %p281 = scmp.eq.s32.totalorder %s91, 1
    %p282 = scmp.ne.s32.totalorder %s277, %s279
    %p283 = scmp.eq.s32.totalorder %s91, 0
    %p284 = por %p282, %p283
    %p285 = scmp.ne.s32.totalorder %s277, %s279
    %p286 = scmp.eq.s32.totalorder %s96, 1
    %p287 = por %p285, %p286
    %p288 = scmp.ne.s32.totalorder %s279, %s280
    %p289 = scmp.eq.s32.totalorder %s96, 0
    %p290 = por %p288, %p289
    %p291 = scmp.ne.s32.totalorder %s279, %s280
    %p292 = scmp.eq.s32.totalorder %s97, 1
    %p293 = por %p291, %p292
    %p295 = scmp.ne.s32.totalorder %s280, %s294
    %p296 = scmp.eq.s32.totalorder %s97, 0
    %p297 = por %p295, %p296
    %s299 = sadd.s32 %s298, 1
    %p302 = scmp.eq.s32.totalorder %s91, 1
    %p303 = scmp.ne.s32.totalorder %s298, %s300
    %p304 = scmp.eq.s32.totalorder %s91, 0
    %p305 = por %p303, %p304
    %p306 = scmp.ne.s32.totalorder %s298, %s300
    %p307 = scmp.eq.s32.totalorder %s96, 1
    %p308 = por %p306, %p307
    %p309 = scmp.ne.s32.totalorder %s300, %s301
    %p310 = scmp.eq.s32.totalorder %s96, 0
    %p311 = por %p309, %p310
    %p312 = scmp.ne.s32.totalorder %s300, %s301
    %p313 = scmp.eq.s32.totalorder %s97, 1
    %p314 = por %p312, %p313
    %p316 = scmp.ne.s32.totalorder %s301, %s315
    %p317 = scmp.eq.s32.totalorder %s97, 0
    %p318 = por %p316, %p317
    %s320 = sadd.s32 %s319, 1
    %p323 = scmp.eq.s32.totalorder %s91, 1
    %p324 = scmp.ne.s32.totalorder %s319, %s321
    %p325 = scmp.eq.s32.totalorder %s91, 0
    %p326 = por %p324, %p325
    %p327 = scmp.ne.s32.totalorder %s319, %s321
    %p328 = scmp.eq.s32.totalorder %s96, 1
    %p329 = por %p327, %p328
    %p330 = scmp.ne.s32.totalorder %s321, %s322
    %p331 = scmp.eq.s32.totalorder %s96, 0
    %p332 = por %p330, %p331
    %p333 = scmp.ne.s32.totalorder %s321, %s322
    %p334 = scmp.eq.s32.totalorder %s97, 1
    %p335 = por %p333, %p334
    %p337 = scmp.ne.s32.totalorder %s322, %s336
    %p338 = scmp.eq.s32.totalorder %s97, 0
    %p339 = por %p337, %p338
    %s341 = sadd.s32 %s340, 1
    %p344 = scmp.eq.s32.totalorder %s91, 1
    %p345 = scmp.ne.s32.totalorder %s340, %s342
    %p346 = scmp.eq.s32.totalorder %s91, 0
    %p347 = por %p345, %p346
    %p348 = scmp.ne.s32.totalorder %s340, %s342
    %p349 = scmp.eq.s32.totalorder %s96, 1
    %p350 = por %p348, %p349
    %p351 = scmp.ne.s32.totalorder %s342, %s343
    %p352 = scmp.eq.s32.totalorder %s96, 0
    %p353 = por %p351, %p352
    %p354 = scmp.ne.s32.totalorder %s342, %s343
    %p355 = scmp.eq.s32.totalorder %s97, 1
    %p356 = por %p354, %p355
    %p358 = scmp.ne.s32.totalorder %s343, %s357
    %p359 = scmp.eq.s32.totalorder %s97, 0
    %p360 = por %p358, %p359
    %s362 = sadd.s32 %s361, 1
    %p365 = scmp.eq.s32.totalorder %s91, 1
    %p366 = scmp.ne.s32.totalorder %s361, %s363
    %p367 = scmp.eq.s32.totalorder %s91, 0
    %p368 = por %p366, %p367
    %p369 = scmp.ne.s32.totalorder %s361, %s363
    %p370 = scmp.eq.s32.totalorder %s96, 1
    %p371 = por %p369, %p370
    %p372 = scmp.ne.s32.totalorder %s363, %s364
    %p373 = scmp.eq.s32.totalorder %s96, 0
    %p374 = por %p372, %p373
    %p375 = scmp.ne.s32.totalorder %s363, %s364
    %p376 = scmp.eq.s32.totalorder %s97, 1
    %p377 = por %p375, %p376
    %p379 = scmp.ne.s32.totalorder %s364, %s378
    %p380 = scmp.eq.s32.totalorder %s97, 0
    %p381 = por %p379, %p380
    %s383 = sadd.s32 %s382, 1
    %p386 = scmp.eq.s32.totalorder %s91, 1
    %p387 = scmp.ne.s32.totalorder %s382, %s384
    %p388 = scmp.eq.s32.totalorder %s91, 0
    %p389 = por %p387, %p388
    %p390 = scmp.ne.s32.totalorder %s382, %s384
    %p391 = scmp.eq.s32.totalorder %s96, 1
    %p392 = por %p390, %p391
    %p393 = scmp.ne.s32.totalorder %s384, %s385
    %p394 = scmp.eq.s32.totalorder %s96, 0
    %p395 = por %p393, %p394
    %p396 = scmp.ne.s32.totalorder %s384, %s385
    %p397 = scmp.eq.s32.totalorder %s97, 1
    %p398 = por %p396, %p397
    %p400 = scmp.ne.s32.totalorder %s385, %s399
    %p401 = scmp.eq.s32.totalorder %s97, 0
    %p402 = por %p400, %p401
    %s404 = sadd.s32 %s403, 1
    %p407 = scmp.eq.s32.totalorder %s91, 1
    %p408 = scmp.ne.s32.totalorder %s403, %s405
    %p409 = scmp.eq.s32.totalorder %s91, 0
    %p410 = por %p408, %p409
    %p411 = scmp.ne.s32.totalorder %s403, %s405
    %p412 = scmp.eq.s32.totalorder %s96, 1
    %p413 = por %p411, %p412
    %p414 = scmp.ne.s32.totalorder %s405, %s406
    %p415 = scmp.eq.s32.totalorder %s96, 0
    %p416 = por %p414, %p415
    %p417 = scmp.ne.s32.totalorder %s405, %s406
    %p418 = scmp.eq.s32.totalorder %s97, 1
    %p419 = por %p417, %p418
    %p421 = scmp.ne.s32.totalorder %s406, %s420
    %p422 = scmp.eq.s32.totalorder %s97, 0
    %p423 = por %p421, %p422
    %s425 = sadd.s32 %s424, 1
    %p428 = scmp.eq.s32.totalorder %s91, 1
    %p429 = scmp.ne.s32.totalorder %s424, %s426
    %p430 = scmp.eq.s32.totalorder %s91, 0
    %p431 = por %p429, %p430
    %p432 = scmp.ne.s32.totalorder %s424, %s426
    %p433 = scmp.eq.s32.totalorder %s96, 1
    %p434 = por %p432, %p433
    %p435 = scmp.ne.s32.totalorder %s426, %s427
    %p436 = scmp.eq.s32.totalorder %s96, 0
    %p437 = por %p435, %p436
    %p438 = scmp.ne.s32.totalorder %s426, %s427
    %p439 = scmp.eq.s32.totalorder %s97, 1
    %p440 = por %p438, %p439
    %p442 = scmp.ne.s32.totalorder %s427, %s441
    %p443 = scmp.eq.s32.totalorder %s97, 0
    %p444 = por %p442, %p443
    %s446 = sadd.s32 %s445, 1
    %p449 = scmp.eq.s32.totalorder %s91, 1
    %p450 = scmp.ne.s32.totalorder %s445, %s447
    %p451 = scmp.eq.s32.totalorder %s91, 0
    %p452 = por %p450, %p451
    %p453 = scmp.ne.s32.totalorder %s445, %s447
    %p454 = scmp.eq.s32.totalorder %s96, 1
    %p455 = por %p453, %p454
    %p456 = scmp.ne.s32.totalorder %s447, %s448
    %p457 = scmp.eq.s32.totalorder %s96, 0
    %p458 = por %p456, %p457
    %p459 = scmp.ne.s32.totalorder %s447, %s448
    %p460 = scmp.eq.s32.totalorder %s97, 1
    %p461 = por %p459, %p460
    %p463 = scmp.ne.s32.totalorder %s448, %s462
    %p464 = scmp.eq.s32.totalorder %s97, 0
    %p465 = por %p463, %p464
    %s467 = sadd.s32 %s466, 1
    %p470 = scmp.eq.s32.totalorder %s91, 1
    %p471 = scmp.ne.s32.totalorder %s466, %s468
    %p472 = scmp.eq.s32.totalorder %s91, 0
    %p473 = por %p471, %p472
    %p474 = scmp.ne.s32.totalorder %s466, %s468
    %p475 = scmp.eq.s32.totalorder %s96, 1
    %p476 = por %p474, %p475
    %p477 = scmp.ne.s32.totalorder %s468, %s469
    %p478 = scmp.eq.s32.totalorder %s96, 0
    %p479 = por %p477, %p478
    %p480 = scmp.ne.s32.totalorder %s468, %s469
    %p481 = scmp.eq.s32.totalorder %s97, 1
    %p482 = por %p480, %p481
    %p484 = scmp.ne.s32.totalorder %s469, %s483
    %p485 = scmp.eq.s32.totalorder %s97, 0
    %p486 = por %p484, %p485
    %s488 = sadd.s32 %s487, 1
    %p491 = scmp.eq.s32.totalorder %s91, 1
    %p492 = scmp.ne.s32.totalorder %s487, %s489
    %p493 = scmp.eq.s32.totalorder %s91, 0
    %p494 = por %p492, %p493
    %p495 = scmp.ne.s32.totalorder %s487, %s489
    %p496 = scmp.eq.s32.totalorder %s96, 1
    %p497 = por %p495, %p496
    %p498 = scmp.ne.s32.totalorder %s489, %s490
    %p499 = scmp.eq.s32.totalorder %s96, 0
    %p500 = por %p498, %p499
    %p501 = scmp.ne.s32.totalorder %s489, %s490
    %p502 = scmp.eq.s32.totalorder %s97, 1
    %p503 = por %p501, %p502
    %p505 = scmp.ne.s32.totalorder %s490, %s504
    %p506 = scmp.eq.s32.totalorder %s97, 0
    %p507 = por %p505, %p506
    %s509 = sadd.s32 %s508, 1
    %p512 = scmp.eq.s32.totalorder %s91, 1
    %p513 = scmp.ne.s32.totalorder %s508, %s510
    %p514 = scmp.eq.s32.totalorder %s91, 0
    %p515 = por %p513, %p514
    %p516 = scmp.ne.s32.totalorder %s508, %s510
    %p517 = scmp.eq.s32.totalorder %s96, 1
    %p518 = por %p516, %p517
    %p519 = scmp.ne.s32.totalorder %s510, %s511
    %p520 = scmp.eq.s32.totalorder %s96, 0
    %p521 = por %p519, %p520
    %p522 = scmp.ne.s32.totalorder %s510, %s511
    %p523 = scmp.eq.s32.totalorder %s97, 1
    %p524 = por %p522, %p523
    %p526 = scmp.ne.s32.totalorder %s511, %s525
    %p527 = scmp.eq.s32.totalorder %s97, 0
    %p528 = por %p526, %p527
    %s530 = sadd.s32 %s529, 1
    %p533 = scmp.eq.s32.totalorder %s91, 1
    %p534 = scmp.ne.s32.totalorder %s529, %s531
    %p535 = scmp.eq.s32.totalorder %s91, 0
    %p536 = por %p534, %p535
    %p537 = scmp.ne.s32.totalorder %s529, %s531
    %p538 = scmp.eq.s32.totalorder %s96, 1
    %p539 = por %p537, %p538
    %p540 = scmp.ne.s32.totalorder %s531, %s532
    %p541 = scmp.eq.s32.totalorder %s96, 0
    %p542 = por %p540, %p541
    %p543 = scmp.ne.s32.totalorder %s531, %s532
    %p544 = scmp.eq.s32.totalorder %s97, 1
    %p545 = por %p543, %p544
    %p547 = scmp.ne.s32.totalorder %s532, %s546
    %p548 = scmp.eq.s32.totalorder %s97, 0
    %p549 = por %p547, %p548
    %s551 = sadd.s32 %s550, 1
    %p554 = scmp.eq.s32.totalorder %s91, 1
    %p555 = scmp.ne.s32.totalorder %s550, %s552
    %p556 = scmp.eq.s32.totalorder %s91, 0
    %p557 = por %p555, %p556
    %p558 = scmp.ne.s32.totalorder %s550, %s552
    %p559 = scmp.eq.s32.totalorder %s96, 1
    %p560 = por %p558, %p559
    %p561 = scmp.ne.s32.totalorder %s552, %s553
    %p562 = scmp.eq.s32.totalorder %s96, 0
    %p563 = por %p561, %p562
    %p564 = scmp.ne.s32.totalorder %s552, %s553
    %p565 = scmp.eq.s32.totalorder %s97, 1
    %p566 = por %p564, %p565
    %p568 = scmp.ne.s32.totalorder %s553, %s567
    %p569 = scmp.eq.s32.totalorder %s97, 0
    %p570 = por %p568, %p569
    %s572 = sadd.s32 %s571, 1
    %p575 = scmp.eq.s32.totalorder %s91, 1
    %p576 = scmp.ne.s32.totalorder %s571, %s573
    %p577 = scmp.eq.s32.totalorder %s91, 0
    %p578 = por %p576, %p577
    %p579 = scmp.ne.s32.totalorder %s571, %s573
    %p580 = scmp.eq.s32.totalorder %s96, 1
    %p581 = por %p579, %p580
    %p582 = scmp.ne.s32.totalorder %s573, %s574
    %p583 = scmp.eq.s32.totalorder %s96, 0
    %p584 = por %p582, %p583
    %p585 = scmp.ne.s32.totalorder %s573, %s574
    %p586 = scmp.eq.s32.totalorder %s97, 1
    %p587 = por %p585, %p586
    %p589 = scmp.ne.s32.totalorder %s574, %s588
    %p590 = scmp.eq.s32.totalorder %s97, 0
    %p591 = por %p589, %p590
    %s593 = sadd.s32 %s592, 1
    %p596 = scmp.eq.s32.totalorder %s91, 1
    %p597 = scmp.ne.s32.totalorder %s592, %s594
    %p598 = scmp.eq.s32.totalorder %s91, 0
    %p599 = por %p597, %p598
    %p600 = scmp.ne.s32.totalorder %s592, %s594
    %p601 = scmp.eq.s32.totalorder %s96, 1
    %p602 = por %p600, %p601
    %p603 = scmp.ne.s32.totalorder %s594, %s595
    %p604 = scmp.eq.s32.totalorder %s96, 0
    %p605 = por %p603, %p604
    %p606 = scmp.ne.s32.totalorder %s594, %s595
    %p607 = scmp.eq.s32.totalorder %s97, 1
    %p608 = por %p606, %p607
    %p610 = scmp.ne.s32.totalorder %s595, %s609
    %p611 = scmp.eq.s32.totalorder %s97, 0
    %p612 = por %p610, %p611
    %s614 = sadd.s32 %s613, 1
    %p617 = scmp.eq.s32.totalorder %s91, 1
    %p618 = scmp.ne.s32.totalorder %s613, %s615
    %p619 = scmp.eq.s32.totalorder %s91, 0
    %p620 = por %p618, %p619
    %p621 = scmp.ne.s32.totalorder %s613, %s615
    %p622 = scmp.eq.s32.totalorder %s96, 1
    %p623 = por %p621, %p622
    %p624 = scmp.ne.s32.totalorder %s615, %s616
    %p625 = scmp.eq.s32.totalorder %s96, 0
    %p626 = por %p624, %p625
    %p627 = scmp.ne.s32.totalorder %s615, %s616
    %p628 = scmp.eq.s32.totalorder %s97, 1
    %p629 = por %p627, %p628
    %p631 = scmp.ne.s32.totalorder %s616, %s630
    %p632 = scmp.eq.s32.totalorder %s97, 0
    %p633 = por %p631, %p632
    %s635 = sadd.s32 %s634, 1
    %p638 = scmp.eq.s32.totalorder %s91, 1
    %p639 = scmp.ne.s32.totalorder %s634, %s636
    %p640 = scmp.eq.s32.totalorder %s91, 0
    %p641 = por %p639, %p640
    %p642 = scmp.ne.s32.totalorder %s634, %s636
    %p643 = scmp.eq.s32.totalorder %s96, 1
    %p644 = por %p642, %p643
    %p645 = scmp.ne.s32.totalorder %s636, %s637
    %p646 = scmp.eq.s32.totalorder %s96, 0
    %p647 = por %p645, %p646
    %p648 = scmp.ne.s32.totalorder %s636, %s637
    %p649 = scmp.eq.s32.totalorder %s97, 1
    %p650 = por %p648, %p649
    %p652 = scmp.ne.s32.totalorder %s637, %s651
    %p653 = scmp.eq.s32.totalorder %s97, 0
    %p654 = por %p652, %p653
    %s656 = sadd.s32 %s655, 1
    %p659 = scmp.eq.s32.totalorder %s91, 1
    %p660 = scmp.ne.s32.totalorder %s655, %s657
    %p661 = scmp.eq.s32.totalorder %s91, 0
    %p662 = por %p660, %p661
    %p663 = scmp.ne.s32.totalorder %s655, %s657
    %p664 = scmp.eq.s32.totalorder %s96, 1
    %p665 = por %p663, %p664
    %p666 = scmp.ne.s32.totalorder %s657, %s658
    %p667 = scmp.eq.s32.totalorder %s96, 0
    %p668 = por %p666, %p667
    %p669 = scmp.ne.s32.totalorder %s657, %s658
    %p670 = scmp.eq.s32.totalorder %s97, 1
    %p671 = por %p669, %p670
    %p673 = scmp.ne.s32.totalorder %s658, %s672
    %p674 = scmp.eq.s32.totalorder %s97, 0
    %p675 = por %p673, %p674
    %s677 = sadd.s32 %s676, 1
    %p680 = scmp.eq.s32.totalorder %s91, 1
    %p681 = scmp.ne.s32.totalorder %s676, %s678
    %p682 = scmp.eq.s32.totalorder %s91, 0
    %p683 = por %p681, %p682
    %p684 = scmp.ne.s32.totalorder %s676, %s678
    %p685 = scmp.eq.s32.totalorder %s96, 1
    %p686 = por %p684, %p685
    %p687 = scmp.ne.s32.totalorder %s678, %s679
    %p688 = scmp.eq.s32.totalorder %s96, 0
    %p689 = por %p687, %p688
    %p690 = scmp.ne.s32.totalorder %s678, %s679
    %p691 = scmp.eq.s32.totalorder %s97, 1
    %p692 = por %p690, %p691
    %p694 = scmp.ne.s32.totalorder %s679, %s693
    %p695 = scmp.eq.s32.totalorder %s97, 0
    %p696 = por %p694, %p695
    %s698 = sadd.s32 %s697, 1
    %p701 = scmp.eq.s32.totalorder %s91, 1
    %p702 = scmp.ne.s32.totalorder %s697, %s699
    %p703 = scmp.eq.s32.totalorder %s91, 0
    %p704 = por %p702, %p703
    %p705 = scmp.ne.s32.totalorder %s697, %s699
    %p706 = scmp.eq.s32.totalorder %s96, 1
    %p707 = por %p705, %p706
    %p708 = scmp.ne.s32.totalorder %s699, %s700
    %p709 = scmp.eq.s32.totalorder %s96, 0
    %p710 = por %p708, %p709
    %p711 = scmp.ne.s32.totalorder %s699, %s700
    %p712 = scmp.eq.s32.totalorder %s97, 1
    %p713 = por %p711, %p712
    %p715 = scmp.ne.s32.totalorder %s700, %s714
    %p716 = scmp.eq.s32.totalorder %s97, 0
    %p717 = por %p715, %p716
    %s719 = sadd.s32 %s718, 1
    %p722 = scmp.eq.s32.totalorder %s91, 1
    %p723 = scmp.ne.s32.totalorder %s718, %s720
    %p724 = scmp.eq.s32.totalorder %s91, 0
    %p725 = por %p723, %p724
    %p726 = scmp.ne.s32.totalorder %s718, %s720
    %p727 = scmp.eq.s32.totalorder %s96, 1
    %p728 = por %p726, %p727
    %p729 = scmp.ne.s32.totalorder %s720, %s721
    %p730 = scmp.eq.s32.totalorder %s96, 0
    %p731 = por %p729, %p730
    %p732 = scmp.ne.s32.totalorder %s720, %s721
    %p733 = scmp.eq.s32.totalorder %s97, 1
    %p734 = por %p732, %p733
    %p736 = scmp.ne.s32.totalorder %s721, %s735
    %p737 = scmp.eq.s32.totalorder %s97, 0
    %p738 = por %p736, %p737
    %s740 = sadd.s32 %s739, 1
    %p743 = scmp.eq.s32.totalorder %s91, 1
    %p744 = scmp.ne.s32.totalorder %s739, %s741
    %p745 = scmp.eq.s32.totalorder %s91, 0
    %p746 = por %p744, %p745
    %p747 = scmp.ne.s32.totalorder %s739, %s741
    %p748 = scmp.eq.s32.totalorder %s96, 1
    %p749 = por %p747, %p748
    %p750 = scmp.ne.s32.totalorder %s741, %s742
    %p751 = scmp.eq.s32.totalorder %s96, 0
    %p752 = por %p750, %p751
    %p753 = scmp.ne.s32.totalorder %s741, %s742
    %p754 = scmp.eq.s32.totalorder %s97, 1
    %p755 = por %p753, %p754
    %p757 = scmp.ne.s32.totalorder %s742, %s756
    %p758 = scmp.eq.s32.totalorder %s97, 0
    %p759 = por %p757, %p758
    %s761 = sadd.s32 %s760, 1
    %p764 = scmp.eq.s32.totalorder %s91, 1
    %p765 = scmp.ne.s32.totalorder %s760, %s762
    %p766 = scmp.eq.s32.totalorder %s91, 0
    %p767 = por %p765, %p766
    %p768 = scmp.ne.s32.totalorder %s760, %s762
    %p769 = scmp.eq.s32.totalorder %s96, 1
    %p770 = por %p768, %p769
    %p771 = scmp.ne.s32.totalorder %s762, %s763
    %p772 = scmp.eq.s32.totalorder %s96, 0
    %p773 = por %p771, %p772
    %p774 = scmp.ne.s32.totalorder %s762, %s763
    %p775 = scmp.eq.s32.totalorder %s97, 1
    %p776 = por %p774, %p775
    %p778 = scmp.ne.s32.totalorder %s763, %s777
    %p779 = scmp.eq.s32.totalorder %s97, 0
    %p780 = por %p778, %p779
    %s782 = sadd.s32 %s781, 1
    %p785 = scmp.eq.s32.totalorder %s91, 1
    %p786 = scmp.ne.s32.totalorder %s781, %s783
    %p787 = scmp.eq.s32.totalorder %s91, 0
    %p788 = por %p786, %p787
    %p789 = scmp.ne.s32.totalorder %s781, %s783
    %p790 = scmp.eq.s32.totalorder %s96, 1
    %p791 = por %p789, %p790
    %p792 = scmp.ne.s32.totalorder %s783, %s784
    %p793 = scmp.eq.s32.totalorder %s96, 0
    %p794 = por %p792, %p793
    %p795 = scmp.ne.s32.totalorder %s783, %s784
    %p796 = scmp.eq.s32.totalorder %s97, 1
    %p797 = por %p795, %p796
    %p799 = scmp.ne.s32.totalorder %s784, %s798
    %p800 = scmp.eq.s32.totalorder %s97, 0
    %p801 = por %p799, %p800
    %s803 = sadd.s32 %s802, 1
    %p806 = scmp.eq.s32.totalorder %s91, 1
    %p807 = scmp.ne.s32.totalorder %s802, %s804
    %p808 = scmp.eq.s32.totalorder %s91, 0
    %p809 = por %p807, %p808
    %p810 = scmp.ne.s32.totalorder %s802, %s804
    %p811 = scmp.eq.s32.totalorder %s96, 1
    %p812 = por %p810, %p811
    %p813 = scmp.ne.s32.totalorder %s804, %s805
    %p814 = scmp.eq.s32.totalorder %s96, 0
    %p815 = por %p813, %p814
    %p816 = scmp.ne.s32.totalorder %s804, %s805
    %p817 = scmp.eq.s32.totalorder %s97, 1
    %p818 = por %p816, %p817
    %p820 = scmp.ne.s32.totalorder %s805, %s819
    %p821 = scmp.eq.s32.totalorder %s97, 0
    %p822 = por %p820, %p821
    %s824 = sadd.s32 %s823, 1
    %p827 = scmp.eq.s32.totalorder %s91, 1
    %p828 = scmp.ne.s32.totalorder %s823, %s825
    %p829 = scmp.eq.s32.totalorder %s91, 0
    %p830 = por %p828, %p829
    %p831 = scmp.ne.s32.totalorder %s823, %s825
    %p832 = scmp.eq.s32.totalorder %s96, 1
    %p833 = por %p831, %p832
    %p834 = scmp.ne.s32.totalorder %s825, %s826
    %p835 = scmp.eq.s32.totalorder %s96, 0
    %p836 = por %p834, %p835
    %p837 = scmp.ne.s32.totalorder %s825, %s826
    %p838 = scmp.eq.s32.totalorder %s97, 1
    %p839 = por %p837, %p838
    %p841 = scmp.ne.s32.totalorder %s826, %s840
    %p842 = scmp.eq.s32.totalorder %s97, 0
    %p843 = por %p841, %p842
    %s845 = sadd.s32 %s844, 1
    %p848 = scmp.eq.s32.totalorder %s91, 1
    %p849 = scmp.ne.s32.totalorder %s844, %s846
    %p850 = scmp.eq.s32.totalorder %s91, 0
    %p851 = por %p849, %p850
    %p852 = scmp.ne.s32.totalorder %s844, %s846
    %p853 = scmp.eq.s32.totalorder %s96, 1
    %p854 = por %p852, %p853
    %p855 = scmp.ne.s32.totalorder %s846, %s847
    %p856 = scmp.eq.s32.totalorder %s96, 0
    %p857 = por %p855, %p856
    %p858 = scmp.ne.s32.totalorder %s846, %s847
    %p859 = scmp.eq.s32.totalorder %s97, 1
    %p860 = por %p858, %p859
    %p862 = scmp.ne.s32.totalorder %s847, %s861
    %p863 = scmp.eq.s32.totalorder %s97, 0
    %p864 = por %p862, %p863
    %s866 = sadd.s32 %s865, 1
    %p869 = scmp.eq.s32.totalorder %s91, 1
    %p870 = scmp.ne.s32.totalorder %s865, %s867
    %p871 = scmp.eq.s32.totalorder %s91, 0
    %p872 = por %p870, %p871
    %p873 = scmp.ne.s32.totalorder %s865, %s867
    %p874 = scmp.eq.s32.totalorder %s96, 1
    %p875 = por %p873, %p874
    %p876 = scmp.ne.s32.totalorder %s867, %s868
    %p877 = scmp.eq.s32.totalorder %s96, 0
    %p878 = por %p876, %p877
    %p879 = scmp.ne.s32.totalorder %s867, %s868
    %p880 = scmp.eq.s32.totalorder %s97, 1
    %p881 = por %p879, %p880
    %p883 = scmp.ne.s32.totalorder %s868, %s882
    %p884 = scmp.eq.s32.totalorder %s97, 0
    %p885 = por %p883, %p884
    %s887 = sadd.s32 %s886, 1
    %p890 = scmp.eq.s32.totalorder %s91, 1
    %p891 = scmp.ne.s32.totalorder %s886, %s888
    %p892 = scmp.eq.s32.totalorder %s91, 0
    %p893 = por %p891, %p892
    %p894 = scmp.ne.s32.totalorder %s886, %s888
    %p895 = scmp.eq.s32.totalorder %s96, 1
    %p896 = por %p894, %p895
    %p897 = scmp.ne.s32.totalorder %s888, %s889
    %p898 = scmp.eq.s32.totalorder %s96, 0
    %p899 = por %p897, %p898
    %p900 = scmp.ne.s32.totalorder %s888, %s889
    %p901 = scmp.eq.s32.totalorder %s97, 1
    %p902 = por %p900, %p901
    %p904 = scmp.ne.s32.totalorder %s889, %s903
    %p905 = scmp.eq.s32.totalorder %s97, 0
    %p906 = por %p904, %p905
    %s908 = sadd.s32 %s907, 1
    %p911 = scmp.eq.s32.totalorder %s91, 1
    %p912 = scmp.ne.s32.totalorder %s907, %s909
    %p913 = scmp.eq.s32.totalorder %s91, 0
    %p914 = por %p912, %p913
    %p915 = scmp.ne.s32.totalorder %s907, %s909
    %p916 = scmp.eq.s32.totalorder %s96, 1
    %p917 = por %p915, %p916
    %p918 = scmp.ne.s32.totalorder %s909, %s910
    %p919 = scmp.eq.s32.totalorder %s96, 0
    %p920 = por %p918, %p919
    %p921 = scmp.ne.s32.totalorder %s909, %s910
    %p922 = scmp.eq.s32.totalorder %s97, 1
    %p923 = por %p921, %p922
    %p925 = scmp.ne.s32.totalorder %s910, %s924
    %p926 = scmp.eq.s32.totalorder %s97, 0
    %p927 = por %p925, %p926
    %s929 = sadd.s32 %s928, 1
    %p932 = scmp.eq.s32.totalorder %s91, 1
    %p933 = scmp.ne.s32.totalorder %s928, %s930
    %p934 = scmp.eq.s32.totalorder %s91, 0
    %p935 = por %p933, %p934
    %p936 = scmp.ne.s32.totalorder %s928, %s930
    %p937 = scmp.eq.s32.totalorder %s96, 1
    %p938 = por %p936, %p937
    %p939 = scmp.ne.s32.totalorder %s930, %s931
    %p940 = scmp.eq.s32.totalorder %s96, 0
    %p941 = por %p939, %p940
    %p942 = scmp.ne.s32.totalorder %s930, %s931
    %p943 = scmp.eq.s32.totalorder %s97, 1
    %p944 = por %p942, %p943
    %p946 = scmp.ne.s32.totalorder %s931, %s945
    %p947 = scmp.eq.s32.totalorder %s97, 0
    %p948 = por %p946, %p947
    %s949 = ssub.s32 %s91, %s98
    %p950 = scmp.eq.s32.totalorder %s949, 0
    %s952 = sadd.s32 %s951, 1
    %s953 = scalar_select %p950, %s951, %s952
    %p956 = pneg %p950
    %p957 = scmp.eq.s32.totalorder %s91, 1
    %p958 = por %p956, %p957
    %p959 = scmp.ne.s32.totalorder %s951, %s954
    %p960 = scmp.eq.s32.totalorder %s91, 0
    %p961 = por %p959, %p960
    %p962 = scmp.ne.s32.totalorder %s951, %s954
    %p963 = scmp.eq.s32.totalorder %s96, 1
    %p964 = por %p962, %p963
    %p965 = scmp.ne.s32.totalorder %s954, %s955
    %p966 = scmp.eq.s32.totalorder %s96, 0
    %p967 = por %p965, %p966
    %p968 = scmp.ne.s32.totalorder %s954, %s955
    %p969 = scmp.eq.s32.totalorder %s97, 1
    %p970 = por %p968, %p969
    %p972 = scmp.ne.s32.totalorder %s955, %s971
    %p973 = scmp.eq.s32.totalorder %s97, 0
    %p974 = por %p972, %p973
    %p975 = scmp.le.s32.totalorder 1, %s91
    %p976 = scmp.lt.s32.totalorder %s91, 3
    %p977 = pnand %p975, %p976
    %p978 = pneg %p977
    // Predicated region
    $region9: #{_lambda_.2} parent=5 // pred_check
      _
    $region10: #{_lambda_.2} parent=5 // pred_check_branch
      %980 = sbr.rel (%p977) target = $region12
    $region11: #{_lambda_.2} parent=5 // pred_region
      %s981 = ssub.s32 %s91, 1
      // Predicated region
      $region13: #{_lambda_.2} parent=11 // pred_check
        %p982 = pneg %p164
      $region14: #{_lambda_.2} parent=11 // pred_check_branch
        %984 = sbr.rel (%p982) target = $region16
      $region15: #{_lambda_.2} parent=11 // pred_region
        _
      $region16: #{_lambda_.2} parent=11 // pred_fallthru
        _
      // Predicated region
      $region17: #{_lambda_.2} parent=11 // pred_check
        %p985 = pneg %p185
      $region18: #{_lambda_.2} parent=11 // pred_check_branch
        %987 = sbr.rel (%p985) target = $region20
      $region19: #{_lambda_.2} parent=11 // pred_region
        _
      $region20: #{_lambda_.2} parent=11 // pred_fallthru
        _
      // Predicated region
      $region21: #{_lambda_.2} parent=11 // pred_check
        %p988 = pneg %p206
      $region22: #{_lambda_.2} parent=11 // pred_check_branch
        %990 = sbr.rel (%p988) target = $region24
      $region23: #{_lambda_.2} parent=11 // pred_region
        _
      $region24: #{_lambda_.2} parent=11 // pred_fallthru
        _
      // Predicated region
      $region25: #{_lambda_.2} parent=11 // pred_check
        %p991 = pneg %p227
      $region26: #{_lambda_.2} parent=11 // pred_check_branch
        %993 = sbr.rel (%p991) target = $region28
      $region27: #{_lambda_.2} parent=11 // pred_region
        _
      $region28: #{_lambda_.2} parent=11 // pred_fallthru
        _
      // Predicated region
      $region29: #{_lambda_.2} parent=11 // pred_check
        %p994 = pneg %p248
      $region30: #{_lambda_.2} parent=11 // pred_check_branch
        %996 = sbr.rel (%p994) target = $region32
      $region31: #{_lambda_.2} parent=11 // pred_region
        _
      $region32: #{_lambda_.2} parent=11 // pred_fallthru
        _
      // Predicated region
      $region33: #{_lambda_.2} parent=11 // pred_check
        %p997 = pneg %p269
      $region34: #{_lambda_.2} parent=11 // pred_check_branch
        %999 = sbr.rel (%p997) target = $region36
      $region35: #{_lambda_.2} parent=11 // pred_region
        _
      $region36: #{_lambda_.2} parent=11 // pred_fallthru
        _
      // Predicated region
      $region37: #{_lambda_.2} parent=11 // pred_check
        %p1000 = pneg %p290
      $region38: #{_lambda_.2} parent=11 // pred_check_branch
        %1002 = sbr.rel (%p1000) target = $region40
      $region39: #{_lambda_.2} parent=11 // pred_region
        _
      $region40: #{_lambda_.2} parent=11 // pred_fallthru
        _
      // Predicated region
      $region41: #{_lambda_.2} parent=11 // pred_check
        %p1003 = pneg %p311
      $region42: #{_lambda_.2} parent=11 // pred_check_branch
        %1005 = sbr.rel (%p1003) target = $region44
      $region43: #{_lambda_.2} parent=11 // pred_region
        _
      $region44: #{_lambda_.2} parent=11 // pred_fallthru
        _
      // Predicated region
      $region45: #{_lambda_.2} parent=11 // pred_check
        %p1006 = pneg %p332
      $region46: #{_lambda_.2} parent=11 // pred_check_branch
        %1008 = sbr.rel (%p1006) target = $region48
      $region47: #{_lambda_.2} parent=11 // pred_region
        _
      $region48: #{_lambda_.2} parent=11 // pred_fallthru
        _
      // Predicated region
      $region49: #{_lambda_.2} parent=11 // pred_check
        %p1009 = pneg %p353
      $region50: #{_lambda_.2} parent=11 // pred_check_branch
        %1011 = sbr.rel (%p1009) target = $region52
      $region51: #{_lambda_.2} parent=11 // pred_region
        _
      $region52: #{_lambda_.2} parent=11 // pred_fallthru
        _
      // Predicated region
      $region53: #{_lambda_.2} parent=11 // pred_check
        %p1012 = pneg %p374
      $region54: #{_lambda_.2} parent=11 // pred_check_branch
        %1014 = sbr.rel (%p1012) target = $region56
      $region55: #{_lambda_.2} parent=11 // pred_region
        _
      $region56: #{_lambda_.2} parent=11 // pred_fallthru
        _
      // Predicated region
      $region57: #{_lambda_.2} parent=11 // pred_check
        %p1015 = pneg %p395
      $region58: #{_lambda_.2} parent=11 // pred_check_branch
        %1017 = sbr.rel (%p1015) target = $region60
      $region59: #{_lambda_.2} parent=11 // pred_region
        _
      $region60: #{_lambda_.2} parent=11 // pred_fallthru
        _
      // Predicated region
      $region61: #{_lambda_.2} parent=11 // pred_check
        %p1018 = pneg %p416
      $region62: #{_lambda_.2} parent=11 // pred_check_branch
        %1020 = sbr.rel (%p1018) target = $region64
      $region63: #{_lambda_.2} parent=11 // pred_region
        _
      $region64: #{_lambda_.2} parent=11 // pred_fallthru
        _
      // Predicated region
      $region65: #{_lambda_.2} parent=11 // pred_check
        %p1021 = pneg %p437
      $region66: #{_lambda_.2} parent=11 // pred_check_branch
        %1023 = sbr.rel (%p1021) target = $region68
      $region67: #{_lambda_.2} parent=11 // pred_region
        _
      $region68: #{_lambda_.2} parent=11 // pred_fallthru
        _
      // Predicated region
      $region69: #{_lambda_.2} parent=11 // pred_check
        %p1024 = pneg %p458
      $region70: #{_lambda_.2} parent=11 // pred_check_branch
        %1026 = sbr.rel (%p1024) target = $region72
      $region71: #{_lambda_.2} parent=11 // pred_region
        _
      $region72: #{_lambda_.2} parent=11 // pred_fallthru
        _
      // Predicated region
      $region73: #{_lambda_.2} parent=11 // pred_check
        %p1027 = pneg %p479
      $region74: #{_lambda_.2} parent=11 // pred_check_branch
        %1029 = sbr.rel (%p1027) target = $region76
      $region75: #{_lambda_.2} parent=11 // pred_region
        _
      $region76: #{_lambda_.2} parent=11 // pred_fallthru
        _
      // Predicated region
      $region77: #{_lambda_.2} parent=11 // pred_check
        %p1030 = pneg %p500
      $region78: #{_lambda_.2} parent=11 // pred_check_branch
        %1032 = sbr.rel (%p1030) target = $region80
      $region79: #{_lambda_.2} parent=11 // pred_region
        _
      $region80: #{_lambda_.2} parent=11 // pred_fallthru
        _
      // Predicated region
      $region81: #{_lambda_.2} parent=11 // pred_check
        %p1033 = pneg %p521
      $region82: #{_lambda_.2} parent=11 // pred_check_branch
        %1035 = sbr.rel (%p1033) target = $region84
      $region83: #{_lambda_.2} parent=11 // pred_region
        _
      $region84: #{_lambda_.2} parent=11 // pred_fallthru
        _
      // Predicated region
      $region85: #{_lambda_.2} parent=11 // pred_check
        %p1036 = pneg %p542
      $region86: #{_lambda_.2} parent=11 // pred_check_branch
        %1038 = sbr.rel (%p1036) target = $region88
      $region87: #{_lambda_.2} parent=11 // pred_region
        _
      $region88: #{_lambda_.2} parent=11 // pred_fallthru
        _
      // Predicated region
      $region89: #{_lambda_.2} parent=11 // pred_check
        %p1039 = pneg %p563
      $region90: #{_lambda_.2} parent=11 // pred_check_branch
        %1041 = sbr.rel (%p1039) target = $region92
      $region91: #{_lambda_.2} parent=11 // pred_region
        _
      $region92: #{_lambda_.2} parent=11 // pred_fallthru
        _
      // Predicated region
      $region93: #{_lambda_.2} parent=11 // pred_check
        %p1042 = pneg %p584
      $region94: #{_lambda_.2} parent=11 // pred_check_branch
        %1044 = sbr.rel (%p1042) target = $region96
      $region95: #{_lambda_.2} parent=11 // pred_region
        _
      $region96: #{_lambda_.2} parent=11 // pred_fallthru
        _
      // Predicated region
      $region97: #{_lambda_.2} parent=11 // pred_check
        %p1045 = pneg %p605
      $region98: #{_lambda_.2} parent=11 // pred_check_branch
        %1047 = sbr.rel (%p1045) target = $region100
      $region99: #{_lambda_.2} parent=11 // pred_region
        _
      $region100: #{_lambda_.2} parent=11 // pred_fallthru
        _
      // Predicated region
      $region101: #{_lambda_.2} parent=11 // pred_check
        %p1048 = pneg %p626
      $region102: #{_lambda_.2} parent=11 // pred_check_branch
        %1050 = sbr.rel (%p1048) target = $region104
      $region103: #{_lambda_.2} parent=11 // pred_region
        _
      $region104: #{_lambda_.2} parent=11 // pred_fallthru
        _
      // Predicated region
      $region105: #{_lambda_.2} parent=11 // pred_check
        %p1051 = pneg %p647
      $region106: #{_lambda_.2} parent=11 // pred_check_branch
        %1053 = sbr.rel (%p1051) target = $region108
      $region107: #{_lambda_.2} parent=11 // pred_region
        _
      $region108: #{_lambda_.2} parent=11 // pred_fallthru
        _
      // Predicated region
      $region109: #{_lambda_.2} parent=11 // pred_check
        %p1054 = pneg %p668
      $region110: #{_lambda_.2} parent=11 // pred_check_branch
        %1056 = sbr.rel (%p1054) target = $region112
      $region111: #{_lambda_.2} parent=11 // pred_region
        _
      $region112: #{_lambda_.2} parent=11 // pred_fallthru
        _
      // Predicated region
      $region113: #{_lambda_.2} parent=11 // pred_check
        %p1057 = pneg %p689
      $region114: #{_lambda_.2} parent=11 // pred_check_branch
        %1059 = sbr.rel (%p1057) target = $region116
      $region115: #{_lambda_.2} parent=11 // pred_region
        _
      $region116: #{_lambda_.2} parent=11 // pred_fallthru
        _
      // Predicated region
      $region117: #{_lambda_.2} parent=11 // pred_check
        %p1060 = pneg %p710
      $region118: #{_lambda_.2} parent=11 // pred_check_branch
        %1062 = sbr.rel (%p1060) target = $region120
      $region119: #{_lambda_.2} parent=11 // pred_region
        _
      $region120: #{_lambda_.2} parent=11 // pred_fallthru
        _
      // Predicated region
      $region121: #{_lambda_.2} parent=11 // pred_check
        %p1063 = pneg %p731
      $region122: #{_lambda_.2} parent=11 // pred_check_branch
        %1065 = sbr.rel (%p1063) target = $region124
      $region123: #{_lambda_.2} parent=11 // pred_region
        _
      $region124: #{_lambda_.2} parent=11 // pred_fallthru
        _
      // Predicated region
      $region125: #{_lambda_.2} parent=11 // pred_check
        %p1066 = pneg %p752
      $region126: #{_lambda_.2} parent=11 // pred_check_branch
        %1068 = sbr.rel (%p1066) target = $region128
      $region127: #{_lambda_.2} parent=11 // pred_region
        _
      $region128: #{_lambda_.2} parent=11 // pred_fallthru
        _
      // Predicated region
      $region129: #{_lambda_.2} parent=11 // pred_check
        %p1069 = pneg %p773
      $region130: #{_lambda_.2} parent=11 // pred_check_branch
        %1071 = sbr.rel (%p1069) target = $region132
      $region131: #{_lambda_.2} parent=11 // pred_region
        _
      $region132: #{_lambda_.2} parent=11 // pred_fallthru
        _
      // Predicated region
      $region133: #{_lambda_.2} parent=11 // pred_check
        %p1072 = pneg %p794
      $region134: #{_lambda_.2} parent=11 // pred_check_branch
        %1074 = sbr.rel (%p1072) target = $region136
      $region135: #{_lambda_.2} parent=11 // pred_region
        _
      $region136: #{_lambda_.2} parent=11 // pred_fallthru
        _
      // Predicated region
      $region137: #{_lambda_.2} parent=11 // pred_check
        %p1075 = pneg %p815
      $region138: #{_lambda_.2} parent=11 // pred_check_branch
        %1077 = sbr.rel (%p1075) target = $region140
      $region139: #{_lambda_.2} parent=11 // pred_region
        _
      $region140: #{_lambda_.2} parent=11 // pred_fallthru
        _
      // Predicated region
      $region141: #{_lambda_.2} parent=11 // pred_check
        %p1078 = pneg %p836
      $region142: #{_lambda_.2} parent=11 // pred_check_branch
        %1080 = sbr.rel (%p1078) target = $region144
      $region143: #{_lambda_.2} parent=11 // pred_region
        _
      $region144: #{_lambda_.2} parent=11 // pred_fallthru
        _
      // Predicated region
      $region145: #{_lambda_.2} parent=11 // pred_check
        %p1081 = pneg %p857
      $region146: #{_lambda_.2} parent=11 // pred_check_branch
        %1083 = sbr.rel (%p1081) target = $region148
      $region147: #{_lambda_.2} parent=11 // pred_region
        _
      $region148: #{_lambda_.2} parent=11 // pred_fallthru
        _
      // Predicated region
      $region149: #{_lambda_.2} parent=11 // pred_check
        %p1084 = pneg %p878
      $region150: #{_lambda_.2} parent=11 // pred_check_branch
        %1086 = sbr.rel (%p1084) target = $region152
      $region151: #{_lambda_.2} parent=11 // pred_region
        _
      $region152: #{_lambda_.2} parent=11 // pred_fallthru
        _
      // Predicated region
      $region153: #{_lambda_.2} parent=11 // pred_check
        %p1087 = pneg %p899
      $region154: #{_lambda_.2} parent=11 // pred_check_branch
        %1089 = sbr.rel (%p1087) target = $region156
      $region155: #{_lambda_.2} parent=11 // pred_region
        _
      $region156: #{_lambda_.2} parent=11 // pred_fallthru
        _
      // Predicated region
      $region157: #{_lambda_.2} parent=11 // pred_check
        %p1090 = pneg %p920
      $region158: #{_lambda_.2} parent=11 // pred_check_branch
        %1092 = sbr.rel (%p1090) target = $region160
      $region159: #{_lambda_.2} parent=11 // pred_region
        _
      $region160: #{_lambda_.2} parent=11 // pred_fallthru
        _
      // Predicated region
      $region161: #{_lambda_.2} parent=11 // pred_check
        %p1093 = pneg %p941
      $region162: #{_lambda_.2} parent=11 // pred_check_branch
        %1095 = sbr.rel (%p1093) target = $region164
      $region163: #{_lambda_.2} parent=11 // pred_region
        _
      $region164: #{_lambda_.2} parent=11 // pred_fallthru
        _
    $region12: #{_lambda_.2} parent=5 // pred_fallthru
      _
    %p1096 = scmp.lt.s32.totalorder %s91, 2
    // Predicated region
    $region165: #{_lambda_.2} parent=5 // pred_check
      %p1097 = pneg %p1096
    $region166: #{_lambda_.2} parent=5 // pred_check_branch
      %1099 = sbr.rel (%p1097) target = $region168
    $region167: #{_lambda_.2} parent=5 // pred_region
      // Predicated region
      $region169: #{_lambda_.2} parent=167 // pred_check
        %p1100 = pneg %p111
      $region170: #{_lambda_.2} parent=167 // pred_check_branch
        %1102 = sbr.rel (%p1100) target = $region172
      $region171: #{_lambda_.2} parent=167 // pred_region
        %p1103 = scmp.lt.s32.totalorder %s91, 1
        %s1104 = scalar_select %p1103, %s91, 1
        %s1105 = smul.addr %s1104, 5
        %s1106 = smul.addr %s1105, 4
        %s1107 = scalar_lea.vmem %s1, %s1106
      $region172: #{_lambda_.2} parent=167 // pred_fallthru
        _
      // Predicated region
      $region173: #{_lambda_.2} parent=167 // pred_check
        %p1108 = pneg %p137
      $region174: #{_lambda_.2} parent=167 // pred_check_branch
        %1110 = sbr.rel (%p1108) target = $region176
      $region175: #{_lambda_.2} parent=167 // pred_region
        %p1111 = scmp.lt.s32.totalorder %s91, 1
        %s1112 = scalar_select %p1111, %s91, 1
        %s1113 = smul.addr %s1112, 7
        %s1114 = smul.addr %s1113, 4
        %s1115 = scalar_lea.vmem %s3, %s1114
      $region176: #{_lambda_.2} parent=167 // pred_fallthru
        _
    $region168: #{_lambda_.2} parent=5 // pred_fallthru
      _
    %p1116 = scmp.le.s32.totalorder 1, %s91
    %p1117 = scmp.lt.s32.totalorder %s91, 3
    %p1118 = pnand %p1116, %p1117
    %p1119 = pneg %p1118
    // Predicated region
    $region177: #{_lambda_.2} parent=5 // pred_check
      _
    $region178: #{_lambda_.2} parent=5 // pred_check_branch
      %1121 = sbr.rel (%p1118) target = $region180
    $region179: #{_lambda_.2} parent=5 // pred_region
      %s1122 = ssub.s32 %s91, 1
      %p1123 = scmp.lt.s32.totalorder %s96, 1
      %s1124 = scalar_select %p1123, %s96, 1
      %s1125 = smul.addr %s1124, 5
      %s1126 = smul.addr %s1125, 4
      %s1127 = scalar_lea.vmem %s1, %s1126
      %p1128 = pneg %p117
      %p1129 = pneg %p114
      %p1130 = scmp.lt.s32.totalorder %s96, 1
      %s1131 = scalar_select %p1130, %s96, 1
      %s1132 = smul.addr %s1131, 7
      %s1133 = smul.addr %s1132, 4
      %s1134 = scalar_lea.vmem %s3, %s1133
      %p1135 = pneg %p143
      %p1136 = pneg %p140
      %p1137 = pneg %p164
      %p1138 = pneg %p161
      %p1139 = pneg %p185
      %p1140 = pneg %p182
      %p1141 = pneg %p206
      %p1142 = pneg %p203
      %p1143 = pneg %p227
      %p1144 = pneg %p224
      %p1145 = pneg %p248
      %p1146 = pneg %p245
      %p1147 = pneg %p269
      %p1148 = pneg %p266
      %p1149 = pneg %p290
      %p1150 = pneg %p287
      %p1151 = pneg %p311
      %p1152 = pneg %p308
      %p1153 = pneg %p332
      %p1154 = pneg %p329
      %p1155 = pneg %p353
      %p1156 = pneg %p350
      %p1157 = pneg %p374
      %p1158 = pneg %p371
      %p1159 = pneg %p395
      %p1160 = pneg %p392
      %p1161 = pneg %p416
      %p1162 = pneg %p413
      %p1163 = pneg %p437
      %p1164 = pneg %p434
      %p1165 = pneg %p458
      %p1166 = pneg %p455
      %p1167 = pneg %p479
      %p1168 = pneg %p476
      %p1169 = pneg %p500
      %p1170 = pneg %p497
      %p1171 = pneg %p521
      %p1172 = pneg %p518
      %p1173 = pneg %p542
      %p1174 = pneg %p539
      %p1175 = pneg %p563
      %p1176 = pneg %p560
      %p1177 = pneg %p584
      %p1178 = pneg %p581
      %p1179 = pneg %p605
      %p1180 = pneg %p602
      %p1181 = pneg %p626
      %p1182 = pneg %p623
      %p1183 = pneg %p647
      %p1184 = pneg %p644
      %p1185 = pneg %p668
      %p1186 = pneg %p665
      %p1187 = pneg %p689
      %p1188 = pneg %p686
      %p1189 = pneg %p710
      %p1190 = pneg %p707
      %p1191 = pneg %p731
      %p1192 = pneg %p728
      %p1193 = pneg %p752
      %p1194 = pneg %p749
      %p1195 = pneg %p773
      %p1196 = pneg %p770
      %p1197 = pneg %p794
      %p1198 = pneg %p791
      %p1199 = pneg %p815
      %p1200 = pneg %p812
      %p1201 = pneg %p836
      %p1202 = pneg %p833
      %p1203 = pneg %p857
      %p1204 = pneg %p854
      %p1205 = pneg %p878
      %p1206 = pneg %p875
      %p1207 = pneg %p899
      %p1208 = pneg %p896
      %p1209 = pneg %p920
      %p1210 = pneg %p917
      %p1211 = pneg %p941
      %p1212 = pneg %p938
      %p1213 = pneg %p967
      %p1214 = pneg %p964
      %p1215 = scmp.lt.s32.totalorder %s96, 1
      %s1216 = scalar_select %p1215, %s96, 1
      %s1217 = smul.addr %s1216, 8
      %s1218 = smul.addr %s1217, 8
      %s1219 = scalar_lea.vmem %s81, %s1218
      %p1220 = scmp.lt.s32.totalorder %s96, 1
      %s1221 = scalar_select %p1220, %s96, 1
      %s1222 = smul.addr %s1221, 5
      %s1223 = smul.addr %s1222, 4
      %s1224 = scalar_lea.vmem %s1, %s1223
      %p1225 = scmp.lt.s32.totalorder %s96, 1
      %s1226 = scalar_select %p1225, %s96, 1
      %s1227 = smul.addr %s1226, 7
      %s1228 = smul.addr %s1227, 4
      %s1229 = scalar_lea.vmem %s3, %s1228
      %p1230 = scmp.lt.s32.totalorder %s96, 1
      %s1231 = scalar_select %p1230, %s96, 1
      %s1232 = smul.addr %s1231, 8
      %s1233 = smul.addr %s1232, 8
      %s1234 = scalar_lea.vmem %s81, %s1233
      %v1236 = vld [vmem:[%s1224] sm:$0xf]
      %v1237 = vld [vmem:[%s1224 + $0x4] sm:$0xf]
      %v1238 = vld [vmem:[%s1224 + $0x8] sm:$0xf]
      %v1239 = vld [vmem:[%s1224 + $0xc] sm:$0xf]
      %v1240 = vld [vmem:[%s1224 + $0x10] sm:$0x3]
      %v1241 = vld [vmem:[%s9] sm:$0xf]
      %v1242 = vld [vmem:[%s9 + $0x4] sm:$0xf]
      %v1243 = vld [vmem:[%s9 + $0x8] sm:$0xf]
      %v1244 = vld [vmem:[%s9 + $0xc] sm:$0xf]
      %v1245 = vld [vmem:[%s11] sm:$0xff]
      %v1246 = vld [vmem:[%s11 + $0x8] sm:$0xff]
      %v1247 = vld [vmem:[%s11 + $0x10] sm:$0xff]
      %v1248 = vld [vmem:[%s11 + $0x18] sm:$0xff]
      %1250 = vset.pattern.permute.xlu0 0
      %1251 = vperm.xlu0 %1250, %v1245
      %v1252 = vpop.permute.xlu0 %1251
      %1255 = vset.pattern.permute.xlu0 0
      %1256 = vperm.xlu0 %1255, %v1246
      %v1257 = vpop.permute.xlu0 %1256
      %1260 = vset.pattern.permute.xlu0 0
      %1261 = vperm.xlu0 %1260, %v1247
      %v1262 = vpop.permute.xlu0 %1261
      %1265 = vset.pattern.permute.xlu0 0
      %1266 = vperm.xlu0 %1265, %v1248
      %v1267 = vpop.permute.xlu0 %1266
      %v1273 = vunpack.c.l.b16 %v1241
      %v1274 = vunpack.c.l.b16 %v1242
      %v1275 = vunpack.c.l.b16 %v1243
      %v1276 = vunpack.c.l.b16 %v1244
      %v1277 = vpack.c.b16 %v1274, %v1273
      %v1278 = vpack.c.b16 %v1276, %v1275
      %v1284 = vunpack.c.l.b16 %v1236
      %v1285 = vunpack.c.l.b16 %v1237
      %v1286 = vunpack.c.l.b16 %v1238
      %v1287 = vunpack.c.l.b16 %v1239
      %v1288 = vunpack.c.l.b16 %v1240
      %v1289 = vpack.c.b16 %v1285, %v1284
      %v1290 = vpack.c.b16 %v1287, %v1286
      %v1291 = vpack.c.b16 %v1288, %v1288
      %vm1294 = vcmask 293888
      %v1296 = vsel %vm1294, %v1277, 0
      %v1299 = vsel %vm1294, %v1278, 0
      %vm1301 = vcmask 1041408
      %v1303 = vsel %vm1301, %v1291, 0
      %1305 = vmatpush.bf16.msra.mxu0 0
      %1306 = vmatpush.bf16.msra.mxu0 0
      %1307 = vmatpush.bf16.msra.mxu0 0
      %1308 = vmatpush.bf16.msra.mxu0 0
      %1309 = vmatpush.bf16.msra.mxu0 0
      %1310 = vmatpush.bf16.msra.mxu0 %v1303
      %1311 = vmatpush.bf16.msra.mxu0 %v1290
      %1312 = vmatpush.bf16.msra.mxu0 %v1289
      %1313 = vmatmul.bf16.gmra.mxu0 %v1296
      %v1314 = vpop.f32.mrf.mxu0
      %v1315 = vadd.f32 %v1252, %v1314
      %v1316 = vpop.f32.mrf.mxu0
      %v1317 = vadd.f32 %v1257, %v1316
      %1318 = vmatmul.bf16.gmra.mxu0 %v1299
      %v1319 = vpop.f32.mrf.mxu0
      %v1320 = vadd.f32 %v1262, %v1319
      %v1321 = vpop.f32.mrf.mxu0
      %v1322 = vadd.f32 %v1267, %v1321
      %1323 = vdwg.mxu0
      %vm1324 = vcmp.ge.f32.partialorder %v1315, 0.0
      %vm1325 = vcmp.ge.f32.partialorder %v1317, 0.0
      %vm1326 = vcmp.ge.f32.partialorder %v1320, 0.0
      %vm1327 = vcmp.ge.f32.partialorder %v1322, 0.0
      %v1328 = vmul.f32 %v1315, 0.01
      %v1329 = vmul.f32 %v1317, 0.01
      %v1330 = vmul.f32 %v1320, 0.01
      %v1331 = vmul.f32 %v1322, 0.01
      %v1332 = vsel %vm1324, %v1315, %v1328
      %v1333 = vsel %vm1325, %v1317, %v1329
      %v1334 = vsel %vm1326, %v1320, %v1330
      %v1335 = vsel %vm1327, %v1322, %v1331
      %v1336 = vld [vmem:[%s13] sm:$0xff]
      %v1337 = vld [vmem:[%s13 + $0x8] sm:$0xff]
      %v1338 = vld [vmem:[%s13 + $0x10] sm:$0xff]
      %v1339 = vld [vmem:[%s13 + $0x18] sm:$0xff]
      %1341 = vset.pattern.permute.xlu0 0
      %1342 = vperm.xlu0 %1341, %v1336
      %v1343 = vpop.permute.xlu0 %1342
      %1346 = vset.pattern.permute.xlu0 0
      %1347 = vperm.xlu0 %1346, %v1337
      %v1348 = vpop.permute.xlu0 %1347
      %1351 = vset.pattern.permute.xlu0 0
      %1352 = vperm.xlu0 %1351, %v1338
      %v1353 = vpop.permute.xlu0 %1352
      %1356 = vset.pattern.permute.xlu0 0
      %1357 = vperm.xlu0 %1356, %v1339
      %v1358 = vpop.permute.xlu0 %1357
      %v1360 = vadd.f32 %v1332, %v1343
      %v1361 = vadd.f32 %v1333, %v1348
      %v1362 = vadd.f32 %v1334, %v1353
      %v1363 = vadd.f32 %v1335, %v1358
      %v1364 = vpack.c.bf16 %v1361, %v1360
      %v1365 = vpack.c.bf16 %v1363, %v1362
      %v1366 = vld [vmem:[%s5] sm:$0xf]
      %v1367 = vld [vmem:[%s5 + $0x4] sm:$0xf]
      %v1368 = vld [vmem:[%s5 + $0x8] sm:$0xf]
      %v1369 = vld [vmem:[%s5 + $0xc] sm:$0xf]
      %v1370 = vld [vmem:[%s5 + $0x10] sm:$0xf]
      %v1371 = vld [vmem:[%s5 + $0x14] sm:$0xf]
      %v1372 = vld [vmem:[%s5 + $0x18] sm:$0xf]
      %v1373 = vld [vmem:[%s5 + $0x1c] sm:$0xf]
      %v1374 = vld [vmem:[%s5 + $0x20] sm:$0xf]
      %v1375 = vld [vmem:[%s5 + $0x24] sm:$0xf]
      %v1376 = vld [vmem:[%s5 + $0x28] sm:$0x1]
      %v1388 = vunpack.c.l.b16 %v1366
      %v1389 = vunpack.c.l.b16 %v1367
      %v1390 = vunpack.c.l.b16 %v1368
      %v1391 = vunpack.c.l.b16 %v1369
      %v1392 = vunpack.c.l.b16 %v1370
      %v1393 = vunpack.c.l.b16 %v1371
      %v1394 = vunpack.c.l.b16 %v1372
      %v1395 = vunpack.c.l.b16 %v1373
      %v1396 = vunpack.c.l.b16 %v1374
      %v1397 = vunpack.c.l.b16 %v1375
      %v1398 = vunpack.c.l.b16 %v1376
      %v1399 = vpack.c.b16 %v1389, %v1388
      %v1400 = vpack.c.b16 %v1391, %v1390
      %v1401 = vpack.c.b16 %v1393, %v1392
      %v1402 = vpack.c.b16 %v1395, %v1394
      %v1403 = vpack.c.b16 %v1397, %v1396
      %v1404 = vpack.c.b16 %v1398, %v1398
      %vm1410 = vcmask 662528
      %v1412 = vsel %vm1410, %v1364, 0
      %v1415 = vsel %vm1410, %v1365, 0
      %vm1417 = vcmask 1040384
      %v1418 = vsel 0, 4294967295, 65535
      %v1419 = vsel %vm1417, %v1418, 0
      %v1421 = vand.u32 %v1404, %v1419
      %1423 = vmatpush.bf16.msra.mxu0 0
      %1424 = vmatpush.bf16.msra.mxu0 0
      %1425 = vmatpush.bf16.msra.mxu0 %v1421
      %1426 = vmatpush.bf16.msra.mxu0 %v1403
      %1427 = vmatpush.bf16.msra.mxu0 %v1402
      %1428 = vmatpush.bf16.msra.mxu0 %v1401
      %1429 = vmatpush.bf16.msra.mxu0 %v1400
      %1430 = vmatpush.bf16.msra.mxu0 %v1399
      %1431 = vmatmul.bf16.gmra.mxu0 %v1412
      %v1432 = vpop.f32.mrf.mxu0
      %v1433 = vadd.f32 0.0, %v1432
      %v1434 = vpop.f32.mrf.mxu0
      %v1435 = vadd.f32 0.0, %v1434
      %1436 = vmatmul.bf16.gmra.mxu0 %v1415
      %v1437 = vpop.f32.mrf.mxu0
      %v1438 = vadd.f32 0.0, %v1437
      %v1439 = vpop.f32.mrf.mxu0
      %v1440 = vadd.f32 0.0, %v1439
      %1441 = vdwg.mxu0
      %v1442 = vld [vmem:[%s15] sm:$0xf]
      %v1443 = vld [vmem:[%s15 + $0x4] sm:$0xf]
      %v1444 = vld [vmem:[%s15 + $0x8] sm:$0xf]
      %v1445 = vld [vmem:[%s15 + $0xc] sm:$0xf]
      %v1446 = vld [vmem:[%s15 + $0x10] sm:$0xf]
      %v1447 = vld [vmem:[%s15 + $0x14] sm:$0xf]
      %v1448 = vld [vmem:[%s15 + $0x18] sm:$0xf]
      %v1449 = vld [vmem:[%s15 + $0x1c] sm:$0xf]
      %v1450 = vpack.c.bf16 %v1435, %v1433
      %v1451 = vpack.c.bf16 %v1440, %v1438
      %s1452 = scalar_lea.vmem %s5, 44
      %v1453 = vld [vmem:[%s1452] sm:$0xf]
      %v1454 = vld [vmem:[%s1452 + $0x4] sm:$0xf]
      %v1455 = vld [vmem:[%s1452 + $0x8] sm:$0xf]
      %v1456 = vld [vmem:[%s1452 + $0xc] sm:$0xf]
      %v1457 = vld [vmem:[%s1452 + $0x10] sm:$0xf]
      %v1458 = vld [vmem:[%s1452 + $0x14] sm:$0xf]
      %v1459 = vld [vmem:[%s1452 + $0x18] sm:$0xf]
      %v1460 = vld [vmem:[%s1452 + $0x1c] sm:$0xf]
      %v1461 = vld [vmem:[%s1452 + $0x20] sm:$0xf]
      %v1462 = vld [vmem:[%s1452 + $0x24] sm:$0xf]
      %v1463 = vld [vmem:[%s1452 + $0x28] sm:$0x1]
      %v1475 = vunpack.c.l.b16 %v1453
      %v1476 = vunpack.c.l.b16 %v1454
      %v1477 = vunpack.c.l.b16 %v1455
      %v1478 = vunpack.c.l.b16 %v1456
      %v1479 = vunpack.c.l.b16 %v1457
      %v1480 = vunpack.c.l.b16 %v1458
      %v1481 = vunpack.c.l.b16 %v1459
      %v1482 = vunpack.c.l.b16 %v1460
      %v1483 = vunpack.c.l.b16 %v1461
      %v1484 = vunpack.c.l.b16 %v1462
      %v1485 = vunpack.c.l.b16 %v1463
      %v1486 = vpack.c.b16 %v1476, %v1475
      %v1487 = vpack.c.b16 %v1478, %v1477
      %v1488 = vpack.c.b16 %v1480, %v1479
      %v1489 = vpack.c.b16 %v1482, %v1481
      %v1490 = vpack.c.b16 %v1484, %v1483
      %v1491 = vpack.c.b16 %v1485, %v1485
      %v1498 = vand.u32 %v1491, %v1419
      %1500 = vmatpush.bf16.msra.mxu0 0
      %1501 = vmatpush.bf16.msra.mxu0 0
      %1502 = vmatpush.bf16.msra.mxu0 %v1498
      %1503 = vmatpush.bf16.msra.mxu0 %v1490
      %1504 = vmatpush.bf16.msra.mxu0 %v1489
      %1505 = vmatpush.bf16.msra.mxu0 %v1488
      %1506 = vmatpush.bf16.msra.mxu0 %v1487
      %1507 = vmatpush.bf16.msra.mxu0 %v1486
      %1508 = vmatmul.bf16.gmra.mxu0 %v1412
      %v1509 = vpop.f32.mrf.mxu0
      %v1510 = vadd.f32 0.0, %v1509
      %v1511 = vpop.f32.mrf.mxu0
      %v1512 = vadd.f32 0.0, %v1511
      %1513 = vmatmul.bf16.gmra.mxu0 %v1415
      %v1514 = vpop.f32.mrf.mxu0
      %v1515 = vadd.f32 0.0, %v1514
      %v1516 = vpop.f32.mrf.mxu0
      %v1517 = vadd.f32 0.0, %v1516
      %1518 = vdwg.mxu0
      %s1519 = scalar_lea.vmem %s15, 32
      %v1520 = vld [vmem:[%s1519] sm:$0xf]
      %v1521 = vld [vmem:[%s1519 + $0x4] sm:$0xf]
      %v1522 = vld [vmem:[%s1519 + $0x8] sm:$0xf]
      %v1523 = vld [vmem:[%s1519 + $0xc] sm:$0xf]
      %v1524 = vld [vmem:[%s1519 + $0x10] sm:$0xf]
      %v1525 = vld [vmem:[%s1519 + $0x14] sm:$0xf]
      %v1526 = vld [vmem:[%s1519 + $0x18] sm:$0xf]
      %v1527 = vld [vmem:[%s1519 + $0x1c] sm:$0xf]
      %v1528 = vpack.c.bf16 %v1512, %v1510
      %v1529 = vpack.c.bf16 %v1517, %v1515
      %v1538 = vunpack.c.l.b16 %v1520
      %v1539 = vunpack.c.l.b16 %v1521
      %v1540 = vunpack.c.l.b16 %v1522
      %v1541 = vunpack.c.l.b16 %v1523
      %v1542 = vunpack.c.l.b16 %v1524
      %v1543 = vunpack.c.l.b16 %v1525
      %v1544 = vunpack.c.l.b16 %v1526
      %v1545 = vunpack.c.l.b16 %v1527
      %v1546 = vpack.c.b16 %v1539, %v1538
      %v1547 = vpack.c.b16 %v1541, %v1540
      %v1548 = vpack.c.b16 %v1543, %v1542
      %v1549 = vpack.c.b16 %v1545, %v1544
      %vm1550 = vcmask 261120
      %v1552 = vsel %vm1550, %v1546, 0
      %v1555 = vsel %vm1550, %v1547, 0
      %v1558 = vsel %vm1550, %v1548, 0
      %v1561 = vsel %vm1550, %v1549, 0
      %1563 = vmatpush.bf16.msra.mxu0 0
      %1564 = vmatpush.bf16.msra.mxu0 0
      %1565 = vmatpush.bf16.msra.mxu0 0
      %1566 = vmatpush.bf16.msra.mxu0 0
      %1567 = vmatpush.bf16.msra.mxu0 0
      %1568 = vmatpush.bf16.msra.mxu0 0
      %1569 = vmatpush.bf16.msra.mxu0 %v1529
      %1570 = vmatpush.bf16.msra.mxu0 %v1528
      %1571 = vmatmul.bf16.gmra.mxu0 %v1552
      %v1572 = vpop.f32.mrf.mxu0
      %v1573 = vadd.f32 0.0, %v1572
      %v1574 = vpop.f32.mrf.mxu0
      %v1575 = vadd.f32 0.0, %v1574
      %1576 = vmatmul.bf16.gmra.mxu0 %v1555
      %v1577 = vpop.f32.mrf.mxu0
      %v1578 = vadd.f32 0.0, %v1577
      %v1579 = vpop.f32.mrf.mxu0
      %v1580 = vadd.f32 0.0, %v1579
      %1581 = vmatmul.bf16.gmra.mxu0 %v1558
      %v1582 = vpop.f32.mrf.mxu0
      %v1583 = vadd.f32 0.0, %v1582
      %v1584 = vpop.f32.mrf.mxu0
      %v1585 = vadd.f32 0.0, %v1584
      %1586 = vmatmul.bf16.gmra.mxu0 %v1561
      %v1587 = vpop.f32.mrf.mxu0
      %v1588 = vadd.f32 0.0, %v1587
      %v1589 = vpop.f32.mrf.mxu0
      %v1590 = vadd.f32 0.0, %v1589
      %1591 = vdwg.mxu0
      %v1600 = vunpack.c.l.b16 %v1442
      %v1601 = vunpack.c.l.b16 %v1443
      %v1602 = vunpack.c.l.b16 %v1444
      %v1603 = vunpack.c.l.b16 %v1445
      %v1604 = vunpack.c.l.b16 %v1446
      %v1605 = vunpack.c.l.b16 %v1447
      %v1606 = vunpack.c.l.b16 %v1448
      %v1607 = vunpack.c.l.b16 %v1449
      %v1608 = vpack.c.b16 %v1601, %v1600
      %v1609 = vpack.c.b16 %v1603, %v1602
      %v1610 = vpack.c.b16 %v1605, %v1604
      %v1611 = vpack.c.b16 %v1607, %v1606
      %v1613 = vsel %vm1550, %v1608, 0
      %v1616 = vsel %vm1550, %v1609, 0
      %v1619 = vsel %vm1550, %v1610, 0
      %v1622 = vsel %vm1550, %v1611, 0
      %1624 = vmatpush.bf16.msra.mxu0 0
      %1625 = vmatpush.bf16.msra.mxu0 0
      %1626 = vmatpush.bf16.msra.mxu0 0
      %1627 = vmatpush.bf16.msra.mxu0 0
      %1628 = vmatpush.bf16.msra.mxu0 0
      %1629 = vmatpush.bf16.msra.mxu0 0
      %1630 = vmatpush.bf16.msra.mxu0 %v1451
      %1631 = vmatpush.bf16.msra.mxu0 %v1450
      %1632 = vmatmul.bf16.gmra.mxu0 %v1613
      %v1633 = vpop.f32.mrf.mxu0
      %v1634 = vadd.f32 %v1573, %v1633
      %v1635 = vpop.f32.mrf.mxu0
      %v1636 = vadd.f32 %v1575, %v1635
      %1637 = vmatmul.bf16.gmra.mxu0 %v1616
      %v1638 = vpop.f32.mrf.mxu0
      %v1639 = vadd.f32 %v1578, %v1638
      %v1640 = vpop.f32.mrf.mxu0
      %v1641 = vadd.f32 %v1580, %v1640
      %1642 = vmatmul.bf16.gmra.mxu0 %v1619
      %v1643 = vpop.f32.mrf.mxu0
      %v1644 = vadd.f32 %v1583, %v1643
      %v1645 = vpop.f32.mrf.mxu0
      %v1646 = vadd.f32 %v1585, %v1645
      %1647 = vmatmul.bf16.gmra.mxu0 %v1622
      %v1648 = vpop.f32.mrf.mxu0
      %v1649 = vadd.f32 %v1588, %v1648
      %v1650 = vpop.f32.mrf.mxu0
      %v1651 = vadd.f32 %v1590, %v1650
      %1652 = vdwg.mxu0
      %s1653 = scalar_lea.vmem %s5, 88
      %v1654 = vld [vmem:[%s1653] sm:$0xf]
      %v1655 = vld [vmem:[%s1653 + $0x4] sm:$0xf]
      %v1656 = vld [vmem:[%s1653 + $0x8] sm:$0xf]
      %v1657 = vld [vmem:[%s1653 + $0xc] sm:$0xf]
      %v1658 = vld [vmem:[%s1653 + $0x10] sm:$0xf]
      %v1659 = vld [vmem:[%s1653 + $0x14] sm:$0xf]
      %v1660 = vld [vmem:[%s1653 + $0x18] sm:$0xf]
      %v1661 = vld [vmem:[%s1653 + $0x1c] sm:$0xf]
      %v1662 = vld [vmem:[%s1653 + $0x20] sm:$0xf]
      %v1663 = vld [vmem:[%s1653 + $0x24] sm:$0xf]
      %v1664 = vld [vmem:[%s1653 + $0x28] sm:$0x1]
      %v1676 = vunpack.c.l.b16 %v1654
      %v1677 = vunpack.c.l.b16 %v1655
      %v1678 = vunpack.c.l.b16 %v1656
      %v1679 = vunpack.c.l.b16 %v1657
      %v1680 = vunpack.c.l.b16 %v1658
      %v1681 = vunpack.c.l.b16 %v1659
      %v1682 = vunpack.c.l.b16 %v1660
      %v1683 = vunpack.c.l.b16 %v1661
      %v1684 = vunpack.c.l.b16 %v1662
      %v1685 = vunpack.c.l.b16 %v1663
      %v1686 = vunpack.c.l.b16 %v1664
      %v1687 = vpack.c.b16 %v1677, %v1676
      %v1688 = vpack.c.b16 %v1679, %v1678
      %v1689 = vpack.c.b16 %v1681, %v1680
      %v1690 = vpack.c.b16 %v1683, %v1682
      %v1691 = vpack.c.b16 %v1685, %v1684
      %v1692 = vpack.c.b16 %v1686, %v1686
      %v1699 = vand.u32 %v1692, %v1419
      %1701 = vmatpush.bf16.msra.mxu0 0
      %1702 = vmatpush.bf16.msra.mxu0 0
      %1703 = vmatpush.bf16.msra.mxu0 %v1699
      %1704 = vmatpush.bf16.msra.mxu0 %v1691
      %1705 = vmatpush.bf16.msra.mxu0 %v1690
      %1706 = vmatpush.bf16.msra.mxu0 %v1689
      %1707 = vmatpush.bf16.msra.mxu0 %v1688
      %1708 = vmatpush.bf16.msra.mxu0 %v1687
      %1709 = vmatmul.bf16.gmra.mxu0 %v1412
      %v1710 = vpop.f32.mrf.mxu0
      %v1711 = vadd.f32 0.0, %v1710
      %v1712 = vpop.f32.mrf.mxu0
      %v1713 = vadd.f32 0.0, %v1712
      %1714 = vmatmul.bf16.gmra.mxu0 %v1415
      %v1715 = vpop.f32.mrf.mxu0
      %v1716 = vadd.f32 0.0, %v1715
      %v1717 = vpop.f32.mrf.mxu0
      %v1718 = vadd.f32 0.0, %v1717
      %1719 = vdwg.mxu0
      %s1720 = scalar_lea.vmem %s15, 64
      %v1721 = vld [vmem:[%s1720] sm:$0xf]
      %v1722 = vld [vmem:[%s1720 + $0x4] sm:$0xf]
      %v1723 = vld [vmem:[%s1720 + $0x8] sm:$0xf]
      %v1724 = vld [vmem:[%s1720 + $0xc] sm:$0xf]
      %v1725 = vld [vmem:[%s1720 + $0x10] sm:$0xf]
      %v1726 = vld [vmem:[%s1720 + $0x14] sm:$0xf]
      %v1727 = vld [vmem:[%s1720 + $0x18] sm:$0xf]
      %v1728 = vld [vmem:[%s1720 + $0x1c] sm:$0xf]
      %v1729 = vpack.c.bf16 %v1713, %v1711
      %v1730 = vpack.c.bf16 %v1718, %v1716
      %v1739 = vunpack.c.l.b16 %v1721
      %v1740 = vunpack.c.l.b16 %v1722
      %v1741 = vunpack.c.l.b16 %v1723
      %v1742 = vunpack.c.l.b16 %v1724
      %v1743 = vunpack.c.l.b16 %v1725
      %v1744 = vunpack.c.l.b16 %v1726
      %v1745 = vunpack.c.l.b16 %v1727
      %v1746 = vunpack.c.l.b16 %v1728
      %v1747 = vpack.c.b16 %v1740, %v1739
      %v1748 = vpack.c.b16 %v1742, %v1741
      %v1749 = vpack.c.b16 %v1744, %v1743
      %v1750 = vpack.c.b16 %v1746, %v1745
      %v1752 = vsel %vm1550, %v1747, 0
      %v1755 = vsel %vm1550, %v1748, 0
      %v1758 = vsel %vm1550, %v1749, 0
      %v1761 = vsel %vm1550, %v1750, 0
      %1763 = vmatpush.bf16.msra.mxu0 0
      %1764 = vmatpush.bf16.msra.mxu0 0
      %1765 = vmatpush.bf16.msra.mxu0 0
      %1766 = vmatpush.bf16.msra.mxu0 0
      %1767 = vmatpush.bf16.msra.mxu0 0
      %1768 = vmatpush.bf16.msra.mxu0 0
      %1769 = vmatpush.bf16.msra.mxu0 %v1730
      %1770 = vmatpush.bf16.msra.mxu0 %v1729
      %1771 = vmatmul.bf16.gmra.mxu0 %v1752
      %v1772 = vpop.f32.mrf.mxu0
      %v1773 = vadd.f32 0.0, %v1772
      %v1774 = vpop.f32.mrf.mxu0
      %v1775 = vadd.f32 0.0, %v1774
      %1776 = vmatmul.bf16.gmra.mxu0 %v1755
      %v1777 = vpop.f32.mrf.mxu0
      %v1778 = vadd.f32 0.0, %v1777
      %v1779 = vpop.f32.mrf.mxu0
      %v1780 = vadd.f32 0.0, %v1779
      %1781 = vmatmul.bf16.gmra.mxu0 %v1758
      %v1782 = vpop.f32.mrf.mxu0
      %v1783 = vadd.f32 0.0, %v1782
      %v1784 = vpop.f32.mrf.mxu0
      %v1785 = vadd.f32 0.0, %v1784
      %1786 = vmatmul.bf16.gmra.mxu0 %v1761
      %v1787 = vpop.f32.mrf.mxu0
      %v1788 = vadd.f32 0.0, %v1787
      %v1789 = vpop.f32.mrf.mxu0
      %v1790 = vadd.f32 0.0, %v1789
      %1791 = vdwg.mxu0
      %v1792 = vadd.f32 %v1634, %v1773
      %v1793 = vadd.f32 %v1636, %v1775
      %v1794 = vadd.f32 %v1639, %v1778
      %v1795 = vadd.f32 %v1641, %v1780
      %v1796 = vadd.f32 %v1644, %v1783
      %v1797 = vadd.f32 %v1646, %v1785
      %v1798 = vadd.f32 %v1649, %v1788
      %v1799 = vadd.f32 %v1651, %v1790
      %s1800 = scalar_lea.vmem %s5, 132
      %v1801 = vld [vmem:[%s1800] sm:$0xf]
      %v1802 = vld [vmem:[%s1800 + $0x4] sm:$0xf]
      %v1803 = vld [vmem:[%s1800 + $0x8] sm:$0xf]
      %v1804 = vld [vmem:[%s1800 + $0xc] sm:$0xf]
      %v1805 = vld [vmem:[%s1800 + $0x10] sm:$0xf]
      %v1806 = vld [vmem:[%s1800 + $0x14] sm:$0xf]
      %v1807 = vld [vmem:[%s1800 + $0x18] sm:$0xf]
      %v1808 = vld [vmem:[%s1800 + $0x1c] sm:$0xf]
      %v1809 = vld [vmem:[%s1800 + $0x20] sm:$0xf]
      %v1810 = vld [vmem:[%s1800 + $0x24] sm:$0xf]
      %v1811 = vld [vmem:[%s1800 + $0x28] sm:$0x1]
      %v1823 = vunpack.c.l.b16 %v1801
      %v1824 = vunpack.c.l.b16 %v1802
      %v1825 = vunpack.c.l.b16 %v1803
      %v1826 = vunpack.c.l.b16 %v1804
      %v1827 = vunpack.c.l.b16 %v1805
      %v1828 = vunpack.c.l.b16 %v1806
      %v1829 = vunpack.c.l.b16 %v1807
      %v1830 = vunpack.c.l.b16 %v1808
      %v1831 = vunpack.c.l.b16 %v1809
      %v1832 = vunpack.c.l.b16 %v1810
      %v1833 = vunpack.c.l.b16 %v1811
      %v1834 = vpack.c.b16 %v1824, %v1823
      %v1835 = vpack.c.b16 %v1826, %v1825
      %v1836 = vpack.c.b16 %v1828, %v1827
      %v1837 = vpack.c.b16 %v1830, %v1829
      %v1838 = vpack.c.b16 %v1832, %v1831
      %v1839 = vpack.c.b16 %v1833, %v1833
      %v1846 = vand.u32 %v1839, %v1419
      %1848 = vmatpush.bf16.msra.mxu0 0
      %1849 = vmatpush.bf16.msra.mxu0 0
      %1850 = vmatpush.bf16.msra.mxu0 %v1846
      %1851 = vmatpush.bf16.msra.mxu0 %v1838
      %1852 = vmatpush.bf16.msra.mxu0 %v1837
      %1853 = vmatpush.bf16.msra.mxu0 %v1836
      %1854 = vmatpush.bf16.msra.mxu0 %v1835
      %1855 = vmatpush.bf16.msra.mxu0 %v1834
      %1856 = vmatmul.bf16.gmra.mxu0 %v1412
      %v1857 = vpop.f32.mrf.mxu0
      %v1858 = vadd.f32 0.0, %v1857
      %v1859 = vpop.f32.mrf.mxu0
      %v1860 = vadd.f32 0.0, %v1859
      %1861 = vmatmul.bf16.gmra.mxu0 %v1415
      %v1862 = vpop.f32.mrf.mxu0
      %v1863 = vadd.f32 0.0, %v1862
      %v1864 = vpop.f32.mrf.mxu0
      %v1865 = vadd.f32 0.0, %v1864
      %1866 = vdwg.mxu0
      %s1867 = scalar_lea.vmem %s15, 96
      %v1868 = vld [vmem:[%s1867] sm:$0xf]
      %v1869 = vld [vmem:[%s1867 + $0x4] sm:$0xf]
      %v1870 = vld [vmem:[%s1867 + $0x8] sm:$0xf]
      %v1871 = vld [vmem:[%s1867 + $0xc] sm:$0xf]
      %v1872 = vld [vmem:[%s1867 + $0x10] sm:$0xf]
      %v1873 = vld [vmem:[%s1867 + $0x14] sm:$0xf]
      %v1874 = vld [vmem:[%s1867 + $0x18] sm:$0xf]
      %v1875 = vld [vmem:[%s1867 + $0x1c] sm:$0xf]
      %v1876 = vpack.c.bf16 %v1860, %v1858
      %v1877 = vpack.c.bf16 %v1865, %v1863
      %v1886 = vunpack.c.l.b16 %v1868
      %v1887 = vunpack.c.l.b16 %v1869
      %v1888 = vunpack.c.l.b16 %v1870
      %v1889 = vunpack.c.l.b16 %v1871
      %v1890 = vunpack.c.l.b16 %v1872
      %v1891 = vunpack.c.l.b16 %v1873
      %v1892 = vunpack.c.l.b16 %v1874
      %v1893 = vunpack.c.l.b16 %v1875
      %v1894 = vpack.c.b16 %v1887, %v1886
      %v1895 = vpack.c.b16 %v1889, %v1888
      %v1896 = vpack.c.b16 %v1891, %v1890
      %v1897 = vpack.c.b16 %v1893, %v1892
      %v1899 = vsel %vm1550, %v1894, 0
      %v1902 = vsel %vm1550, %v1895, 0
      %v1905 = vsel %vm1550, %v1896, 0
      %v1908 = vsel %vm1550, %v1897, 0
      %1910 = vmatpush.bf16.msra.mxu0 0
      %1911 = vmatpush.bf16.msra.mxu0 0
      %1912 = vmatpush.bf16.msra.mxu0 0
      %1913 = vmatpush.bf16.msra.mxu0 0
      %1914 = vmatpush.bf16.msra.mxu0 0
      %1915 = vmatpush.bf16.msra.mxu0 0
      %1916 = vmatpush.bf16.msra.mxu0 %v1877
      %1917 = vmatpush.bf16.msra.mxu0 %v1876
      %1918 = vmatmul.bf16.gmra.mxu0 %v1899
      %v1919 = vpop.f32.mrf.mxu0
      %v1920 = vadd.f32 0.0, %v1919
      %v1921 = vpop.f32.mrf.mxu0
      %v1922 = vadd.f32 0.0, %v1921
      %1923 = vmatmul.bf16.gmra.mxu0 %v1902
      %v1924 = vpop.f32.mrf.mxu0
      %v1925 = vadd.f32 0.0, %v1924
      %v1926 = vpop.f32.mrf.mxu0
      %v1927 = vadd.f32 0.0, %v1926
      %1928 = vmatmul.bf16.gmra.mxu0 %v1905
      %v1929 = vpop.f32.mrf.mxu0
      %v1930 = vadd.f32 0.0, %v1929
      %v1931 = vpop.f32.mrf.mxu0
      %v1932 = vadd.f32 0.0, %v1931
      %1933 = vmatmul.bf16.gmra.mxu0 %v1908
      %v1934 = vpop.f32.mrf.mxu0
      %v1935 = vadd.f32 0.0, %v1934
      %v1936 = vpop.f32.mrf.mxu0
      %v1937 = vadd.f32 0.0, %v1936
      %1938 = vdwg.mxu0
      %v1939 = vadd.f32 %v1792, %v1920
      %v1940 = vadd.f32 %v1793, %v1922
      %v1941 = vadd.f32 %v1794, %v1925
      %v1942 = vadd.f32 %v1795, %v1927
      %v1943 = vadd.f32 %v1796, %v1930
      %v1944 = vadd.f32 %v1797, %v1932
      %v1945 = vadd.f32 %v1798, %v1935
      %v1946 = vadd.f32 %v1799, %v1937
      %s1947 = scalar_lea.vmem %s5, 176
      %v1948 = vld [vmem:[%s1947] sm:$0xf]
      %v1949 = vld [vmem:[%s1947 + $0x4] sm:$0xf]
      %v1950 = vld [vmem:[%s1947 + $0x8] sm:$0xf]
      %v1951 = vld [vmem:[%s1947 + $0xc] sm:$0xf]
      %v1952 = vld [vmem:[%s1947 + $0x10] sm:$0xf]
      %v1953 = vld [vmem:[%s1947 + $0x14] sm:$0xf]
      %v1954 = vld [vmem:[%s1947 + $0x18] sm:$0xf]
      %v1955 = vld [vmem:[%s1947 + $0x1c] sm:$0xf]
      %v1956 = vld [vmem:[%s1947 + $0x20] sm:$0xf]
      %v1957 = vld [vmem:[%s1947 + $0x24] sm:$0xf]
      %v1958 = vld [vmem:[%s1947 + $0x28] sm:$0x1]
      %v1970 = vunpack.c.l.b16 %v1948
      %v1971 = vunpack.c.l.b16 %v1949
      %v1972 = vunpack.c.l.b16 %v1950
      %v1973 = vunpack.c.l.b16 %v1951
      %v1974 = vunpack.c.l.b16 %v1952
      %v1975 = vunpack.c.l.b16 %v1953
      %v1976 = vunpack.c.l.b16 %v1954
      %v1977 = vunpack.c.l.b16 %v1955
      %v1978 = vunpack.c.l.b16 %v1956
      %v1979 = vunpack.c.l.b16 %v1957
      %v1980 = vunpack.c.l.b16 %v1958
      %v1981 = vpack.c.b16 %v1971, %v1970
      %v1982 = vpack.c.b16 %v1973, %v1972
      %v1983 = vpack.c.b16 %v1975, %v1974
      %v1984 = vpack.c.b16 %v1977, %v1976
      %v1985 = vpack.c.b16 %v1979, %v1978
      %v1986 = vpack.c.b16 %v1980, %v1980
      %v1993 = vand.u32 %v1986, %v1419
      %1995 = vmatpush.bf16.msra.mxu0 0
      %1996 = vmatpush.bf16.msra.mxu0 0
      %1997 = vmatpush.bf16.msra.mxu0 %v1993
      %1998 = vmatpush.bf16.msra.mxu0 %v1985
      %1999 = vmatpush.bf16.msra.mxu0 %v1984
      %2000 = vmatpush.bf16.msra.mxu0 %v1983
      %2001 = vmatpush.bf16.msra.mxu0 %v1982
      %2002 = vmatpush.bf16.msra.mxu0 %v1981
      %2003 = vmatmul.bf16.gmra.mxu0 %v1412
      %v2004 = vpop.f32.mrf.mxu0
      %v2005 = vadd.f32 0.0, %v2004
      %v2006 = vpop.f32.mrf.mxu0
      %v2007 = vadd.f32 0.0, %v2006
      %2008 = vmatmul.bf16.gmra.mxu0 %v1415
      %v2009 = vpop.f32.mrf.mxu0
      %v2010 = vadd.f32 0.0, %v2009
      %v2011 = vpop.f32.mrf.mxu0
      %v2012 = vadd.f32 0.0, %v2011
      %2013 = vdwg.mxu0
      %s2014 = scalar_lea.vmem %s15, 128
      %v2015 = vld [vmem:[%s2014] sm:$0xf]
      %v2016 = vld [vmem:[%s2014 + $0x4] sm:$0xf]
      %v2017 = vld [vmem:[%s2014 + $0x8] sm:$0xf]
      %v2018 = vld [vmem:[%s2014 + $0xc] sm:$0xf]
      %v2019 = vld [vmem:[%s2014 + $0x10] sm:$0xf]
      %v2020 = vld [vmem:[%s2014 + $0x14] sm:$0xf]
      %v2021 = vld [vmem:[%s2014 + $0x18] sm:$0xf]
      %v2022 = vld [vmem:[%s2014 + $0x1c] sm:$0xf]
      %v2023 = vpack.c.bf16 %v2007, %v2005
      %v2024 = vpack.c.bf16 %v2012, %v2010
      %v2033 = vunpack.c.l.b16 %v2015
      %v2034 = vunpack.c.l.b16 %v2016
      %v2035 = vunpack.c.l.b16 %v2017
      %v2036 = vunpack.c.l.b16 %v2018
      %v2037 = vunpack.c.l.b16 %v2019
      %v2038 = vunpack.c.l.b16 %v2020
      %v2039 = vunpack.c.l.b16 %v2021
      %v2040 = vunpack.c.l.b16 %v2022
      %v2041 = vpack.c.b16 %v2034, %v2033
      %v2042 = vpack.c.b16 %v2036, %v2035
      %v2043 = vpack.c.b16 %v2038, %v2037
      %v2044 = vpack.c.b16 %v2040, %v2039
      %v2046 = vsel %vm1550, %v2041, 0
      %v2049 = vsel %vm1550, %v2042, 0
      %v2052 = vsel %vm1550, %v2043, 0
      %v2055 = vsel %vm1550, %v2044, 0
      %2057 = vmatpush.bf16.msra.mxu0 0
      %2058 = vmatpush.bf16.msra.mxu0 0
      %2059 = vmatpush.bf16.msra.mxu0 0
      %2060 = vmatpush.bf16.msra.mxu0 0
      %2061 = vmatpush.bf16.msra.mxu0 0
      %2062 = vmatpush.bf16.msra.mxu0 0
      %2063 = vmatpush.bf16.msra.mxu0 %v2024
      %2064 = vmatpush.bf16.msra.mxu0 %v2023
      %2065 = vmatmul.bf16.gmra.mxu0 %v2046
      %v2066 = vpop.f32.mrf.mxu0
      %v2067 = vadd.f32 0.0, %v2066
      %v2068 = vpop.f32.mrf.mxu0
      %v2069 = vadd.f32 0.0, %v2068
      %2070 = vmatmul.bf16.gmra.mxu0 %v2049
      %v2071 = vpop.f32.mrf.mxu0
      %v2072 = vadd.f32 0.0, %v2071
      %v2073 = vpop.f32.mrf.mxu0
      %v2074 = vadd.f32 0.0, %v2073
      %2075 = vmatmul.bf16.gmra.mxu0 %v2052
      %v2076 = vpop.f32.mrf.mxu0
      %v2077 = vadd.f32 0.0, %v2076
      %v2078 = vpop.f32.mrf.mxu0
      %v2079 = vadd.f32 0.0, %v2078
      %2080 = vmatmul.bf16.gmra.mxu0 %v2055
      %v2081 = vpop.f32.mrf.mxu0
      %v2082 = vadd.f32 0.0, %v2081
      %v2083 = vpop.f32.mrf.mxu0
      %v2084 = vadd.f32 0.0, %v2083
      %2085 = vdwg.mxu0
      %v2086 = vadd.f32 %v1939, %v2067
      %v2087 = vadd.f32 %v1940, %v2069
      %v2088 = vadd.f32 %v1941, %v2072
      %v2089 = vadd.f32 %v1942, %v2074
      %v2090 = vadd.f32 %v1943, %v2077
      %v2091 = vadd.f32 %v1944, %v2079
      %v2092 = vadd.f32 %v1945, %v2082
      %v2093 = vadd.f32 %v1946, %v2084
      %s2094 = scalar_lea.vmem %s5, 220
      %v2095 = vld [vmem:[%s2094] sm:$0xf]
      %v2096 = vld [vmem:[%s2094 + $0x4] sm:$0xf]
      %v2097 = vld [vmem:[%s2094 + $0x8] sm:$0xf]
      %v2098 = vld [vmem:[%s2094 + $0xc] sm:$0xf]
      %v2099 = vld [vmem:[%s2094 + $0x10] sm:$0xf]
      %v2100 = vld [vmem:[%s2094 + $0x14] sm:$0xf]
      %v2101 = vld [vmem:[%s2094 + $0x18] sm:$0xf]
      %v2102 = vld [vmem:[%s2094 + $0x1c] sm:$0xf]
      %v2103 = vld [vmem:[%s2094 + $0x20] sm:$0xf]
      %v2104 = vld [vmem:[%s2094 + $0x24] sm:$0xf]
      %v2105 = vld [vmem:[%s2094 + $0x28] sm:$0x1]
      %v2117 = vunpack.c.l.b16 %v2095
      %v2118 = vunpack.c.l.b16 %v2096
      %v2119 = vunpack.c.l.b16 %v2097
      %v2120 = vunpack.c.l.b16 %v2098
      %v2121 = vunpack.c.l.b16 %v2099
      %v2122 = vunpack.c.l.b16 %v2100
      %v2123 = vunpack.c.l.b16 %v2101
      %v2124 = vunpack.c.l.b16 %v2102
      %v2125 = vunpack.c.l.b16 %v2103
      %v2126 = vunpack.c.l.b16 %v2104
      %v2127 = vunpack.c.l.b16 %v2105
      %v2128 = vpack.c.b16 %v2118, %v2117
      %v2129 = vpack.c.b16 %v2120, %v2119
      %v2130 = vpack.c.b16 %v2122, %v2121
      %v2131 = vpack.c.b16 %v2124, %v2123
      %v2132 = vpack.c.b16 %v2126, %v2125
      %v2133 = vpack.c.b16 %v2127, %v2127
      %v2140 = vand.u32 %v2133, %v1419
      %2142 = vmatpush.bf16.msra.mxu0 0
      %2143 = vmatpush.bf16.msra.mxu0 0
      %2144 = vmatpush.bf16.msra.mxu0 %v2140
      %2145 = vmatpush.bf16.msra.mxu0 %v2132
      %2146 = vmatpush.bf16.msra.mxu0 %v2131
      %2147 = vmatpush.bf16.msra.mxu0 %v2130
      %2148 = vmatpush.bf16.msra.mxu0 %v2129
      %2149 = vmatpush.bf16.msra.mxu0 %v2128
      %2150 = vmatmul.bf16.gmra.mxu0 %v1412
      %v2151 = vpop.f32.mrf.mxu0
      %v2152 = vadd.f32 0.0, %v2151
      %v2153 = vpop.f32.mrf.mxu0
      %v2154 = vadd.f32 0.0, %v2153
      %2155 = vmatmul.bf16.gmra.mxu0 %v1415
      %v2156 = vpop.f32.mrf.mxu0
      %v2157 = vadd.f32 0.0, %v2156
      %v2158 = vpop.f32.mrf.mxu0
      %v2159 = vadd.f32 0.0, %v2158
      %2160 = vdwg.mxu0
      %s2161 = scalar_lea.vmem %s15, 160
      %v2162 = vld [vmem:[%s2161] sm:$0xf]
      %v2163 = vld [vmem:[%s2161 + $0x4] sm:$0xf]
      %v2164 = vld [vmem:[%s2161 + $0x8] sm:$0xf]
      %v2165 = vld [vmem:[%s2161 + $0xc] sm:$0xf]
      %v2166 = vld [vmem:[%s2161 + $0x10] sm:$0xf]
      %v2167 = vld [vmem:[%s2161 + $0x14] sm:$0xf]
      %v2168 = vld [vmem:[%s2161 + $0x18] sm:$0xf]
      %v2169 = vld [vmem:[%s2161 + $0x1c] sm:$0xf]
      %v2170 = vpack.c.bf16 %v2154, %v2152
      %v2171 = vpack.c.bf16 %v2159, %v2157
      %v2180 = vunpack.c.l.b16 %v2162
      %v2181 = vunpack.c.l.b16 %v2163
      %v2182 = vunpack.c.l.b16 %v2164
      %v2183 = vunpack.c.l.b16 %v2165
      %v2184 = vunpack.c.l.b16 %v2166
      %v2185 = vunpack.c.l.b16 %v2167
      %v2186 = vunpack.c.l.b16 %v2168
      %v2187 = vunpack.c.l.b16 %v2169
      %v2188 = vpack.c.b16 %v2181, %v2180
      %v2189 = vpack.c.b16 %v2183, %v2182
      %v2190 = vpack.c.b16 %v2185, %v2184
      %v2191 = vpack.c.b16 %v2187, %v2186
      %v2193 = vsel %vm1550, %v2188, 0
      %v2196 = vsel %vm1550, %v2189, 0
      %v2199 = vsel %vm1550, %v2190, 0
      %v2202 = vsel %vm1550, %v2191, 0
      %2204 = vmatpush.bf16.msra.mxu0 0
      %2205 = vmatpush.bf16.msra.mxu0 0
      %2206 = vmatpush.bf16.msra.mxu0 0
      %2207 = vmatpush.bf16.msra.mxu0 0
      %2208 = vmatpush.bf16.msra.mxu0 0
      %2209 = vmatpush.bf16.msra.mxu0 0
      %2210 = vmatpush.bf16.msra.mxu0 %v2171
      %2211 = vmatpush.bf16.msra.mxu0 %v2170
      %2212 = vmatmul.bf16.gmra.mxu0 %v2193
      %v2213 = vpop.f32.mrf.mxu0
      %v2214 = vadd.f32 0.0, %v2213
      %v2215 = vpop.f32.mrf.mxu0
      %v2216 = vadd.f32 0.0, %v2215
      %2217 = vmatmul.bf16.gmra.mxu0 %v2196
      %v2218 = vpop.f32.mrf.mxu0
      %v2219 = vadd.f32 0.0, %v2218
      %v2220 = vpop.f32.mrf.mxu0
      %v2221 = vadd.f32 0.0, %v2220
      %2222 = vmatmul.bf16.gmra.mxu0 %v2199
      %v2223 = vpop.f32.mrf.mxu0
      %v2224 = vadd.f32 0.0, %v2223
      %v2225 = vpop.f32.mrf.mxu0
      %v2226 = vadd.f32 0.0, %v2225
      %2227 = vmatmul.bf16.gmra.mxu0 %v2202
      %v2228 = vpop.f32.mrf.mxu0
      %v2229 = vadd.f32 0.0, %v2228
      %v2230 = vpop.f32.mrf.mxu0
      %v2231 = vadd.f32 0.0, %v2230
      %2232 = vdwg.mxu0
      %v2233 = vadd.f32 %v2086, %v2214
      %v2234 = vadd.f32 %v2087, %v2216
      %v2235 = vadd.f32 %v2088, %v2219
      %v2236 = vadd.f32 %v2089, %v2221
      %v2237 = vadd.f32 %v2090, %v2224
      %v2238 = vadd.f32 %v2091, %v2226
      %v2239 = vadd.f32 %v2092, %v2229
      %v2240 = vadd.f32 %v2093, %v2231
      %s2241 = scalar_lea.vmem %s5, 264
      %v2242 = vld [vmem:[%s2241] sm:$0xf]
      %v2243 = vld [vmem:[%s2241 + $0x4] sm:$0xf]
      %v2244 = vld [vmem:[%s2241 + $0x8] sm:$0xf]
      %v2245 = vld [vmem:[%s2241 + $0xc] sm:$0xf]
      %v2246 = vld [vmem:[%s2241 + $0x10] sm:$0xf]
      %v2247 = vld [vmem:[%s2241 + $0x14] sm:$0xf]
      %v2248 = vld [vmem:[%s2241 + $0x18] sm:$0xf]
      %v2249 = vld [vmem:[%s2241 + $0x1c] sm:$0xf]
      %v2250 = vld [vmem:[%s2241 + $0x20] sm:$0xf]
      %v2251 = vld [vmem:[%s2241 + $0x24] sm:$0xf]
      %v2252 = vld [vmem:[%s2241 + $0x28] sm:$0x1]
      %v2264 = vunpack.c.l.b16 %v2242
      %v2265 = vunpack.c.l.b16 %v2243
      %v2266 = vunpack.c.l.b16 %v2244
      %v2267 = vunpack.c.l.b16 %v2245
      %v2268 = vunpack.c.l.b16 %v2246
      %v2269 = vunpack.c.l.b16 %v2247
      %v2270 = vunpack.c.l.b16 %v2248
      %v2271 = vunpack.c.l.b16 %v2249
      %v2272 = vunpack.c.l.b16 %v2250
      %v2273 = vunpack.c.l.b16 %v2251
      %v2274 = vunpack.c.l.b16 %v2252
      %v2275 = vpack.c.b16 %v2265, %v2264
      %v2276 = vpack.c.b16 %v2267, %v2266
      %v2277 = vpack.c.b16 %v2269, %v2268
      %v2278 = vpack.c.b16 %v2271, %v2270
      %v2279 = vpack.c.b16 %v2273, %v2272
      %v2280 = vpack.c.b16 %v2274, %v2274
      %v2287 = vand.u32 %v2280, %v1419
      %2289 = vmatpush.bf16.msra.mxu0 0
      %2290 = vmatpush.bf16.msra.mxu0 0
      %2291 = vmatpush.bf16.msra.mxu0 %v2287
      %2292 = vmatpush.bf16.msra.mxu0 %v2279
      %2293 = vmatpush.bf16.msra.mxu0 %v2278
      %2294 = vmatpush.bf16.msra.mxu0 %v2277
      %2295 = vmatpush.bf16.msra.mxu0 %v2276
      %2296 = vmatpush.bf16.msra.mxu0 %v2275
      %2297 = vmatmul.bf16.gmra.mxu0 %v1412
      %v2298 = vpop.f32.mrf.mxu0
      %v2299 = vadd.f32 0.0, %v2298
      %v2300 = vpop.f32.mrf.mxu0
      %v2301 = vadd.f32 0.0, %v2300
      %2302 = vmatmul.bf16.gmra.mxu0 %v1415
      %v2303 = vpop.f32.mrf.mxu0
      %v2304 = vadd.f32 0.0, %v2303
      %v2305 = vpop.f32.mrf.mxu0
      %v2306 = vadd.f32 0.0, %v2305
      %2307 = vdwg.mxu0
      %s2308 = scalar_lea.vmem %s15, 192
      %v2309 = vld [vmem:[%s2308] sm:$0xf]
      %v2310 = vld [vmem:[%s2308 + $0x4] sm:$0xf]
      %v2311 = vld [vmem:[%s2308 + $0x8] sm:$0xf]
      %v2312 = vld [vmem:[%s2308 + $0xc] sm:$0xf]
      %v2313 = vld [vmem:[%s2308 + $0x10] sm:$0xf]
      %v2314 = vld [vmem:[%s2308 + $0x14] sm:$0xf]
      %v2315 = vld [vmem:[%s2308 + $0x18] sm:$0xf]
      %v2316 = vld [vmem:[%s2308 + $0x1c] sm:$0xf]
      %v2317 = vpack.c.bf16 %v2301, %v2299
      %v2318 = vpack.c.bf16 %v2306, %v2304
      %v2327 = vunpack.c.l.b16 %v2309
      %v2328 = vunpack.c.l.b16 %v2310
      %v2329 = vunpack.c.l.b16 %v2311
      %v2330 = vunpack.c.l.b16 %v2312
      %v2331 = vunpack.c.l.b16 %v2313
      %v2332 = vunpack.c.l.b16 %v2314
      %v2333 = vunpack.c.l.b16 %v2315
      %v2334 = vunpack.c.l.b16 %v2316
      %v2335 = vpack.c.b16 %v2328, %v2327
      %v2336 = vpack.c.b16 %v2330, %v2329
      %v2337 = vpack.c.b16 %v2332, %v2331
      %v2338 = vpack.c.b16 %v2334, %v2333
      %v2340 = vsel %vm1550, %v2335, 0
      %v2343 = vsel %vm1550, %v2336, 0
      %v2346 = vsel %vm1550, %v2337, 0
      %v2349 = vsel %vm1550, %v2338, 0
      %2351 = vmatpush.bf16.msra.mxu0 0
      %2352 = vmatpush.bf16.msra.mxu0 0
      %2353 = vmatpush.bf16.msra.mxu0 0
      %2354 = vmatpush.bf16.msra.mxu0 0
      %2355 = vmatpush.bf16.msra.mxu0 0
      %2356 = vmatpush.bf16.msra.mxu0 0
      %2357 = vmatpush.bf16.msra.mxu0 %v2318
      %2358 = vmatpush.bf16.msra.mxu0 %v2317
      %2359 = vmatmul.bf16.gmra.mxu0 %v2340
      %v2360 = vpop.f32.mrf.mxu0
      %v2361 = vadd.f32 0.0, %v2360
      %v2362 = vpop.f32.mrf.mxu0
      %v2363 = vadd.f32 0.0, %v2362
      %2364 = vmatmul.bf16.gmra.mxu0 %v2343
      %v2365 = vpop.f32.mrf.mxu0
      %v2366 = vadd.f32 0.0, %v2365
      %v2367 = vpop.f32.mrf.mxu0
      %v2368 = vadd.f32 0.0, %v2367
      %2369 = vmatmul.bf16.gmra.mxu0 %v2346
      %v2370 = vpop.f32.mrf.mxu0
      %v2371 = vadd.f32 0.0, %v2370
      %v2372 = vpop.f32.mrf.mxu0
      %v2373 = vadd.f32 0.0, %v2372
      %2374 = vmatmul.bf16.gmra.mxu0 %v2349
      %v2375 = vpop.f32.mrf.mxu0
      %v2376 = vadd.f32 0.0, %v2375
      %v2377 = vpop.f32.mrf.mxu0
      %v2378 = vadd.f32 0.0, %v2377
      %2379 = vdwg.mxu0
      %v2380 = vadd.f32 %v2233, %v2361
      %v2381 = vadd.f32 %v2234, %v2363
      %v2382 = vadd.f32 %v2235, %v2366
      %v2383 = vadd.f32 %v2236, %v2368
      %v2384 = vadd.f32 %v2237, %v2371
      %v2385 = vadd.f32 %v2238, %v2373
      %v2386 = vadd.f32 %v2239, %v2376
      %v2387 = vadd.f32 %v2240, %v2378
      %s2388 = scalar_lea.vmem %s5, 308
      %v2389 = vld [vmem:[%s2388] sm:$0xf]
      %v2390 = vld [vmem:[%s2388 + $0x4] sm:$0xf]
      %v2391 = vld [vmem:[%s2388 + $0x8] sm:$0xf]
      %v2392 = vld [vmem:[%s2388 + $0xc] sm:$0xf]
      %v2393 = vld [vmem:[%s2388 + $0x10] sm:$0xf]
      %v2394 = vld [vmem:[%s2388 + $0x14] sm:$0xf]
      %v2395 = vld [vmem:[%s2388 + $0x18] sm:$0xf]
      %v2396 = vld [vmem:[%s2388 + $0x1c] sm:$0xf]
      %v2397 = vld [vmem:[%s2388 + $0x20] sm:$0xf]
      %v2398 = vld [vmem:[%s2388 + $0x24] sm:$0xf]
      %v2399 = vld [vmem:[%s2388 + $0x28] sm:$0x1]
      %v2411 = vunpack.c.l.b16 %v2389
      %v2412 = vunpack.c.l.b16 %v2390
      %v2413 = vunpack.c.l.b16 %v2391
      %v2414 = vunpack.c.l.b16 %v2392
      %v2415 = vunpack.c.l.b16 %v2393
      %v2416 = vunpack.c.l.b16 %v2394
      %v2417 = vunpack.c.l.b16 %v2395
      %v2418 = vunpack.c.l.b16 %v2396
      %v2419 = vunpack.c.l.b16 %v2397
      %v2420 = vunpack.c.l.b16 %v2398
      %v2421 = vunpack.c.l.b16 %v2399
      %v2422 = vpack.c.b16 %v2412, %v2411
      %v2423 = vpack.c.b16 %v2414, %v2413
      %v2424 = vpack.c.b16 %v2416, %v2415
      %v2425 = vpack.c.b16 %v2418, %v2417
      %v2426 = vpack.c.b16 %v2420, %v2419
      %v2427 = vpack.c.b16 %v2421, %v2421
      %v2434 = vand.u32 %v2427, %v1419
      %2436 = vmatpush.bf16.msra.mxu0 0
      %2437 = vmatpush.bf16.msra.mxu0 0
      %2438 = vmatpush.bf16.msra.mxu0 %v2434
      %2439 = vmatpush.bf16.msra.mxu0 %v2426
      %2440 = vmatpush.bf16.msra.mxu0 %v2425
      %2441 = vmatpush.bf16.msra.mxu0 %v2424
      %2442 = vmatpush.bf16.msra.mxu0 %v2423
      %2443 = vmatpush.bf16.msra.mxu0 %v2422
      %2444 = vmatmul.bf16.gmra.mxu0 %v1412
      %v2445 = vpop.f32.mrf.mxu0
      %v2446 = vadd.f32 0.0, %v2445
      %v2447 = vpop.f32.mrf.mxu0
      %v2448 = vadd.f32 0.0, %v2447
      %2449 = vmatmul.bf16.gmra.mxu0 %v1415
      %v2450 = vpop.f32.mrf.mxu0
      %v2451 = vadd.f32 0.0, %v2450
      %v2452 = vpop.f32.mrf.mxu0
      %v2453 = vadd.f32 0.0, %v2452
      %2454 = vdwg.mxu0
      %s2455 = scalar_lea.vmem %s15, 224
      %v2456 = vld [vmem:[%s2455] sm:$0xf]
      %v2457 = vld [vmem:[%s2455 + $0x4] sm:$0xf]
      %v2458 = vld [vmem:[%s2455 + $0x8] sm:$0xf]
      %v2459 = vld [vmem:[%s2455 + $0xc] sm:$0xf]
      %v2460 = vld [vmem:[%s2455 + $0x10] sm:$0xf]
      %v2461 = vld [vmem:[%s2455 + $0x14] sm:$0xf]
      %v2462 = vld [vmem:[%s2455 + $0x18] sm:$0xf]
      %v2463 = vld [vmem:[%s2455 + $0x1c] sm:$0xf]
      %v2464 = vpack.c.bf16 %v2448, %v2446
      %v2465 = vpack.c.bf16 %v2453, %v2451
      %v2474 = vunpack.c.l.b16 %v2456
      %v2475 = vunpack.c.l.b16 %v2457
      %v2476 = vunpack.c.l.b16 %v2458
      %v2477 = vunpack.c.l.b16 %v2459
      %v2478 = vunpack.c.l.b16 %v2460
      %v2479 = vunpack.c.l.b16 %v2461
      %v2480 = vunpack.c.l.b16 %v2462
      %v2481 = vunpack.c.l.b16 %v2463
      %v2482 = vpack.c.b16 %v2475, %v2474
      %v2483 = vpack.c.b16 %v2477, %v2476
      %v2484 = vpack.c.b16 %v2479, %v2478
      %v2485 = vpack.c.b16 %v2481, %v2480
      %v2487 = vsel %vm1550, %v2482, 0
      %v2490 = vsel %vm1550, %v2483, 0
      %v2493 = vsel %vm1550, %v2484, 0
      %v2496 = vsel %vm1550, %v2485, 0
      %2498 = vmatpush.bf16.msra.mxu0 0
      %2499 = vmatpush.bf16.msra.mxu0 0
      %2500 = vmatpush.bf16.msra.mxu0 0
      %2501 = vmatpush.bf16.msra.mxu0 0
      %2502 = vmatpush.bf16.msra.mxu0 0
      %2503 = vmatpush.bf16.msra.mxu0 0
      %2504 = vmatpush.bf16.msra.mxu0 %v2465
      %2505 = vmatpush.bf16.msra.mxu0 %v2464
      %2506 = vmatmul.bf16.gmra.mxu0 %v2487
      %v2507 = vpop.f32.mrf.mxu0
      %v2508 = vadd.f32 0.0, %v2507
      %v2509 = vpop.f32.mrf.mxu0
      %v2510 = vadd.f32 0.0, %v2509
      %2511 = vmatmul.bf16.gmra.mxu0 %v2490
      %v2512 = vpop.f32.mrf.mxu0
      %v2513 = vadd.f32 0.0, %v2512
      %v2514 = vpop.f32.mrf.mxu0
      %v2515 = vadd.f32 0.0, %v2514
      %2516 = vmatmul.bf16.gmra.mxu0 %v2493
      %v2517 = vpop.f32.mrf.mxu0
      %v2518 = vadd.f32 0.0, %v2517
      %v2519 = vpop.f32.mrf.mxu0
      %v2520 = vadd.f32 0.0, %v2519
      %2521 = vmatmul.bf16.gmra.mxu0 %v2496
      %v2522 = vpop.f32.mrf.mxu0
      %v2523 = vadd.f32 0.0, %v2522
      %v2524 = vpop.f32.mrf.mxu0
      %v2525 = vadd.f32 0.0, %v2524
      %2526 = vdwg.mxu0
      %v2527 = vadd.f32 %v2380, %v2508
      %v2528 = vadd.f32 %v2381, %v2510
      %v2529 = vadd.f32 %v2382, %v2513
      %v2530 = vadd.f32 %v2383, %v2515
      %v2531 = vadd.f32 %v2384, %v2518
      %v2532 = vadd.f32 %v2385, %v2520
      %v2533 = vadd.f32 %v2386, %v2523
      %v2534 = vadd.f32 %v2387, %v2525
      %s2535 = scalar_lea.vmem %s5, 352
      %v2536 = vld [vmem:[%s2535] sm:$0xf]
      %v2537 = vld [vmem:[%s2535 + $0x4] sm:$0xf]
      %v2538 = vld [vmem:[%s2535 + $0x8] sm:$0xf]
      %v2539 = vld [vmem:[%s2535 + $0xc] sm:$0xf]
      %v2540 = vld [vmem:[%s2535 + $0x10] sm:$0xf]
      %v2541 = vld [vmem:[%s2535 + $0x14] sm:$0xf]
      %v2542 = vld [vmem:[%s2535 + $0x18] sm:$0xf]
      %v2543 = vld [vmem:[%s2535 + $0x1c] sm:$0xf]
      %v2544 = vld [vmem:[%s2535 + $0x20] sm:$0xf]
      %v2545 = vld [vmem:[%s2535 + $0x24] sm:$0xf]
      %v2546 = vld [vmem:[%s2535 + $0x28] sm:$0x1]
      %v2558 = vunpack.c.l.b16 %v2536
      %v2559 = vunpack.c.l.b16 %v2537
      %v2560 = vunpack.c.l.b16 %v2538
      %v2561 = vunpack.c.l.b16 %v2539
      %v2562 = vunpack.c.l.b16 %v2540
      %v2563 = vunpack.c.l.b16 %v2541
      %v2564 = vunpack.c.l.b16 %v2542
      %v2565 = vunpack.c.l.b16 %v2543
      %v2566 = vunpack.c.l.b16 %v2544
      %v2567 = vunpack.c.l.b16 %v2545
      %v2568 = vunpack.c.l.b16 %v2546
      %v2569 = vpack.c.b16 %v2559, %v2558
      %v2570 = vpack.c.b16 %v2561, %v2560
      %v2571 = vpack.c.b16 %v2563, %v2562
      %v2572 = vpack.c.b16 %v2565, %v2564
      %v2573 = vpack.c.b16 %v2567, %v2566
      %v2574 = vpack.c.b16 %v2568, %v2568
      %v2581 = vand.u32 %v2574, %v1419
      %2583 = vmatpush.bf16.msra.mxu0 0
      %2584 = vmatpush.bf16.msra.mxu0 0
      %2585 = vmatpush.bf16.msra.mxu0 %v2581
      %2586 = vmatpush.bf16.msra.mxu0 %v2573
      %2587 = vmatpush.bf16.msra.mxu0 %v2572
      %2588 = vmatpush.bf16.msra.mxu0 %v2571
      %2589 = vmatpush.bf16.msra.mxu0 %v2570
      %2590 = vmatpush.bf16.msra.mxu0 %v2569
      %2591 = vmatmul.bf16.gmra.mxu0 %v1412
      %v2592 = vpop.f32.mrf.mxu0
      %v2593 = vadd.f32 0.0, %v2592
      %v2594 = vpop.f32.mrf.mxu0
      %v2595 = vadd.f32 0.0, %v2594
      %2596 = vmatmul.bf16.gmra.mxu0 %v1415
      %v2597 = vpop.f32.mrf.mxu0
      %v2598 = vadd.f32 0.0, %v2597
      %v2599 = vpop.f32.mrf.mxu0
      %v2600 = vadd.f32 0.0, %v2599
      %2601 = vdwg.mxu0
      %s2602 = scalar_lea.vmem %s15, 256
      %v2603 = vld [vmem:[%s2602] sm:$0xf]
      %v2604 = vld [vmem:[%s2602 + $0x4] sm:$0xf]
      %v2605 = vld [vmem:[%s2602 + $0x8] sm:$0xf]
      %v2606 = vld [vmem:[%s2602 + $0xc] sm:$0xf]
      %v2607 = vld [vmem:[%s2602 + $0x10] sm:$0xf]
      %v2608 = vld [vmem:[%s2602 + $0x14] sm:$0xf]
      %v2609 = vld [vmem:[%s2602 + $0x18] sm:$0xf]
      %v2610 = vld [vmem:[%s2602 + $0x1c] sm:$0xf]
      %v2611 = vpack.c.bf16 %v2595, %v2593
      %v2612 = vpack.c.bf16 %v2600, %v2598
      %v2621 = vunpack.c.l.b16 %v2603
      %v2622 = vunpack.c.l.b16 %v2604
      %v2623 = vunpack.c.l.b16 %v2605
      %v2624 = vunpack.c.l.b16 %v2606
      %v2625 = vunpack.c.l.b16 %v2607
      %v2626 = vunpack.c.l.b16 %v2608
      %v2627 = vunpack.c.l.b16 %v2609
      %v2628 = vunpack.c.l.b16 %v2610
      %v2629 = vpack.c.b16 %v2622, %v2621
      %v2630 = vpack.c.b16 %v2624, %v2623
      %v2631 = vpack.c.b16 %v2626, %v2625
      %v2632 = vpack.c.b16 %v2628, %v2627
      %v2634 = vsel %vm1550, %v2629, 0
      %v2637 = vsel %vm1550, %v2630, 0
      %v2640 = vsel %vm1550, %v2631, 0
      %v2643 = vsel %vm1550, %v2632, 0
      %2645 = vmatpush.bf16.msra.mxu0 0
      %2646 = vmatpush.bf16.msra.mxu0 0
      %2647 = vmatpush.bf16.msra.mxu0 0
      %2648 = vmatpush.bf16.msra.mxu0 0
      %2649 = vmatpush.bf16.msra.mxu0 0
      %2650 = vmatpush.bf16.msra.mxu0 0
      %2651 = vmatpush.bf16.msra.mxu0 %v2612
      %2652 = vmatpush.bf16.msra.mxu0 %v2611
      %2653 = vmatmul.bf16.gmra.mxu0 %v2634
      %v2654 = vpop.f32.mrf.mxu0
      %v2655 = vadd.f32 0.0, %v2654
      %v2656 = vpop.f32.mrf.mxu0
      %v2657 = vadd.f32 0.0, %v2656
      %2658 = vmatmul.bf16.gmra.mxu0 %v2637
      %v2659 = vpop.f32.mrf.mxu0
      %v2660 = vadd.f32 0.0, %v2659
      %v2661 = vpop.f32.mrf.mxu0
      %v2662 = vadd.f32 0.0, %v2661
      %2663 = vmatmul.bf16.gmra.mxu0 %v2640
      %v2664 = vpop.f32.mrf.mxu0
      %v2665 = vadd.f32 0.0, %v2664
      %v2666 = vpop.f32.mrf.mxu0
      %v2667 = vadd.f32 0.0, %v2666
      %2668 = vmatmul.bf16.gmra.mxu0 %v2643
      %v2669 = vpop.f32.mrf.mxu0
      %v2670 = vadd.f32 0.0, %v2669
      %v2671 = vpop.f32.mrf.mxu0
      %v2672 = vadd.f32 0.0, %v2671
      %2673 = vdwg.mxu0
      %v2674 = vadd.f32 %v2527, %v2655
      %v2675 = vadd.f32 %v2528, %v2657
      %v2676 = vadd.f32 %v2529, %v2660
      %v2677 = vadd.f32 %v2530, %v2662
      %v2678 = vadd.f32 %v2531, %v2665
      %v2679 = vadd.f32 %v2532, %v2667
      %v2680 = vadd.f32 %v2533, %v2670
      %v2681 = vadd.f32 %v2534, %v2672
      %v2682 = vld [vmem:[%s17] sm:$0xff]
      %v2683 = vld [vmem:[%s17 + $0x8] sm:$0xff]
      %v2684 = vld [vmem:[%s17 + $0x10] sm:$0xff]
      %v2685 = vld [vmem:[%s17 + $0x18] sm:$0xff]
      %v2686 = vld [vmem:[%s17 + $0x20] sm:$0xff]
      %v2687 = vld [vmem:[%s17 + $0x28] sm:$0xff]
      %v2688 = vld [vmem:[%s17 + $0x30] sm:$0xff]
      %v2689 = vld [vmem:[%s17 + $0x38] sm:$0xff]
      %2691 = vset.pattern.permute.xlu0 0
      %2692 = vperm.xlu0 %2691, %v2682
      %v2693 = vpop.permute.xlu0 %2692
      %2696 = vset.pattern.permute.xlu0 0
      %2697 = vperm.xlu0 %2696, %v2683
      %v2698 = vpop.permute.xlu0 %2697
      %2701 = vset.pattern.permute.xlu0 0
      %2702 = vperm.xlu0 %2701, %v2684
      %v2703 = vpop.permute.xlu0 %2702
      %2706 = vset.pattern.permute.xlu0 0
      %2707 = vperm.xlu0 %2706, %v2685
      %v2708 = vpop.permute.xlu0 %2707
      %2711 = vset.pattern.permute.xlu0 0
      %2712 = vperm.xlu0 %2711, %v2686
      %v2713 = vpop.permute.xlu0 %2712
      %2716 = vset.pattern.permute.xlu0 0
      %2717 = vperm.xlu0 %2716, %v2687
      %v2718 = vpop.permute.xlu0 %2717
      %2721 = vset.pattern.permute.xlu0 0
      %2722 = vperm.xlu0 %2721, %v2688
      %v2723 = vpop.permute.xlu0 %2722
      %2726 = vset.pattern.permute.xlu0 0
      %2727 = vperm.xlu0 %2726, %v2689
      %v2728 = vpop.permute.xlu0 %2727
      %v2730 = vadd.f32 %v2674, %v2693
      %v2731 = vadd.f32 %v2675, %v2698
      %v2732 = vadd.f32 %v2676, %v2703
      %v2733 = vadd.f32 %v2677, %v2708
      %v2734 = vadd.f32 %v2678, %v2713
      %v2735 = vadd.f32 %v2679, %v2718
      %v2736 = vadd.f32 %v2680, %v2723
      %v2737 = vadd.f32 %v2681, %v2728
      %vm2738 = vcmp.ge.f32.partialorder %v2730, 0.0
      %vm2739 = vcmp.ge.f32.partialorder %v2731, 0.0
      %vm2740 = vcmp.ge.f32.partialorder %v2732, 0.0
      %vm2741 = vcmp.ge.f32.partialorder %v2733, 0.0
      %vm2742 = vcmp.ge.f32.partialorder %v2734, 0.0
      %vm2743 = vcmp.ge.f32.partialorder %v2735, 0.0
      %vm2744 = vcmp.ge.f32.partialorder %v2736, 0.0
      %vm2745 = vcmp.ge.f32.partialorder %v2737, 0.0
      %v2746 = vmul.f32 %v2730, 0.01
      %v2747 = vmul.f32 %v2731, 0.01
      %v2748 = vmul.f32 %v2732, 0.01
      %v2749 = vmul.f32 %v2733, 0.01
      %v2750 = vmul.f32 %v2734, 0.01
      %v2751 = vmul.f32 %v2735, 0.01
      %v2752 = vmul.f32 %v2736, 0.01
      %v2753 = vmul.f32 %v2737, 0.01
      %v2754 = vsel %vm2738, %v2730, %v2746
      %v2755 = vsel %vm2739, %v2731, %v2747
      %v2756 = vsel %vm2740, %v2732, %v2748
      %v2757 = vsel %vm2741, %v2733, %v2749
      %v2758 = vsel %vm2742, %v2734, %v2750
      %v2759 = vsel %vm2743, %v2735, %v2751
      %v2760 = vsel %vm2744, %v2736, %v2752
      %v2761 = vsel %vm2745, %v2737, %v2753
      %v2762 = vld [vmem:[%s19] sm:$0xff]
      %v2763 = vld [vmem:[%s19 + $0x8] sm:$0xff]
      %v2764 = vld [vmem:[%s19 + $0x10] sm:$0xff]
      %v2765 = vld [vmem:[%s19 + $0x18] sm:$0xff]
      %v2766 = vld [vmem:[%s19 + $0x20] sm:$0xff]
      %v2767 = vld [vmem:[%s19 + $0x28] sm:$0xff]
      %v2768 = vld [vmem:[%s19 + $0x30] sm:$0xff]
      %v2769 = vld [vmem:[%s19 + $0x38] sm:$0xff]
      %2771 = vset.pattern.permute.xlu0 0
      %2772 = vperm.xlu0 %2771, %v2762
      %v2773 = vpop.permute.xlu0 %2772
      %2776 = vset.pattern.permute.xlu0 0
      %2777 = vperm.xlu0 %2776, %v2763
      %v2778 = vpop.permute.xlu0 %2777
      %2781 = vset.pattern.permute.xlu0 0
      %2782 = vperm.xlu0 %2781, %v2764
      %v2783 = vpop.permute.xlu0 %2782
      %2786 = vset.pattern.permute.xlu0 0
      %2787 = vperm.xlu0 %2786, %v2765
      %v2788 = vpop.permute.xlu0 %2787
      %2791 = vset.pattern.permute.xlu0 0
      %2792 = vperm.xlu0 %2791, %v2766
      %v2793 = vpop.permute.xlu0 %2792
      %2796 = vset.pattern.permute.xlu0 0
      %2797 = vperm.xlu0 %2796, %v2767
      %v2798 = vpop.permute.xlu0 %2797
      %2801 = vset.pattern.permute.xlu0 0
      %2802 = vperm.xlu0 %2801, %v2768
      %v2803 = vpop.permute.xlu0 %2802
      %2806 = vset.pattern.permute.xlu0 0
      %2807 = vperm.xlu0 %2806, %v2769
      %v2808 = vpop.permute.xlu0 %2807
      %v2810 = vadd.f32 %v2754, %v2773
      %v2811 = vadd.f32 %v2755, %v2778
      %v2812 = vadd.f32 %v2756, %v2783
      %v2813 = vadd.f32 %v2757, %v2788
      %v2814 = vadd.f32 %v2758, %v2793
      %v2815 = vadd.f32 %v2759, %v2798
      %v2816 = vadd.f32 %v2760, %v2803
      %v2817 = vadd.f32 %v2761, %v2808
      %v2818 = vpack.c.bf16 %v2811, %v2810
      %v2819 = vpack.c.bf16 %v2813, %v2812
      %v2820 = vpack.c.bf16 %v2815, %v2814
      %v2821 = vpack.c.bf16 %v2817, %v2816
      %v2822 = vld [vmem:[%s21] sm:$0xf]
      %vm2823 = vcmask 523264
      %v2825 = vsel %vm2823, %v2822, 0
      %2827 = vmatpush.bf16.msra.mxu0 0
      %2828 = vmatpush.bf16.msra.mxu0 0
      %2829 = vmatpush.bf16.msra.mxu0 0
      %2830 = vmatpush.bf16.msra.mxu0 0
      %2831 = vmatpush.bf16.msra.mxu0 %v2821
      %2832 = vmatpush.bf16.msra.mxu0 %v2820
      %2833 = vmatpush.bf16.msra.mxu0 %v2819
      %2834 = vmatpush.bf16.msra.mxu0 %v2818
      %2835 = vmatmul.bf16.gmra.mxu0 %v2825
      %v2836 = vpop.f32.mrf.mxu0
      %v2837 = vadd.f32 0.0, %v2836
      %v2838 = vpop.f32.mrf.mxu0
      %2839 = vdwg.mxu0
      %v2840 = vxor.u32 %v2837, 2147483648
      %v2841 = vmul.f32 %v2840, 1.442695
      %v2842 = vpow.pop %v2841
      %v2843 = vadd.f32 %v2842, 1.0
      %v2844 = vrcp.pop %v2843
      %v2845 = vmul.f32 %v2843, %v2844
      %v2846 = vsub.f32 1.0, %v2845
      %v2847 = vmul.f32 %v2844, %v2846
      %v2848 = vadd.f32 %v2844, %v2847
      %vm2849 = vweird.f32 %v2843
      %vm2850 = vweird.f32 %v2844
      %vm2851 = vmor %vm2849, %vm2850
      %v2852 = vsel %vm2851, %v2844, %v2848
      %v2853 = vand.u32 2147483647, %v2843
      %vm2854 = vcmp.eq.f32.partialorder %v2853, 8.507059e+37
      %v2855 = vand.u32 %v2843, 2147483648
      %v2856 = vor.u32 1.1754944e-38, %v2855
      %v2857 = vsel %vm2854, %v2856, %v2852
      %v2858 = vmul.f32 1.0, %v2857
      %v2859 = vld [vmem:[%s23] sm:$0xf]
      %v2860 = vld [vmem:[%s23 + $0x4] sm:$0xf]
      %v2861 = vld [vmem:[%s23 + $0x8] sm:$0xf]
      %v2862 = vld [vmem:[%s23 + $0xc] sm:$0xf]
      %v2863 = vld [vmem:[%s25] sm:$0xff]
      %v2864 = vld [vmem:[%s25 + $0x8] sm:$0xff]
      %v2865 = vld [vmem:[%s25 + $0x10] sm:$0xff]
      %v2866 = vld [vmem:[%s25 + $0x18] sm:$0xff]
      %2868 = vset.pattern.permute.xlu0 0
      %2869 = vperm.xlu0 %2868, %v2863
      %v2870 = vpop.permute.xlu0 %2869
      %2873 = vset.pattern.permute.xlu0 0
      %2874 = vperm.xlu0 %2873, %v2864
      %v2875 = vpop.permute.xlu0 %2874
      %2878 = vset.pattern.permute.xlu0 0
      %2879 = vperm.xlu0 %2878, %v2865
      %v2880 = vpop.permute.xlu0 %2879
      %2883 = vset.pattern.permute.xlu0 0
      %2884 = vperm.xlu0 %2883, %v2866
      %v2885 = vpop.permute.xlu0 %2884
      %v2891 = vunpack.c.l.b16 %v2859
      %v2892 = vunpack.c.l.b16 %v2860
      %v2893 = vunpack.c.l.b16 %v2861
      %v2894 = vunpack.c.l.b16 %v2862
      %v2895 = vpack.c.b16 %v2892, %v2891
      %v2896 = vpack.c.b16 %v2894, %v2893
      %v2898 = vsel %vm2823, %v2895, 0
      %v2901 = vsel %vm2823, %v2896, 0
      %2903 = vmatpush.bf16.msra.mxu0 0
      %2904 = vmatpush.bf16.msra.mxu0 0
      %2905 = vmatpush.bf16.msra.mxu0 0
      %2906 = vmatpush.bf16.msra.mxu0 0
      %2907 = vmatpush.bf16.msra.mxu0 %v2821
      %2908 = vmatpush.bf16.msra.mxu0 %v2820
      %2909 = vmatpush.bf16.msra.mxu0 %v2819
      %2910 = vmatpush.bf16.msra.mxu0 %v2818
      %2911 = vmatmul.bf16.gmra.mxu0 %v2898
      %v2912 = vpop.f32.mrf.mxu0
      %v2913 = vadd.f32 %v2870, %v2912
      %v2914 = vpop.f32.mrf.mxu0
      %v2915 = vadd.f32 %v2875, %v2914
      %2916 = vmatmul.bf16.gmra.mxu0 %v2901
      %v2917 = vpop.f32.mrf.mxu0
      %v2918 = vadd.f32 %v2880, %v2917
      %v2919 = vpop.f32.mrf.mxu0
      %v2920 = vadd.f32 %v2885, %v2919
      %2921 = vdwg.mxu0
      %v2922 = vld [vmem:[%s7] sm:$0x1]
      %v2924 = vperm.slane %v2922, 0
      %v2926 = vmul.f32 %v2913, %v2924
      %v2927 = vmul.f32 %v2915, %v2924
      %v2928 = vmul.f32 %v2918, %v2924
      %v2929 = vmul.f32 %v2920, %v2924
      %v2931 = vsel %vm1410, %v2926, 0
      %v2934 = vsel %vm1410, %v2927, 0
      %v2937 = vsel %vm1410, %v2928, 0
      %v2940 = vsel %vm1410, %v2929, 0
      %v2943 = vsel %vm1410, %v2858, 0
      %2945 = vmatpush.xpose.msra.mxu0 0.0
      %2946 = vmatpush.xpose.msra.mxu0 0.0
      %2947 = vmatpush.xpose.msra.mxu0 0.0
      %2948 = vmatpush.xpose.msra.mxu0 0.0
      %2949 = vmatpush.xpose.msra.mxu0 0.0
      %2950 = vmatpush.xpose.msra.mxu0 0.0
      %2951 = vmatpush.xpose.msra.mxu0 0.0
      %2952 = vmatpush.xpose.msra.mxu0 0.0
      %2953 = vmatpush.xpose.msra.mxu0 0.0
      %2954 = vmatpush.xpose.msra.mxu0 0.0
      %2955 = vmatpush.xpose.msra.mxu0 0.0
      %2956 = vmatpush.xpose.msra.mxu0 0.0
      %2957 = vmatpush.xpose.msra.mxu0 0.0
      %2958 = vmatpush.xpose.msra.mxu0 0.0
      %2959 = vmatpush.xpose.msra.mxu0 0.0
      %2960 = vmatpush.xpose.msra.mxu0 %v2943
      %2961 = vmatmul.f32.gmra.mxu0 %v2931
      %v2962 = vpop.f32.mrf.mxu0
      %v2963 = vadd.f32 0.0, %v2962
      %2964 = vmatmul.f32.gmra.mxu0 %v2934
      %v2965 = vpop.f32.mrf.mxu0
      %v2966 = vadd.f32 0.0, %v2965
      %2967 = vmatmul.f32.gmra.mxu0 %v2937
      %v2968 = vpop.f32.mrf.mxu0
      %v2969 = vadd.f32 0.0, %v2968
      %2970 = vmatmul.f32.gmra.mxu0 %v2940
      %v2971 = vpop.f32.mrf.mxu0
      %v2972 = vadd.f32 0.0, %v2971
      %2973 = vdwg.mxu0
      %v2974 = vld [vmem:[%s27] sm:$0xff]
      %vm2975 = vcmask 64512
      %v2977 = vsel %vm2975, %v2974, 0
      %v2980 = vsel %vm2975, %v2963, 0
      %v2983 = vsel %vm2975, %v2966, 0
      %v2986 = vsel %vm2975, %v2969, 0
      %v2989 = vsel %vm2975, %v2972, 0
      %2991 = vmatpush.xpose.msra.mxu0 0.0
      %2992 = vmatpush.xpose.msra.mxu0 0.0
      %2993 = vmatpush.xpose.msra.mxu0 0.0
      %2994 = vmatpush.xpose.msra.mxu0 0.0
      %2995 = vmatpush.xpose.msra.mxu0 0.0
      %2996 = vmatpush.xpose.msra.mxu0 0.0
      %2997 = vmatpush.xpose.msra.mxu0 0.0
      %2998 = vmatpush.xpose.msra.mxu0 0.0
      %2999 = vmatpush.xpose.msra.mxu0 0.0
      %3000 = vmatpush.xpose.msra.mxu0 0.0
      %3001 = vmatpush.xpose.msra.mxu0 0.0
      %3002 = vmatpush.xpose.msra.mxu0 0.0
      %3003 = vmatpush.xpose.msra.mxu0 %v2989
      %3004 = vmatpush.xpose.msra.mxu0 %v2986
      %3005 = vmatpush.xpose.msra.mxu0 %v2983
      %3006 = vmatpush.xpose.msra.mxu0 %v2980
      %3007 = vmatmul.f32.gmra.mxu0 %v2977
      %v3008 = vpop.f32.mrf.mxu0
      %v3009 = vadd.f32 0.0, %v3008
      %3010 = vdwg.mxu0
      %vm3011 = vcmp.ge.f32.partialorder %v3009, 0.0
      %v3012 = vmul.f32 %v3009, 0.2
      %v3013 = vsel %vm3011, %v3009, %v3012
      %v3014 = vld [vmem:[%s29] sm:$0xff]
      %v3015 = vld [vmem:[%s29 + $0x8] sm:$0xff]
      %v3016 = vld [vmem:[%s29 + $0x10] sm:$0xff]
      %v3017 = vld [vmem:[%s29 + $0x18] sm:$0xff]
      %v3018 = vld [vmem:[%s31] sm:$0xff]
      %v3019 = vld [vmem:[%s31 + $0x8] sm:$0xff]
      %v3020 = vld [vmem:[%s31 + $0x10] sm:$0xff]
      %v3021 = vld [vmem:[%s31 + $0x18] sm:$0xff]
      %3023 = vset.pattern.permute.xlu0 0
      %3024 = vperm.xlu0 %3023, %v3018
      %v3025 = vpop.permute.xlu0 %3024
      %3028 = vset.pattern.permute.xlu0 0
      %3029 = vperm.xlu0 %3028, %v3019
      %v3030 = vpop.permute.xlu0 %3029
      %3033 = vset.pattern.permute.xlu0 0
      %3034 = vperm.xlu0 %3033, %v3020
      %v3035 = vpop.permute.xlu0 %3034
      %3038 = vset.pattern.permute.xlu0 0
      %3039 = vperm.xlu0 %3038, %v3021
      %v3040 = vpop.permute.xlu0 %3039
      %v3043 = vsel %vm1550, %v3014, 0
      %v3046 = vsel %vm1550, %v3015, 0
      %v3049 = vsel %vm1550, %v3016, 0
      %v3052 = vsel %vm1550, %v3017, 0
      %v3055 = vsel %vm1550, %v3013, 0
      %3057 = vmatpush.xpose.msra.mxu0 0.0
      %3058 = vmatpush.xpose.msra.mxu0 0.0
      %3059 = vmatpush.xpose.msra.mxu0 0.0
      %3060 = vmatpush.xpose.msra.mxu0 0.0
      %3061 = vmatpush.xpose.msra.mxu0 0.0
      %3062 = vmatpush.xpose.msra.mxu0 0.0
      %3063 = vmatpush.xpose.msra.mxu0 0.0
      %3064 = vmatpush.xpose.msra.mxu0 0.0
      %3065 = vmatpush.xpose.msra.mxu0 0.0
      %3066 = vmatpush.xpose.msra.mxu0 0.0
      %3067 = vmatpush.xpose.msra.mxu0 0.0
      %3068 = vmatpush.xpose.msra.mxu0 0.0
      %3069 = vmatpush.xpose.msra.mxu0 0.0
      %3070 = vmatpush.xpose.msra.mxu0 0.0
      %3071 = vmatpush.xpose.msra.mxu0 0.0
      %3072 = vmatpush.xpose.msra.mxu0 %v3055
      %3073 = vmatmul.f32.gmra.mxu0 %v3043
      %v3074 = vpop.f32.mrf.mxu0
      %v3075 = vadd.f32 %v3025, %v3074
      %3076 = vmatmul.f32.gmra.mxu0 %v3046
      %v3077 = vpop.f32.mrf.mxu0
      %v3078 = vadd.f32 %v3030, %v3077
      %3079 = vmatmul.f32.gmra.mxu0 %v3049
      %v3080 = vpop.f32.mrf.mxu0
      %v3081 = vadd.f32 %v3035, %v3080
      %3082 = vmatmul.f32.gmra.mxu0 %v3052
      %v3083 = vpop.f32.mrf.mxu0
      %v3084 = vadd.f32 %v3040, %v3083
      %3085 = vdwg.mxu0
      %vm3086 = vcmp.ge.f32.partialorder %v3075, 0.0
      %vm3087 = vcmp.ge.f32.partialorder %v3078, 0.0
      %vm3088 = vcmp.ge.f32.partialorder %v3081, 0.0
      %vm3089 = vcmp.ge.f32.partialorder %v3084, 0.0
      %v3090 = vmul.f32 %v3075, 0.2
      %v3091 = vmul.f32 %v3078, 0.2
      %v3092 = vmul.f32 %v3081, 0.2
      %v3093 = vmul.f32 %v3084, 0.2
      %v3094 = vsel %vm3086, %v3075, %v3090
      %v3095 = vsel %vm3087, %v3078, %v3091
      %v3096 = vsel %vm3088, %v3081, %v3092
      %v3097 = vsel %vm3089, %v3084, %v3093
      %v3098 = vadd.f32 %v3094, %v2963
      %v3099 = vadd.f32 %v3095, %v2966
      %v3100 = vadd.f32 %v3096, %v2969
      %v3101 = vadd.f32 %v3097, %v2972
      %v3103 = vsel %vm2975, %v3098, 0
      %v3106 = vsel %vm2975, %v3099, 0
      %v3109 = vsel %vm2975, %v3100, 0
      %v3112 = vsel %vm2975, %v3101, 0
      %3114 = vmatpush.xpose.msra.mxu0 0.0
      %3115 = vmatpush.xpose.msra.mxu0 0.0
      %3116 = vmatpush.xpose.msra.mxu0 0.0
      %3117 = vmatpush.xpose.msra.mxu0 0.0
      %3118 = vmatpush.xpose.msra.mxu0 0.0
      %3119 = vmatpush.xpose.msra.mxu0 0.0
      %3120 = vmatpush.xpose.msra.mxu0 0.0
      %3121 = vmatpush.xpose.msra.mxu0 0.0
      %3122 = vmatpush.xpose.msra.mxu0 0.0
      %3123 = vmatpush.xpose.msra.mxu0 0.0
      %3124 = vmatpush.xpose.msra.mxu0 0.0
      %3125 = vmatpush.xpose.msra.mxu0 0.0
      %3126 = vmatpush.xpose.msra.mxu0 %v3112
      %3127 = vmatpush.xpose.msra.mxu0 %v3109
      %3128 = vmatpush.xpose.msra.mxu0 %v3106
      %3129 = vmatpush.xpose.msra.mxu0 %v3103
      %3130 = vmatmul.f32.gmra.mxu0 %v3103
      %v3131 = vpop.f32.mrf.mxu0
      %v3132 = vadd.f32 0.0, %v3131
      %3133 = vmatmul.f32.gmra.mxu0 %v3106
      %v3134 = vpop.f32.mrf.mxu0
      %v3135 = vadd.f32 0.0, %v3134
      %3136 = vmatmul.f32.gmra.mxu0 %v3109
      %v3137 = vpop.f32.mrf.mxu0
      %v3138 = vadd.f32 0.0, %v3137
      %3139 = vmatmul.f32.gmra.mxu0 %v3112
      %v3140 = vpop.f32.mrf.mxu0
      %v3141 = vadd.f32 0.0, %v3140
      %3142 = vdwg.mxu0
      %v3143 = vsel %vm1550, %v3132, -inf
      %3144 = vmax.xlane.f32.xlu0 %v3143
      %v3145 = vpop.xlane.xlu0 %3144
      %v3146 = vsel %vm1550, %v3135, -inf
      %3147 = vmax.xlane.f32.xlu0 %v3146
      %v3148 = vpop.xlane.xlu0 %3147
      %v3149 = vsel %vm1550, %v3138, -inf
      %3150 = vmax.xlane.f32.xlu0 %v3149
      %v3151 = vpop.xlane.xlu0 %3150
      %v3152 = vsel %vm1550, %v3141, -inf
      %3153 = vmax.xlane.f32.xlu0 %v3152
      %v3154 = vpop.xlane.xlu0 %3153
      %v3155 = vsub.f32 %v3145, %v3132
      %v3156 = vsub.f32 %v3148, %v3135
      %v3157 = vsub.f32 %v3151, %v3138
      %v3158 = vsub.f32 %v3154, %v3141
      %v3159 = vsel %vm1550, %v3155, -inf
      %3160 = vmax.xlane.f32.xlu0 %v3159
      %v3161 = vpop.xlane.xlu0 %3160
      %v3162 = vsel %vm1550, %v3156, -inf
      %3163 = vmax.xlane.f32.xlu0 %v3162
      %v3164 = vpop.xlane.xlu0 %3163
      %v3165 = vsel %vm1550, %v3157, -inf
      %3166 = vmax.xlane.f32.xlu0 %v3165
      %v3167 = vpop.xlane.xlu0 %3166
      %v3168 = vsel %vm1550, %v3158, -inf
      %3169 = vmax.xlane.f32.xlu0 %v3168
      %v3170 = vpop.xlane.xlu0 %3169
      %v3171 = vsub.f32 %v3155, %v3161
      %v3172 = vsub.f32 %v3156, %v3164
      %v3173 = vsub.f32 %v3157, %v3167
      %v3174 = vsub.f32 %v3158, %v3170
      %v3175 = vmul.f32 %v3171, 1.442695
      %v3176 = vpow.pop %v3175
      %v3177 = vmul.f32 %v3172, 1.442695
      %v3178 = vpow.pop %v3177
      %v3179 = vmul.f32 %v3173, 1.442695
      %v3180 = vpow.pop %v3179
      %v3181 = vmul.f32 %v3174, 1.442695
      %v3182 = vpow.pop %v3181
      %v3183 = vsel %vm1550, %v3176, 0.0
      %3184 = vadd.xlane.f32.xlu0 %v3183
      %v3185 = vpop.xlane.xlu0 %3184
      %v3186 = vsel %vm1550, %v3178, 0.0
      %3187 = vadd.xlane.f32.xlu0 %v3186
      %v3188 = vpop.xlane.xlu0 %3187
      %v3189 = vsel %vm1550, %v3180, 0.0
      %3190 = vadd.xlane.f32.xlu0 %v3189
      %v3191 = vpop.xlane.xlu0 %3190
      %v3192 = vsel %vm1550, %v3182, 0.0
      %3193 = vadd.xlane.f32.xlu0 %v3192
      %v3194 = vpop.xlane.xlu0 %3193
      %v3195 = vrcp.pop %v3185
      %v3196 = vrcp.pop %v3188
      %v3197 = vrcp.pop %v3191
      %v3198 = vrcp.pop %v3194
      %v3199 = vmul.f32 %v3176, %v3195
      %v3200 = vmul.f32 %v3178, %v3196
      %v3201 = vmul.f32 %v3180, %v3197
      %v3202 = vmul.f32 %v3182, %v3198
      %v3204 = vsel %vm1550, %v3199, 0
      %v3207 = vsel %vm1550, %v3200, 0
      %v3210 = vsel %vm1550, %v3201, 0
      %v3213 = vsel %vm1550, %v3202, 0
      %3215 = vmatpush.msra.mxu0 0.0
      %3216 = vmatpush.msra.mxu0 0.0
      %3217 = vmatpush.msra.mxu0 0.0
      %3218 = vmatpush.msra.mxu0 0.0
      %3219 = vmatpush.msra.mxu0 0.0
      %3220 = vmatpush.msra.mxu0 0.0
      %3221 = vmatpush.msra.mxu0 0.0
      %3222 = vmatpush.msra.mxu0 0.0
      %3223 = vmatpush.msra.mxu0 0.0
      %3224 = vmatpush.msra.mxu0 0.0
      %3225 = vmatpush.msra.mxu0 0.0
      %3226 = vmatpush.msra.mxu0 0.0
      %3227 = vmatpush.msra.mxu0 %v3101
      %3228 = vmatpush.msra.mxu0 %v3100
      %3229 = vmatpush.msra.mxu0 %v3099
      %3230 = vmatpush.msra.mxu0 %v3098
      %3231 = vmatmul.f32.gmra.mxu0 %v3204
      %v3232 = vpop.f32.mrf.mxu0
      %v3233 = vadd.f32 0.0, %v3232
      %3234 = vmatmul.f32.gmra.mxu0 %v3207
      %v3235 = vpop.f32.mrf.mxu0
      %v3236 = vadd.f32 0.0, %v3235
      %3237 = vmatmul.f32.gmra.mxu0 %v3210
      %v3238 = vpop.f32.mrf.mxu0
      %v3239 = vadd.f32 0.0, %v3238
      %3240 = vmatmul.f32.gmra.mxu0 %v3213
      %v3241 = vpop.f32.mrf.mxu0
      %v3242 = vadd.f32 0.0, %v3241
      %3243 = vdwg.mxu0
      %v3244 = vld [vmem:[#allocation2] sm:$0x1]
      %s3245 = vtos %v3244
      %v3246 = vstv %s3245
      %v3247 = vmul.f32 %v3246, %v3233
      %v3248 = vmul.f32 %v3246, %v3236
      %v3249 = vmul.f32 %v3246, %v3239
      %v3250 = vmul.f32 %v3246, %v3242
      %v3251 = vadd.f32 %v3247, %v3098
      %v3252 = vadd.f32 %v3248, %v3099
      %v3253 = vadd.f32 %v3249, %v3100
      %v3254 = vadd.f32 %v3250, %v3101
      %v3255 = vld [vmem:[%s35] sm:$0xff]
      %v3256 = vld [vmem:[%s37] sm:$0xff]
      %v3258 = vsel %vm1550, %v3256, 0
      %3260 = vmatpush.msra.mxu0 0.0
      %3261 = vmatpush.msra.mxu0 0.0
      %3262 = vmatpush.msra.mxu0 0.0
      %3263 = vmatpush.msra.mxu0 0.0
      %3264 = vmatpush.msra.mxu0 0.0
      %3265 = vmatpush.msra.mxu0 0.0
      %3266 = vmatpush.msra.mxu0 0.0
      %3267 = vmatpush.msra.mxu0 0.0
      %3268 = vmatpush.msra.mxu0 0.0
      %3269 = vmatpush.msra.mxu0 0.0
      %3270 = vmatpush.msra.mxu0 0.0
      %3271 = vmatpush.msra.mxu0 0.0
      %3272 = vmatpush.msra.mxu0 %v3101
      %3273 = vmatpush.msra.mxu0 %v3100
      %3274 = vmatpush.msra.mxu0 %v3099
      %3275 = vmatpush.msra.mxu0 %v3098
      %3276 = vmatmul.f32.gmra.mxu0 %v3258
      %v3277 = vpop.f32.mrf.mxu0
      %v3278 = vadd.f32 0.0, %v3277
      %3279 = vdwg.mxu0
      %v3281 = vsel %vm1550, %v3255, 0
      %3283 = vmatpush.msra.mxu0 0.0
      %3284 = vmatpush.msra.mxu0 0.0
      %3285 = vmatpush.msra.mxu0 0.0
      %3286 = vmatpush.msra.mxu0 0.0
      %3287 = vmatpush.msra.mxu0 0.0
      %3288 = vmatpush.msra.mxu0 0.0
      %3289 = vmatpush.msra.mxu0 0.0
      %3290 = vmatpush.msra.mxu0 0.0
      %3291 = vmatpush.msra.mxu0 0.0
      %3292 = vmatpush.msra.mxu0 0.0
      %3293 = vmatpush.msra.mxu0 0.0
      %3294 = vmatpush.msra.mxu0 0.0
      %3295 = vmatpush.msra.mxu0 %v3254
      %3296 = vmatpush.msra.mxu0 %v3253
      %3297 = vmatpush.msra.mxu0 %v3252
      %3298 = vmatpush.msra.mxu0 %v3251
      %3299 = vmatmul.f32.gmra.mxu0 %v3281
      %v3300 = vpop.f32.mrf.mxu0
      %v3301 = vadd.f32 %v3278, %v3300
      %3302 = vdwg.mxu0
      %v3303 = vld [vmem:[%s39] sm:$0xff]
      %3305 = vset.pattern.permute.xlu0 0
      %3306 = vperm.xlu0 %3305, %v3303
      %v3307 = vpop.permute.xlu0 %3306
      %v3309 = vadd.f32 %v3301, %v3307
      %v3310 = vxor.u32 %v3309, 2147483648
      %v3311 = vmul.f32 %v3310, 1.442695
      %v3312 = vpow.pop %v3311
      %v3313 = vadd.f32 %v3312, 1.0
      %v3314 = vrcp.pop %v3313
      %v3315 = vmul.f32 %v3313, %v3314
      %v3316 = vsub.f32 1.0, %v3315
      %v3317 = vmul.f32 %v3314, %v3316
      %v3318 = vadd.f32 %v3314, %v3317
      %vm3319 = vweird.f32 %v3313
      %vm3320 = vweird.f32 %v3314
      %vm3321 = vmor %vm3319, %vm3320
      %v3322 = vsel %vm3321, %v3314, %v3318
      %v3323 = vand.u32 2147483647, %v3313
      %vm3324 = vcmp.eq.f32.partialorder %v3323, 8.507059e+37
      %v3325 = vand.u32 %v3313, 2147483648
      %v3326 = vor.u32 1.1754944e-38, %v3325
      %v3327 = vsel %vm3324, %v3326, %v3322
      %v3328 = vmul.f32 1.0, %v3327
      %3329 = vmatpush.msra.mxu0 0.0
      %3330 = vmatpush.msra.mxu0 0.0
      %3331 = vmatpush.msra.mxu0 0.0
      %3332 = vmatpush.msra.mxu0 0.0
      %3333 = vmatpush.msra.mxu0 0.0
      %3334 = vmatpush.msra.mxu0 0.0
      %3335 = vmatpush.msra.mxu0 0.0
      %3336 = vmatpush.msra.mxu0 0.0
      %3337 = vmatpush.msra.mxu0 0.0
      %3338 = vmatpush.msra.mxu0 0.0
      %3339 = vmatpush.msra.mxu0 0.0
      %3340 = vmatpush.msra.mxu0 0.0
      %3341 = vmatpush.msra.mxu0 0.0
      %3342 = vmatpush.msra.mxu0 0.0
      %3343 = vmatpush.msra.mxu0 0.0
      %3344 = vmatpush.msra.mxu0 %v3328
      %3345 = vmatmul.f32.gmra.mxu0 %v3103
      %v3346 = vpop.f32.mrf.mxu0
      %v3347 = vadd.f32 0.0, %v3346
      %3348 = vmatmul.f32.gmra.mxu0 %v3106
      %v3349 = vpop.f32.mrf.mxu0
      %v3350 = vadd.f32 0.0, %v3349
      %3351 = vmatmul.f32.gmra.mxu0 %v3109
      %v3352 = vpop.f32.mrf.mxu0
      %v3353 = vadd.f32 0.0, %v3352
      %3354 = vmatmul.f32.gmra.mxu0 %v3112
      %v3355 = vpop.f32.mrf.mxu0
      %v3356 = vadd.f32 0.0, %v3355
      %3357 = vdwg.mxu0
      %vm3358 = vcmp.ge.f32.partialorder %v3347, 0.0
      %vm3359 = vcmp.ge.f32.partialorder %v3350, 0.0
      %vm3360 = vcmp.ge.f32.partialorder %v3353, 0.0
      %vm3361 = vcmp.ge.f32.partialorder %v3356, 0.0
      %v3362 = vmul.f32 %v3347, 0.2
      %v3363 = vmul.f32 %v3350, 0.2
      %v3364 = vmul.f32 %v3353, 0.2
      %v3365 = vmul.f32 %v3356, 0.2
      %v3366 = vsel %vm3358, %v3347, %v3362
      %v3367 = vsel %vm3359, %v3350, %v3363
      %v3368 = vsel %vm3360, %v3353, %v3364
      %v3369 = vsel %vm3361, %v3356, %v3365
      %v3370 = vld [vmem:[%s41] sm:$0xff]
      %v3371 = vld [vmem:[%s41 + $0x8] sm:$0xff]
      %v3372 = vld [vmem:[%s41 + $0x10] sm:$0xff]
      %v3373 = vld [vmem:[%s41 + $0x18] sm:$0xff]
      %v3374 = vld [vmem:[%s43] sm:$0xff]
      %v3375 = vld [vmem:[%s43 + $0x8] sm:$0xff]
      %v3376 = vld [vmem:[%s43 + $0x10] sm:$0xff]
      %v3377 = vld [vmem:[%s43 + $0x18] sm:$0xff]
      %3379 = vset.pattern.permute.xlu0 0
      %3380 = vperm.xlu0 %3379, %v3374
      %v3381 = vpop.permute.xlu0 %3380
      %3384 = vset.pattern.permute.xlu0 0
      %3385 = vperm.xlu0 %3384, %v3375
      %v3386 = vpop.permute.xlu0 %3385
      %3389 = vset.pattern.permute.xlu0 0
      %3390 = vperm.xlu0 %3389, %v3376
      %v3391 = vpop.permute.xlu0 %3390
      %3394 = vset.pattern.permute.xlu0 0
      %3395 = vperm.xlu0 %3394, %v3377
      %v3396 = vpop.permute.xlu0 %3395
      %v3399 = vsel %vm1550, %v3370, 0
      %v3402 = vsel %vm1550, %v3371, 0
      %v3405 = vsel %vm1550, %v3372, 0
      %v3408 = vsel %vm1550, %v3373, 0
      %3410 = vmatpush.msra.mxu0 0.0
      %3411 = vmatpush.msra.mxu0 0.0
      %3412 = vmatpush.msra.mxu0 0.0
      %3413 = vmatpush.msra.mxu0 0.0
      %3414 = vmatpush.msra.mxu0 0.0
      %3415 = vmatpush.msra.mxu0 0.0
      %3416 = vmatpush.msra.mxu0 0.0
      %3417 = vmatpush.msra.mxu0 0.0
      %3418 = vmatpush.msra.mxu0 0.0
      %3419 = vmatpush.msra.mxu0 0.0
      %3420 = vmatpush.msra.mxu0 0.0
      %3421 = vmatpush.msra.mxu0 0.0
      %3422 = vmatpush.msra.mxu0 %v3369
      %3423 = vmatpush.msra.mxu0 %v3368
      %3424 = vmatpush.msra.mxu0 %v3367
      %3425 = vmatpush.msra.mxu0 %v3366
      %3426 = vmatmul.f32.gmra.mxu0 %v3399
      %v3427 = vpop.f32.mrf.mxu0
      %v3428 = vadd.f32 %v3381, %v3427
      %3429 = vmatmul.f32.gmra.mxu0 %v3402
      %v3430 = vpop.f32.mrf.mxu0
      %v3431 = vadd.f32 %v3386, %v3430
      %3432 = vmatmul.f32.gmra.mxu0 %v3405
      %v3433 = vpop.f32.mrf.mxu0
      %v3434 = vadd.f32 %v3391, %v3433
      %3435 = vmatmul.f32.gmra.mxu0 %v3408
      %v3436 = vpop.f32.mrf.mxu0
      %v3437 = vadd.f32 %v3396, %v3436
      %3438 = vdwg.mxu0
      %vm3439 = vcmp.ge.f32.partialorder %v3428, 0.0
      %vm3440 = vcmp.ge.f32.partialorder %v3431, 0.0
      %vm3441 = vcmp.ge.f32.partialorder %v3434, 0.0
      %vm3442 = vcmp.ge.f32.partialorder %v3437, 0.0
      %v3443 = vmul.f32 %v3428, 0.2
      %v3444 = vmul.f32 %v3431, 0.2
      %v3445 = vmul.f32 %v3434, 0.2
      %v3446 = vmul.f32 %v3437, 0.2
      %v3447 = vsel %vm3439, %v3428, %v3443
      %v3448 = vsel %vm3440, %v3431, %v3444
      %v3449 = vsel %vm3441, %v3434, %v3445
      %v3450 = vsel %vm3442, %v3437, %v3446
      %v3451 = vadd.f32 %v3447, %v3098
      %v3452 = vadd.f32 %v3448, %v3099
      %v3453 = vadd.f32 %v3449, %v3100
      %v3454 = vadd.f32 %v3450, %v3101
      %3455 = vst.msk [vmem:[%s1234] sm:$0xff] %vm2975, %v3451
      %3456 = vst.msk [vmem:[%s1234 + $0x8] sm:$0xff] %vm2975, %v3452
      %3457 = vst.msk [vmem:[%s1234 + $0x10] sm:$0xff] %vm2975, %v3453
      %3458 = vst.msk [vmem:[%s1234 + $0x18] sm:$0xff] %vm2975, %v3454
      %v3459 = vld [vmem:[%s1229] sm:$0xf]
      %v3460 = vld [vmem:[%s1229 + $0x4] sm:$0xf]
      %v3461 = vld [vmem:[%s1229 + $0x8] sm:$0xf]
      %v3462 = vld [vmem:[%s1229 + $0xc] sm:$0xf]
      %v3463 = vld [vmem:[%s1229 + $0x10] sm:$0xf]
      %v3464 = vld [vmem:[%s1229 + $0x14] sm:$0xf]
      %v3465 = vld [vmem:[%s1229 + $0x18] sm:$0x7]
      %v3466 = vld [vmem:[%s45] sm:$0xf]
      %v3467 = vld [vmem:[%s45 + $0x4] sm:$0xf]
      %v3468 = vld [vmem:[%s45 + $0x8] sm:$0xf]
      %v3469 = vld [vmem:[%s45 + $0xc] sm:$0xf]
      %v3470 = vld [vmem:[%s47] sm:$0xff]
      %v3471 = vld [vmem:[%s47 + $0x8] sm:$0xff]
      %v3472 = vld [vmem:[%s47 + $0x10] sm:$0xff]
      %v3473 = vld [vmem:[%s47 + $0x18] sm:$0xff]
      %3475 = vset.pattern.permute.xlu0 0
      %3476 = vperm.xlu0 %3475, %v3470
      %v3477 = vpop.permute.xlu0 %3476
      %3480 = vset.pattern.permute.xlu0 0
      %3481 = vperm.xlu0 %3480, %v3471
      %v3482 = vpop.permute.xlu0 %3481
      %3485 = vset.pattern.permute.xlu0 0
      %3486 = vperm.xlu0 %3485, %v3472
      %v3487 = vpop.permute.xlu0 %3486
      %3490 = vset.pattern.permute.xlu0 0
      %3491 = vperm.xlu0 %3490, %v3473
      %v3492 = vpop.permute.xlu0 %3491
      %v3498 = vunpack.c.l.b16 %v3466
      %v3499 = vunpack.c.l.b16 %v3467
      %v3500 = vunpack.c.l.b16 %v3468
      %v3501 = vunpack.c.l.b16 %v3469
      %v3502 = vpack.c.b16 %v3499, %v3498
      %v3503 = vpack.c.b16 %v3501, %v3500
      %v3511 = vunpack.c.l.b16 %v3459
      %v3512 = vunpack.c.l.b16 %v3460
      %v3513 = vunpack.c.l.b16 %v3461
      %v3514 = vunpack.c.l.b16 %v3462
      %v3515 = vunpack.c.l.b16 %v3463
      %v3516 = vunpack.c.l.b16 %v3464
      %v3517 = vunpack.c.l.b16 %v3465
      %v3518 = vpack.c.b16 %v3512, %v3511
      %v3519 = vpack.c.b16 %v3514, %v3513
      %v3520 = vpack.c.b16 %v3516, %v3515
      %v3521 = vpack.c.b16 %v3517, %v3517
      %vm3525 = vcmask 441344
      %v3527 = vsel %vm3525, %v3502, 0
      %v3530 = vsel %vm3525, %v3503, 0
      %vm3532 = vcmask 1042432
      %v3534 = vsel %vm3532, %v3521, 0
      %3536 = vmatpush.bf16.msra.mxu0 0
      %3537 = vmatpush.bf16.msra.mxu0 0
      %3538 = vmatpush.bf16.msra.mxu0 0
      %3539 = vmatpush.bf16.msra.mxu0 0
      %3540 = vmatpush.bf16.msra.mxu0 %v3534
      %3541 = vmatpush.bf16.msra.mxu0 %v3520
      %3542 = vmatpush.bf16.msra.mxu0 %v3519
      %3543 = vmatpush.bf16.msra.mxu0 %v3518
      %3544 = vmatmul.bf16.gmra.mxu0 %v3527
      %v3545 = vpop.f32.mrf.mxu0
      %v3546 = vadd.f32 %v3477, %v3545
      %v3547 = vpop.f32.mrf.mxu0
      %v3548 = vadd.f32 %v3482, %v3547
      %3549 = vmatmul.bf16.gmra.mxu0 %v3530
      %v3550 = vpop.f32.mrf.mxu0
      %v3551 = vadd.f32 %v3487, %v3550
      %v3552 = vpop.f32.mrf.mxu0
      %v3553 = vadd.f32 %v3492, %v3552
      %3554 = vdwg.mxu0
      %vm3555 = vcmp.ge.f32.partialorder %v3546, 0.0
      %vm3556 = vcmp.ge.f32.partialorder %v3548, 0.0
      %vm3557 = vcmp.ge.f32.partialorder %v3551, 0.0
      %vm3558 = vcmp.ge.f32.partialorder %v3553, 0.0
      %v3559 = vmul.f32 %v3546, 0.01
      %v3560 = vmul.f32 %v3548, 0.01
      %v3561 = vmul.f32 %v3551, 0.01
      %v3562 = vmul.f32 %v3553, 0.01
      %v3563 = vsel %vm3555, %v3546, %v3559
      %v3564 = vsel %vm3556, %v3548, %v3560
      %v3565 = vsel %vm3557, %v3551, %v3561
      %v3566 = vsel %vm3558, %v3553, %v3562
      %v3567 = vld [vmem:[%s49] sm:$0xff]
      %v3568 = vld [vmem:[%s49 + $0x8] sm:$0xff]
      %v3569 = vld [vmem:[%s49 + $0x10] sm:$0xff]
      %v3570 = vld [vmem:[%s49 + $0x18] sm:$0xff]
      %3572 = vset.pattern.permute.xlu0 0
      %3573 = vperm.xlu0 %3572, %v3567
      %v3574 = vpop.permute.xlu0 %3573
      %3577 = vset.pattern.permute.xlu0 0
      %3578 = vperm.xlu0 %3577, %v3568
      %v3579 = vpop.permute.xlu0 %3578
      %3582 = vset.pattern.permute.xlu0 0
      %3583 = vperm.xlu0 %3582, %v3569
      %v3584 = vpop.permute.xlu0 %3583
      %3587 = vset.pattern.permute.xlu0 0
      %3588 = vperm.xlu0 %3587, %v3570
      %v3589 = vpop.permute.xlu0 %3588
      %v3591 = vadd.f32 %v3563, %v3574
      %v3592 = vadd.f32 %v3564, %v3579
      %v3593 = vadd.f32 %v3565, %v3584
      %v3594 = vadd.f32 %v3566, %v3589
      %v3595 = vpack.c.bf16 %v3592, %v3591
      %v3596 = vpack.c.bf16 %v3594, %v3593
      %v3597 = vld [vmem:[%s5] sm:$0xf]
      %v3598 = vld [vmem:[%s5 + $0x4] sm:$0xf]
      %v3599 = vld [vmem:[%s5 + $0x8] sm:$0xf]
      %v3600 = vld [vmem:[%s5 + $0xc] sm:$0xf]
      %v3601 = vld [vmem:[%s5 + $0x10] sm:$0xf]
      %v3602 = vld [vmem:[%s5 + $0x14] sm:$0xf]
      %v3603 = vld [vmem:[%s5 + $0x18] sm:$0xf]
      %v3604 = vld [vmem:[%s5 + $0x1c] sm:$0xf]
      %v3605 = vld [vmem:[%s5 + $0x20] sm:$0xf]
      %v3606 = vld [vmem:[%s5 + $0x24] sm:$0xf]
      %v3607 = vld [vmem:[%s5 + $0x28] sm:$0x1]
      %v3619 = vunpack.c.l.b16 %v3597
      %v3620 = vunpack.c.l.b16 %v3598
      %v3621 = vunpack.c.l.b16 %v3599
      %v3622 = vunpack.c.l.b16 %v3600
      %v3623 = vunpack.c.l.b16 %v3601
      %v3624 = vunpack.c.l.b16 %v3602
      %v3625 = vunpack.c.l.b16 %v3603
      %v3626 = vunpack.c.l.b16 %v3604
      %v3627 = vunpack.c.l.b16 %v3605
      %v3628 = vunpack.c.l.b16 %v3606
      %v3629 = vunpack.c.l.b16 %v3607
      %v3630 = vpack.c.b16 %v3620, %v3619
      %v3631 = vpack.c.b16 %v3622, %v3621
      %v3632 = vpack.c.b16 %v3624, %v3623
      %v3633 = vpack.c.b16 %v3626, %v3625
      %v3634 = vpack.c.b16 %v3628, %v3627
      %v3635 = vpack.c.b16 %v3629, %v3629
      %v3642 = vsel %vm1410, %v3595, 0
      %v3645 = vsel %vm1410, %v3596, 0
      %v3648 = vand.u32 %v3635, %v1419
      %3650 = vmatpush.bf16.msra.mxu0 0
      %3651 = vmatpush.bf16.msra.mxu0 0
      %3652 = vmatpush.bf16.msra.mxu0 %v3648
      %3653 = vmatpush.bf16.msra.mxu0 %v3634
      %3654 = vmatpush.bf16.msra.mxu0 %v3633
      %3655 = vmatpush.bf16.msra.mxu0 %v3632
      %3656 = vmatpush.bf16.msra.mxu0 %v3631
      %3657 = vmatpush.bf16.msra.mxu0 %v3630
      %3658 = vmatmul.bf16.gmra.mxu0 %v3642
      %v3659 = vpop.f32.mrf.mxu0
      %v3660 = vadd.f32 0.0, %v3659
      %v3661 = vpop.f32.mrf.mxu0
      %v3662 = vadd.f32 0.0, %v3661
      %3663 = vmatmul.bf16.gmra.mxu0 %v3645
      %v3664 = vpop.f32.mrf.mxu0
      %v3665 = vadd.f32 0.0, %v3664
      %v3666 = vpop.f32.mrf.mxu0
      %v3667 = vadd.f32 0.0, %v3666
      %3668 = vdwg.mxu0
      %v3669 = vld [vmem:[%s51] sm:$0xf]
      %v3670 = vld [vmem:[%s51 + $0x4] sm:$0xf]
      %v3671 = vld [vmem:[%s51 + $0x8] sm:$0xf]
      %v3672 = vld [vmem:[%s51 + $0xc] sm:$0xf]
      %v3673 = vld [vmem:[%s51 + $0x10] sm:$0xf]
      %v3674 = vld [vmem:[%s51 + $0x14] sm:$0xf]
      %v3675 = vld [vmem:[%s51 + $0x18] sm:$0xf]
      %v3676 = vld [vmem:[%s51 + $0x1c] sm:$0xf]
      %v3677 = vpack.c.bf16 %v3662, %v3660
      %v3678 = vpack.c.bf16 %v3667, %v3665
      %v3679 = vld [vmem:[%s1452] sm:$0xf]
      %v3680 = vld [vmem:[%s1452 + $0x4] sm:$0xf]
      %v3681 = vld [vmem:[%s1452 + $0x8] sm:$0xf]
      %v3682 = vld [vmem:[%s1452 + $0xc] sm:$0xf]
      %v3683 = vld [vmem:[%s1452 + $0x10] sm:$0xf]
      %v3684 = vld [vmem:[%s1452 + $0x14] sm:$0xf]
      %v3685 = vld [vmem:[%s1452 + $0x18] sm:$0xf]
      %v3686 = vld [vmem:[%s1452 + $0x1c] sm:$0xf]
      %v3687 = vld [vmem:[%s1452 + $0x20] sm:$0xf]
      %v3688 = vld [vmem:[%s1452 + $0x24] sm:$0xf]
      %v3689 = vld [vmem:[%s1452 + $0x28] sm:$0x1]
      %v3701 = vunpack.c.l.b16 %v3679
      %v3702 = vunpack.c.l.b16 %v3680
      %v3703 = vunpack.c.l.b16 %v3681
      %v3704 = vunpack.c.l.b16 %v3682
      %v3705 = vunpack.c.l.b16 %v3683
      %v3706 = vunpack.c.l.b16 %v3684
      %v3707 = vunpack.c.l.b16 %v3685
      %v3708 = vunpack.c.l.b16 %v3686
      %v3709 = vunpack.c.l.b16 %v3687
      %v3710 = vunpack.c.l.b16 %v3688
      %v3711 = vunpack.c.l.b16 %v3689
      %v3712 = vpack.c.b16 %v3702, %v3701
      %v3713 = vpack.c.b16 %v3704, %v3703
      %v3714 = vpack.c.b16 %v3706, %v3705
      %v3715 = vpack.c.b16 %v3708, %v3707
      %v3716 = vpack.c.b16 %v3710, %v3709
      %v3717 = vpack.c.b16 %v3711, %v3711
      %v3724 = vand.u32 %v3717, %v1419
      %3726 = vmatpush.bf16.msra.mxu0 0
      %3727 = vmatpush.bf16.msra.mxu0 0
      %3728 = vmatpush.bf16.msra.mxu0 %v3724
      %3729 = vmatpush.bf16.msra.mxu0 %v3716
      %3730 = vmatpush.bf16.msra.mxu0 %v3715
      %3731 = vmatpush.bf16.msra.mxu0 %v3714
      %3732 = vmatpush.bf16.msra.mxu0 %v3713
      %3733 = vmatpush.bf16.msra.mxu0 %v3712
      %3734 = vmatmul.bf16.gmra.mxu0 %v3642
      %v3735 = vpop.f32.mrf.mxu0
      %v3736 = vadd.f32 0.0, %v3735
      %v3737 = vpop.f32.mrf.mxu0
      %v3738 = vadd.f32 0.0, %v3737
      %3739 = vmatmul.bf16.gmra.mxu0 %v3645
      %v3740 = vpop.f32.mrf.mxu0
      %v3741 = vadd.f32 0.0, %v3740
      %v3742 = vpop.f32.mrf.mxu0
      %v3743 = vadd.f32 0.0, %v3742
      %3744 = vdwg.mxu0
      %s3745 = scalar_lea.vmem %s51, 32
      %v3746 = vld [vmem:[%s3745] sm:$0xf]
      %v3747 = vld [vmem:[%s3745 + $0x4] sm:$0xf]
      %v3748 = vld [vmem:[%s3745 + $0x8] sm:$0xf]
      %v3749 = vld [vmem:[%s3745 + $0xc] sm:$0xf]
      %v3750 = vld [vmem:[%s3745 + $0x10] sm:$0xf]
      %v3751 = vld [vmem:[%s3745 + $0x14] sm:$0xf]
      %v3752 = vld [vmem:[%s3745 + $0x18] sm:$0xf]
      %v3753 = vld [vmem:[%s3745 + $0x1c] sm:$0xf]
      %v3754 = vpack.c.bf16 %v3738, %v3736
      %v3755 = vpack.c.bf16 %v3743, %v3741
      %v3764 = vunpack.c.l.b16 %v3746
      %v3765 = vunpack.c.l.b16 %v3747
      %v3766 = vunpack.c.l.b16 %v3748
      %v3767 = vunpack.c.l.b16 %v3749
      %v3768 = vunpack.c.l.b16 %v3750
      %v3769 = vunpack.c.l.b16 %v3751
      %v3770 = vunpack.c.l.b16 %v3752
      %v3771 = vunpack.c.l.b16 %v3753
      %v3772 = vpack.c.b16 %v3765, %v3764
      %v3773 = vpack.c.b16 %v3767, %v3766
      %v3774 = vpack.c.b16 %v3769, %v3768
      %v3775 = vpack.c.b16 %v3771, %v3770
      %v3777 = vsel %vm1550, %v3772, 0
      %v3780 = vsel %vm1550, %v3773, 0
      %v3783 = vsel %vm1550, %v3774, 0
      %v3786 = vsel %vm1550, %v3775, 0
      %3788 = vmatpush.bf16.msra.mxu0 0
      %3789 = vmatpush.bf16.msra.mxu0 0
      %3790 = vmatpush.bf16.msra.mxu0 0
      %3791 = vmatpush.bf16.msra.mxu0 0
      %3792 = vmatpush.bf16.msra.mxu0 0
      %3793 = vmatpush.bf16.msra.mxu0 0
      %3794 = vmatpush.bf16.msra.mxu0 %v3755
      %3795 = vmatpush.bf16.msra.mxu0 %v3754
      %3796 = vmatmul.bf16.gmra.mxu0 %v3777
      %v3797 = vpop.f32.mrf.mxu0
      %v3798 = vadd.f32 0.0, %v3797
      %v3799 = vpop.f32.mrf.mxu0
      %v3800 = vadd.f32 0.0, %v3799
      %3801 = vmatmul.bf16.gmra.mxu0 %v3780
      %v3802 = vpop.f32.mrf.mxu0
      %v3803 = vadd.f32 0.0, %v3802
      %v3804 = vpop.f32.mrf.mxu0
      %v3805 = vadd.f32 0.0, %v3804
      %3806 = vmatmul.bf16.gmra.mxu0 %v3783
      %v3807 = vpop.f32.mrf.mxu0
      %v3808 = vadd.f32 0.0, %v3807
      %v3809 = vpop.f32.mrf.mxu0
      %v3810 = vadd.f32 0.0, %v3809
      %3811 = vmatmul.bf16.gmra.mxu0 %v3786
      %v3812 = vpop.f32.mrf.mxu0
      %v3813 = vadd.f32 0.0, %v3812
      %v3814 = vpop.f32.mrf.mxu0
      %v3815 = vadd.f32 0.0, %v3814
      %3816 = vdwg.mxu0
      %v3825 = vunpack.c.l.b16 %v3669
      %v3826 = vunpack.c.l.b16 %v3670
      %v3827 = vunpack.c.l.b16 %v3671
      %v3828 = vunpack.c.l.b16 %v3672
      %v3829 = vunpack.c.l.b16 %v3673
      %v3830 = vunpack.c.l.b16 %v3674
      %v3831 = vunpack.c.l.b16 %v3675
      %v3832 = vunpack.c.l.b16 %v3676
      %v3833 = vpack.c.b16 %v3826, %v3825
      %v3834 = vpack.c.b16 %v3828, %v3827
      %v3835 = vpack.c.b16 %v3830, %v3829
      %v3836 = vpack.c.b16 %v3832, %v3831
      %v3838 = vsel %vm1550, %v3833, 0
      %v3841 = vsel %vm1550, %v3834, 0
      %v3844 = vsel %vm1550, %v3835, 0
      %v3847 = vsel %vm1550, %v3836, 0
      %3849 = vmatpush.bf16.msra.mxu0 0
      %3850 = vmatpush.bf16.msra.mxu0 0
      %3851 = vmatpush.bf16.msra.mxu0 0
      %3852 = vmatpush.bf16.msra.mxu0 0
      %3853 = vmatpush.bf16.msra.mxu0 0
      %3854 = vmatpush.bf16.msra.mxu0 0
      %3855 = vmatpush.bf16.msra.mxu0 %v3678
      %3856 = vmatpush.bf16.msra.mxu0 %v3677
      %3857 = vmatmul.bf16.gmra.mxu0 %v3838
      %v3858 = vpop.f32.mrf.mxu0
      %v3859 = vadd.f32 %v3798, %v3858
      %v3860 = vpop.f32.mrf.mxu0
      %v3861 = vadd.f32 %v3800, %v3860
      %3862 = vmatmul.bf16.gmra.mxu0 %v3841
      %v3863 = vpop.f32.mrf.mxu0
      %v3864 = vadd.f32 %v3803, %v3863
      %v3865 = vpop.f32.mrf.mxu0
      %v3866 = vadd.f32 %v3805, %v3865
      %3867 = vmatmul.bf16.gmra.mxu0 %v3844
      %v3868 = vpop.f32.mrf.mxu0
      %v3869 = vadd.f32 %v3808, %v3868
      %v3870 = vpop.f32.mrf.mxu0
      %v3871 = vadd.f32 %v3810, %v3870
      %3872 = vmatmul.bf16.gmra.mxu0 %v3847
      %v3873 = vpop.f32.mrf.mxu0
      %v3874 = vadd.f32 %v3813, %v3873
      %v3875 = vpop.f32.mrf.mxu0
      %v3876 = vadd.f32 %v3815, %v3875
      %3877 = vdwg.mxu0
      %v3878 = vld [vmem:[%s1653] sm:$0xf]
      %v3879 = vld [vmem:[%s1653 + $0x4] sm:$0xf]
      %v3880 = vld [vmem:[%s1653 + $0x8] sm:$0xf]
      %v3881 = vld [vmem:[%s1653 + $0xc] sm:$0xf]
      %v3882 = vld [vmem:[%s1653 + $0x10] sm:$0xf]
      %v3883 = vld [vmem:[%s1653 + $0x14] sm:$0xf]
      %v3884 = vld [vmem:[%s1653 + $0x18] sm:$0xf]
      %v3885 = vld [vmem:[%s1653 + $0x1c] sm:$0xf]
      %v3886 = vld [vmem:[%s1653 + $0x20] sm:$0xf]
      %v3887 = vld [vmem:[%s1653 + $0x24] sm:$0xf]
      %v3888 = vld [vmem:[%s1653 + $0x28] sm:$0x1]
      %v3900 = vunpack.c.l.b16 %v3878
      %v3901 = vunpack.c.l.b16 %v3879
      %v3902 = vunpack.c.l.b16 %v3880
      %v3903 = vunpack.c.l.b16 %v3881
      %v3904 = vunpack.c.l.b16 %v3882
      %v3905 = vunpack.c.l.b16 %v3883
      %v3906 = vunpack.c.l.b16 %v3884
      %v3907 = vunpack.c.l.b16 %v3885
      %v3908 = vunpack.c.l.b16 %v3886
      %v3909 = vunpack.c.l.b16 %v3887
      %v3910 = vunpack.c.l.b16 %v3888
      %v3911 = vpack.c.b16 %v3901, %v3900
      %v3912 = vpack.c.b16 %v3903, %v3902
      %v3913 = vpack.c.b16 %v3905, %v3904
      %v3914 = vpack.c.b16 %v3907, %v3906
      %v3915 = vpack.c.b16 %v3909, %v3908
      %v3916 = vpack.c.b16 %v3910, %v3910
      %v3923 = vand.u32 %v3916, %v1419
      %3925 = vmatpush.bf16.msra.mxu0 0
      %3926 = vmatpush.bf16.msra.mxu0 0
      %3927 = vmatpush.bf16.msra.mxu0 %v3923
      %3928 = vmatpush.bf16.msra.mxu0 %v3915
      %3929 = vmatpush.bf16.msra.mxu0 %v3914
      %3930 = vmatpush.bf16.msra.mxu0 %v3913
      %3931 = vmatpush.bf16.msra.mxu0 %v3912
      %3932 = vmatpush.bf16.msra.mxu0 %v3911
      %3933 = vmatmul.bf16.gmra.mxu0 %v3642
      %v3934 = vpop.f32.mrf.mxu0
      %v3935 = vadd.f32 0.0, %v3934
      %v3936 = vpop.f32.mrf.mxu0
      %v3937 = vadd.f32 0.0, %v3936
      %3938 = vmatmul.bf16.gmra.mxu0 %v3645
      %v3939 = vpop.f32.mrf.mxu0
      %v3940 = vadd.f32 0.0, %v3939
      %v3941 = vpop.f32.mrf.mxu0
      %v3942 = vadd.f32 0.0, %v3941
      %3943 = vdwg.mxu0
      %s3944 = scalar_lea.vmem %s51, 64
      %v3945 = vld [vmem:[%s3944] sm:$0xf]
      %v3946 = vld [vmem:[%s3944 + $0x4] sm:$0xf]
      %v3947 = vld [vmem:[%s3944 + $0x8] sm:$0xf]
      %v3948 = vld [vmem:[%s3944 + $0xc] sm:$0xf]
      %v3949 = vld [vmem:[%s3944 + $0x10] sm:$0xf]
      %v3950 = vld [vmem:[%s3944 + $0x14] sm:$0xf]
      %v3951 = vld [vmem:[%s3944 + $0x18] sm:$0xf]
      %v3952 = vld [vmem:[%s3944 + $0x1c] sm:$0xf]
      %v3953 = vpack.c.bf16 %v3937, %v3935
      %v3954 = vpack.c.bf16 %v3942, %v3940
      %v3963 = vunpack.c.l.b16 %v3945
      %v3964 = vunpack.c.l.b16 %v3946
      %v3965 = vunpack.c.l.b16 %v3947
      %v3966 = vunpack.c.l.b16 %v3948
      %v3967 = vunpack.c.l.b16 %v3949
      %v3968 = vunpack.c.l.b16 %v3950
      %v3969 = vunpack.c.l.b16 %v3951
      %v3970 = vunpack.c.l.b16 %v3952
      %v3971 = vpack.c.b16 %v3964, %v3963
      %v3972 = vpack.c.b16 %v3966, %v3965
      %v3973 = vpack.c.b16 %v3968, %v3967
      %v3974 = vpack.c.b16 %v3970, %v3969
      %v3976 = vsel %vm1550, %v3971, 0
      %v3979 = vsel %vm1550, %v3972, 0
      %v3982 = vsel %vm1550, %v3973, 0
      %v3985 = vsel %vm1550, %v3974, 0
      %3987 = vmatpush.bf16.msra.mxu0 0
      %3988 = vmatpush.bf16.msra.mxu0 0
      %3989 = vmatpush.bf16.msra.mxu0 0
      %3990 = vmatpush.bf16.msra.mxu0 0
      %3991 = vmatpush.bf16.msra.mxu0 0
      %3992 = vmatpush.bf16.msra.mxu0 0
      %3993 = vmatpush.bf16.msra.mxu0 %v3954
      %3994 = vmatpush.bf16.msra.mxu0 %v3953
      %3995 = vmatmul.bf16.gmra.mxu0 %v3976
      %v3996 = vpop.f32.mrf.mxu0
      %v3997 = vadd.f32 0.0, %v3996
      %v3998 = vpop.f32.mrf.mxu0
      %v3999 = vadd.f32 0.0, %v3998
      %4000 = vmatmul.bf16.gmra.mxu0 %v3979
      %v4001 = vpop.f32.mrf.mxu0
      %v4002 = vadd.f32 0.0, %v4001
      %v4003 = vpop.f32.mrf.mxu0
      %v4004 = vadd.f32 0.0, %v4003
      %4005 = vmatmul.bf16.gmra.mxu0 %v3982
      %v4006 = vpop.f32.mrf.mxu0
      %v4007 = vadd.f32 0.0, %v4006
      %v4008 = vpop.f32.mrf.mxu0
      %v4009 = vadd.f32 0.0, %v4008
      %4010 = vmatmul.bf16.gmra.mxu0 %v3985
      %v4011 = vpop.f32.mrf.mxu0
      %v4012 = vadd.f32 0.0, %v4011
      %v4013 = vpop.f32.mrf.mxu0
      %v4014 = vadd.f32 0.0, %v4013
      %4015 = vdwg.mxu0
      %v4016 = vadd.f32 %v3859, %v3997
      %v4017 = vadd.f32 %v3861, %v3999
      %v4018 = vadd.f32 %v3864, %v4002
      %v4019 = vadd.f32 %v3866, %v4004
      %v4020 = vadd.f32 %v3869, %v4007
      %v4021 = vadd.f32 %v3871, %v4009
      %v4022 = vadd.f32 %v3874, %v4012
      %v4023 = vadd.f32 %v3876, %v4014
      %v4024 = vld [vmem:[%s1800] sm:$0xf]
      %v4025 = vld [vmem:[%s1800 + $0x4] sm:$0xf]
      %v4026 = vld [vmem:[%s1800 + $0x8] sm:$0xf]
      %v4027 = vld [vmem:[%s1800 + $0xc] sm:$0xf]
      %v4028 = vld [vmem:[%s1800 + $0x10] sm:$0xf]
      %v4029 = vld [vmem:[%s1800 + $0x14] sm:$0xf]
      %v4030 = vld [vmem:[%s1800 + $0x18] sm:$0xf]
      %v4031 = vld [vmem:[%s1800 + $0x1c] sm:$0xf]
      %v4032 = vld [vmem:[%s1800 + $0x20] sm:$0xf]
      %v4033 = vld [vmem:[%s1800 + $0x24] sm:$0xf]
      %v4034 = vld [vmem:[%s1800 + $0x28] sm:$0x1]
      %v4046 = vunpack.c.l.b16 %v4024
      %v4047 = vunpack.c.l.b16 %v4025
      %v4048 = vunpack.c.l.b16 %v4026
      %v4049 = vunpack.c.l.b16 %v4027
      %v4050 = vunpack.c.l.b16 %v4028
      %v4051 = vunpack.c.l.b16 %v4029
      %v4052 = vunpack.c.l.b16 %v4030
      %v4053 = vunpack.c.l.b16 %v4031
      %v4054 = vunpack.c.l.b16 %v4032
      %v4055 = vunpack.c.l.b16 %v4033
      %v4056 = vunpack.c.l.b16 %v4034
      %v4057 = vpack.c.b16 %v4047, %v4046
      %v4058 = vpack.c.b16 %v4049, %v4048
      %v4059 = vpack.c.b16 %v4051, %v4050
      %v4060 = vpack.c.b16 %v4053, %v4052
      %v4061 = vpack.c.b16 %v4055, %v4054
      %v4062 = vpack.c.b16 %v4056, %v4056
      %v4069 = vand.u32 %v4062, %v1419
      %4071 = vmatpush.bf16.msra.mxu0 0
      %4072 = vmatpush.bf16.msra.mxu0 0
      %4073 = vmatpush.bf16.msra.mxu0 %v4069
      %4074 = vmatpush.bf16.msra.mxu0 %v4061
      %4075 = vmatpush.bf16.msra.mxu0 %v4060
      %4076 = vmatpush.bf16.msra.mxu0 %v4059
      %4077 = vmatpush.bf16.msra.mxu0 %v4058
      %4078 = vmatpush.bf16.msra.mxu0 %v4057
      %4079 = vmatmul.bf16.gmra.mxu0 %v3642
      %v4080 = vpop.f32.mrf.mxu0
      %v4081 = vadd.f32 0.0, %v4080
      %v4082 = vpop.f32.mrf.mxu0
      %v4083 = vadd.f32 0.0, %v4082
      %4084 = vmatmul.bf16.gmra.mxu0 %v3645
      %v4085 = vpop.f32.mrf.mxu0
      %v4086 = vadd.f32 0.0, %v4085
      %v4087 = vpop.f32.mrf.mxu0
      %v4088 = vadd.f32 0.0, %v4087
      %4089 = vdwg.mxu0
      %s4090 = scalar_lea.vmem %s51, 96
      %v4091 = vld [vmem:[%s4090] sm:$0xf]
      %v4092 = vld [vmem:[%s4090 + $0x4] sm:$0xf]
      %v4093 = vld [vmem:[%s4090 + $0x8] sm:$0xf]
      %v4094 = vld [vmem:[%s4090 + $0xc] sm:$0xf]
      %v4095 = vld [vmem:[%s4090 + $0x10] sm:$0xf]
      %v4096 = vld [vmem:[%s4090 + $0x14] sm:$0xf]
      %v4097 = vld [vmem:[%s4090 + $0x18] sm:$0xf]
      %v4098 = vld [vmem:[%s4090 + $0x1c] sm:$0xf]
      %v4099 = vpack.c.bf16 %v4083, %v4081
      %v4100 = vpack.c.bf16 %v4088, %v4086
      %v4109 = vunpack.c.l.b16 %v4091
      %v4110 = vunpack.c.l.b16 %v4092
      %v4111 = vunpack.c.l.b16 %v4093
      %v4112 = vunpack.c.l.b16 %v4094
      %v4113 = vunpack.c.l.b16 %v4095
      %v4114 = vunpack.c.l.b16 %v4096
      %v4115 = vunpack.c.l.b16 %v4097
      %v4116 = vunpack.c.l.b16 %v4098
      %v4117 = vpack.c.b16 %v4110, %v4109
      %v4118 = vpack.c.b16 %v4112, %v4111
      %v4119 = vpack.c.b16 %v4114, %v4113
      %v4120 = vpack.c.b16 %v4116, %v4115
      %v4122 = vsel %vm1550, %v4117, 0
      %v4125 = vsel %vm1550, %v4118, 0
      %v4128 = vsel %vm1550, %v4119, 0
      %v4131 = vsel %vm1550, %v4120, 0
      %4133 = vmatpush.bf16.msra.mxu0 0
      %4134 = vmatpush.bf16.msra.mxu0 0
      %4135 = vmatpush.bf16.msra.mxu0 0
      %4136 = vmatpush.bf16.msra.mxu0 0
      %4137 = vmatpush.bf16.msra.mxu0 0
      %4138 = vmatpush.bf16.msra.mxu0 0
      %4139 = vmatpush.bf16.msra.mxu0 %v4100
      %4140 = vmatpush.bf16.msra.mxu0 %v4099
      %4141 = vmatmul.bf16.gmra.mxu0 %v4122
      %v4142 = vpop.f32.mrf.mxu0
      %v4143 = vadd.f32 0.0, %v4142
      %v4144 = vpop.f32.mrf.mxu0
      %v4145 = vadd.f32 0.0, %v4144
      %4146 = vmatmul.bf16.gmra.mxu0 %v4125
      %v4147 = vpop.f32.mrf.mxu0
      %v4148 = vadd.f32 0.0, %v4147
      %v4149 = vpop.f32.mrf.mxu0
      %v4150 = vadd.f32 0.0, %v4149
      %4151 = vmatmul.bf16.gmra.mxu0 %v4128
      %v4152 = vpop.f32.mrf.mxu0
      %v4153 = vadd.f32 0.0, %v4152
      %v4154 = vpop.f32.mrf.mxu0
      %v4155 = vadd.f32 0.0, %v4154
      %4156 = vmatmul.bf16.gmra.mxu0 %v4131
      %v4157 = vpop.f32.mrf.mxu0
      %v4158 = vadd.f32 0.0, %v4157
      %v4159 = vpop.f32.mrf.mxu0
      %v4160 = vadd.f32 0.0, %v4159
      %4161 = vdwg.mxu0
      %v4162 = vadd.f32 %v4016, %v4143
      %v4163 = vadd.f32 %v4017, %v4145
      %v4164 = vadd.f32 %v4018, %v4148
      %v4165 = vadd.f32 %v4019, %v4150
      %v4166 = vadd.f32 %v4020, %v4153
      %v4167 = vadd.f32 %v4021, %v4155
      %v4168 = vadd.f32 %v4022, %v4158
      %v4169 = vadd.f32 %v4023, %v4160
      %v4170 = vld [vmem:[%s1947] sm:$0xf]
      %v4171 = vld [vmem:[%s1947 + $0x4] sm:$0xf]
      %v4172 = vld [vmem:[%s1947 + $0x8] sm:$0xf]
      %v4173 = vld [vmem:[%s1947 + $0xc] sm:$0xf]
      %v4174 = vld [vmem:[%s1947 + $0x10] sm:$0xf]
      %v4175 = vld [vmem:[%s1947 + $0x14] sm:$0xf]
      %v4176 = vld [vmem:[%s1947 + $0x18] sm:$0xf]
      %v4177 = vld [vmem:[%s1947 + $0x1c] sm:$0xf]
      %v4178 = vld [vmem:[%s1947 + $0x20] sm:$0xf]
      %v4179 = vld [vmem:[%s1947 + $0x24] sm:$0xf]
      %v4180 = vld [vmem:[%s1947 + $0x28] sm:$0x1]
      %v4192 = vunpack.c.l.b16 %v4170
      %v4193 = vunpack.c.l.b16 %v4171
      %v4194 = vunpack.c.l.b16 %v4172
      %v4195 = vunpack.c.l.b16 %v4173
      %v4196 = vunpack.c.l.b16 %v4174
      %v4197 = vunpack.c.l.b16 %v4175
      %v4198 = vunpack.c.l.b16 %v4176
      %v4199 = vunpack.c.l.b16 %v4177
      %v4200 = vunpack.c.l.b16 %v4178
      %v4201 = vunpack.c.l.b16 %v4179
      %v4202 = vunpack.c.l.b16 %v4180
      %v4203 = vpack.c.b16 %v4193, %v4192
      %v4204 = vpack.c.b16 %v4195, %v4194
      %v4205 = vpack.c.b16 %v4197, %v4196
      %v4206 = vpack.c.b16 %v4199, %v4198
      %v4207 = vpack.c.b16 %v4201, %v4200
      %v4208 = vpack.c.b16 %v4202, %v4202
      %v4215 = vand.u32 %v4208, %v1419
      %4217 = vmatpush.bf16.msra.mxu0 0
      %4218 = vmatpush.bf16.msra.mxu0 0
      %4219 = vmatpush.bf16.msra.mxu0 %v4215
      %4220 = vmatpush.bf16.msra.mxu0 %v4207
      %4221 = vmatpush.bf16.msra.mxu0 %v4206
      %4222 = vmatpush.bf16.msra.mxu0 %v4205
      %4223 = vmatpush.bf16.msra.mxu0 %v4204
      %4224 = vmatpush.bf16.msra.mxu0 %v4203
      %4225 = vmatmul.bf16.gmra.mxu0 %v3642
      %v4226 = vpop.f32.mrf.mxu0
      %v4227 = vadd.f32 0.0, %v4226
      %v4228 = vpop.f32.mrf.mxu0
      %v4229 = vadd.f32 0.0, %v4228
      %4230 = vmatmul.bf16.gmra.mxu0 %v3645
      %v4231 = vpop.f32.mrf.mxu0
      %v4232 = vadd.f32 0.0, %v4231
      %v4233 = vpop.f32.mrf.mxu0
      %v4234 = vadd.f32 0.0, %v4233
      %4235 = vdwg.mxu0
      %s4236 = scalar_lea.vmem %s51, 128
      %v4237 = vld [vmem:[%s4236] sm:$0xf]
      %v4238 = vld [vmem:[%s4236 + $0x4] sm:$0xf]
      %v4239 = vld [vmem:[%s4236 + $0x8] sm:$0xf]
      %v4240 = vld [vmem:[%s4236 + $0xc] sm:$0xf]
      %v4241 = vld [vmem:[%s4236 + $0x10] sm:$0xf]
      %v4242 = vld [vmem:[%s4236 + $0x14] sm:$0xf]
      %v4243 = vld [vmem:[%s4236 + $0x18] sm:$0xf]
      %v4244 = vld [vmem:[%s4236 + $0x1c] sm:$0xf]
      %v4245 = vpack.c.bf16 %v4229, %v4227
      %v4246 = vpack.c.bf16 %v4234, %v4232
      %v4255 = vunpack.c.l.b16 %v4237
      %v4256 = vunpack.c.l.b16 %v4238
      %v4257 = vunpack.c.l.b16 %v4239
      %v4258 = vunpack.c.l.b16 %v4240
      %v4259 = vunpack.c.l.b16 %v4241
      %v4260 = vunpack.c.l.b16 %v4242
      %v4261 = vunpack.c.l.b16 %v4243
      %v4262 = vunpack.c.l.b16 %v4244
      %v4263 = vpack.c.b16 %v4256, %v4255
      %v4264 = vpack.c.b16 %v4258, %v4257
      %v4265 = vpack.c.b16 %v4260, %v4259
      %v4266 = vpack.c.b16 %v4262, %v4261
      %v4268 = vsel %vm1550, %v4263, 0
      %v4271 = vsel %vm1550, %v4264, 0
      %v4274 = vsel %vm1550, %v4265, 0
      %v4277 = vsel %vm1550, %v4266, 0
      %4279 = vmatpush.bf16.msra.mxu0 0
      %4280 = vmatpush.bf16.msra.mxu0 0
      %4281 = vmatpush.bf16.msra.mxu0 0
      %4282 = vmatpush.bf16.msra.mxu0 0
      %4283 = vmatpush.bf16.msra.mxu0 0
      %4284 = vmatpush.bf16.msra.mxu0 0
      %4285 = vmatpush.bf16.msra.mxu0 %v4246
      %4286 = vmatpush.bf16.msra.mxu0 %v4245
      %4287 = vmatmul.bf16.gmra.mxu0 %v4268
      %v4288 = vpop.f32.mrf.mxu0
      %v4289 = vadd.f32 0.0, %v4288
      %v4290 = vpop.f32.mrf.mxu0
      %v4291 = vadd.f32 0.0, %v4290
      %4292 = vmatmul.bf16.gmra.mxu0 %v4271
      %v4293 = vpop.f32.mrf.mxu0
      %v4294 = vadd.f32 0.0, %v4293
      %v4295 = vpop.f32.mrf.mxu0
      %v4296 = vadd.f32 0.0, %v4295
      %4297 = vmatmul.bf16.gmra.mxu0 %v4274
      %v4298 = vpop.f32.mrf.mxu0
      %v4299 = vadd.f32 0.0, %v4298
      %v4300 = vpop.f32.mrf.mxu0
      %v4301 = vadd.f32 0.0, %v4300
      %4302 = vmatmul.bf16.gmra.mxu0 %v4277
      %v4303 = vpop.f32.mrf.mxu0
      %v4304 = vadd.f32 0.0, %v4303
      %v4305 = vpop.f32.mrf.mxu0
      %v4306 = vadd.f32 0.0, %v4305
      %4307 = vdwg.mxu0
      %v4308 = vadd.f32 %v4162, %v4289
      %v4309 = vadd.f32 %v4163, %v4291
      %v4310 = vadd.f32 %v4164, %v4294
      %v4311 = vadd.f32 %v4165, %v4296
      %v4312 = vadd.f32 %v4166, %v4299
      %v4313 = vadd.f32 %v4167, %v4301
      %v4314 = vadd.f32 %v4168, %v4304
      %v4315 = vadd.f32 %v4169, %v4306
      %v4316 = vld [vmem:[%s2094] sm:$0xf]
      %v4317 = vld [vmem:[%s2094 + $0x4] sm:$0xf]
      %v4318 = vld [vmem:[%s2094 + $0x8] sm:$0xf]
      %v4319 = vld [vmem:[%s2094 + $0xc] sm:$0xf]
      %v4320 = vld [vmem:[%s2094 + $0x10] sm:$0xf]
      %v4321 = vld [vmem:[%s2094 + $0x14] sm:$0xf]
      %v4322 = vld [vmem:[%s2094 + $0x18] sm:$0xf]
      %v4323 = vld [vmem:[%s2094 + $0x1c] sm:$0xf]
      %v4324 = vld [vmem:[%s2094 + $0x20] sm:$0xf]
      %v4325 = vld [vmem:[%s2094 + $0x24] sm:$0xf]
      %v4326 = vld [vmem:[%s2094 + $0x28] sm:$0x1]
      %v4338 = vunpack.c.l.b16 %v4316
      %v4339 = vunpack.c.l.b16 %v4317
      %v4340 = vunpack.c.l.b16 %v4318
      %v4341 = vunpack.c.l.b16 %v4319
      %v4342 = vunpack.c.l.b16 %v4320
      %v4343 = vunpack.c.l.b16 %v4321
      %v4344 = vunpack.c.l.b16 %v4322
      %v4345 = vunpack.c.l.b16 %v4323
      %v4346 = vunpack.c.l.b16 %v4324
      %v4347 = vunpack.c.l.b16 %v4325
      %v4348 = vunpack.c.l.b16 %v4326
      %v4349 = vpack.c.b16 %v4339, %v4338
      %v4350 = vpack.c.b16 %v4341, %v4340
      %v4351 = vpack.c.b16 %v4343, %v4342
      %v4352 = vpack.c.b16 %v4345, %v4344
      %v4353 = vpack.c.b16 %v4347, %v4346
      %v4354 = vpack.c.b16 %v4348, %v4348
      %v4361 = vand.u32 %v4354, %v1419
      %4363 = vmatpush.bf16.msra.mxu0 0
      %4364 = vmatpush.bf16.msra.mxu0 0
      %4365 = vmatpush.bf16.msra.mxu0 %v4361
      %4366 = vmatpush.bf16.msra.mxu0 %v4353
      %4367 = vmatpush.bf16.msra.mxu0 %v4352
      %4368 = vmatpush.bf16.msra.mxu0 %v4351
      %4369 = vmatpush.bf16.msra.mxu0 %v4350
      %4370 = vmatpush.bf16.msra.mxu0 %v4349
      %4371 = vmatmul.bf16.gmra.mxu0 %v3642
      %v4372 = vpop.f32.mrf.mxu0
      %v4373 = vadd.f32 0.0, %v4372
      %v4374 = vpop.f32.mrf.mxu0
      %v4375 = vadd.f32 0.0, %v4374
      %4376 = vmatmul.bf16.gmra.mxu0 %v3645
      %v4377 = vpop.f32.mrf.mxu0
      %v4378 = vadd.f32 0.0, %v4377
      %v4379 = vpop.f32.mrf.mxu0
      %v4380 = vadd.f32 0.0, %v4379
      %4381 = vdwg.mxu0
      %s4382 = scalar_lea.vmem %s51, 160
      %v4383 = vld [vmem:[%s4382] sm:$0xf]
      %v4384 = vld [vmem:[%s4382 + $0x4] sm:$0xf]
      %v4385 = vld [vmem:[%s4382 + $0x8] sm:$0xf]
      %v4386 = vld [vmem:[%s4382 + $0xc] sm:$0xf]
      %v4387 = vld [vmem:[%s4382 + $0x10] sm:$0xf]
      %v4388 = vld [vmem:[%s4382 + $0x14] sm:$0xf]
      %v4389 = vld [vmem:[%s4382 + $0x18] sm:$0xf]
      %v4390 = vld [vmem:[%s4382 + $0x1c] sm:$0xf]
      %v4391 = vpack.c.bf16 %v4375, %v4373
      %v4392 = vpack.c.bf16 %v4380, %v4378
      %v4401 = vunpack.c.l.b16 %v4383
      %v4402 = vunpack.c.l.b16 %v4384
      %v4403 = vunpack.c.l.b16 %v4385
      %v4404 = vunpack.c.l.b16 %v4386
      %v4405 = vunpack.c.l.b16 %v4387
      %v4406 = vunpack.c.l.b16 %v4388
      %v4407 = vunpack.c.l.b16 %v4389
      %v4408 = vunpack.c.l.b16 %v4390
      %v4409 = vpack.c.b16 %v4402, %v4401
      %v4410 = vpack.c.b16 %v4404, %v4403
      %v4411 = vpack.c.b16 %v4406, %v4405
      %v4412 = vpack.c.b16 %v4408, %v4407
      %v4414 = vsel %vm1550, %v4409, 0
      %v4417 = vsel %vm1550, %v4410, 0
      %v4420 = vsel %vm1550, %v4411, 0
      %v4423 = vsel %vm1550, %v4412, 0
      %4425 = vmatpush.bf16.msra.mxu0 0
      %4426 = vmatpush.bf16.msra.mxu0 0
      %4427 = vmatpush.bf16.msra.mxu0 0
      %4428 = vmatpush.bf16.msra.mxu0 0
      %4429 = vmatpush.bf16.msra.mxu0 0
      %4430 = vmatpush.bf16.msra.mxu0 0
      %4431 = vmatpush.bf16.msra.mxu0 %v4392
      %4432 = vmatpush.bf16.msra.mxu0 %v4391
      %4433 = vmatmul.bf16.gmra.mxu0 %v4414
      %v4434 = vpop.f32.mrf.mxu0
      %v4435 = vadd.f32 0.0, %v4434
      %v4436 = vpop.f32.mrf.mxu0
      %v4437 = vadd.f32 0.0, %v4436
      %4438 = vmatmul.bf16.gmra.mxu0 %v4417
      %v4439 = vpop.f32.mrf.mxu0
      %v4440 = vadd.f32 0.0, %v4439
      %v4441 = vpop.f32.mrf.mxu0
      %v4442 = vadd.f32 0.0, %v4441
      %4443 = vmatmul.bf16.gmra.mxu0 %v4420
      %v4444 = vpop.f32.mrf.mxu0
      %v4445 = vadd.f32 0.0, %v4444
      %v4446 = vpop.f32.mrf.mxu0
      %v4447 = vadd.f32 0.0, %v4446
      %4448 = vmatmul.bf16.gmra.mxu0 %v4423
      %v4449 = vpop.f32.mrf.mxu0
      %v4450 = vadd.f32 0.0, %v4449
      %v4451 = vpop.f32.mrf.mxu0
      %v4452 = vadd.f32 0.0, %v4451
      %4453 = vdwg.mxu0
      %v4454 = vadd.f32 %v4308, %v4435
      %v4455 = vadd.f32 %v4309, %v4437
      %v4456 = vadd.f32 %v4310, %v4440
      %v4457 = vadd.f32 %v4311, %v4442
      %v4458 = vadd.f32 %v4312, %v4445
      %v4459 = vadd.f32 %v4313, %v4447
      %v4460 = vadd.f32 %v4314, %v4450
      %v4461 = vadd.f32 %v4315, %v4452
      %v4462 = vld [vmem:[%s2241] sm:$0xf]
      %v4463 = vld [vmem:[%s2241 + $0x4] sm:$0xf]
      %v4464 = vld [vmem:[%s2241 + $0x8] sm:$0xf]
      %v4465 = vld [vmem:[%s2241 + $0xc] sm:$0xf]
      %v4466 = vld [vmem:[%s2241 + $0x10] sm:$0xf]
      %v4467 = vld [vmem:[%s2241 + $0x14] sm:$0xf]
      %v4468 = vld [vmem:[%s2241 + $0x18] sm:$0xf]
      %v4469 = vld [vmem:[%s2241 + $0x1c] sm:$0xf]
      %v4470 = vld [vmem:[%s2241 + $0x20] sm:$0xf]
      %v4471 = vld [vmem:[%s2241 + $0x24] sm:$0xf]
      %v4472 = vld [vmem:[%s2241 + $0x28] sm:$0x1]
      %v4484 = vunpack.c.l.b16 %v4462
      %v4485 = vunpack.c.l.b16 %v4463
      %v4486 = vunpack.c.l.b16 %v4464
      %v4487 = vunpack.c.l.b16 %v4465
      %v4488 = vunpack.c.l.b16 %v4466
      %v4489 = vunpack.c.l.b16 %v4467
      %v4490 = vunpack.c.l.b16 %v4468
      %v4491 = vunpack.c.l.b16 %v4469
      %v4492 = vunpack.c.l.b16 %v4470
      %v4493 = vunpack.c.l.b16 %v4471
      %v4494 = vunpack.c.l.b16 %v4472
      %v4495 = vpack.c.b16 %v4485, %v4484
      %v4496 = vpack.c.b16 %v4487, %v4486
      %v4497 = vpack.c.b16 %v4489, %v4488
      %v4498 = vpack.c.b16 %v4491, %v4490
      %v4499 = vpack.c.b16 %v4493, %v4492
      %v4500 = vpack.c.b16 %v4494, %v4494
      %v4507 = vand.u32 %v4500, %v1419
      %4509 = vmatpush.bf16.msra.mxu0 0
      %4510 = vmatpush.bf16.msra.mxu0 0
      %4511 = vmatpush.bf16.msra.mxu0 %v4507
      %4512 = vmatpush.bf16.msra.mxu0 %v4499
      %4513 = vmatpush.bf16.msra.mxu0 %v4498
      %4514 = vmatpush.bf16.msra.mxu0 %v4497
      %4515 = vmatpush.bf16.msra.mxu0 %v4496
      %4516 = vmatpush.bf16.msra.mxu0 %v4495
      %4517 = vmatmul.bf16.gmra.mxu0 %v3642
      %v4518 = vpop.f32.mrf.mxu0
      %v4519 = vadd.f32 0.0, %v4518
      %v4520 = vpop.f32.mrf.mxu0
      %v4521 = vadd.f32 0.0, %v4520
      %4522 = vmatmul.bf16.gmra.mxu0 %v3645
      %v4523 = vpop.f32.mrf.mxu0
      %v4524 = vadd.f32 0.0, %v4523
      %v4525 = vpop.f32.mrf.mxu0
      %v4526 = vadd.f32 0.0, %v4525
      %4527 = vdwg.mxu0
      %s4528 = scalar_lea.vmem %s51, 192
      %v4529 = vld [vmem:[%s4528] sm:$0xf]
      %v4530 = vld [vmem:[%s4528 + $0x4] sm:$0xf]
      %v4531 = vld [vmem:[%s4528 + $0x8] sm:$0xf]
      %v4532 = vld [vmem:[%s4528 + $0xc] sm:$0xf]
      %v4533 = vld [vmem:[%s4528 + $0x10] sm:$0xf]
      %v4534 = vld [vmem:[%s4528 + $0x14] sm:$0xf]
      %v4535 = vld [vmem:[%s4528 + $0x18] sm:$0xf]
      %v4536 = vld [vmem:[%s4528 + $0x1c] sm:$0xf]
      %v4537 = vpack.c.bf16 %v4521, %v4519
      %v4538 = vpack.c.bf16 %v4526, %v4524
      %v4547 = vunpack.c.l.b16 %v4529
      %v4548 = vunpack.c.l.b16 %v4530
      %v4549 = vunpack.c.l.b16 %v4531
      %v4550 = vunpack.c.l.b16 %v4532
      %v4551 = vunpack.c.l.b16 %v4533
      %v4552 = vunpack.c.l.b16 %v4534
      %v4553 = vunpack.c.l.b16 %v4535
      %v4554 = vunpack.c.l.b16 %v4536
      %v4555 = vpack.c.b16 %v4548, %v4547
      %v4556 = vpack.c.b16 %v4550, %v4549
      %v4557 = vpack.c.b16 %v4552, %v4551
      %v4558 = vpack.c.b16 %v4554, %v4553
      %v4560 = vsel %vm1550, %v4555, 0
      %v4563 = vsel %vm1550, %v4556, 0
      %v4566 = vsel %vm1550, %v4557, 0
      %v4569 = vsel %vm1550, %v4558, 0
      %4571 = vmatpush.bf16.msra.mxu0 0
      %4572 = vmatpush.bf16.msra.mxu0 0
      %4573 = vmatpush.bf16.msra.mxu0 0
      %4574 = vmatpush.bf16.msra.mxu0 0
      %4575 = vmatpush.bf16.msra.mxu0 0
      %4576 = vmatpush.bf16.msra.mxu0 0
      %4577 = vmatpush.bf16.msra.mxu0 %v4538
      %4578 = vmatpush.bf16.msra.mxu0 %v4537
      %4579 = vmatmul.bf16.gmra.mxu0 %v4560
      %v4580 = vpop.f32.mrf.mxu0
      %v4581 = vadd.f32 0.0, %v4580
      %v4582 = vpop.f32.mrf.mxu0
      %v4583 = vadd.f32 0.0, %v4582
      %4584 = vmatmul.bf16.gmra.mxu0 %v4563
      %v4585 = vpop.f32.mrf.mxu0
      %v4586 = vadd.f32 0.0, %v4585
      %v4587 = vpop.f32.mrf.mxu0
      %v4588 = vadd.f32 0.0, %v4587
      %4589 = vmatmul.bf16.gmra.mxu0 %v4566
      %v4590 = vpop.f32.mrf.mxu0
      %v4591 = vadd.f32 0.0, %v4590
      %v4592 = vpop.f32.mrf.mxu0
      %v4593 = vadd.f32 0.0, %v4592
      %4594 = vmatmul.bf16.gmra.mxu0 %v4569
      %v4595 = vpop.f32.mrf.mxu0
      %v4596 = vadd.f32 0.0, %v4595
      %v4597 = vpop.f32.mrf.mxu0
      %v4598 = vadd.f32 0.0, %v4597
      %4599 = vdwg.mxu0
      %v4600 = vadd.f32 %v4454, %v4581
      %v4601 = vadd.f32 %v4455, %v4583
      %v4602 = vadd.f32 %v4456, %v4586
      %v4603 = vadd.f32 %v4457, %v4588
      %v4604 = vadd.f32 %v4458, %v4591
      %v4605 = vadd.f32 %v4459, %v4593
      %v4606 = vadd.f32 %v4460, %v4596
      %v4607 = vadd.f32 %v4461, %v4598
      %v4608 = vld [vmem:[%s2388] sm:$0xf]
      %v4609 = vld [vmem:[%s2388 + $0x4] sm:$0xf]
      %v4610 = vld [vmem:[%s2388 + $0x8] sm:$0xf]
      %v4611 = vld [vmem:[%s2388 + $0xc] sm:$0xf]
      %v4612 = vld [vmem:[%s2388 + $0x10] sm:$0xf]
      %v4613 = vld [vmem:[%s2388 + $0x14] sm:$0xf]
      %v4614 = vld [vmem:[%s2388 + $0x18] sm:$0xf]
      %v4615 = vld [vmem:[%s2388 + $0x1c] sm:$0xf]
      %v4616 = vld [vmem:[%s2388 + $0x20] sm:$0xf]
      %v4617 = vld [vmem:[%s2388 + $0x24] sm:$0xf]
      %v4618 = vld [vmem:[%s2388 + $0x28] sm:$0x1]
      %v4630 = vunpack.c.l.b16 %v4608
      %v4631 = vunpack.c.l.b16 %v4609
      %v4632 = vunpack.c.l.b16 %v4610
      %v4633 = vunpack.c.l.b16 %v4611
      %v4634 = vunpack.c.l.b16 %v4612
      %v4635 = vunpack.c.l.b16 %v4613
      %v4636 = vunpack.c.l.b16 %v4614
      %v4637 = vunpack.c.l.b16 %v4615
      %v4638 = vunpack.c.l.b16 %v4616
      %v4639 = vunpack.c.l.b16 %v4617
      %v4640 = vunpack.c.l.b16 %v4618
      %v4641 = vpack.c.b16 %v4631, %v4630
      %v4642 = vpack.c.b16 %v4633, %v4632
      %v4643 = vpack.c.b16 %v4635, %v4634
      %v4644 = vpack.c.b16 %v4637, %v4636
      %v4645 = vpack.c.b16 %v4639, %v4638
      %v4646 = vpack.c.b16 %v4640, %v4640
      %v4653 = vand.u32 %v4646, %v1419
      %4655 = vmatpush.bf16.msra.mxu0 0
      %4656 = vmatpush.bf16.msra.mxu0 0
      %4657 = vmatpush.bf16.msra.mxu0 %v4653
      %4658 = vmatpush.bf16.msra.mxu0 %v4645
      %4659 = vmatpush.bf16.msra.mxu0 %v4644
      %4660 = vmatpush.bf16.msra.mxu0 %v4643
      %4661 = vmatpush.bf16.msra.mxu0 %v4642
      %4662 = vmatpush.bf16.msra.mxu0 %v4641
      %4663 = vmatmul.bf16.gmra.mxu0 %v3642
      %v4664 = vpop.f32.mrf.mxu0
      %v4665 = vadd.f32 0.0, %v4664
      %v4666 = vpop.f32.mrf.mxu0
      %v4667 = vadd.f32 0.0, %v4666
      %4668 = vmatmul.bf16.gmra.mxu0 %v3645
      %v4669 = vpop.f32.mrf.mxu0
      %v4670 = vadd.f32 0.0, %v4669
      %v4671 = vpop.f32.mrf.mxu0
      %v4672 = vadd.f32 0.0, %v4671
      %4673 = vdwg.mxu0
      %s4674 = scalar_lea.vmem %s51, 224
      %v4675 = vld [vmem:[%s4674] sm:$0xf]
      %v4676 = vld [vmem:[%s4674 + $0x4] sm:$0xf]
      %v4677 = vld [vmem:[%s4674 + $0x8] sm:$0xf]
      %v4678 = vld [vmem:[%s4674 + $0xc] sm:$0xf]
      %v4679 = vld [vmem:[%s4674 + $0x10] sm:$0xf]
      %v4680 = vld [vmem:[%s4674 + $0x14] sm:$0xf]
      %v4681 = vld [vmem:[%s4674 + $0x18] sm:$0xf]
      %v4682 = vld [vmem:[%s4674 + $0x1c] sm:$0xf]
      %v4683 = vpack.c.bf16 %v4667, %v4665
      %v4684 = vpack.c.bf16 %v4672, %v4670
      %v4693 = vunpack.c.l.b16 %v4675
      %v4694 = vunpack.c.l.b16 %v4676
      %v4695 = vunpack.c.l.b16 %v4677
      %v4696 = vunpack.c.l.b16 %v4678
      %v4697 = vunpack.c.l.b16 %v4679
      %v4698 = vunpack.c.l.b16 %v4680
      %v4699 = vunpack.c.l.b16 %v4681
      %v4700 = vunpack.c.l.b16 %v4682
      %v4701 = vpack.c.b16 %v4694, %v4693
      %v4702 = vpack.c.b16 %v4696, %v4695
      %v4703 = vpack.c.b16 %v4698, %v4697
      %v4704 = vpack.c.b16 %v4700, %v4699
      %v4706 = vsel %vm1550, %v4701, 0
      %v4709 = vsel %vm1550, %v4702, 0
      %v4712 = vsel %vm1550, %v4703, 0
      %v4715 = vsel %vm1550, %v4704, 0
      %4717 = vmatpush.bf16.msra.mxu0 0
      %4718 = vmatpush.bf16.msra.mxu0 0
      %4719 = vmatpush.bf16.msra.mxu0 0
      %4720 = vmatpush.bf16.msra.mxu0 0
      %4721 = vmatpush.bf16.msra.mxu0 0
      %4722 = vmatpush.bf16.msra.mxu0 0
      %4723 = vmatpush.bf16.msra.mxu0 %v4684
      %4724 = vmatpush.bf16.msra.mxu0 %v4683
      %4725 = vmatmul.bf16.gmra.mxu0 %v4706
      %v4726 = vpop.f32.mrf.mxu0
      %v4727 = vadd.f32 0.0, %v4726
      %v4728 = vpop.f32.mrf.mxu0
      %v4729 = vadd.f32 0.0, %v4728
      %4730 = vmatmul.bf16.gmra.mxu0 %v4709
      %v4731 = vpop.f32.mrf.mxu0
      %v4732 = vadd.f32 0.0, %v4731
      %v4733 = vpop.f32.mrf.mxu0
      %v4734 = vadd.f32 0.0, %v4733
      %4735 = vmatmul.bf16.gmra.mxu0 %v4712
      %v4736 = vpop.f32.mrf.mxu0
      %v4737 = vadd.f32 0.0, %v4736
      %v4738 = vpop.f32.mrf.mxu0
      %v4739 = vadd.f32 0.0, %v4738
      %4740 = vmatmul.bf16.gmra.mxu0 %v4715
      %v4741 = vpop.f32.mrf.mxu0
      %v4742 = vadd.f32 0.0, %v4741
      %v4743 = vpop.f32.mrf.mxu0
      %v4744 = vadd.f32 0.0, %v4743
      %4745 = vdwg.mxu0
      %v4746 = vadd.f32 %v4600, %v4727
      %v4747 = vadd.f32 %v4601, %v4729
      %v4748 = vadd.f32 %v4602, %v4732
      %v4749 = vadd.f32 %v4603, %v4734
      %v4750 = vadd.f32 %v4604, %v4737
      %v4751 = vadd.f32 %v4605, %v4739
      %v4752 = vadd.f32 %v4606, %v4742
      %v4753 = vadd.f32 %v4607, %v4744
      %v4754 = vld [vmem:[%s2535] sm:$0xf]
      %v4755 = vld [vmem:[%s2535 + $0x4] sm:$0xf]
      %v4756 = vld [vmem:[%s2535 + $0x8] sm:$0xf]
      %v4757 = vld [vmem:[%s2535 + $0xc] sm:$0xf]
      %v4758 = vld [vmem:[%s2535 + $0x10] sm:$0xf]
      %v4759 = vld [vmem:[%s2535 + $0x14] sm:$0xf]
      %v4760 = vld [vmem:[%s2535 + $0x18] sm:$0xf]
      %v4761 = vld [vmem:[%s2535 + $0x1c] sm:$0xf]
      %v4762 = vld [vmem:[%s2535 + $0x20] sm:$0xf]
      %v4763 = vld [vmem:[%s2535 + $0x24] sm:$0xf]
      %v4764 = vld [vmem:[%s2535 + $0x28] sm:$0x1]
      %v4776 = vunpack.c.l.b16 %v4754
      %v4777 = vunpack.c.l.b16 %v4755
      %v4778 = vunpack.c.l.b16 %v4756
      %v4779 = vunpack.c.l.b16 %v4757
      %v4780 = vunpack.c.l.b16 %v4758
      %v4781 = vunpack.c.l.b16 %v4759
      %v4782 = vunpack.c.l.b16 %v4760
      %v4783 = vunpack.c.l.b16 %v4761
      %v4784 = vunpack.c.l.b16 %v4762
      %v4785 = vunpack.c.l.b16 %v4763
      %v4786 = vunpack.c.l.b16 %v4764
      %v4787 = vpack.c.b16 %v4777, %v4776
      %v4788 = vpack.c.b16 %v4779, %v4778
      %v4789 = vpack.c.b16 %v4781, %v4780
      %v4790 = vpack.c.b16 %v4783, %v4782
      %v4791 = vpack.c.b16 %v4785, %v4784
      %v4792 = vpack.c.b16 %v4786, %v4786
      %v4799 = vand.u32 %v4792, %v1419
      %4801 = vmatpush.bf16.msra.mxu0 0
      %4802 = vmatpush.bf16.msra.mxu0 0
      %4803 = vmatpush.bf16.msra.mxu0 %v4799
      %4804 = vmatpush.bf16.msra.mxu0 %v4791
      %4805 = vmatpush.bf16.msra.mxu0 %v4790
      %4806 = vmatpush.bf16.msra.mxu0 %v4789
      %4807 = vmatpush.bf16.msra.mxu0 %v4788
      %4808 = vmatpush.bf16.msra.mxu0 %v4787
      %4809 = vmatmul.bf16.gmra.mxu0 %v3642
      %v4810 = vpop.f32.mrf.mxu0
      %v4811 = vadd.f32 0.0, %v4810
      %v4812 = vpop.f32.mrf.mxu0
      %v4813 = vadd.f32 0.0, %v4812
      %4814 = vmatmul.bf16.gmra.mxu0 %v3645
      %v4815 = vpop.f32.mrf.mxu0
      %v4816 = vadd.f32 0.0, %v4815
      %v4817 = vpop.f32.mrf.mxu0
      %v4818 = vadd.f32 0.0, %v4817
      %4819 = vdwg.mxu0
      %s4820 = scalar_lea.vmem %s51, 256
      %v4821 = vld [vmem:[%s4820] sm:$0xf]
      %v4822 = vld [vmem:[%s4820 + $0x4] sm:$0xf]
      %v4823 = vld [vmem:[%s4820 + $0x8] sm:$0xf]
      %v4824 = vld [vmem:[%s4820 + $0xc] sm:$0xf]
      %v4825 = vld [vmem:[%s4820 + $0x10] sm:$0xf]
      %v4826 = vld [vmem:[%s4820 + $0x14] sm:$0xf]
      %v4827 = vld [vmem:[%s4820 + $0x18] sm:$0xf]
      %v4828 = vld [vmem:[%s4820 + $0x1c] sm:$0xf]
      %v4829 = vpack.c.bf16 %v4813, %v4811
      %v4830 = vpack.c.bf16 %v4818, %v4816
      %v4839 = vunpack.c.l.b16 %v4821
      %v4840 = vunpack.c.l.b16 %v4822
      %v4841 = vunpack.c.l.b16 %v4823
      %v4842 = vunpack.c.l.b16 %v4824
      %v4843 = vunpack.c.l.b16 %v4825
      %v4844 = vunpack.c.l.b16 %v4826
      %v4845 = vunpack.c.l.b16 %v4827
      %v4846 = vunpack.c.l.b16 %v4828
      %v4847 = vpack.c.b16 %v4840, %v4839
      %v4848 = vpack.c.b16 %v4842, %v4841
      %v4849 = vpack.c.b16 %v4844, %v4843
      %v4850 = vpack.c.b16 %v4846, %v4845
      %v4852 = vsel %vm1550, %v4847, 0
      %v4855 = vsel %vm1550, %v4848, 0
      %v4858 = vsel %vm1550, %v4849, 0
      %v4861 = vsel %vm1550, %v4850, 0
      %4863 = vmatpush.bf16.msra.mxu0 0
      %4864 = vmatpush.bf16.msra.mxu0 0
      %4865 = vmatpush.bf16.msra.mxu0 0
      %4866 = vmatpush.bf16.msra.mxu0 0
      %4867 = vmatpush.bf16.msra.mxu0 0
      %4868 = vmatpush.bf16.msra.mxu0 0
      %4869 = vmatpush.bf16.msra.mxu0 %v4830
      %4870 = vmatpush.bf16.msra.mxu0 %v4829
      %4871 = vmatmul.bf16.gmra.mxu0 %v4852
      %v4872 = vpop.f32.mrf.mxu0
      %v4873 = vadd.f32 0.0, %v4872
      %v4874 = vpop.f32.mrf.mxu0
      %v4875 = vadd.f32 0.0, %v4874
      %4876 = vmatmul.bf16.gmra.mxu0 %v4855
      %v4877 = vpop.f32.mrf.mxu0
      %v4878 = vadd.f32 0.0, %v4877
      %v4879 = vpop.f32.mrf.mxu0
      %v4880 = vadd.f32 0.0, %v4879
      %4881 = vmatmul.bf16.gmra.mxu0 %v4858
      %v4882 = vpop.f32.mrf.mxu0
      %v4883 = vadd.f32 0.0, %v4882
      %v4884 = vpop.f32.mrf.mxu0
      %v4885 = vadd.f32 0.0, %v4884
      %4886 = vmatmul.bf16.gmra.mxu0 %v4861
      %v4887 = vpop.f32.mrf.mxu0
      %v4888 = vadd.f32 0.0, %v4887
      %v4889 = vpop.f32.mrf.mxu0
      %v4890 = vadd.f32 0.0, %v4889
      %4891 = vdwg.mxu0
      %v4892 = vadd.f32 %v4746, %v4873
      %v4893 = vadd.f32 %v4747, %v4875
      %v4894 = vadd.f32 %v4748, %v4878
      %v4895 = vadd.f32 %v4749, %v4880
      %v4896 = vadd.f32 %v4750, %v4883
      %v4897 = vadd.f32 %v4751, %v4885
      %v4898 = vadd.f32 %v4752, %v4888
      %v4899 = vadd.f32 %v4753, %v4890
      %v4900 = vld [vmem:[%s53] sm:$0xff]
      %v4901 = vld [vmem:[%s53 + $0x8] sm:$0xff]
      %v4902 = vld [vmem:[%s53 + $0x10] sm:$0xff]
      %v4903 = vld [vmem:[%s53 + $0x18] sm:$0xff]
      %v4904 = vld [vmem:[%s53 + $0x20] sm:$0xff]
      %v4905 = vld [vmem:[%s53 + $0x28] sm:$0xff]
      %v4906 = vld [vmem:[%s53 + $0x30] sm:$0xff]
      %v4907 = vld [vmem:[%s53 + $0x38] sm:$0xff]
      %4909 = vset.pattern.permute.xlu0 0
      %4910 = vperm.xlu0 %4909, %v4900
      %v4911 = vpop.permute.xlu0 %4910
      %4914 = vset.pattern.permute.xlu0 0
      %4915 = vperm.xlu0 %4914, %v4901
      %v4916 = vpop.permute.xlu0 %4915
      %4919 = vset.pattern.permute.xlu0 0
      %4920 = vperm.xlu0 %4919, %v4902
      %v4921 = vpop.permute.xlu0 %4920
      %4924 = vset.pattern.permute.xlu0 0
      %4925 = vperm.xlu0 %4924, %v4903
      %v4926 = vpop.permute.xlu0 %4925
      %4929 = vset.pattern.permute.xlu0 0
      %4930 = vperm.xlu0 %4929, %v4904
      %v4931 = vpop.permute.xlu0 %4930
      %4934 = vset.pattern.permute.xlu0 0
      %4935 = vperm.xlu0 %4934, %v4905
      %v4936 = vpop.permute.xlu0 %4935
      %4939 = vset.pattern.permute.xlu0 0
      %4940 = vperm.xlu0 %4939, %v4906
      %v4941 = vpop.permute.xlu0 %4940
      %4944 = vset.pattern.permute.xlu0 0
      %4945 = vperm.xlu0 %4944, %v4907
      %v4946 = vpop.permute.xlu0 %4945
      %v4948 = vadd.f32 %v4892, %v4911
      %v4949 = vadd.f32 %v4893, %v4916
      %v4950 = vadd.f32 %v4894, %v4921
      %v4951 = vadd.f32 %v4895, %v4926
      %v4952 = vadd.f32 %v4896, %v4931
      %v4953 = vadd.f32 %v4897, %v4936
      %v4954 = vadd.f32 %v4898, %v4941
      %v4955 = vadd.f32 %v4899, %v4946
      %vm4956 = vcmp.ge.f32.partialorder %v4948, 0.0
      %vm4957 = vcmp.ge.f32.partialorder %v4949, 0.0
      %vm4958 = vcmp.ge.f32.partialorder %v4950, 0.0
      %vm4959 = vcmp.ge.f32.partialorder %v4951, 0.0
      %vm4960 = vcmp.ge.f32.partialorder %v4952, 0.0
      %vm4961 = vcmp.ge.f32.partialorder %v4953, 0.0
      %vm4962 = vcmp.ge.f32.partialorder %v4954, 0.0
      %vm4963 = vcmp.ge.f32.partialorder %v4955, 0.0
      %v4964 = vmul.f32 %v4948, 0.01
      %v4965 = vmul.f32 %v4949, 0.01
      %v4966 = vmul.f32 %v4950, 0.01
      %v4967 = vmul.f32 %v4951, 0.01
      %v4968 = vmul.f32 %v4952, 0.01
      %v4969 = vmul.f32 %v4953, 0.01
      %v4970 = vmul.f32 %v4954, 0.01
      %v4971 = vmul.f32 %v4955, 0.01
      %v4972 = vsel %vm4956, %v4948, %v4964
      %v4973 = vsel %vm4957, %v4949, %v4965
      %v4974 = vsel %vm4958, %v4950, %v4966
      %v4975 = vsel %vm4959, %v4951, %v4967
      %v4976 = vsel %vm4960, %v4952, %v4968
      %v4977 = vsel %vm4961, %v4953, %v4969
      %v4978 = vsel %vm4962, %v4954, %v4970
      %v4979 = vsel %vm4963, %v4955, %v4971
      %v4980 = vld [vmem:[%s55] sm:$0xff]
      %v4981 = vld [vmem:[%s55 + $0x8] sm:$0xff]
      %v4982 = vld [vmem:[%s55 + $0x10] sm:$0xff]
      %v4983 = vld [vmem:[%s55 + $0x18] sm:$0xff]
      %v4984 = vld [vmem:[%s55 + $0x20] sm:$0xff]
      %v4985 = vld [vmem:[%s55 + $0x28] sm:$0xff]
      %v4986 = vld [vmem:[%s55 + $0x30] sm:$0xff]
      %v4987 = vld [vmem:[%s55 + $0x38] sm:$0xff]
      %4989 = vset.pattern.permute.xlu0 0
      %4990 = vperm.xlu0 %4989, %v4980
      %v4991 = vpop.permute.xlu0 %4990
      %4994 = vset.pattern.permute.xlu0 0
      %4995 = vperm.xlu0 %4994, %v4981
      %v4996 = vpop.permute.xlu0 %4995
      %4999 = vset.pattern.permute.xlu0 0
      %5000 = vperm.xlu0 %4999, %v4982
      %v5001 = vpop.permute.xlu0 %5000
      %5004 = vset.pattern.permute.xlu0 0
      %5005 = vperm.xlu0 %5004, %v4983
      %v5006 = vpop.permute.xlu0 %5005
      %5009 = vset.pattern.permute.xlu0 0
      %5010 = vperm.xlu0 %5009, %v4984
      %v5011 = vpop.permute.xlu0 %5010
      %5014 = vset.pattern.permute.xlu0 0
      %5015 = vperm.xlu0 %5014, %v4985
      %v5016 = vpop.permute.xlu0 %5015
      %5019 = vset.pattern.permute.xlu0 0
      %5020 = vperm.xlu0 %5019, %v4986
      %v5021 = vpop.permute.xlu0 %5020
      %5024 = vset.pattern.permute.xlu0 0
      %5025 = vperm.xlu0 %5024, %v4987
      %v5026 = vpop.permute.xlu0 %5025
      %v5028 = vadd.f32 %v4972, %v4991
      %v5029 = vadd.f32 %v4973, %v4996
      %v5030 = vadd.f32 %v4974, %v5001
      %v5031 = vadd.f32 %v4975, %v5006
      %v5032 = vadd.f32 %v4976, %v5011
      %v5033 = vadd.f32 %v4977, %v5016
      %v5034 = vadd.f32 %v4978, %v5021
      %v5035 = vadd.f32 %v4979, %v5026
      %v5036 = vpack.c.bf16 %v5029, %v5028
      %v5037 = vpack.c.bf16 %v5031, %v5030
      %v5038 = vpack.c.bf16 %v5033, %v5032
      %v5039 = vpack.c.bf16 %v5035, %v5034
      %v5040 = vld [vmem:[%s57] sm:$0xf]
      %v5042 = vsel %vm2823, %v5040, 0
      %5044 = vmatpush.bf16.msra.mxu0 0
      %5045 = vmatpush.bf16.msra.mxu0 0
      %5046 = vmatpush.bf16.msra.mxu0 0
      %5047 = vmatpush.bf16.msra.mxu0 0
      %5048 = vmatpush.bf16.msra.mxu0 %v5039
      %5049 = vmatpush.bf16.msra.mxu0 %v5038
      %5050 = vmatpush.bf16.msra.mxu0 %v5037
      %5051 = vmatpush.bf16.msra.mxu0 %v5036
      %5052 = vmatmul.bf16.gmra.mxu0 %v5042
      %v5053 = vpop.f32.mrf.mxu0
      %v5054 = vadd.f32 0.0, %v5053
      %v5055 = vpop.f32.mrf.mxu0
      %5056 = vdwg.mxu0
      %v5057 = vxor.u32 %v5054, 2147483648
      %v5058 = vmul.f32 %v5057, 1.442695
      %v5059 = vpow.pop %v5058
      %v5060 = vadd.f32 %v5059, 1.0
      %v5061 = vrcp.pop %v5060
      %v5062 = vmul.f32 %v5060, %v5061
      %v5063 = vsub.f32 1.0, %v5062
      %v5064 = vmul.f32 %v5061, %v5063
      %v5065 = vadd.f32 %v5061, %v5064
      %vm5066 = vweird.f32 %v5060
      %vm5067 = vweird.f32 %v5061
      %vm5068 = vmor %vm5066, %vm5067
      %v5069 = vsel %vm5068, %v5061, %v5065
      %v5070 = vand.u32 2147483647, %v5060
      %vm5071 = vcmp.eq.f32.partialorder %v5070, 8.507059e+37
      %v5072 = vand.u32 %v5060, 2147483648
      %v5073 = vor.u32 1.1754944e-38, %v5072
      %v5074 = vsel %vm5071, %v5073, %v5069
      %v5075 = vmul.f32 1.0, %v5074
      %v5076 = vld [vmem:[%s59] sm:$0xf]
      %v5077 = vld [vmem:[%s59 + $0x4] sm:$0xf]
      %v5078 = vld [vmem:[%s59 + $0x8] sm:$0xf]
      %v5079 = vld [vmem:[%s59 + $0xc] sm:$0xf]
      %v5080 = vld [vmem:[%s61] sm:$0xff]
      %v5081 = vld [vmem:[%s61 + $0x8] sm:$0xff]
      %v5082 = vld [vmem:[%s61 + $0x10] sm:$0xff]
      %v5083 = vld [vmem:[%s61 + $0x18] sm:$0xff]
      %5085 = vset.pattern.permute.xlu0 0
      %5086 = vperm.xlu0 %5085, %v5080
      %v5087 = vpop.permute.xlu0 %5086
      %5090 = vset.pattern.permute.xlu0 0
      %5091 = vperm.xlu0 %5090, %v5081
      %v5092 = vpop.permute.xlu0 %5091
      %5095 = vset.pattern.permute.xlu0 0
      %5096 = vperm.xlu0 %5095, %v5082
      %v5097 = vpop.permute.xlu0 %5096
      %5100 = vset.pattern.permute.xlu0 0
      %5101 = vperm.xlu0 %5100, %v5083
      %v5102 = vpop.permute.xlu0 %5101
      %v5108 = vunpack.c.l.b16 %v5076
      %v5109 = vunpack.c.l.b16 %v5077
      %v5110 = vunpack.c.l.b16 %v5078
      %v5111 = vunpack.c.l.b16 %v5079
      %v5112 = vpack.c.b16 %v5109, %v5108
      %v5113 = vpack.c.b16 %v5111, %v5110
      %v5115 = vsel %vm2823, %v5112, 0
      %v5118 = vsel %vm2823, %v5113, 0
      %5120 = vmatpush.bf16.msra.mxu0 0
      %5121 = vmatpush.bf16.msra.mxu0 0
      %5122 = vmatpush.bf16.msra.mxu0 0
      %5123 = vmatpush.bf16.msra.mxu0 0
      %5124 = vmatpush.bf16.msra.mxu0 %v5039
      %5125 = vmatpush.bf16.msra.mxu0 %v5038
      %5126 = vmatpush.bf16.msra.mxu0 %v5037
      %5127 = vmatpush.bf16.msra.mxu0 %v5036
      %5128 = vmatmul.bf16.gmra.mxu0 %v5115
      %v5129 = vpop.f32.mrf.mxu0
      %v5130 = vadd.f32 %v5087, %v5129
      %v5131 = vpop.f32.mrf.mxu0
      %v5132 = vadd.f32 %v5092, %v5131
      %5133 = vmatmul.bf16.gmra.mxu0 %v5118
      %v5134 = vpop.f32.mrf.mxu0
      %v5135 = vadd.f32 %v5097, %v5134
      %v5136 = vpop.f32.mrf.mxu0
      %v5137 = vadd.f32 %v5102, %v5136
      %5138 = vdwg.mxu0
      %v5139 = vld [vmem:[%s7] sm:$0x1]
      %v5141 = vperm.slane %v5139, 0
      %v5143 = vmul.f32 %v5130, %v5141
      %v5144 = vmul.f32 %v5132, %v5141
      %v5145 = vmul.f32 %v5135, %v5141
      %v5146 = vmul.f32 %v5137, %v5141
      %v5148 = vsel %vm1410, %v5143, 0
      %v5151 = vsel %vm1410, %v5144, 0
      %v5154 = vsel %vm1410, %v5145, 0
      %v5157 = vsel %vm1410, %v5146, 0
      %v5160 = vsel %vm1410, %v5075, 0
      %5162 = vmatpush.xpose.msra.mxu0 0.0
      %5163 = vmatpush.xpose.msra.mxu0 0.0
      %5164 = vmatpush.xpose.msra.mxu0 0.0
      %5165 = vmatpush.xpose.msra.mxu0 0.0
      %5166 = vmatpush.xpose.msra.mxu0 0.0
      %5167 = vmatpush.xpose.msra.mxu0 0.0
      %5168 = vmatpush.xpose.msra.mxu0 0.0
      %5169 = vmatpush.xpose.msra.mxu0 0.0
      %5170 = vmatpush.xpose.msra.mxu0 0.0
      %5171 = vmatpush.xpose.msra.mxu0 0.0
      %5172 = vmatpush.xpose.msra.mxu0 0.0
      %5173 = vmatpush.xpose.msra.mxu0 0.0
      %5174 = vmatpush.xpose.msra.mxu0 0.0
      %5175 = vmatpush.xpose.msra.mxu0 0.0
      %5176 = vmatpush.xpose.msra.mxu0 0.0
      %5177 = vmatpush.xpose.msra.mxu0 %v5160
      %5178 = vmatmul.f32.gmra.mxu0 %v5148
      %v5179 = vpop.f32.mrf.mxu0
      %v5180 = vadd.f32 0.0, %v5179
      %5181 = vmatmul.f32.gmra.mxu0 %v5151
      %v5182 = vpop.f32.mrf.mxu0
      %v5183 = vadd.f32 0.0, %v5182
      %5184 = vmatmul.f32.gmra.mxu0 %v5154
      %v5185 = vpop.f32.mrf.mxu0
      %v5186 = vadd.f32 0.0, %v5185
      %5187 = vmatmul.f32.gmra.mxu0 %v5157
      %v5188 = vpop.f32.mrf.mxu0
      %v5189 = vadd.f32 0.0, %v5188
      %5190 = vdwg.mxu0
      %v5191 = vld [vmem:[%s63] sm:$0xff]
      %v5193 = vsel %vm2975, %v5191, 0
      %v5196 = vsel %vm2975, %v5180, 0
      %v5199 = vsel %vm2975, %v5183, 0
      %v5202 = vsel %vm2975, %v5186, 0
      %v5205 = vsel %vm2975, %v5189, 0
      %5207 = vmatpush.xpose.msra.mxu0 0.0
      %5208 = vmatpush.xpose.msra.mxu0 0.0
      %5209 = vmatpush.xpose.msra.mxu0 0.0
      %5210 = vmatpush.xpose.msra.mxu0 0.0
      %5211 = vmatpush.xpose.msra.mxu0 0.0
      %5212 = vmatpush.xpose.msra.mxu0 0.0
      %5213 = vmatpush.xpose.msra.mxu0 0.0
      %5214 = vmatpush.xpose.msra.mxu0 0.0
      %5215 = vmatpush.xpose.msra.mxu0 0.0
      %5216 = vmatpush.xpose.msra.mxu0 0.0
      %5217 = vmatpush.xpose.msra.mxu0 0.0
      %5218 = vmatpush.xpose.msra.mxu0 0.0
      %5219 = vmatpush.xpose.msra.mxu0 %v5205
      %5220 = vmatpush.xpose.msra.mxu0 %v5202
      %5221 = vmatpush.xpose.msra.mxu0 %v5199
      %5222 = vmatpush.xpose.msra.mxu0 %v5196
      %5223 = vmatmul.f32.gmra.mxu0 %v5193
      %v5224 = vpop.f32.mrf.mxu0
      %v5225 = vadd.f32 0.0, %v5224
      %5226 = vdwg.mxu0
      %vm5227 = vcmp.ge.f32.partialorder %v5225, 0.0
      %v5228 = vmul.f32 %v5225, 0.2
      %v5229 = vsel %vm5227, %v5225, %v5228
      %v5230 = vld [vmem:[%s65] sm:$0xff]
      %v5231 = vld [vmem:[%s65 + $0x8] sm:$0xff]
      %v5232 = vld [vmem:[%s65 + $0x10] sm:$0xff]
      %v5233 = vld [vmem:[%s65 + $0x18] sm:$0xff]
      %v5234 = vld [vmem:[%s67] sm:$0xff]
      %v5235 = vld [vmem:[%s67 + $0x8] sm:$0xff]
      %v5236 = vld [vmem:[%s67 + $0x10] sm:$0xff]
      %v5237 = vld [vmem:[%s67 + $0x18] sm:$0xff]
      %5239 = vset.pattern.permute.xlu0 0
      %5240 = vperm.xlu0 %5239, %v5234
      %v5241 = vpop.permute.xlu0 %5240
      %5244 = vset.pattern.permute.xlu0 0
      %5245 = vperm.xlu0 %5244, %v5235
      %v5246 = vpop.permute.xlu0 %5245
      %5249 = vset.pattern.permute.xlu0 0
      %5250 = vperm.xlu0 %5249, %v5236
      %v5251 = vpop.permute.xlu0 %5250
      %5254 = vset.pattern.permute.xlu0 0
      %5255 = vperm.xlu0 %5254, %v5237
      %v5256 = vpop.permute.xlu0 %5255
      %v5259 = vsel %vm1550, %v5230, 0
      %v5262 = vsel %vm1550, %v5231, 0
      %v5265 = vsel %vm1550, %v5232, 0
      %v5268 = vsel %vm1550, %v5233, 0
      %v5271 = vsel %vm1550, %v5229, 0
      %5273 = vmatpush.xpose.msra.mxu0 0.0
      %5274 = vmatpush.xpose.msra.mxu0 0.0
      %5275 = vmatpush.xpose.msra.mxu0 0.0
      %5276 = vmatpush.xpose.msra.mxu0 0.0
      %5277 = vmatpush.xpose.msra.mxu0 0.0
      %5278 = vmatpush.xpose.msra.mxu0 0.0
      %5279 = vmatpush.xpose.msra.mxu0 0.0
      %5280 = vmatpush.xpose.msra.mxu0 0.0
      %5281 = vmatpush.xpose.msra.mxu0 0.0
      %5282 = vmatpush.xpose.msra.mxu0 0.0
      %5283 = vmatpush.xpose.msra.mxu0 0.0
      %5284 = vmatpush.xpose.msra.mxu0 0.0
      %5285 = vmatpush.xpose.msra.mxu0 0.0
      %5286 = vmatpush.xpose.msra.mxu0 0.0
      %5287 = vmatpush.xpose.msra.mxu0 0.0
      %5288 = vmatpush.xpose.msra.mxu0 %v5271
      %5289 = vmatmul.f32.gmra.mxu0 %v5259
      %v5290 = vpop.f32.mrf.mxu0
      %v5291 = vadd.f32 %v5241, %v5290
      %5292 = vmatmul.f32.gmra.mxu0 %v5262
      %v5293 = vpop.f32.mrf.mxu0
      %v5294 = vadd.f32 %v5246, %v5293
      %5295 = vmatmul.f32.gmra.mxu0 %v5265
      %v5296 = vpop.f32.mrf.mxu0
      %v5297 = vadd.f32 %v5251, %v5296
      %5298 = vmatmul.f32.gmra.mxu0 %v5268
      %v5299 = vpop.f32.mrf.mxu0
      %v5300 = vadd.f32 %v5256, %v5299
      %5301 = vdwg.mxu0
      %vm5302 = vcmp.ge.f32.partialorder %v5291, 0.0
      %vm5303 = vcmp.ge.f32.partialorder %v5294, 0.0
      %vm5304 = vcmp.ge.f32.partialorder %v5297, 0.0
      %vm5305 = vcmp.ge.f32.partialorder %v5300, 0.0
      %v5306 = vmul.f32 %v5291, 0.2
      %v5307 = vmul.f32 %v5294, 0.2
      %v5308 = vmul.f32 %v5297, 0.2
      %v5309 = vmul.f32 %v5300, 0.2
      %v5310 = vsel %vm5302, %v5291, %v5306
      %v5311 = vsel %vm5303, %v5294, %v5307
      %v5312 = vsel %vm5304, %v5297, %v5308
      %v5313 = vsel %vm5305, %v5300, %v5309
      %v5314 = vadd.f32 %v5310, %v5180
      %v5315 = vadd.f32 %v5311, %v5183
      %v5316 = vadd.f32 %v5312, %v5186
      %v5317 = vadd.f32 %v5313, %v5189
      %v5319 = vsel %vm2975, %v5314, 0
      %v5322 = vsel %vm2975, %v5315, 0
      %v5325 = vsel %vm2975, %v5316, 0
      %v5328 = vsel %vm2975, %v5317, 0
      %5330 = vmatpush.xpose.msra.mxu0 0.0
      %5331 = vmatpush.xpose.msra.mxu0 0.0
      %5332 = vmatpush.xpose.msra.mxu0 0.0
      %5333 = vmatpush.xpose.msra.mxu0 0.0
      %5334 = vmatpush.xpose.msra.mxu0 0.0
      %5335 = vmatpush.xpose.msra.mxu0 0.0
      %5336 = vmatpush.xpose.msra.mxu0 0.0
      %5337 = vmatpush.xpose.msra.mxu0 0.0
      %5338 = vmatpush.xpose.msra.mxu0 0.0
      %5339 = vmatpush.xpose.msra.mxu0 0.0
      %5340 = vmatpush.xpose.msra.mxu0 0.0
      %5341 = vmatpush.xpose.msra.mxu0 0.0
      %5342 = vmatpush.xpose.msra.mxu0 %v5328
      %5343 = vmatpush.xpose.msra.mxu0 %v5325
      %5344 = vmatpush.xpose.msra.mxu0 %v5322
      %5345 = vmatpush.xpose.msra.mxu0 %v5319
      %5346 = vmatmul.f32.gmra.mxu0 %v5319
      %v5347 = vpop.f32.mrf.mxu0
      %v5348 = vadd.f32 0.0, %v5347
      %5349 = vmatmul.f32.gmra.mxu0 %v5322
      %v5350 = vpop.f32.mrf.mxu0
      %v5351 = vadd.f32 0.0, %v5350
      %5352 = vmatmul.f32.gmra.mxu0 %v5325
      %v5353 = vpop.f32.mrf.mxu0
      %v5354 = vadd.f32 0.0, %v5353
      %5355 = vmatmul.f32.gmra.mxu0 %v5328
      %v5356 = vpop.f32.mrf.mxu0
      %v5357 = vadd.f32 0.0, %v5356
      %5358 = vdwg.mxu0
      %v5359 = vsel %vm1550, %v5348, -inf
      %5360 = vmax.xlane.f32.xlu0 %v5359
      %v5361 = vpop.xlane.xlu0 %5360
      %v5362 = vsel %vm1550, %v5351, -inf
      %5363 = vmax.xlane.f32.xlu0 %v5362
      %v5364 = vpop.xlane.xlu0 %5363
      %v5365 = vsel %vm1550, %v5354, -inf
      %5366 = vmax.xlane.f32.xlu0 %v5365
      %v5367 = vpop.xlane.xlu0 %5366
      %v5368 = vsel %vm1550, %v5357, -inf
      %5369 = vmax.xlane.f32.xlu0 %v5368
      %v5370 = vpop.xlane.xlu0 %5369
      %v5371 = vsub.f32 %v5361, %v5348
      %v5372 = vsub.f32 %v5364, %v5351
      %v5373 = vsub.f32 %v5367, %v5354
      %v5374 = vsub.f32 %v5370, %v5357
      %v5375 = vsel %vm1550, %v5371, -inf
      %5376 = vmax.xlane.f32.xlu0 %v5375
      %v5377 = vpop.xlane.xlu0 %5376
      %v5378 = vsel %vm1550, %v5372, -inf
      %5379 = vmax.xlane.f32.xlu0 %v5378
      %v5380 = vpop.xlane.xlu0 %5379
      %v5381 = vsel %vm1550, %v5373, -inf
      %5382 = vmax.xlane.f32.xlu0 %v5381
      %v5383 = vpop.xlane.xlu0 %5382
      %v5384 = vsel %vm1550, %v5374, -inf
      %5385 = vmax.xlane.f32.xlu0 %v5384
      %v5386 = vpop.xlane.xlu0 %5385
      %v5387 = vsub.f32 %v5371, %v5377
      %v5388 = vsub.f32 %v5372, %v5380
      %v5389 = vsub.f32 %v5373, %v5383
      %v5390 = vsub.f32 %v5374, %v5386
      %v5391 = vmul.f32 %v5387, 1.442695
      %v5392 = vpow.pop %v5391
      %v5393 = vmul.f32 %v5388, 1.442695
      %v5394 = vpow.pop %v5393
      %v5395 = vmul.f32 %v5389, 1.442695
      %v5396 = vpow.pop %v5395
      %v5397 = vmul.f32 %v5390, 1.442695
      %v5398 = vpow.pop %v5397
      %v5399 = vsel %vm1550, %v5392, 0.0
      %5400 = vadd.xlane.f32.xlu0 %v5399
      %v5401 = vpop.xlane.xlu0 %5400
      %v5402 = vsel %vm1550, %v5394, 0.0
      %5403 = vadd.xlane.f32.xlu0 %v5402
      %v5404 = vpop.xlane.xlu0 %5403
      %v5405 = vsel %vm1550, %v5396, 0.0
      %5406 = vadd.xlane.f32.xlu0 %v5405
      %v5407 = vpop.xlane.xlu0 %5406
      %v5408 = vsel %vm1550, %v5398, 0.0
      %5409 = vadd.xlane.f32.xlu0 %v5408
      %v5410 = vpop.xlane.xlu0 %5409
      %v5411 = vrcp.pop %v5401
      %v5412 = vrcp.pop %v5404
      %v5413 = vrcp.pop %v5407
      %v5414 = vrcp.pop %v5410
      %v5415 = vmul.f32 %v5392, %v5411
      %v5416 = vmul.f32 %v5394, %v5412
      %v5417 = vmul.f32 %v5396, %v5413
      %v5418 = vmul.f32 %v5398, %v5414
      %v5420 = vsel %vm1550, %v5415, 0
      %v5423 = vsel %vm1550, %v5416, 0
      %v5426 = vsel %vm1550, %v5417, 0
      %v5429 = vsel %vm1550, %v5418, 0
      %5431 = vmatpush.msra.mxu0 0.0
      %5432 = vmatpush.msra.mxu0 0.0
      %5433 = vmatpush.msra.mxu0 0.0
      %5434 = vmatpush.msra.mxu0 0.0
      %5435 = vmatpush.msra.mxu0 0.0
      %5436 = vmatpush.msra.mxu0 0.0
      %5437 = vmatpush.msra.mxu0 0.0
      %5438 = vmatpush.msra.mxu0 0.0
      %5439 = vmatpush.msra.mxu0 0.0
      %5440 = vmatpush.msra.mxu0 0.0
      %5441 = vmatpush.msra.mxu0 0.0
      %5442 = vmatpush.msra.mxu0 0.0
      %5443 = vmatpush.msra.mxu0 %v5317
      %5444 = vmatpush.msra.mxu0 %v5316
      %5445 = vmatpush.msra.mxu0 %v5315
      %5446 = vmatpush.msra.mxu0 %v5314
      %5447 = vmatmul.f32.gmra.mxu0 %v5420
      %v5448 = vpop.f32.mrf.mxu0
      %v5449 = vadd.f32 0.0, %v5448
      %5450 = vmatmul.f32.gmra.mxu0 %v5423
      %v5451 = vpop.f32.mrf.mxu0
      %v5452 = vadd.f32 0.0, %v5451
      %5453 = vmatmul.f32.gmra.mxu0 %v5426
      %v5454 = vpop.f32.mrf.mxu0
      %v5455 = vadd.f32 0.0, %v5454
      %5456 = vmatmul.f32.gmra.mxu0 %v5429
      %v5457 = vpop.f32.mrf.mxu0
      %v5458 = vadd.f32 0.0, %v5457
      %5459 = vdwg.mxu0
      %v5460 = vld [vmem:[#allocation3] sm:$0x1]
      %s5461 = vtos %v5460
      %v5462 = vstv %s5461
      %v5463 = vmul.f32 %v5462, %v5449
      %v5464 = vmul.f32 %v5462, %v5452
      %v5465 = vmul.f32 %v5462, %v5455
      %v5466 = vmul.f32 %v5462, %v5458
      %v5467 = vadd.f32 %v5463, %v5314
      %v5468 = vadd.f32 %v5464, %v5315
      %v5469 = vadd.f32 %v5465, %v5316
      %v5470 = vadd.f32 %v5466, %v5317
      %v5471 = vld [vmem:[%s71] sm:$0xff]
      %v5472 = vld [vmem:[%s73] sm:$0xff]
      %v5474 = vsel %vm1550, %v5472, 0
      %5476 = vmatpush.msra.mxu0 0.0
      %5477 = vmatpush.msra.mxu0 0.0
      %5478 = vmatpush.msra.mxu0 0.0
      %5479 = vmatpush.msra.mxu0 0.0
      %5480 = vmatpush.msra.mxu0 0.0
      %5481 = vmatpush.msra.mxu0 0.0
      %5482 = vmatpush.msra.mxu0 0.0
      %5483 = vmatpush.msra.mxu0 0.0
      %5484 = vmatpush.msra.mxu0 0.0
      %5485 = vmatpush.msra.mxu0 0.0
      %5486 = vmatpush.msra.mxu0 0.0
      %5487 = vmatpush.msra.mxu0 0.0
      %5488 = vmatpush.msra.mxu0 %v5317
      %5489 = vmatpush.msra.mxu0 %v5316
      %5490 = vmatpush.msra.mxu0 %v5315
      %5491 = vmatpush.msra.mxu0 %v5314
      %5492 = vmatmul.f32.gmra.mxu0 %v5474
      %v5493 = vpop.f32.mrf.mxu0
      %v5494 = vadd.f32 0.0, %v5493
      %5495 = vdwg.mxu0
      %v5497 = vsel %vm1550, %v5471, 0
      %5499 = vmatpush.msra.mxu0 0.0
      %5500 = vmatpush.msra.mxu0 0.0
      %5501 = vmatpush.msra.mxu0 0.0
      %5502 = vmatpush.msra.mxu0 0.0
      %5503 = vmatpush.msra.mxu0 0.0
      %5504 = vmatpush.msra.mxu0 0.0
      %5505 = vmatpush.msra.mxu0 0.0
      %5506 = vmatpush.msra.mxu0 0.0
      %5507 = vmatpush.msra.mxu0 0.0
      %5508 = vmatpush.msra.mxu0 0.0
      %5509 = vmatpush.msra.mxu0 0.0
      %5510 = vmatpush.msra.mxu0 0.0
      %5511 = vmatpush.msra.mxu0 %v5470
      %5512 = vmatpush.msra.mxu0 %v5469
      %5513 = vmatpush.msra.mxu0 %v5468
      %5514 = vmatpush.msra.mxu0 %v5467
      %5515 = vmatmul.f32.gmra.mxu0 %v5497
      %v5516 = vpop.f32.mrf.mxu0
      %v5517 = vadd.f32 %v5494, %v5516
      %5518 = vdwg.mxu0
      %v5519 = vld [vmem:[%s75] sm:$0xff]
      %5521 = vset.pattern.permute.xlu0 0
      %5522 = vperm.xlu0 %5521, %v5519
      %v5523 = vpop.permute.xlu0 %5522
      %v5525 = vadd.f32 %v5517, %v5523
      %v5526 = vxor.u32 %v5525, 2147483648
      %v5527 = vmul.f32 %v5526, 1.442695
      %v5528 = vpow.pop %v5527
      %v5529 = vadd.f32 %v5528, 1.0
      %v5530 = vrcp.pop %v5529
      %v5531 = vmul.f32 %v5529, %v5530
      %v5532 = vsub.f32 1.0, %v5531
      %v5533 = vmul.f32 %v5530, %v5532
      %v5534 = vadd.f32 %v5530, %v5533
      %vm5535 = vweird.f32 %v5529
      %vm5536 = vweird.f32 %v5530
      %vm5537 = vmor %vm5535, %vm5536
      %v5538 = vsel %vm5537, %v5530, %v5534
      %v5539 = vand.u32 2147483647, %v5529
      %vm5540 = vcmp.eq.f32.partialorder %v5539, 8.507059e+37
      %v5541 = vand.u32 %v5529, 2147483648
      %v5542 = vor.u32 1.1754944e-38, %v5541
      %v5543 = vsel %vm5540, %v5542, %v5538
      %v5544 = vmul.f32 1.0, %v5543
      %5545 = vmatpush.msra.mxu0 0.0
      %5546 = vmatpush.msra.mxu0 0.0
      %5547 = vmatpush.msra.mxu0 0.0
      %5548 = vmatpush.msra.mxu0 0.0
      %5549 = vmatpush.msra.mxu0 0.0
      %5550 = vmatpush.msra.mxu0 0.0
      %5551 = vmatpush.msra.mxu0 0.0
      %5552 = vmatpush.msra.mxu0 0.0
      %5553 = vmatpush.msra.mxu0 0.0
      %5554 = vmatpush.msra.mxu0 0.0
      %5555 = vmatpush.msra.mxu0 0.0
      %5556 = vmatpush.msra.mxu0 0.0
      %5557 = vmatpush.msra.mxu0 0.0
      %5558 = vmatpush.msra.mxu0 0.0
      %5559 = vmatpush.msra.mxu0 0.0
      %5560 = vmatpush.msra.mxu0 %v5544
      %5561 = vmatmul.f32.gmra.mxu0 %v5319
      %v5562 = vpop.f32.mrf.mxu0
      %v5563 = vadd.f32 0.0, %v5562
      %5564 = vmatmul.f32.gmra.mxu0 %v5322
      %v5565 = vpop.f32.mrf.mxu0
      %v5566 = vadd.f32 0.0, %v5565
      %5567 = vmatmul.f32.gmra.mxu0 %v5325
      %v5568 = vpop.f32.mrf.mxu0
      %v5569 = vadd.f32 0.0, %v5568
      %5570 = vmatmul.f32.gmra.mxu0 %v5328
      %v5571 = vpop.f32.mrf.mxu0
      %v5572 = vadd.f32 0.0, %v5571
      %5573 = vdwg.mxu0
      %vm5574 = vcmp.ge.f32.partialorder %v5563, 0.0
      %vm5575 = vcmp.ge.f32.partialorder %v5566, 0.0
      %vm5576 = vcmp.ge.f32.partialorder %v5569, 0.0
      %vm5577 = vcmp.ge.f32.partialorder %v5572, 0.0
      %v5578 = vmul.f32 %v5563, 0.2
      %v5579 = vmul.f32 %v5566, 0.2
      %v5580 = vmul.f32 %v5569, 0.2
      %v5581 = vmul.f32 %v5572, 0.2
      %v5582 = vsel %vm5574, %v5563, %v5578
      %v5583 = vsel %vm5575, %v5566, %v5579
      %v5584 = vsel %vm5576, %v5569, %v5580
      %v5585 = vsel %vm5577, %v5572, %v5581
      %v5586 = vld [vmem:[%s77] sm:$0xff]
      %v5587 = vld [vmem:[%s77 + $0x8] sm:$0xff]
      %v5588 = vld [vmem:[%s77 + $0x10] sm:$0xff]
      %v5589 = vld [vmem:[%s77 + $0x18] sm:$0xff]
      %v5590 = vld [vmem:[%s79] sm:$0xff]
      %v5591 = vld [vmem:[%s79 + $0x8] sm:$0xff]
      %v5592 = vld [vmem:[%s79 + $0x10] sm:$0xff]
      %v5593 = vld [vmem:[%s79 + $0x18] sm:$0xff]
      %5595 = vset.pattern.permute.xlu0 0
      %5596 = vperm.xlu0 %5595, %v5590
      %v5597 = vpop.permute.xlu0 %5596
      %5600 = vset.pattern.permute.xlu0 0
      %5601 = vperm.xlu0 %5600, %v5591
      %v5602 = vpop.permute.xlu0 %5601
      %5605 = vset.pattern.permute.xlu0 0
      %5606 = vperm.xlu0 %5605, %v5592
      %v5607 = vpop.permute.xlu0 %5606
      %5610 = vset.pattern.permute.xlu0 0
      %5611 = vperm.xlu0 %5610, %v5593
      %v5612 = vpop.permute.xlu0 %5611
      %v5615 = vsel %vm1550, %v5586, 0
      %v5618 = vsel %vm1550, %v5587, 0
      %v5621 = vsel %vm1550, %v5588, 0
      %v5624 = vsel %vm1550, %v5589, 0
      %5626 = vmatpush.msra.mxu0 0.0
      %5627 = vmatpush.msra.mxu0 0.0
      %5628 = vmatpush.msra.mxu0 0.0
      %5629 = vmatpush.msra.mxu0 0.0
      %5630 = vmatpush.msra.mxu0 0.0
      %5631 = vmatpush.msra.mxu0 0.0
      %5632 = vmatpush.msra.mxu0 0.0
      %5633 = vmatpush.msra.mxu0 0.0
      %5634 = vmatpush.msra.mxu0 0.0
      %5635 = vmatpush.msra.mxu0 0.0
      %5636 = vmatpush.msra.mxu0 0.0
      %5637 = vmatpush.msra.mxu0 0.0
      %5638 = vmatpush.msra.mxu0 %v5585
      %5639 = vmatpush.msra.mxu0 %v5584
      %5640 = vmatpush.msra.mxu0 %v5583
      %5641 = vmatpush.msra.mxu0 %v5582
      %5642 = vmatmul.f32.gmra.mxu0 %v5615
      %v5643 = vpop.f32.mrf.mxu0
      %v5644 = vadd.f32 %v5597, %v5643
      %5645 = vmatmul.f32.gmra.mxu0 %v5618
      %v5646 = vpop.f32.mrf.mxu0
      %v5647 = vadd.f32 %v5602, %v5646
      %5648 = vmatmul.f32.gmra.mxu0 %v5621
      %v5649 = vpop.f32.mrf.mxu0
      %v5650 = vadd.f32 %v5607, %v5649
      %5651 = vmatmul.f32.gmra.mxu0 %v5624
      %v5652 = vpop.f32.mrf.mxu0
      %v5653 = vadd.f32 %v5612, %v5652
      %5654 = vdwg.mxu0
      %vm5655 = vcmp.ge.f32.partialorder %v5644, 0.0
      %vm5656 = vcmp.ge.f32.partialorder %v5647, 0.0
      %vm5657 = vcmp.ge.f32.partialorder %v5650, 0.0
      %vm5658 = vcmp.ge.f32.partialorder %v5653, 0.0
      %v5659 = vmul.f32 %v5644, 0.2
      %v5660 = vmul.f32 %v5647, 0.2
      %v5661 = vmul.f32 %v5650, 0.2
      %v5662 = vmul.f32 %v5653, 0.2
      %v5663 = vsel %vm5655, %v5644, %v5659
      %v5664 = vsel %vm5656, %v5647, %v5660
      %v5665 = vsel %vm5657, %v5650, %v5661
      %v5666 = vsel %vm5658, %v5653, %v5662
      %v5667 = vadd.f32 %v5663, %v5314
      %v5668 = vadd.f32 %v5664, %v5315
      %v5669 = vadd.f32 %v5665, %v5316
      %v5670 = vadd.f32 %v5666, %v5317
      %s5671 = scalar_lea.vmem %s1234, 32
      %5672 = vst.msk [vmem:[%s5671] sm:$0xff] %vm2975, %v5667
      %5673 = vst.msk [vmem:[%s5671 + $0x8] sm:$0xff] %vm2975, %v5668
      %5674 = vst.msk [vmem:[%s5671 + $0x10] sm:$0xff] %vm2975, %v5669
      %5675 = vst.msk [vmem:[%s5671 + $0x18] sm:$0xff] %vm2975, %v5670
      %p5676 = scmp.lt.s32.totalorder %s96, 1
      %s5677 = scalar_select %p5676, %s96, 1
      %s5678 = smul.addr %s5677, 8
      %s5679 = smul.addr %s5678, 8
      %s5680 = scalar_lea.vmem %s81, %s5679
      // Predicated region
      $region181: #{_lambda_.2} parent=179 // pred_check
        %p5681 = pneg %p964
      $region182: #{_lambda_.2} parent=179 // pred_check_branch
        %5683 = sbr.rel (%p5681) target = $region184
      $region183: #{_lambda_.2} parent=179 // pred_region
        _
      $region184: #{_lambda_.2} parent=179 // pred_fallthru
        _
    $region180: #{_lambda_.2} parent=5 // pred_fallthru
      _
    %p5684 = scmp.le.s32.totalorder 2, %s91
    // Predicated region
    $region185: #{_lambda_.2} parent=5 // pred_check
      %p5685 = pneg %p5684
    $region186: #{_lambda_.2} parent=5 // pred_check_branch
      %5687 = sbr.rel (%p5685) target = $region188
    $region187: #{_lambda_.2} parent=5 // pred_region
      %s5688 = ssub.s32 %s91, 2
      // Predicated region
      $region189: #{_lambda_.2} parent=187 // pred_check
        %p5689 = pneg %p970
      $region190: #{_lambda_.2} parent=187 // pred_check_branch
        %5691 = sbr.rel (%p5689) target = $region192
      $region191: #{_lambda_.2} parent=187 // pred_region
        %p5692 = scmp.lt.s32.totalorder %s97, 1
        %s5693 = scalar_select %p5692, %s97, 1
        %s5694 = smul.addr %s5693, 8
        %s5695 = smul.addr %s5694, 8
        %s5696 = scalar_lea.vmem %s81, %s5695
      $region192: #{_lambda_.2} parent=187 // pred_fallthru
        _
    $region188: #{_lambda_.2} parent=5 // pred_fallthru
      _
  $region6: #{_lambda_.2} parent=0 // loop_footer
    %s95 = sadd.s32 1, %s91
  $region7: #{_lambda_.2} parent=0 // loop_footer_branch
    %90 = sbr.rel target = $region3
  $region8: #{_lambda_.2} parent=0 // loop_exit
    _

</llo_original>
